<compile_context>
chip_gen: v7x
topology: tpu7x:2x2x1
jax: 0.10.0
libtpu: 0.0.40
codegen_flags: <defaults>
</compile_context>

<pallas_src>
import jax
import jax.numpy as jnp
import numpy as np
from jax.experimental import pallas as pl
from jax.experimental.pallas import tpu as pltpu


def din_kernel(user_ref, target_ref, behav_ref,
               w1a_ref, b1a_ref, w2a_ref, b2a_ref,
               w1f_ref, b1f_ref, w2f_ref, b2f_ref,
               out_ref):
    user = user_ref[...]            # (TB, UE)   f32
    target = target_ref[...]        # (TB, E)    f32
    behav = behav_ref[...]          # (TB, S, E) f32
    TB, S, E = behav.shape
    H = b1a_ref.shape[-1]

    # ---- attention MLP layer 1: single fused K=3E dot (bf16 operands) ----
    tgt_b = jnp.broadcast_to(target[:, None, :], (TB, S, E))
    lhs = jnp.concatenate([behav, behav * tgt_b, tgt_b], axis=-1)   # (TB, S, 3E)
    lhs = lhs.reshape(TB * S, 3 * E).astype(jnp.bfloat16)
    h = jnp.dot(lhs, w1a_ref[...],
                preferred_element_type=jnp.float32)                 # (TB*S, H)
    h = jnp.maximum(h.reshape(TB, S, H) + b1a_ref[...], 0.0)        # (TB, S, H)

    # ---- attention MLP layer 2: MXU matvec ----
    scores = jnp.dot(h.reshape(TB * S, H).astype(jnp.bfloat16), w2a_ref[...],
                     preferred_element_type=jnp.float32)            # (TB*S, 1)
    scores = scores.reshape(TB, S) + b2a_ref[0]                     # (TB, S)

    # ---- softmax over the sequence axis (EUP approx reciprocal) ----
    m = jnp.max(scores, axis=1, keepdims=True)
    e = jnp.exp(scores - m)
    inv = pl.reciprocal(jnp.sum(e, axis=1, keepdims=True), approx=True)
    attn_w = e * inv                                                 # (TB, S)

    # ---- attention-weighted pooling on the VPU (S-sublane reduce) ----
    interest = jnp.sum(behav * attn_w[:, :, None], axis=1)           # (TB, E) f32

    # ---- final MLP: single K = UE+2E dot, then MXU matvec ----
    combined = jnp.concatenate([user, interest, target],
                               axis=-1).astype(jnp.bfloat16)         # (TB, UE+2E)
    h2 = jnp.dot(combined, w1f_ref[...],
                 preferred_element_type=jnp.float32) + b1f_ref[...]  # (TB, H)
    h2 = jnp.maximum(h2, 0.0)
    out = jnp.dot(h2.astype(jnp.bfloat16), w2f_ref[...],
                  preferred_element_type=jnp.float32)[:, 0] + b2f_ref[0]

    # lane-dense store: one (1, TB) row per grid step (TB is a multiple of 128)
    out_ref[...] = out[None, :]


def _round_up(x, m):
    return ((x + m - 1) // m) * m


def _pick_tb(B):
    # Multiple of 128 (unmasked output stores, decent MXU M = tb*S); keep at
    # least 2 grid steps when the batch allows so "parallel" spans both v7x
    # TensorCores.
    for t in (512, 256, 128):
        if B >= 2 * t:
            return t
    return 128


def din_pallas(user_embeds, target_embed, behavior_embeds, params, *, tb=None):
    B, UE = user_embeds.shape
    _, S, E = behavior_embeds.shape
    H = params['w1a'].shape[1]

    # ---- fold attention-MLP layer-1 weights: attn_in = [b, t, b-t, b*t] ----
    # lhs columns are [behav | behav*tgt | tgt]  ->  stack [W0+W2 ; W3 ; W1-W2]
    w1a = params['w1a']
    wb = w1a[0 * E:1 * E] + w1a[2 * E:3 * E]
    wt = w1a[1 * E:2 * E] - w1a[2 * E:3 * E]
    wp = w1a[3 * E:4 * E]
    w1a_fold = jnp.concatenate([wb, wp, wt], axis=0).astype(jnp.bfloat16)  # (3E, H)

    w1f = params['w1f'].astype(jnp.bfloat16)            # (UE+2E, H), original layout
    w2a = params['w2a'].reshape(H, 1).astype(jnp.bfloat16)
    w2f = params['w2f'].reshape(H, 1).astype(jnp.bfloat16)
    b1a = params['b1a'].reshape(1, H)
    b1f = params['b1f'].reshape(1, H)
    b2a = params['b2a'].reshape(1)
    b2f = params['b2f'].reshape(1)

    # ---- batch tiling ----
    if tb is None:
        tb = _pick_tb(B)
    tb = max(128, _round_up(tb, 128))
    Bp = _round_up(B, tb)
    G = Bp // tb

    def padb(x):
        pad = Bp - B
        if pad == 0:
            return x
        return jnp.pad(x, ((0, pad),) + ((0, 0),) * (x.ndim - 1))

    user_p = padb(user_embeds)
    tgt_p = padb(target_embed)
    behav_p = padb(behavior_embeds)

    def resident(shape):  # VMEM-resident weight: full block, constant index
        return pl.BlockSpec(shape, lambda i: (0, 0))

    smem = pl.BlockSpec(memory_space=pltpu.MemorySpace.SMEM)

    cost = pl.CostEstimate(
        flops=int(2 * Bp * S * (3 * E) * H + 2 * Bp * S * H
                  + 2 * Bp * (UE + 2 * E) * H + 2 * Bp * H),
        transcendentals=int(Bp * S),
        bytes_accessed=int(4 * Bp * (UE + E + S * E + 1)
                           + 2 * (3 * E * H + H + (UE + 2 * E) * H + H)
                           + 4 * (2 * H + 2)),
    )

    out = pl.pallas_call(
        din_kernel,
        out_shape=jax.ShapeDtypeStruct((G, tb), jnp.float32),
        grid=(G,),
        in_specs=[
            pl.BlockSpec((tb, UE), lambda i: (i, 0)),
            pl.BlockSpec((tb, E), lambda i: (i, 0)),
            pl.BlockSpec((tb, S, E), lambda i: (i, 0, 0)),
            resident(w1a_fold.shape), resident(b1a.shape),
            resident(w2a.shape), smem,
            resident(w1f.shape), resident(b1f.shape),
            resident(w2f.shape), smem,
        ],
        out_specs=pl.BlockSpec((1, tb), lambda i: (i, 0)),
        compiler_params=pltpu.CompilerParams(
            dimension_semantics=("parallel",)),
        cost_estimate=cost,
    )(user_p, tgt_p, behav_p,
      w1a_fold, b1a, w2a, b2a,
      w1f, b1f, w2f, b2f)

    return out.reshape(Bp)[:B].reshape(B, 1)


def din_reference(params, user_embeds, target_embed, behavior_embeds):
    tgt = jnp.broadcast_to(target_embed[:, None, :], behavior_embeds.shape)
    attn_in = jnp.concatenate(
        [behavior_embeds, tgt, behavior_embeds - tgt, behavior_embeds * tgt], axis=-1)
    h = jax.nn.relu(attn_in @ params['w1a'] + params['b1a'])
    scores = jnp.sum(h * params['w2a'], axis=-1) + params['b2a']
    w = jax.nn.softmax(scores, axis=1)
    interest = jnp.sum(behavior_embeds * w[:, :, None], axis=1)
    combined = jnp.concatenate([user_embeds, interest, target_embed], axis=-1)
    h2 = jax.nn.relu(combined @ params['w1f'] + params['b1f'])
    return jnp.sum(h2 * params['w2f'], axis=-1, keepdims=True) + params['b2f']


if __name__ == "__main__":
    key = jax.random.PRNGKey(0)

    # Module config: num_item_features must be 1 for the original module's
    # attention_mlp (Linear(embedding_dim*4)) / fc input dims to be consistent.
    user_feature_sizes = [10, 20]
    item_feature_sizes = [30]
    E = 16            # embedding_dim
    B, S = 2, 8       # batch, behavior sequence length
    U = len(user_feature_sizes)
    H = 128

    keys = jax.random.split(key, 16)
    params = {
        'user_emb': [0.1 * jax.random.normal(keys[i], (sz, E), jnp.float32)
                     for i, sz in enumerate(user_feature_sizes)],
        'item_emb': [0.1 * jax.random.normal(keys[4 + i], (sz, E), jnp.float32)
                     for i, sz in enumerate(item_feature_sizes)],
        'w1a': 0.1 * jax.random.normal(keys[8], (4 * E, H), jnp.float32),
        'b1a': 0.01 * jax.random.normal(keys[9], (H,), jnp.float32),
        'w2a': 0.1 * jax.random.normal(keys[10], (H,), jnp.float32),
        'b2a': 0.01 * jax.random.normal(keys[11], (1,), jnp.float32),
        'w1f': 0.1 * jax.random.normal(keys[12], (E * (U + 2), H), jnp.float32),
        'b1f': 0.01 * jax.random.normal(keys[13], (H,), jnp.float32),
        'w2f': 0.1 * jax.random.normal(keys[14], (H,), jnp.float32),
        'b2f': 0.01 * jax.random.normal(keys[15], (1,), jnp.float32),
    }

    ik = jax.random.split(jax.random.PRNGKey(42), 3)
    user_features = jax.random.randint(ik[0], (B, U), 0, min(user_feature_sizes))
    target_item_features = jax.random.randint(ik[1], (B, 1), 0, item_feature_sizes[0])
    behavior_sequence = jax.random.randint(ik[2], (B, S, 1), 0, item_feature_sizes[0])

    # Embedding lookups (gathers) kept as plain-JAX glue.
    user_embeds = jnp.concatenate(
        [params['user_emb'][i][user_features[:, i]] for i in range(U)], axis=-1)
    target_embed = jnp.concatenate(
        [params['item_emb'][i][target_item_features[:, i]]
         for i in range(len(item_feature_sizes))], axis=-1)
    behavior_embeds = jnp.concatenate(
        [params['item_emb'][i][behavior_sequence[:, :, i]]
         for i in range(len(item_feature_sizes))], axis=-1)

    out = din_pallas(user_embeds, target_embed, behavior_embeds, params)
    out = jax.block_until_ready(out)

    ref = din_reference(params, user_embeds, target_embed, behavior_embeds)
    # tolerance accounts for bf16 MXU operands (f32 accumulation) and the
    # EUP approximate reciprocal in the softmax denominator
    np.testing.assert_allclose(np.asarray(out), np.asarray(ref), rtol=2e-2, atol=2e-2)

    print("KERNEL_OK")
</pallas_src>

<mosaic_0001>
module attributes {stable_mosaic.version = 11 : i64} {
  func.func @din_kernel(%arg0: i32, %arg1: memref<128x32xf32, #tpu.memory_space<vmem>>, %arg2: memref<128x16xf32, #tpu.memory_space<vmem>>, %arg3: memref<128x8x16xf32, #tpu.memory_space<vmem>>, %arg4: memref<48x128xbf16, #tpu.memory_space<vmem>>, %arg5: memref<1x128xf32, #tpu.memory_space<vmem>>, %arg6: memref<128x1xbf16, #tpu.memory_space<vmem>>, %arg7: memref<1xf32, #tpu.memory_space<smem>>, %arg8: memref<64x128xbf16, #tpu.memory_space<vmem>>, %arg9: memref<1x128xf32, #tpu.memory_space<vmem>>, %arg10: memref<128x1xbf16, #tpu.memory_space<vmem>>, %arg11: memref<1xf32, #tpu.memory_space<smem>>, %arg12: memref<1x128xf32, #tpu.memory_space<vmem>>) attributes {dimension_semantics = [#tpu.dimension_semantics<parallel>], iteration_bounds = array<i64: 1>, scalar_prefetch = 0 : i64, scratch_operands = 0 : i64, tpu.core_type = #tpu.core_type<tc>, window_params = [{transform_indices = @transform_0, window_bounds = array<i64: 128, 32>}, {transform_indices = @transform_1, window_bounds = array<i64: 128, 16>}, {transform_indices = @transform_2, window_bounds = array<i64: 128, 8, 16>}, {pipeline_mode = #tpu.pipeline_mode<synchronous>, transform_indices = @transform_3, window_bounds = array<i64: 48, 128>}, {pipeline_mode = #tpu.pipeline_mode<synchronous>, transform_indices = @transform_4, window_bounds = array<i64: 1, 128>}, {pipeline_mode = #tpu.pipeline_mode<synchronous>, transform_indices = @transform_5, window_bounds = array<i64: 128, 1>}, {transform_indices = @transform_6, window_bounds = array<i64: 1>}, {pipeline_mode = #tpu.pipeline_mode<synchronous>, transform_indices = @transform_7, window_bounds = array<i64: 64, 128>}, {pipeline_mode = #tpu.pipeline_mode<synchronous>, transform_indices = @transform_8, window_bounds = array<i64: 1, 128>}, {pipeline_mode = #tpu.pipeline_mode<synchronous>, transform_indices = @transform_9, window_bounds = array<i64: 128, 1>}, {transform_indices = @transform_10, window_bounds = array<i64: 1>}, {transform_indices = @transform_11, window_bounds = array<i64: 1, 128>}]} {
    %c0 = arith.constant 0 : index
    %c0_0 = arith.constant 0 : index
    %0 = vector.load %arg1[%c0, %c0_0] : memref<128x32xf32, #tpu.memory_space<vmem>>, vector<128x32xf32>
    %c0_1 = arith.constant 0 : index
    %c0_2 = arith.constant 0 : index
    %1 = vector.load %arg2[%c0_1, %c0_2] : memref<128x16xf32, #tpu.memory_space<vmem>>, vector<128x16xf32>
    %c0_3 = arith.constant 0 : index
    %c0_4 = arith.constant 0 : index
    %c0_5 = arith.constant 0 : index
    %2 = vector.load %arg3[%c0_3, %c0_4, %c0_5] : memref<128x8x16xf32, #tpu.memory_space<vmem>>, vector<128x8x16xf32>
    %3 = vector.shape_cast %1 : vector<128x16xf32> to vector<128x1x16xf32>
    %4 = vector.shape_cast %3 : vector<128x1x16xf32> to vector<128x1x16xf32>
    %5 = vector.broadcast %4 : vector<128x1x16xf32> to vector<128x8x16xf32>
    %6 = arith.mulf %2, %5 : vector<128x8x16xf32>
    %7 = tpu.concatenate %2, %6, %5 in 2 : vector<128x8x16xf32>, vector<128x8x16xf32>, vector<128x8x16xf32> -> vector<128x8x48xf32>
    %8 = vector.shape_cast %7 : vector<128x8x48xf32> to vector<1024x48xf32>
    %9 = arith.truncf %8 : vector<1024x48xf32> to vector<1024x48xbf16>
    %c0_6 = arith.constant 0 : index
    %c0_7 = arith.constant 0 : index
    %10 = vector.load %arg4[%c0_6, %c0_7] : memref<48x128xbf16, #tpu.memory_space<vmem>>, vector<48x128xbf16>
    %cst = arith.constant dense<0.000000e+00> : vector<1024x128xf32>
    %11 = tpu.matmul %9, %10, %cst {dimension_numbers = #tpu.dot_dimension_numbers<[1], [0], [0], [1], [0, 0, 1, 1], [], []>} : vector<1024x48xbf16>, vector<48x128xbf16>, vector<1024x128xf32> -> vector<1024x128xf32>
    %12 = vector.shape_cast %11 : vector<1024x128xf32> to vector<128x8x128xf32>
    %c0_8 = arith.constant 0 : index
    %c0_9 = arith.constant 0 : index
    %13 = vector.load %arg5[%c0_8, %c0_9] : memref<1x128xf32, #tpu.memory_space<vmem>>, vector<1x128xf32>
    %14 = vector.shape_cast %13 : vector<1x128xf32> to vector<1x1x128xf32>
    %15 = vector.broadcast %14 : vector<1x1x128xf32> to vector<128x8x128xf32>
    %16 = arith.addf %12, %15 : vector<128x8x128xf32>
    %cst_10 = arith.constant 0.000000e+00 : f32
    %17 = vector.broadcast %cst_10 : f32 to vector<128x8x128xf32>
    %18 = arith.maximumf %16, %17 : vector<128x8x128xf32>
    %19 = vector.shape_cast %18 : vector<128x8x128xf32> to vector<1024x128xf32>
    %20 = arith.truncf %19 : vector<1024x128xf32> to vector<1024x128xbf16>
    %c0_11 = arith.constant 0 : index
    %c0_12 = arith.constant 0 : index
    %21 = vector.load %arg6[%c0_11, %c0_12] : memref<128x1xbf16, #tpu.memory_space<vmem>>, vector<128x1xbf16>
    %cst_13 = arith.constant dense<0.000000e+00> : vector<1024x1xf32>
    %22 = tpu.matmul %20, %21, %cst_13 {dimension_numbers = #tpu.dot_dimension_numbers<[1], [0], [0], [1], [0, 0, 1, 1], [], []>} : vector<1024x128xbf16>, vector<128x1xbf16>, vector<1024x1xf32> -> vector<1024x1xf32>
    %23 = vector.shape_cast %22 : vector<1024x1xf32> to vector<128x8xf32>
    %c0_14 = arith.constant 0 : index
    %24 = memref.load %arg7[%c0_14] : memref<1xf32, #tpu.memory_space<smem>>
    %25 = vector.broadcast %24 : f32 to vector<128x8xf32>
    %26 = arith.addf %23, %25 : vector<128x8xf32>
    %cst_15 = arith.constant dense<0xFF800000> : vector<128xf32>
    %27 = vector.multi_reduction <maximumf>, %26, %cst_15 [1] : vector<128x8xf32> to vector<128xf32>
    %28 = vector.shape_cast %27 : vector<128xf32> to vector<128x1xf32>
    %29 = vector.broadcast %28 : vector<128x1xf32> to vector<128x8xf32>
    %30 = arith.subf %26, %29 : vector<128x8xf32>
    %31 = math.exp %30 : vector<128x8xf32>
    %cst_16 = arith.constant dense<0.000000e+00> : vector<128xf32>
    %32 = vector.multi_reduction <add>, %31, %cst_16 [1] : vector<128x8xf32> to vector<128xf32>
    %33 = vector.shape_cast %32 : vector<128xf32> to vector<128x1xf32>
    %34 = tpu.reciprocal %33 {approx = true} : vector<128x1xf32> -> vector<128x1xf32>
    %35 = vector.broadcast %34 : vector<128x1xf32> to vector<128x8xf32>
    %36 = arith.mulf %31, %35 : vector<128x8xf32>
    %37 = vector.shape_cast %36 : vector<128x8xf32> to vector<128x8x1xf32>
    %38 = vector.broadcast %37 : vector<128x8x1xf32> to vector<128x8x16xf32>
    %39 = arith.mulf %2, %38 : vector<128x8x16xf32>
    %cst_17 = arith.constant dense<0.000000e+00> : vector<128x16xf32>
    %40 = vector.multi_reduction <add>, %39, %cst_17 [1] : vector<128x8x16xf32> to vector<128x16xf32>
    %41 = tpu.concatenate %0, %40, %1 in 1 : vector<128x32xf32>, vector<128x16xf32>, vector<128x16xf32> -> vector<128x64xf32>
    %42 = arith.truncf %41 : vector<128x64xf32> to vector<128x64xbf16>
    %c0_18 = arith.constant 0 : index
    %c0_19 = arith.constant 0 : index
    %43 = vector.load %arg8[%c0_18, %c0_19] : memref<64x128xbf16, #tpu.memory_space<vmem>>, vector<64x128xbf16>
    %cst_20 = arith.constant dense<0.000000e+00> : vector<128x128xf32>
    %44 = tpu.matmul %42, %43, %cst_20 {dimension_numbers = #tpu.dot_dimension_numbers<[1], [0], [0], [1], [0, 0, 1, 1], [], []>} : vector<128x64xbf16>, vector<64x128xbf16>, vector<128x128xf32> -> vector<128x128xf32>
    %c0_21 = arith.constant 0 : index
    %c0_22 = arith.constant 0 : index
    %45 = vector.load %arg9[%c0_21, %c0_22] : memref<1x128xf32, #tpu.memory_space<vmem>>, vector<1x128xf32>
    %46 = vector.broadcast %45 : vector<1x128xf32> to vector<128x128xf32>
    %47 = arith.addf %44, %46 : vector<128x128xf32>
    %cst_23 = arith.constant 0.000000e+00 : f32
    %48 = vector.broadcast %cst_23 : f32 to vector<128x128xf32>
    %49 = arith.maximumf %47, %48 : vector<128x128xf32>
    %50 = arith.truncf %49 : vector<128x128xf32> to vector<128x128xbf16>
    %c0_24 = arith.constant 0 : index
    %c0_25 = arith.constant 0 : index
    %51 = vector.load %arg10[%c0_24, %c0_25] : memref<128x1xbf16, #tpu.memory_space<vmem>>, vector<128x1xbf16>
    %cst_26 = arith.constant dense<0.000000e+00> : vector<128x1xf32>
    %52 = tpu.matmul %50, %51, %cst_26 {dimension_numbers = #tpu.dot_dimension_numbers<[1], [0], [0], [1], [0, 0, 1, 1], [], []>} : vector<128x128xbf16>, vector<128x1xbf16>, vector<128x1xf32> -> vector<128x1xf32>
    %53 = vector.shape_cast %52 : vector<128x1xf32> to vector<128xf32>
    %c0_27 = arith.constant 0 : index
    %54 = memref.load %arg11[%c0_27] : memref<1xf32, #tpu.memory_space<smem>>
    %55 = vector.broadcast %54 : f32 to vector<128xf32>
    %56 = arith.addf %53, %55 : vector<128xf32>
    %57 = vector.shape_cast %56 : vector<128xf32> to vector<1x128xf32>
    %c0_28 = arith.constant 0 : index
    %c0_29 = arith.constant 0 : index
    %58 = vector.load %arg12[%c0_28, %c0_29] : memref<1x128xf32, #tpu.memory_space<vmem>>, vector<1x128xf32>
    tpu.vector_store %arg12[%c0_28, %c0_29], %57 {strides = array<i32>} : memref<1x128xf32, #tpu.memory_space<vmem>>, vector<1x128xf32>,
    return
  }
  func.func @transform_0(%arg0: i32) -> (i32, i32) {
    %c0_i32 = arith.constant 0 : i32
    %c0_i32_0 = arith.constant 0 : i32
    return %arg0, %c0_i32 : i32, i32
  }
  func.func @transform_1(%arg0: i32) -> (i32, i32) {
    %c0_i32 = arith.constant 0 : i32
    %c0_i32_0 = arith.constant 0 : i32
    return %arg0, %c0_i32 : i32, i32
  }
  func.func @transform_2(%arg0: i32) -> (i32, i32, i32) {
    %c0_i32 = arith.constant 0 : i32
    %c0_i32_0 = arith.constant 0 : i32
    %c0_i32_1 = arith.constant 0 : i32
    return %arg0, %c0_i32, %c0_i32_0 : i32, i32, i32
  }
  func.func @transform_3(%arg0: i32) -> (i32, i32) {
    %c0_i32 = arith.constant 0 : i32
    %c0_i32_0 = arith.constant 0 : i32
    %c0_i32_1 = arith.constant 0 : i32
    return %c0_i32, %c0_i32_0 : i32, i32
  }
  func.func @transform_4(%arg0: i32) -> (i32, i32) {
    %c0_i32 = arith.constant 0 : i32
    %c0_i32_0 = arith.constant 0 : i32
    %c0_i32_1 = arith.constant 0 : i32
    return %c0_i32, %c0_i32_0 : i32, i32
  }
  func.func @transform_5(%arg0: i32) -> (i32, i32) {
    %c0_i32 = arith.constant 0 : i32
    %c0_i32_0 = arith.constant 0 : i32
    %c0_i32_1 = arith.constant 0 : i32
    return %c0_i32, %c0_i32_0 : i32, i32
  }
  func.func @transform_6(%arg0: i32) -> i32 {
    %c0_i32 = arith.constant 0 : i32
    %c0_i32_0 = arith.constant 0 : i32
    return %c0_i32 : i32
  }
  func.func @transform_7(%arg0: i32) -> (i32, i32) {
    %c0_i32 = arith.constant 0 : i32
    %c0_i32_0 = arith.constant 0 : i32
    %c0_i32_1 = arith.constant 0 : i32
    return %c0_i32, %c0_i32_0 : i32, i32
  }
  func.func @transform_8(%arg0: i32) -> (i32, i32) {
    %c0_i32 = arith.constant 0 : i32
    %c0_i32_0 = arith.constant 0 : i32
    %c0_i32_1 = arith.constant 0 : i32
    return %c0_i32, %c0_i32_0 : i32, i32
  }
  func.func @transform_9(%arg0: i32) -> (i32, i32) {
    %c0_i32 = arith.constant 0 : i32
    %c0_i32_0 = arith.constant 0 : i32
    %c0_i32_1 = arith.constant 0 : i32
    return %c0_i32, %c0_i32_0 : i32, i32
  }
  func.func @transform_10(%arg0: i32) -> i32 {
    %c0_i32 = arith.constant 0 : i32
    %c0_i32_0 = arith.constant 0 : i32
    return %c0_i32 : i32
  }
  func.func @transform_11(%arg0: i32) -> (i32, i32) {
    %c0_i32 = arith.constant 0 : i32
    %c0_i32_0 = arith.constant 0 : i32
    return %arg0, %c0_i32 : i32, i32
  }
}

</mosaic_0001>

<llo_original>
// kernel: tpu_custom_call.1
$region0: #{tpu_custom_call.1}
  #allocation0 [shape = 'u32[]', space=smem, size = 0x4, offset = 0x4, fixed_abs, tag = 'smem constant byte address 0x4 - core index']
  #allocation1 [shape = 'u32[144,128]{1,0:T(1,128)}', space=vmem, size = 0x12000, scoped, tag = 'internal scratch']
  #allocation2 [shape = 'f32[1]{0:T(128)S(6)}', space=smem, size = 0x200, scoped, tag = 'scoped memory for tpu_custom_call.1']
  #allocation3 [shape = 'f32[1]{0:T(128)S(6)}', space=smem, size = 0x200, scoped, tag = 'scoped memory for tpu_custom_call.1']
  %s0 = inlined_call_operand.vmem [shape: f32[128,32], index: 0, kind: input, shape index: {}]
  %s1 = inlined_call_operand.vmem [shape: f32[128,16], index: 1, kind: input, shape index: {}]
  %s2 = inlined_call_operand.vmem [shape: f32[128,8,16], index: 2, kind: input, shape index: {}]
  %s3 = inlined_call_operand.vmem [shape: bf16[48,128], index: 3, kind: input, shape index: {}]
  %s4 = inlined_call_operand.vmem [shape: f32[1,128], index: 4, kind: input, shape index: {}]
  %s5 = inlined_call_operand.vmem [shape: bf16[128,1], index: 5, kind: input, shape index: {}]
  %s6 = inlined_call_operand.<no memory space> [shape: f32[1], index: 6, kind: input, shape index: {}]
  %s7 = inlined_call_operand.vmem [shape: bf16[64,128], index: 7, kind: input, shape index: {}]
  %s8 = inlined_call_operand.vmem [shape: f32[1,128], index: 8, kind: input, shape index: {}]
  %s9 = inlined_call_operand.vmem [shape: bf16[128,1], index: 9, kind: input, shape index: {}]
  %s10 = inlined_call_operand.<no memory space> [shape: f32[1], index: 10, kind: input, shape index: {}]
  %s11 = inlined_call_operand.hbm [shape: f32[1,128], index: 11, kind: output, shape index: {}]
  %s12 = sld [smem:[#allocation0]]
  $region54: #{tpu_custom_call.1} parent=0
    _
  %s14 = ssub.s32 1, %s12
  %s15 = scalar_select 0, %s14, %s12
  %16 = sst [smem:[#allocation2]] %s6
  %17 = sst [smem:[#allocation3]] %s10
  $region1: #{tpu_custom_call.1} parent=0
    #allocation4 [shape = 'u8[512]{0}', space=vmem, size = 0x400, scoped, tag = 'output window, operand 0, single buffered']
    #allocation5 [shape = 's32[1]{0}', space=sflag, size = 0x4, scoped, tag = 'scoped memory for tpu_custom_call.1']
    %18 = vsyncpa [#allocation5], 0
    // Predicated region
    $region2: #{tpu_custom_call.1} parent=1 // pred_check
      _
    $region3: #{tpu_custom_call.1} parent=1 // pred_check_branch
      %20 = sbr.rel (0) target = $region5
    $region4: #{tpu_custom_call.1} parent=1 // pred_region
      _
    $region5: #{tpu_custom_call.1} parent=1 // pred_fallthru
      _
    // Predicated region
    $region6: #{tpu_custom_call.1} parent=1 // pred_check
      _
    $region7: #{tpu_custom_call.1} parent=1 // pred_check_branch
      %22 = sbr.rel (0) target = $region9
    $region8: #{tpu_custom_call.1} parent=1 // pred_region
      _
    $region9: #{tpu_custom_call.1} parent=1 // pred_fallthru
      _
    // Predicated region
    $region10: #{tpu_custom_call.1} parent=1 // pred_check
      _
    $region11: #{tpu_custom_call.1} parent=1 // pred_check_branch
      %24 = sbr.rel (0) target = $region13
    $region12: #{tpu_custom_call.1} parent=1 // pred_region
      _
    $region13: #{tpu_custom_call.1} parent=1 // pred_fallthru
      _
    // Predicated region
    $region14: #{tpu_custom_call.1} parent=1 // pred_check
      _
    $region15: #{tpu_custom_call.1} parent=1 // pred_check_branch
      %26 = sbr.rel (0) target = $region17
    $region16: #{tpu_custom_call.1} parent=1 // pred_region
      _
    $region17: #{tpu_custom_call.1} parent=1 // pred_fallthru
      _
    // Predicated region
    $region18: #{tpu_custom_call.1} parent=1 // pred_check
      _
    $region19: #{tpu_custom_call.1} parent=1 // pred_check_branch
      %28 = sbr.rel (0) target = $region21
    $region20: #{tpu_custom_call.1} parent=1 // pred_region
      _
    $region21: #{tpu_custom_call.1} parent=1 // pred_fallthru
      _
    // Predicated region
    $region22: #{tpu_custom_call.1} parent=1 // pred_check
      _
    $region23: #{tpu_custom_call.1} parent=1 // pred_check_branch
      %30 = sbr.rel (0) target = $region25
    $region24: #{tpu_custom_call.1} parent=1 // pred_region
      _
    $region25: #{tpu_custom_call.1} parent=1 // pred_fallthru
      _
    // Predicated region
    $region26: #{tpu_custom_call.1} parent=1 // pred_check
      _
    $region27: #{tpu_custom_call.1} parent=1 // pred_check_branch
      %32 = sbr.rel (0) target = $region29
    $region28: #{tpu_custom_call.1} parent=1 // pred_region
      _
    $region29: #{tpu_custom_call.1} parent=1 // pred_fallthru
      _
    // Predicated region
    $region30: #{tpu_custom_call.1} parent=1 // pred_check
      _
    $region31: #{tpu_custom_call.1} parent=1 // pred_check_branch
      %34 = sbr.rel (0) target = $region33
    $region32: #{tpu_custom_call.1} parent=1 // pred_region
      _
    $region33: #{tpu_custom_call.1} parent=1 // pred_fallthru
      _
    // Predicated region
    $region34: #{tpu_custom_call.1} parent=1 // pred_check
      _
    $region35: #{tpu_custom_call.1} parent=1 // pred_check_branch
      %36 = sbr.rel (0) target = $region37
    $region36: #{tpu_custom_call.1} parent=1 // pred_region
      _
    $region37: #{tpu_custom_call.1} parent=1 // pred_fallthru
      _
    // Predicated region
    $region38: #{tpu_custom_call.1} parent=1 // pred_check
      _
    $region39: #{tpu_custom_call.1} parent=1 // pred_check_branch
      %38 = sbr.rel (0) target = $region41
    $region40: #{tpu_custom_call.1} parent=1 // pred_region
      _
    $region41: #{tpu_custom_call.1} parent=1 // pred_fallthru
      _
    // Predicated region
    $region42: #{tpu_custom_call.1} parent=1 // pred_check
      _
    $region43: #{tpu_custom_call.1} parent=1 // pred_check_branch
      %40 = sbr.rel (0) target = $region45
    $region44: #{tpu_custom_call.1} parent=1 // pred_region
      _
    $region45: #{tpu_custom_call.1} parent=1 // pred_fallthru
      _
    %v42 = vld [vmem:[%s0] sm:$0xff]
    %v43 = vld [vmem:[%s0 + $0x8] sm:$0xff]
    %v44 = vld [vmem:[%s0 + $0x10] sm:$0xff]
    %v45 = vld [vmem:[%s0 + $0x18] sm:$0xff]
    %v46 = vld [vmem:[%s0 + $0x20] sm:$0xff]
    %v47 = vld [vmem:[%s0 + $0x28] sm:$0xff]
    %v48 = vld [vmem:[%s0 + $0x30] sm:$0xff]
    %v49 = vld [vmem:[%s0 + $0x38] sm:$0xff]
    %v50 = vld [vmem:[%s0 + $0x40] sm:$0xff]
    %v51 = vld [vmem:[%s0 + $0x48] sm:$0xff]
    %v52 = vld [vmem:[%s0 + $0x50] sm:$0xff]
    %v53 = vld [vmem:[%s0 + $0x58] sm:$0xff]
    %v54 = vld [vmem:[%s0 + $0x60] sm:$0xff]
    %v55 = vld [vmem:[%s0 + $0x68] sm:$0xff]
    %v56 = vld [vmem:[%s0 + $0x70] sm:$0xff]
    %v57 = vld [vmem:[%s0 + $0x78] sm:$0xff]
    %v58 = vld [vmem:[%s1] sm:$0xff]
    %v59 = vld [vmem:[%s1 + $0x8] sm:$0xff]
    %v60 = vld [vmem:[%s1 + $0x10] sm:$0xff]
    %v61 = vld [vmem:[%s1 + $0x18] sm:$0xff]
    %v62 = vld [vmem:[%s1 + $0x20] sm:$0xff]
    %v63 = vld [vmem:[%s1 + $0x28] sm:$0xff]
    %v64 = vld [vmem:[%s1 + $0x30] sm:$0xff]
    %v65 = vld [vmem:[%s1 + $0x38] sm:$0xff]
    %v66 = vld [vmem:[%s1 + $0x40] sm:$0xff]
    %v67 = vld [vmem:[%s1 + $0x48] sm:$0xff]
    %v68 = vld [vmem:[%s1 + $0x50] sm:$0xff]
    %v69 = vld [vmem:[%s1 + $0x58] sm:$0xff]
    %v70 = vld [vmem:[%s1 + $0x60] sm:$0xff]
    %v71 = vld [vmem:[%s1 + $0x68] sm:$0xff]
    %v72 = vld [vmem:[%s1 + $0x70] sm:$0xff]
    %v73 = vld [vmem:[%s1 + $0x78] sm:$0xff]
    %v74 = vld [vmem:[%s2] sm:$0xff]
    %v75 = vld [vmem:[%s2 + $0x8] sm:$0xff]
    %v76 = vld [vmem:[%s2 + $0x10] sm:$0xff]
    %v77 = vld [vmem:[%s2 + $0x18] sm:$0xff]
    %v78 = vld [vmem:[%s2 + $0x20] sm:$0xff]
    %v79 = vld [vmem:[%s2 + $0x28] sm:$0xff]
    %v80 = vld [vmem:[%s2 + $0x30] sm:$0xff]
    %v81 = vld [vmem:[%s2 + $0x38] sm:$0xff]
    %v82 = vld [vmem:[%s2 + $0x40] sm:$0xff]
    %v83 = vld [vmem:[%s2 + $0x48] sm:$0xff]
    %v84 = vld [vmem:[%s2 + $0x50] sm:$0xff]
    %v85 = vld [vmem:[%s2 + $0x58] sm:$0xff]
    %v86 = vld [vmem:[%s2 + $0x60] sm:$0xff]
    %v87 = vld [vmem:[%s2 + $0x68] sm:$0xff]
    %v88 = vld [vmem:[%s2 + $0x70] sm:$0xff]
    %v89 = vld [vmem:[%s2 + $0x78] sm:$0xff]
    %v90 = vld [vmem:[%s2 + $0x80] sm:$0xff]
    %v91 = vld [vmem:[%s2 + $0x88] sm:$0xff]
    %v92 = vld [vmem:[%s2 + $0x90] sm:$0xff]
    %v93 = vld [vmem:[%s2 + $0x98] sm:$0xff]
    %v94 = vld [vmem:[%s2 + $0xa0] sm:$0xff]
    %v95 = vld [vmem:[%s2 + $0xa8] sm:$0xff]
    %v96 = vld [vmem:[%s2 + $0xb0] sm:$0xff]
    %v97 = vld [vmem:[%s2 + $0xb8] sm:$0xff]
    %v98 = vld [vmem:[%s2 + $0xc0] sm:$0xff]
    %v99 = vld [vmem:[%s2 + $0xc8] sm:$0xff]
    %v100 = vld [vmem:[%s2 + $0xd0] sm:$0xff]
    %v101 = vld [vmem:[%s2 + $0xd8] sm:$0xff]
    %v102 = vld [vmem:[%s2 + $0xe0] sm:$0xff]
    %v103 = vld [vmem:[%s2 + $0xe8] sm:$0xff]
    %v104 = vld [vmem:[%s2 + $0xf0] sm:$0xff]
    %v105 = vld [vmem:[%s2 + $0xf8] sm:$0xff]
    %v106 = vld [vmem:[%s2 + $0x100] sm:$0xff]
    %v107 = vld [vmem:[%s2 + $0x108] sm:$0xff]
    %v108 = vld [vmem:[%s2 + $0x110] sm:$0xff]
    %v109 = vld [vmem:[%s2 + $0x118] sm:$0xff]
    %v110 = vld [vmem:[%s2 + $0x120] sm:$0xff]
    %v111 = vld [vmem:[%s2 + $0x128] sm:$0xff]
    %v112 = vld [vmem:[%s2 + $0x130] sm:$0xff]
    %v113 = vld [vmem:[%s2 + $0x138] sm:$0xff]
    %v114 = vld [vmem:[%s2 + $0x140] sm:$0xff]
    %v115 = vld [vmem:[%s2 + $0x148] sm:$0xff]
    %v116 = vld [vmem:[%s2 + $0x150] sm:$0xff]
    %v117 = vld [vmem:[%s2 + $0x158] sm:$0xff]
    %v118 = vld [vmem:[%s2 + $0x160] sm:$0xff]
    %v119 = vld [vmem:[%s2 + $0x168] sm:$0xff]
    %v120 = vld [vmem:[%s2 + $0x170] sm:$0xff]
    %v121 = vld [vmem:[%s2 + $0x178] sm:$0xff]
    %v122 = vld [vmem:[%s2 + $0x180] sm:$0xff]
    %v123 = vld [vmem:[%s2 + $0x188] sm:$0xff]
    %v124 = vld [vmem:[%s2 + $0x190] sm:$0xff]
    %v125 = vld [vmem:[%s2 + $0x198] sm:$0xff]
    %v126 = vld [vmem:[%s2 + $0x1a0] sm:$0xff]
    %v127 = vld [vmem:[%s2 + $0x1a8] sm:$0xff]
    %v128 = vld [vmem:[%s2 + $0x1b0] sm:$0xff]
    %v129 = vld [vmem:[%s2 + $0x1b8] sm:$0xff]
    %v130 = vld [vmem:[%s2 + $0x1c0] sm:$0xff]
    %v131 = vld [vmem:[%s2 + $0x1c8] sm:$0xff]
    %v132 = vld [vmem:[%s2 + $0x1d0] sm:$0xff]
    %v133 = vld [vmem:[%s2 + $0x1d8] sm:$0xff]
    %v134 = vld [vmem:[%s2 + $0x1e0] sm:$0xff]
    %v135 = vld [vmem:[%s2 + $0x1e8] sm:$0xff]
    %v136 = vld [vmem:[%s2 + $0x1f0] sm:$0xff]
    %v137 = vld [vmem:[%s2 + $0x1f8] sm:$0xff]
    %v138 = vld [vmem:[%s2 + $0x200] sm:$0xff]
    %v139 = vld [vmem:[%s2 + $0x208] sm:$0xff]
    %v140 = vld [vmem:[%s2 + $0x210] sm:$0xff]
    %v141 = vld [vmem:[%s2 + $0x218] sm:$0xff]
    %v142 = vld [vmem:[%s2 + $0x220] sm:$0xff]
    %v143 = vld [vmem:[%s2 + $0x228] sm:$0xff]
    %v144 = vld [vmem:[%s2 + $0x230] sm:$0xff]
    %v145 = vld [vmem:[%s2 + $0x238] sm:$0xff]
    %v146 = vld [vmem:[%s2 + $0x240] sm:$0xff]
    %v147 = vld [vmem:[%s2 + $0x248] sm:$0xff]
    %v148 = vld [vmem:[%s2 + $0x250] sm:$0xff]
    %v149 = vld [vmem:[%s2 + $0x258] sm:$0xff]
    %v150 = vld [vmem:[%s2 + $0x260] sm:$0xff]
    %v151 = vld [vmem:[%s2 + $0x268] sm:$0xff]
    %v152 = vld [vmem:[%s2 + $0x270] sm:$0xff]
    %v153 = vld [vmem:[%s2 + $0x278] sm:$0xff]
    %v154 = vld [vmem:[%s2 + $0x280] sm:$0xff]
    %v155 = vld [vmem:[%s2 + $0x288] sm:$0xff]
    %v156 = vld [vmem:[%s2 + $0x290] sm:$0xff]
    %v157 = vld [vmem:[%s2 + $0x298] sm:$0xff]
    %v158 = vld [vmem:[%s2 + $0x2a0] sm:$0xff]
    %v159 = vld [vmem:[%s2 + $0x2a8] sm:$0xff]
    %v160 = vld [vmem:[%s2 + $0x2b0] sm:$0xff]
    %v161 = vld [vmem:[%s2 + $0x2b8] sm:$0xff]
    %v162 = vld [vmem:[%s2 + $0x2c0] sm:$0xff]
    %v163 = vld [vmem:[%s2 + $0x2c8] sm:$0xff]
    %v164 = vld [vmem:[%s2 + $0x2d0] sm:$0xff]
    %v165 = vld [vmem:[%s2 + $0x2d8] sm:$0xff]
    %v166 = vld [vmem:[%s2 + $0x2e0] sm:$0xff]
    %v167 = vld [vmem:[%s2 + $0x2e8] sm:$0xff]
    %v168 = vld [vmem:[%s2 + $0x2f0] sm:$0xff]
    %v169 = vld [vmem:[%s2 + $0x2f8] sm:$0xff]
    %v170 = vld [vmem:[%s2 + $0x300] sm:$0xff]
    %v171 = vld [vmem:[%s2 + $0x308] sm:$0xff]
    %v172 = vld [vmem:[%s2 + $0x310] sm:$0xff]
    %v173 = vld [vmem:[%s2 + $0x318] sm:$0xff]
    %v174 = vld [vmem:[%s2 + $0x320] sm:$0xff]
    %v175 = vld [vmem:[%s2 + $0x328] sm:$0xff]
    %v176 = vld [vmem:[%s2 + $0x330] sm:$0xff]
    %v177 = vld [vmem:[%s2 + $0x338] sm:$0xff]
    %v178 = vld [vmem:[%s2 + $0x340] sm:$0xff]
    %v179 = vld [vmem:[%s2 + $0x348] sm:$0xff]
    %v180 = vld [vmem:[%s2 + $0x350] sm:$0xff]
    %v181 = vld [vmem:[%s2 + $0x358] sm:$0xff]
    %v182 = vld [vmem:[%s2 + $0x360] sm:$0xff]
    %v183 = vld [vmem:[%s2 + $0x368] sm:$0xff]
    %v184 = vld [vmem:[%s2 + $0x370] sm:$0xff]
    %v185 = vld [vmem:[%s2 + $0x378] sm:$0xff]
    %v186 = vld [vmem:[%s2 + $0x380] sm:$0xff]
    %v187 = vld [vmem:[%s2 + $0x388] sm:$0xff]
    %v188 = vld [vmem:[%s2 + $0x390] sm:$0xff]
    %v189 = vld [vmem:[%s2 + $0x398] sm:$0xff]
    %v190 = vld [vmem:[%s2 + $0x3a0] sm:$0xff]
    %v191 = vld [vmem:[%s2 + $0x3a8] sm:$0xff]
    %v192 = vld [vmem:[%s2 + $0x3b0] sm:$0xff]
    %v193 = vld [vmem:[%s2 + $0x3b8] sm:$0xff]
    %v194 = vld [vmem:[%s2 + $0x3c0] sm:$0xff]
    %v195 = vld [vmem:[%s2 + $0x3c8] sm:$0xff]
    %v196 = vld [vmem:[%s2 + $0x3d0] sm:$0xff]
    %v197 = vld [vmem:[%s2 + $0x3d8] sm:$0xff]
    %v198 = vld [vmem:[%s2 + $0x3e0] sm:$0xff]
    %v199 = vld [vmem:[%s2 + $0x3e8] sm:$0xff]
    %v200 = vld [vmem:[%s2 + $0x3f0] sm:$0xff]
    %v201 = vld [vmem:[%s2 + $0x3f8] sm:$0xff]
    %v218 = vcombine.high %v58, %v58
    %v220 = vunpack.c.l.s4 1966171168
    %v221 = vunpack.c.0.s8 %v220
    %v222 = vlaneseq
    %v223 = vshrl.u32 %v222, 7
    %v224 = vsub.s32 %v221, %v223
    %v225 = vrot.slane %v58, %v224
    %v227 = vunpack.c.l.s4 1966171168
    %v228 = vunpack.c.0.s8 %v227
    %v229 = vlaneseq
    %v230 = vshrl.u32 %v229, 7
    %v231 = vsub.s32 %v228, %v230
    %v232 = vrot.slane %v218, %v231
    %v233 = vcombine.high %v225, %v225
    %v234 = vcombine.high %v232, %v232
    %v236 = vunpack.c.l.s4 1966171168
    %v237 = vunpack.c.0.s8 %v236
    %v238 = vlaneseq
    %v239 = vshrl.u32 %v238, 7
    %v240 = vsub.s32 %v237, %v239
    %v241 = vrot.slane %v225, %v240
    %v243 = vunpack.c.l.s4 1966171168
    %v244 = vunpack.c.0.s8 %v243
    %v245 = vlaneseq
    %v246 = vshrl.u32 %v245, 7
    %v247 = vsub.s32 %v244, %v246
    %v248 = vrot.slane %v232, %v247
    %v250 = vunpack.c.l.s4 1966171168
    %v251 = vunpack.c.0.s8 %v250
    %v252 = vlaneseq
    %v253 = vshrl.u32 %v252, 7
    %v254 = vsub.s32 %v251, %v253
    %v255 = vrot.slane %v233, %v254
    %v257 = vunpack.c.l.s4 1966171168
    %v258 = vunpack.c.0.s8 %v257
    %v259 = vlaneseq
    %v260 = vshrl.u32 %v259, 7
    %v261 = vsub.s32 %v258, %v260
    %v262 = vrot.slane %v234, %v261
    %v263 = vcombine.high %v241, %v241
    %v264 = vcombine.high %v248, %v248
    %v265 = vcombine.high %v255, %v255
    %v266 = vcombine.high %v262, %v262
    %v267 = vcombine.high %v59, %v59
    %v269 = vunpack.c.l.s4 1966171168
    %v270 = vunpack.c.0.s8 %v269
    %v271 = vlaneseq
    %v272 = vshrl.u32 %v271, 7
    %v273 = vsub.s32 %v270, %v272
    %v274 = vrot.slane %v59, %v273
    %v276 = vunpack.c.l.s4 1966171168
    %v277 = vunpack.c.0.s8 %v276
    %v278 = vlaneseq
    %v279 = vshrl.u32 %v278, 7
    %v280 = vsub.s32 %v277, %v279
    %v281 = vrot.slane %v267, %v280
    %v282 = vcombine.high %v274, %v274
    %v283 = vcombine.high %v281, %v281
    %v285 = vunpack.c.l.s4 1966171168
    %v286 = vunpack.c.0.s8 %v285
    %v287 = vlaneseq
    %v288 = vshrl.u32 %v287, 7
    %v289 = vsub.s32 %v286, %v288
    %v290 = vrot.slane %v274, %v289
    %v292 = vunpack.c.l.s4 1966171168
    %v293 = vunpack.c.0.s8 %v292
    %v294 = vlaneseq
    %v295 = vshrl.u32 %v294, 7
    %v296 = vsub.s32 %v293, %v295
    %v297 = vrot.slane %v281, %v296
    %v299 = vunpack.c.l.s4 1966171168
    %v300 = vunpack.c.0.s8 %v299
    %v301 = vlaneseq
    %v302 = vshrl.u32 %v301, 7
    %v303 = vsub.s32 %v300, %v302
    %v304 = vrot.slane %v282, %v303
    %v306 = vunpack.c.l.s4 1966171168
    %v307 = vunpack.c.0.s8 %v306
    %v308 = vlaneseq
    %v309 = vshrl.u32 %v308, 7
    %v310 = vsub.s32 %v307, %v309
    %v311 = vrot.slane %v283, %v310
    %v312 = vcombine.high %v290, %v290
    %v313 = vcombine.high %v297, %v297
    %v314 = vcombine.high %v304, %v304
    %v315 = vcombine.high %v311, %v311
    %v316 = vcombine.high %v60, %v60
    %v318 = vunpack.c.l.s4 1966171168
    %v319 = vunpack.c.0.s8 %v318
    %v320 = vlaneseq
    %v321 = vshrl.u32 %v320, 7
    %v322 = vsub.s32 %v319, %v321
    %v323 = vrot.slane %v60, %v322
    %v325 = vunpack.c.l.s4 1966171168
    %v326 = vunpack.c.0.s8 %v325
    %v327 = vlaneseq
    %v328 = vshrl.u32 %v327, 7
    %v329 = vsub.s32 %v326, %v328
    %v330 = vrot.slane %v316, %v329
    %v331 = vcombine.high %v323, %v323
    %v332 = vcombine.high %v330, %v330
    %v334 = vunpack.c.l.s4 1966171168
    %v335 = vunpack.c.0.s8 %v334
    %v336 = vlaneseq
    %v337 = vshrl.u32 %v336, 7
    %v338 = vsub.s32 %v335, %v337
    %v339 = vrot.slane %v323, %v338
    %v341 = vunpack.c.l.s4 1966171168
    %v342 = vunpack.c.0.s8 %v341
    %v343 = vlaneseq
    %v344 = vshrl.u32 %v343, 7
    %v345 = vsub.s32 %v342, %v344
    %v346 = vrot.slane %v330, %v345
    %v348 = vunpack.c.l.s4 1966171168
    %v349 = vunpack.c.0.s8 %v348
    %v350 = vlaneseq
    %v351 = vshrl.u32 %v350, 7
    %v352 = vsub.s32 %v349, %v351
    %v353 = vrot.slane %v331, %v352
    %v355 = vunpack.c.l.s4 1966171168
    %v356 = vunpack.c.0.s8 %v355
    %v357 = vlaneseq
    %v358 = vshrl.u32 %v357, 7
    %v359 = vsub.s32 %v356, %v358
    %v360 = vrot.slane %v332, %v359
    %v361 = vcombine.high %v339, %v339
    %v362 = vcombine.high %v346, %v346
    %v363 = vcombine.high %v353, %v353
    %v364 = vcombine.high %v360, %v360
    %v365 = vcombine.high %v61, %v61
    %v367 = vunpack.c.l.s4 1966171168
    %v368 = vunpack.c.0.s8 %v367
    %v369 = vlaneseq
    %v370 = vshrl.u32 %v369, 7
    %v371 = vsub.s32 %v368, %v370
    %v372 = vrot.slane %v61, %v371
    %v374 = vunpack.c.l.s4 1966171168
    %v375 = vunpack.c.0.s8 %v374
    %v376 = vlaneseq
    %v377 = vshrl.u32 %v376, 7
    %v378 = vsub.s32 %v375, %v377
    %v379 = vrot.slane %v365, %v378
    %v380 = vcombine.high %v372, %v372
    %v381 = vcombine.high %v379, %v379
    %v383 = vunpack.c.l.s4 1966171168
    %v384 = vunpack.c.0.s8 %v383
    %v385 = vlaneseq
    %v386 = vshrl.u32 %v385, 7
    %v387 = vsub.s32 %v384, %v386
    %v388 = vrot.slane %v372, %v387
    %v390 = vunpack.c.l.s4 1966171168
    %v391 = vunpack.c.0.s8 %v390
    %v392 = vlaneseq
    %v393 = vshrl.u32 %v392, 7
    %v394 = vsub.s32 %v391, %v393
    %v395 = vrot.slane %v379, %v394
    %v397 = vunpack.c.l.s4 1966171168
    %v398 = vunpack.c.0.s8 %v397
    %v399 = vlaneseq
    %v400 = vshrl.u32 %v399, 7
    %v401 = vsub.s32 %v398, %v400
    %v402 = vrot.slane %v380, %v401
    %v404 = vunpack.c.l.s4 1966171168
    %v405 = vunpack.c.0.s8 %v404
    %v406 = vlaneseq
    %v407 = vshrl.u32 %v406, 7
    %v408 = vsub.s32 %v405, %v407
    %v409 = vrot.slane %v381, %v408
    %v410 = vcombine.high %v388, %v388
    %v411 = vcombine.high %v395, %v395
    %v412 = vcombine.high %v402, %v402
    %v413 = vcombine.high %v409, %v409
    %v414 = vcombine.high %v62, %v62
    %v416 = vunpack.c.l.s4 1966171168
    %v417 = vunpack.c.0.s8 %v416
    %v418 = vlaneseq
    %v419 = vshrl.u32 %v418, 7
    %v420 = vsub.s32 %v417, %v419
    %v421 = vrot.slane %v62, %v420
    %v423 = vunpack.c.l.s4 1966171168
    %v424 = vunpack.c.0.s8 %v423
    %v425 = vlaneseq
    %v426 = vshrl.u32 %v425, 7
    %v427 = vsub.s32 %v424, %v426
    %v428 = vrot.slane %v414, %v427
    %v429 = vcombine.high %v421, %v421
    %v430 = vcombine.high %v428, %v428
    %v432 = vunpack.c.l.s4 1966171168
    %v433 = vunpack.c.0.s8 %v432
    %v434 = vlaneseq
    %v435 = vshrl.u32 %v434, 7
    %v436 = vsub.s32 %v433, %v435
    %v437 = vrot.slane %v421, %v436
    %v439 = vunpack.c.l.s4 1966171168
    %v440 = vunpack.c.0.s8 %v439
    %v441 = vlaneseq
    %v442 = vshrl.u32 %v441, 7
    %v443 = vsub.s32 %v440, %v442
    %v444 = vrot.slane %v428, %v443
    %v446 = vunpack.c.l.s4 1966171168
    %v447 = vunpack.c.0.s8 %v446
    %v448 = vlaneseq
    %v449 = vshrl.u32 %v448, 7
    %v450 = vsub.s32 %v447, %v449
    %v451 = vrot.slane %v429, %v450
    %v453 = vunpack.c.l.s4 1966171168
    %v454 = vunpack.c.0.s8 %v453
    %v455 = vlaneseq
    %v456 = vshrl.u32 %v455, 7
    %v457 = vsub.s32 %v454, %v456
    %v458 = vrot.slane %v430, %v457
    %v459 = vcombine.high %v437, %v437
    %v460 = vcombine.high %v444, %v444
    %v461 = vcombine.high %v451, %v451
    %v462 = vcombine.high %v458, %v458
    %v463 = vcombine.high %v63, %v63
    %v465 = vunpack.c.l.s4 1966171168
    %v466 = vunpack.c.0.s8 %v465
    %v467 = vlaneseq
    %v468 = vshrl.u32 %v467, 7
    %v469 = vsub.s32 %v466, %v468
    %v470 = vrot.slane %v63, %v469
    %v472 = vunpack.c.l.s4 1966171168
    %v473 = vunpack.c.0.s8 %v472
    %v474 = vlaneseq
    %v475 = vshrl.u32 %v474, 7
    %v476 = vsub.s32 %v473, %v475
    %v477 = vrot.slane %v463, %v476
    %v478 = vcombine.high %v470, %v470
    %v479 = vcombine.high %v477, %v477
    %v481 = vunpack.c.l.s4 1966171168
    %v482 = vunpack.c.0.s8 %v481
    %v483 = vlaneseq
    %v484 = vshrl.u32 %v483, 7
    %v485 = vsub.s32 %v482, %v484
    %v486 = vrot.slane %v470, %v485
    %v488 = vunpack.c.l.s4 1966171168
    %v489 = vunpack.c.0.s8 %v488
    %v490 = vlaneseq
    %v491 = vshrl.u32 %v490, 7
    %v492 = vsub.s32 %v489, %v491
    %v493 = vrot.slane %v477, %v492
    %v495 = vunpack.c.l.s4 1966171168
    %v496 = vunpack.c.0.s8 %v495
    %v497 = vlaneseq
    %v498 = vshrl.u32 %v497, 7
    %v499 = vsub.s32 %v496, %v498
    %v500 = vrot.slane %v478, %v499
    %v502 = vunpack.c.l.s4 1966171168
    %v503 = vunpack.c.0.s8 %v502
    %v504 = vlaneseq
    %v505 = vshrl.u32 %v504, 7
    %v506 = vsub.s32 %v503, %v505
    %v507 = vrot.slane %v479, %v506
    %v508 = vcombine.high %v486, %v486
    %v509 = vcombine.high %v493, %v493
    %v510 = vcombine.high %v500, %v500
    %v511 = vcombine.high %v507, %v507
    %v512 = vcombine.high %v64, %v64
    %v514 = vunpack.c.l.s4 1966171168
    %v515 = vunpack.c.0.s8 %v514
    %v516 = vlaneseq
    %v517 = vshrl.u32 %v516, 7
    %v518 = vsub.s32 %v515, %v517
    %v519 = vrot.slane %v64, %v518
    %v521 = vunpack.c.l.s4 1966171168
    %v522 = vunpack.c.0.s8 %v521
    %v523 = vlaneseq
    %v524 = vshrl.u32 %v523, 7
    %v525 = vsub.s32 %v522, %v524
    %v526 = vrot.slane %v512, %v525
    %v527 = vcombine.high %v519, %v519
    %v528 = vcombine.high %v526, %v526
    %v530 = vunpack.c.l.s4 1966171168
    %v531 = vunpack.c.0.s8 %v530
    %v532 = vlaneseq
    %v533 = vshrl.u32 %v532, 7
    %v534 = vsub.s32 %v531, %v533
    %v535 = vrot.slane %v519, %v534
    %v537 = vunpack.c.l.s4 1966171168
    %v538 = vunpack.c.0.s8 %v537
    %v539 = vlaneseq
    %v540 = vshrl.u32 %v539, 7
    %v541 = vsub.s32 %v538, %v540
    %v542 = vrot.slane %v526, %v541
    %v544 = vunpack.c.l.s4 1966171168
    %v545 = vunpack.c.0.s8 %v544
    %v546 = vlaneseq
    %v547 = vshrl.u32 %v546, 7
    %v548 = vsub.s32 %v545, %v547
    %v549 = vrot.slane %v527, %v548
    %v551 = vunpack.c.l.s4 1966171168
    %v552 = vunpack.c.0.s8 %v551
    %v553 = vlaneseq
    %v554 = vshrl.u32 %v553, 7
    %v555 = vsub.s32 %v552, %v554
    %v556 = vrot.slane %v528, %v555
    %v557 = vcombine.high %v535, %v535
    %v558 = vcombine.high %v542, %v542
    %v559 = vcombine.high %v549, %v549
    %v560 = vcombine.high %v556, %v556
    %v561 = vcombine.high %v65, %v65
    %v563 = vunpack.c.l.s4 1966171168
    %v564 = vunpack.c.0.s8 %v563
    %v565 = vlaneseq
    %v566 = vshrl.u32 %v565, 7
    %v567 = vsub.s32 %v564, %v566
    %v568 = vrot.slane %v65, %v567
    %v570 = vunpack.c.l.s4 1966171168
    %v571 = vunpack.c.0.s8 %v570
    %v572 = vlaneseq
    %v573 = vshrl.u32 %v572, 7
    %v574 = vsub.s32 %v571, %v573
    %v575 = vrot.slane %v561, %v574
    %v576 = vcombine.high %v568, %v568
    %v577 = vcombine.high %v575, %v575
    %v579 = vunpack.c.l.s4 1966171168
    %v580 = vunpack.c.0.s8 %v579
    %v581 = vlaneseq
    %v582 = vshrl.u32 %v581, 7
    %v583 = vsub.s32 %v580, %v582
    %v584 = vrot.slane %v568, %v583
    %v586 = vunpack.c.l.s4 1966171168
    %v587 = vunpack.c.0.s8 %v586
    %v588 = vlaneseq
    %v589 = vshrl.u32 %v588, 7
    %v590 = vsub.s32 %v587, %v589
    %v591 = vrot.slane %v575, %v590
    %v593 = vunpack.c.l.s4 1966171168
    %v594 = vunpack.c.0.s8 %v593
    %v595 = vlaneseq
    %v596 = vshrl.u32 %v595, 7
    %v597 = vsub.s32 %v594, %v596
    %v598 = vrot.slane %v576, %v597
    %v600 = vunpack.c.l.s4 1966171168
    %v601 = vunpack.c.0.s8 %v600
    %v602 = vlaneseq
    %v603 = vshrl.u32 %v602, 7
    %v604 = vsub.s32 %v601, %v603
    %v605 = vrot.slane %v577, %v604
    %v606 = vcombine.high %v584, %v584
    %v607 = vcombine.high %v591, %v591
    %v608 = vcombine.high %v598, %v598
    %v609 = vcombine.high %v605, %v605
    %v610 = vcombine.high %v66, %v66
    %v612 = vunpack.c.l.s4 1966171168
    %v613 = vunpack.c.0.s8 %v612
    %v614 = vlaneseq
    %v615 = vshrl.u32 %v614, 7
    %v616 = vsub.s32 %v613, %v615
    %v617 = vrot.slane %v66, %v616
    %v619 = vunpack.c.l.s4 1966171168
    %v620 = vunpack.c.0.s8 %v619
    %v621 = vlaneseq
    %v622 = vshrl.u32 %v621, 7
    %v623 = vsub.s32 %v620, %v622
    %v624 = vrot.slane %v610, %v623
    %v625 = vcombine.high %v617, %v617
    %v626 = vcombine.high %v624, %v624
    %v628 = vunpack.c.l.s4 1966171168
    %v629 = vunpack.c.0.s8 %v628
    %v630 = vlaneseq
    %v631 = vshrl.u32 %v630, 7
    %v632 = vsub.s32 %v629, %v631
    %v633 = vrot.slane %v617, %v632
    %v635 = vunpack.c.l.s4 1966171168
    %v636 = vunpack.c.0.s8 %v635
    %v637 = vlaneseq
    %v638 = vshrl.u32 %v637, 7
    %v639 = vsub.s32 %v636, %v638
    %v640 = vrot.slane %v624, %v639
    %v642 = vunpack.c.l.s4 1966171168
    %v643 = vunpack.c.0.s8 %v642
    %v644 = vlaneseq
    %v645 = vshrl.u32 %v644, 7
    %v646 = vsub.s32 %v643, %v645
    %v647 = vrot.slane %v625, %v646
    %v649 = vunpack.c.l.s4 1966171168
    %v650 = vunpack.c.0.s8 %v649
    %v651 = vlaneseq
    %v652 = vshrl.u32 %v651, 7
    %v653 = vsub.s32 %v650, %v652
    %v654 = vrot.slane %v626, %v653
    %v655 = vcombine.high %v633, %v633
    %v656 = vcombine.high %v640, %v640
    %v657 = vcombine.high %v647, %v647
    %v658 = vcombine.high %v654, %v654
    %v659 = vcombine.high %v67, %v67
    %v661 = vunpack.c.l.s4 1966171168
    %v662 = vunpack.c.0.s8 %v661
    %v663 = vlaneseq
    %v664 = vshrl.u32 %v663, 7
    %v665 = vsub.s32 %v662, %v664
    %v666 = vrot.slane %v67, %v665
    %v668 = vunpack.c.l.s4 1966171168
    %v669 = vunpack.c.0.s8 %v668
    %v670 = vlaneseq
    %v671 = vshrl.u32 %v670, 7
    %v672 = vsub.s32 %v669, %v671
    %v673 = vrot.slane %v659, %v672
    %v674 = vcombine.high %v666, %v666
    %v675 = vcombine.high %v673, %v673
    %v677 = vunpack.c.l.s4 1966171168
    %v678 = vunpack.c.0.s8 %v677
    %v679 = vlaneseq
    %v680 = vshrl.u32 %v679, 7
    %v681 = vsub.s32 %v678, %v680
    %v682 = vrot.slane %v666, %v681
    %v684 = vunpack.c.l.s4 1966171168
    %v685 = vunpack.c.0.s8 %v684
    %v686 = vlaneseq
    %v687 = vshrl.u32 %v686, 7
    %v688 = vsub.s32 %v685, %v687
    %v689 = vrot.slane %v673, %v688
    %v691 = vunpack.c.l.s4 1966171168
    %v692 = vunpack.c.0.s8 %v691
    %v693 = vlaneseq
    %v694 = vshrl.u32 %v693, 7
    %v695 = vsub.s32 %v692, %v694
    %v696 = vrot.slane %v674, %v695
    %v698 = vunpack.c.l.s4 1966171168
    %v699 = vunpack.c.0.s8 %v698
    %v700 = vlaneseq
    %v701 = vshrl.u32 %v700, 7
    %v702 = vsub.s32 %v699, %v701
    %v703 = vrot.slane %v675, %v702
    %v704 = vcombine.high %v682, %v682
    %v705 = vcombine.high %v689, %v689
    %v706 = vcombine.high %v696, %v696
    %v707 = vcombine.high %v703, %v703
    %v708 = vcombine.high %v68, %v68
    %v710 = vunpack.c.l.s4 1966171168
    %v711 = vunpack.c.0.s8 %v710
    %v712 = vlaneseq
    %v713 = vshrl.u32 %v712, 7
    %v714 = vsub.s32 %v711, %v713
    %v715 = vrot.slane %v68, %v714
    %v717 = vunpack.c.l.s4 1966171168
    %v718 = vunpack.c.0.s8 %v717
    %v719 = vlaneseq
    %v720 = vshrl.u32 %v719, 7
    %v721 = vsub.s32 %v718, %v720
    %v722 = vrot.slane %v708, %v721
    %v723 = vcombine.high %v715, %v715
    %v724 = vcombine.high %v722, %v722
    %v726 = vunpack.c.l.s4 1966171168
    %v727 = vunpack.c.0.s8 %v726
    %v728 = vlaneseq
    %v729 = vshrl.u32 %v728, 7
    %v730 = vsub.s32 %v727, %v729
    %v731 = vrot.slane %v715, %v730
    %v733 = vunpack.c.l.s4 1966171168
    %v734 = vunpack.c.0.s8 %v733
    %v735 = vlaneseq
    %v736 = vshrl.u32 %v735, 7
    %v737 = vsub.s32 %v734, %v736
    %v738 = vrot.slane %v722, %v737
    %v740 = vunpack.c.l.s4 1966171168
    %v741 = vunpack.c.0.s8 %v740
    %v742 = vlaneseq
    %v743 = vshrl.u32 %v742, 7
    %v744 = vsub.s32 %v741, %v743
    %v745 = vrot.slane %v723, %v744
    %v747 = vunpack.c.l.s4 1966171168
    %v748 = vunpack.c.0.s8 %v747
    %v749 = vlaneseq
    %v750 = vshrl.u32 %v749, 7
    %v751 = vsub.s32 %v748, %v750
    %v752 = vrot.slane %v724, %v751
    %v753 = vcombine.high %v731, %v731
    %v754 = vcombine.high %v738, %v738
    %v755 = vcombine.high %v745, %v745
    %v756 = vcombine.high %v752, %v752
    %v757 = vcombine.high %v69, %v69
    %v759 = vunpack.c.l.s4 1966171168
    %v760 = vunpack.c.0.s8 %v759
    %v761 = vlaneseq
    %v762 = vshrl.u32 %v761, 7
    %v763 = vsub.s32 %v760, %v762
    %v764 = vrot.slane %v69, %v763
    %v766 = vunpack.c.l.s4 1966171168
    %v767 = vunpack.c.0.s8 %v766
    %v768 = vlaneseq
    %v769 = vshrl.u32 %v768, 7
    %v770 = vsub.s32 %v767, %v769
    %v771 = vrot.slane %v757, %v770
    %v772 = vcombine.high %v764, %v764
    %v773 = vcombine.high %v771, %v771
    %v775 = vunpack.c.l.s4 1966171168
    %v776 = vunpack.c.0.s8 %v775
    %v777 = vlaneseq
    %v778 = vshrl.u32 %v777, 7
    %v779 = vsub.s32 %v776, %v778
    %v780 = vrot.slane %v764, %v779
    %v782 = vunpack.c.l.s4 1966171168
    %v783 = vunpack.c.0.s8 %v782
    %v784 = vlaneseq
    %v785 = vshrl.u32 %v784, 7
    %v786 = vsub.s32 %v783, %v785
    %v787 = vrot.slane %v771, %v786
    %v789 = vunpack.c.l.s4 1966171168
    %v790 = vunpack.c.0.s8 %v789
    %v791 = vlaneseq
    %v792 = vshrl.u32 %v791, 7
    %v793 = vsub.s32 %v790, %v792
    %v794 = vrot.slane %v772, %v793
    %v796 = vunpack.c.l.s4 1966171168
    %v797 = vunpack.c.0.s8 %v796
    %v798 = vlaneseq
    %v799 = vshrl.u32 %v798, 7
    %v800 = vsub.s32 %v797, %v799
    %v801 = vrot.slane %v773, %v800
    %v802 = vcombine.high %v780, %v780
    %v803 = vcombine.high %v787, %v787
    %v804 = vcombine.high %v794, %v794
    %v805 = vcombine.high %v801, %v801
    %v806 = vcombine.high %v70, %v70
    %v808 = vunpack.c.l.s4 1966171168
    %v809 = vunpack.c.0.s8 %v808
    %v810 = vlaneseq
    %v811 = vshrl.u32 %v810, 7
    %v812 = vsub.s32 %v809, %v811
    %v813 = vrot.slane %v70, %v812
    %v815 = vunpack.c.l.s4 1966171168
    %v816 = vunpack.c.0.s8 %v815
    %v817 = vlaneseq
    %v818 = vshrl.u32 %v817, 7
    %v819 = vsub.s32 %v816, %v818
    %v820 = vrot.slane %v806, %v819
    %v821 = vcombine.high %v813, %v813
    %v822 = vcombine.high %v820, %v820
    %v824 = vunpack.c.l.s4 1966171168
    %v825 = vunpack.c.0.s8 %v824
    %v826 = vlaneseq
    %v827 = vshrl.u32 %v826, 7
    %v828 = vsub.s32 %v825, %v827
    %v829 = vrot.slane %v813, %v828
    %v831 = vunpack.c.l.s4 1966171168
    %v832 = vunpack.c.0.s8 %v831
    %v833 = vlaneseq
    %v834 = vshrl.u32 %v833, 7
    %v835 = vsub.s32 %v832, %v834
    %v836 = vrot.slane %v820, %v835
    %v838 = vunpack.c.l.s4 1966171168
    %v839 = vunpack.c.0.s8 %v838
    %v840 = vlaneseq
    %v841 = vshrl.u32 %v840, 7
    %v842 = vsub.s32 %v839, %v841
    %v843 = vrot.slane %v821, %v842
    %v845 = vunpack.c.l.s4 1966171168
    %v846 = vunpack.c.0.s8 %v845
    %v847 = vlaneseq
    %v848 = vshrl.u32 %v847, 7
    %v849 = vsub.s32 %v846, %v848
    %v850 = vrot.slane %v822, %v849
    %v851 = vcombine.high %v829, %v829
    %v852 = vcombine.high %v836, %v836
    %v853 = vcombine.high %v843, %v843
    %v854 = vcombine.high %v850, %v850
    %v855 = vcombine.high %v71, %v71
    %v857 = vunpack.c.l.s4 1966171168
    %v858 = vunpack.c.0.s8 %v857
    %v859 = vlaneseq
    %v860 = vshrl.u32 %v859, 7
    %v861 = vsub.s32 %v858, %v860
    %v862 = vrot.slane %v71, %v861
    %v864 = vunpack.c.l.s4 1966171168
    %v865 = vunpack.c.0.s8 %v864
    %v866 = vlaneseq
    %v867 = vshrl.u32 %v866, 7
    %v868 = vsub.s32 %v865, %v867
    %v869 = vrot.slane %v855, %v868
    %v870 = vcombine.high %v862, %v862
    %v871 = vcombine.high %v869, %v869
    %v873 = vunpack.c.l.s4 1966171168
    %v874 = vunpack.c.0.s8 %v873
    %v875 = vlaneseq
    %v876 = vshrl.u32 %v875, 7
    %v877 = vsub.s32 %v874, %v876
    %v878 = vrot.slane %v862, %v877
    %v880 = vunpack.c.l.s4 1966171168
    %v881 = vunpack.c.0.s8 %v880
    %v882 = vlaneseq
    %v883 = vshrl.u32 %v882, 7
    %v884 = vsub.s32 %v881, %v883
    %v885 = vrot.slane %v869, %v884
    %v887 = vunpack.c.l.s4 1966171168
    %v888 = vunpack.c.0.s8 %v887
    %v889 = vlaneseq
    %v890 = vshrl.u32 %v889, 7
    %v891 = vsub.s32 %v888, %v890
    %v892 = vrot.slane %v870, %v891
    %v894 = vunpack.c.l.s4 1966171168
    %v895 = vunpack.c.0.s8 %v894
    %v896 = vlaneseq
    %v897 = vshrl.u32 %v896, 7
    %v898 = vsub.s32 %v895, %v897
    %v899 = vrot.slane %v871, %v898
    %v900 = vcombine.high %v878, %v878
    %v901 = vcombine.high %v885, %v885
    %v902 = vcombine.high %v892, %v892
    %v903 = vcombine.high %v899, %v899
    %v904 = vcombine.high %v72, %v72
    %v906 = vunpack.c.l.s4 1966171168
    %v907 = vunpack.c.0.s8 %v906
    %v908 = vlaneseq
    %v909 = vshrl.u32 %v908, 7
    %v910 = vsub.s32 %v907, %v909
    %v911 = vrot.slane %v72, %v910
    %v913 = vunpack.c.l.s4 1966171168
    %v914 = vunpack.c.0.s8 %v913
    %v915 = vlaneseq
    %v916 = vshrl.u32 %v915, 7
    %v917 = vsub.s32 %v914, %v916
    %v918 = vrot.slane %v904, %v917
    %v919 = vcombine.high %v911, %v911
    %v920 = vcombine.high %v918, %v918
    %v922 = vunpack.c.l.s4 1966171168
    %v923 = vunpack.c.0.s8 %v922
    %v924 = vlaneseq
    %v925 = vshrl.u32 %v924, 7
    %v926 = vsub.s32 %v923, %v925
    %v927 = vrot.slane %v911, %v926
    %v929 = vunpack.c.l.s4 1966171168
    %v930 = vunpack.c.0.s8 %v929
    %v931 = vlaneseq
    %v932 = vshrl.u32 %v931, 7
    %v933 = vsub.s32 %v930, %v932
    %v934 = vrot.slane %v918, %v933
    %v936 = vunpack.c.l.s4 1966171168
    %v937 = vunpack.c.0.s8 %v936
    %v938 = vlaneseq
    %v939 = vshrl.u32 %v938, 7
    %v940 = vsub.s32 %v937, %v939
    %v941 = vrot.slane %v919, %v940
    %v943 = vunpack.c.l.s4 1966171168
    %v944 = vunpack.c.0.s8 %v943
    %v945 = vlaneseq
    %v946 = vshrl.u32 %v945, 7
    %v947 = vsub.s32 %v944, %v946
    %v948 = vrot.slane %v920, %v947
    %v949 = vcombine.high %v927, %v927
    %v950 = vcombine.high %v934, %v934
    %v951 = vcombine.high %v941, %v941
    %v952 = vcombine.high %v948, %v948
    %v953 = vcombine.high %v73, %v73
    %v955 = vunpack.c.l.s4 1966171168
    %v956 = vunpack.c.0.s8 %v955
    %v957 = vlaneseq
    %v958 = vshrl.u32 %v957, 7
    %v959 = vsub.s32 %v956, %v958
    %v960 = vrot.slane %v73, %v959
    %v962 = vunpack.c.l.s4 1966171168
    %v963 = vunpack.c.0.s8 %v962
    %v964 = vlaneseq
    %v965 = vshrl.u32 %v964, 7
    %v966 = vsub.s32 %v963, %v965
    %v967 = vrot.slane %v953, %v966
    %v968 = vcombine.high %v960, %v960
    %v969 = vcombine.high %v967, %v967
    %v971 = vunpack.c.l.s4 1966171168
    %v972 = vunpack.c.0.s8 %v971
    %v973 = vlaneseq
    %v974 = vshrl.u32 %v973, 7
    %v975 = vsub.s32 %v972, %v974
    %v976 = vrot.slane %v960, %v975
    %v978 = vunpack.c.l.s4 1966171168
    %v979 = vunpack.c.0.s8 %v978
    %v980 = vlaneseq
    %v981 = vshrl.u32 %v980, 7
    %v982 = vsub.s32 %v979, %v981
    %v983 = vrot.slane %v967, %v982
    %v985 = vunpack.c.l.s4 1966171168
    %v986 = vunpack.c.0.s8 %v985
    %v987 = vlaneseq
    %v988 = vshrl.u32 %v987, 7
    %v989 = vsub.s32 %v986, %v988
    %v990 = vrot.slane %v968, %v989
    %v992 = vunpack.c.l.s4 1966171168
    %v993 = vunpack.c.0.s8 %v992
    %v994 = vlaneseq
    %v995 = vshrl.u32 %v994, 7
    %v996 = vsub.s32 %v993, %v995
    %v997 = vrot.slane %v969, %v996
    %v998 = vcombine.high %v976, %v976
    %v999 = vcombine.high %v983, %v983
    %v1000 = vcombine.high %v990, %v990
    %v1001 = vcombine.high %v997, %v997
    %v1002 = vlaneseq
    %v1003 = vshrl.u32 %v1002, 7
    %v1004 = vsub.s32 0, %v1003
    %v1005 = vrot.slane %v241, %v1004
    %v1006 = vlaneseq
    %v1007 = vshrl.u32 %v1006, 7
    %v1008 = vsub.s32 0, %v1007
    %v1009 = vrot.slane %v255, %v1008
    %v1010 = vlaneseq
    %v1011 = vshrl.u32 %v1010, 7
    %v1012 = vsub.s32 0, %v1011
    %v1013 = vrot.slane %v263, %v1012
    %v1014 = vlaneseq
    %v1015 = vshrl.u32 %v1014, 7
    %v1016 = vsub.s32 0, %v1015
    %v1017 = vrot.slane %v265, %v1016
    %v1018 = vlaneseq
    %v1019 = vshrl.u32 %v1018, 7
    %v1020 = vsub.s32 0, %v1019
    %v1021 = vrot.slane %v248, %v1020
    %v1022 = vlaneseq
    %v1023 = vshrl.u32 %v1022, 7
    %v1024 = vsub.s32 0, %v1023
    %v1025 = vrot.slane %v262, %v1024
    %v1026 = vlaneseq
    %v1027 = vshrl.u32 %v1026, 7
    %v1028 = vsub.s32 0, %v1027
    %v1029 = vrot.slane %v264, %v1028
    %v1030 = vlaneseq
    %v1031 = vshrl.u32 %v1030, 7
    %v1032 = vsub.s32 0, %v1031
    %v1033 = vrot.slane %v266, %v1032
    %v1034 = vlaneseq
    %v1035 = vshrl.u32 %v1034, 7
    %v1036 = vsub.s32 0, %v1035
    %v1037 = vrot.slane %v290, %v1036
    %v1038 = vlaneseq
    %v1039 = vshrl.u32 %v1038, 7
    %v1040 = vsub.s32 0, %v1039
    %v1041 = vrot.slane %v304, %v1040
    %v1042 = vlaneseq
    %v1043 = vshrl.u32 %v1042, 7
    %v1044 = vsub.s32 0, %v1043
    %v1045 = vrot.slane %v312, %v1044
    %v1046 = vlaneseq
    %v1047 = vshrl.u32 %v1046, 7
    %v1048 = vsub.s32 0, %v1047
    %v1049 = vrot.slane %v314, %v1048
    %v1050 = vlaneseq
    %v1051 = vshrl.u32 %v1050, 7
    %v1052 = vsub.s32 0, %v1051
    %v1053 = vrot.slane %v297, %v1052
    %v1054 = vlaneseq
    %v1055 = vshrl.u32 %v1054, 7
    %v1056 = vsub.s32 0, %v1055
    %v1057 = vrot.slane %v311, %v1056
    %v1058 = vlaneseq
    %v1059 = vshrl.u32 %v1058, 7
    %v1060 = vsub.s32 0, %v1059
    %v1061 = vrot.slane %v313, %v1060
    %v1062 = vlaneseq
    %v1063 = vshrl.u32 %v1062, 7
    %v1064 = vsub.s32 0, %v1063
    %v1065 = vrot.slane %v315, %v1064
    %v1066 = vlaneseq
    %v1067 = vshrl.u32 %v1066, 7
    %v1068 = vsub.s32 0, %v1067
    %v1069 = vrot.slane %v339, %v1068
    %v1070 = vlaneseq
    %v1071 = vshrl.u32 %v1070, 7
    %v1072 = vsub.s32 0, %v1071
    %v1073 = vrot.slane %v353, %v1072
    %v1074 = vlaneseq
    %v1075 = vshrl.u32 %v1074, 7
    %v1076 = vsub.s32 0, %v1075
    %v1077 = vrot.slane %v361, %v1076
    %v1078 = vlaneseq
    %v1079 = vshrl.u32 %v1078, 7
    %v1080 = vsub.s32 0, %v1079
    %v1081 = vrot.slane %v363, %v1080
    %v1082 = vlaneseq
    %v1083 = vshrl.u32 %v1082, 7
    %v1084 = vsub.s32 0, %v1083
    %v1085 = vrot.slane %v346, %v1084
    %v1086 = vlaneseq
    %v1087 = vshrl.u32 %v1086, 7
    %v1088 = vsub.s32 0, %v1087
    %v1089 = vrot.slane %v360, %v1088
    %v1090 = vlaneseq
    %v1091 = vshrl.u32 %v1090, 7
    %v1092 = vsub.s32 0, %v1091
    %v1093 = vrot.slane %v362, %v1092
    %v1094 = vlaneseq
    %v1095 = vshrl.u32 %v1094, 7
    %v1096 = vsub.s32 0, %v1095
    %v1097 = vrot.slane %v364, %v1096
    %v1098 = vlaneseq
    %v1099 = vshrl.u32 %v1098, 7
    %v1100 = vsub.s32 0, %v1099
    %v1101 = vrot.slane %v388, %v1100
    %v1102 = vlaneseq
    %v1103 = vshrl.u32 %v1102, 7
    %v1104 = vsub.s32 0, %v1103
    %v1105 = vrot.slane %v402, %v1104
    %v1106 = vlaneseq
    %v1107 = vshrl.u32 %v1106, 7
    %v1108 = vsub.s32 0, %v1107
    %v1109 = vrot.slane %v410, %v1108
    %v1110 = vlaneseq
    %v1111 = vshrl.u32 %v1110, 7
    %v1112 = vsub.s32 0, %v1111
    %v1113 = vrot.slane %v412, %v1112
    %v1114 = vlaneseq
    %v1115 = vshrl.u32 %v1114, 7
    %v1116 = vsub.s32 0, %v1115
    %v1117 = vrot.slane %v395, %v1116
    %v1118 = vlaneseq
    %v1119 = vshrl.u32 %v1118, 7
    %v1120 = vsub.s32 0, %v1119
    %v1121 = vrot.slane %v409, %v1120
    %v1122 = vlaneseq
    %v1123 = vshrl.u32 %v1122, 7
    %v1124 = vsub.s32 0, %v1123
    %v1125 = vrot.slane %v411, %v1124
    %v1126 = vlaneseq
    %v1127 = vshrl.u32 %v1126, 7
    %v1128 = vsub.s32 0, %v1127
    %v1129 = vrot.slane %v413, %v1128
    %v1130 = vlaneseq
    %v1131 = vshrl.u32 %v1130, 7
    %v1132 = vsub.s32 0, %v1131
    %v1133 = vrot.slane %v437, %v1132
    %v1134 = vlaneseq
    %v1135 = vshrl.u32 %v1134, 7
    %v1136 = vsub.s32 0, %v1135
    %v1137 = vrot.slane %v451, %v1136
    %v1138 = vlaneseq
    %v1139 = vshrl.u32 %v1138, 7
    %v1140 = vsub.s32 0, %v1139
    %v1141 = vrot.slane %v459, %v1140
    %v1142 = vlaneseq
    %v1143 = vshrl.u32 %v1142, 7
    %v1144 = vsub.s32 0, %v1143
    %v1145 = vrot.slane %v461, %v1144
    %v1146 = vlaneseq
    %v1147 = vshrl.u32 %v1146, 7
    %v1148 = vsub.s32 0, %v1147
    %v1149 = vrot.slane %v444, %v1148
    %v1150 = vlaneseq
    %v1151 = vshrl.u32 %v1150, 7
    %v1152 = vsub.s32 0, %v1151
    %v1153 = vrot.slane %v458, %v1152
    %v1154 = vlaneseq
    %v1155 = vshrl.u32 %v1154, 7
    %v1156 = vsub.s32 0, %v1155
    %v1157 = vrot.slane %v460, %v1156
    %v1158 = vlaneseq
    %v1159 = vshrl.u32 %v1158, 7
    %v1160 = vsub.s32 0, %v1159
    %v1161 = vrot.slane %v462, %v1160
    %v1162 = vlaneseq
    %v1163 = vshrl.u32 %v1162, 7
    %v1164 = vsub.s32 0, %v1163
    %v1165 = vrot.slane %v486, %v1164
    %v1166 = vlaneseq
    %v1167 = vshrl.u32 %v1166, 7
    %v1168 = vsub.s32 0, %v1167
    %v1169 = vrot.slane %v500, %v1168
    %v1170 = vlaneseq
    %v1171 = vshrl.u32 %v1170, 7
    %v1172 = vsub.s32 0, %v1171
    %v1173 = vrot.slane %v508, %v1172
    %v1174 = vlaneseq
    %v1175 = vshrl.u32 %v1174, 7
    %v1176 = vsub.s32 0, %v1175
    %v1177 = vrot.slane %v510, %v1176
    %v1178 = vlaneseq
    %v1179 = vshrl.u32 %v1178, 7
    %v1180 = vsub.s32 0, %v1179
    %v1181 = vrot.slane %v493, %v1180
    %v1182 = vlaneseq
    %v1183 = vshrl.u32 %v1182, 7
    %v1184 = vsub.s32 0, %v1183
    %v1185 = vrot.slane %v507, %v1184
    %v1186 = vlaneseq
    %v1187 = vshrl.u32 %v1186, 7
    %v1188 = vsub.s32 0, %v1187
    %v1189 = vrot.slane %v509, %v1188
    %v1190 = vlaneseq
    %v1191 = vshrl.u32 %v1190, 7
    %v1192 = vsub.s32 0, %v1191
    %v1193 = vrot.slane %v511, %v1192
    %v1194 = vlaneseq
    %v1195 = vshrl.u32 %v1194, 7
    %v1196 = vsub.s32 0, %v1195
    %v1197 = vrot.slane %v535, %v1196
    %v1198 = vlaneseq
    %v1199 = vshrl.u32 %v1198, 7
    %v1200 = vsub.s32 0, %v1199
    %v1201 = vrot.slane %v549, %v1200
    %v1202 = vlaneseq
    %v1203 = vshrl.u32 %v1202, 7
    %v1204 = vsub.s32 0, %v1203
    %v1205 = vrot.slane %v557, %v1204
    %v1206 = vlaneseq
    %v1207 = vshrl.u32 %v1206, 7
    %v1208 = vsub.s32 0, %v1207
    %v1209 = vrot.slane %v559, %v1208
    %v1210 = vlaneseq
    %v1211 = vshrl.u32 %v1210, 7
    %v1212 = vsub.s32 0, %v1211
    %v1213 = vrot.slane %v542, %v1212
    %v1214 = vlaneseq
    %v1215 = vshrl.u32 %v1214, 7
    %v1216 = vsub.s32 0, %v1215
    %v1217 = vrot.slane %v556, %v1216
    %v1218 = vlaneseq
    %v1219 = vshrl.u32 %v1218, 7
    %v1220 = vsub.s32 0, %v1219
    %v1221 = vrot.slane %v558, %v1220
    %v1222 = vlaneseq
    %v1223 = vshrl.u32 %v1222, 7
    %v1224 = vsub.s32 0, %v1223
    %v1225 = vrot.slane %v560, %v1224
    %v1226 = vlaneseq
    %v1227 = vshrl.u32 %v1226, 7
    %v1228 = vsub.s32 0, %v1227
    %v1229 = vrot.slane %v584, %v1228
    %v1230 = vlaneseq
    %v1231 = vshrl.u32 %v1230, 7
    %v1232 = vsub.s32 0, %v1231
    %v1233 = vrot.slane %v598, %v1232
    %v1234 = vlaneseq
    %v1235 = vshrl.u32 %v1234, 7
    %v1236 = vsub.s32 0, %v1235
    %v1237 = vrot.slane %v606, %v1236
    %v1238 = vlaneseq
    %v1239 = vshrl.u32 %v1238, 7
    %v1240 = vsub.s32 0, %v1239
    %v1241 = vrot.slane %v608, %v1240
    %v1242 = vlaneseq
    %v1243 = vshrl.u32 %v1242, 7
    %v1244 = vsub.s32 0, %v1243
    %v1245 = vrot.slane %v591, %v1244
    %v1246 = vlaneseq
    %v1247 = vshrl.u32 %v1246, 7
    %v1248 = vsub.s32 0, %v1247
    %v1249 = vrot.slane %v605, %v1248
    %v1250 = vlaneseq
    %v1251 = vshrl.u32 %v1250, 7
    %v1252 = vsub.s32 0, %v1251
    %v1253 = vrot.slane %v607, %v1252
    %v1254 = vlaneseq
    %v1255 = vshrl.u32 %v1254, 7
    %v1256 = vsub.s32 0, %v1255
    %v1257 = vrot.slane %v609, %v1256
    %v1258 = vlaneseq
    %v1259 = vshrl.u32 %v1258, 7
    %v1260 = vsub.s32 0, %v1259
    %v1261 = vrot.slane %v633, %v1260
    %v1262 = vlaneseq
    %v1263 = vshrl.u32 %v1262, 7
    %v1264 = vsub.s32 0, %v1263
    %v1265 = vrot.slane %v647, %v1264
    %v1266 = vlaneseq
    %v1267 = vshrl.u32 %v1266, 7
    %v1268 = vsub.s32 0, %v1267
    %v1269 = vrot.slane %v655, %v1268
    %v1270 = vlaneseq
    %v1271 = vshrl.u32 %v1270, 7
    %v1272 = vsub.s32 0, %v1271
    %v1273 = vrot.slane %v657, %v1272
    %v1274 = vlaneseq
    %v1275 = vshrl.u32 %v1274, 7
    %v1276 = vsub.s32 0, %v1275
    %v1277 = vrot.slane %v640, %v1276
    %v1278 = vlaneseq
    %v1279 = vshrl.u32 %v1278, 7
    %v1280 = vsub.s32 0, %v1279
    %v1281 = vrot.slane %v654, %v1280
    %v1282 = vlaneseq
    %v1283 = vshrl.u32 %v1282, 7
    %v1284 = vsub.s32 0, %v1283
    %v1285 = vrot.slane %v656, %v1284
    %v1286 = vlaneseq
    %v1287 = vshrl.u32 %v1286, 7
    %v1288 = vsub.s32 0, %v1287
    %v1289 = vrot.slane %v658, %v1288
    %v1290 = vlaneseq
    %v1291 = vshrl.u32 %v1290, 7
    %v1292 = vsub.s32 0, %v1291
    %v1293 = vrot.slane %v682, %v1292
    %v1294 = vlaneseq
    %v1295 = vshrl.u32 %v1294, 7
    %v1296 = vsub.s32 0, %v1295
    %v1297 = vrot.slane %v696, %v1296
    %v1298 = vlaneseq
    %v1299 = vshrl.u32 %v1298, 7
    %v1300 = vsub.s32 0, %v1299
    %v1301 = vrot.slane %v704, %v1300
    %v1302 = vlaneseq
    %v1303 = vshrl.u32 %v1302, 7
    %v1304 = vsub.s32 0, %v1303
    %v1305 = vrot.slane %v706, %v1304
    %v1306 = vlaneseq
    %v1307 = vshrl.u32 %v1306, 7
    %v1308 = vsub.s32 0, %v1307
    %v1309 = vrot.slane %v689, %v1308
    %v1310 = vlaneseq
    %v1311 = vshrl.u32 %v1310, 7
    %v1312 = vsub.s32 0, %v1311
    %v1313 = vrot.slane %v703, %v1312
    %v1314 = vlaneseq
    %v1315 = vshrl.u32 %v1314, 7
    %v1316 = vsub.s32 0, %v1315
    %v1317 = vrot.slane %v705, %v1316
    %v1318 = vlaneseq
    %v1319 = vshrl.u32 %v1318, 7
    %v1320 = vsub.s32 0, %v1319
    %v1321 = vrot.slane %v707, %v1320
    %v1322 = vlaneseq
    %v1323 = vshrl.u32 %v1322, 7
    %v1324 = vsub.s32 0, %v1323
    %v1325 = vrot.slane %v731, %v1324
    %v1326 = vlaneseq
    %v1327 = vshrl.u32 %v1326, 7
    %v1328 = vsub.s32 0, %v1327
    %v1329 = vrot.slane %v745, %v1328
    %v1330 = vlaneseq
    %v1331 = vshrl.u32 %v1330, 7
    %v1332 = vsub.s32 0, %v1331
    %v1333 = vrot.slane %v753, %v1332
    %v1334 = vlaneseq
    %v1335 = vshrl.u32 %v1334, 7
    %v1336 = vsub.s32 0, %v1335
    %v1337 = vrot.slane %v755, %v1336
    %v1338 = vlaneseq
    %v1339 = vshrl.u32 %v1338, 7
    %v1340 = vsub.s32 0, %v1339
    %v1341 = vrot.slane %v738, %v1340
    %v1342 = vlaneseq
    %v1343 = vshrl.u32 %v1342, 7
    %v1344 = vsub.s32 0, %v1343
    %v1345 = vrot.slane %v752, %v1344
    %v1346 = vlaneseq
    %v1347 = vshrl.u32 %v1346, 7
    %v1348 = vsub.s32 0, %v1347
    %v1349 = vrot.slane %v754, %v1348
    %v1350 = vlaneseq
    %v1351 = vshrl.u32 %v1350, 7
    %v1352 = vsub.s32 0, %v1351
    %v1353 = vrot.slane %v756, %v1352
    %v1354 = vlaneseq
    %v1355 = vshrl.u32 %v1354, 7
    %v1356 = vsub.s32 0, %v1355
    %v1357 = vrot.slane %v780, %v1356
    %v1358 = vlaneseq
    %v1359 = vshrl.u32 %v1358, 7
    %v1360 = vsub.s32 0, %v1359
    %v1361 = vrot.slane %v794, %v1360
    %v1362 = vlaneseq
    %v1363 = vshrl.u32 %v1362, 7
    %v1364 = vsub.s32 0, %v1363
    %v1365 = vrot.slane %v802, %v1364
    %v1366 = vlaneseq
    %v1367 = vshrl.u32 %v1366, 7
    %v1368 = vsub.s32 0, %v1367
    %v1369 = vrot.slane %v804, %v1368
    %v1370 = vlaneseq
    %v1371 = vshrl.u32 %v1370, 7
    %v1372 = vsub.s32 0, %v1371
    %v1373 = vrot.slane %v787, %v1372
    %v1374 = vlaneseq
    %v1375 = vshrl.u32 %v1374, 7
    %v1376 = vsub.s32 0, %v1375
    %v1377 = vrot.slane %v801, %v1376
    %v1378 = vlaneseq
    %v1379 = vshrl.u32 %v1378, 7
    %v1380 = vsub.s32 0, %v1379
    %v1381 = vrot.slane %v803, %v1380
    %v1382 = vlaneseq
    %v1383 = vshrl.u32 %v1382, 7
    %v1384 = vsub.s32 0, %v1383
    %v1385 = vrot.slane %v805, %v1384
    %v1386 = vlaneseq
    %v1387 = vshrl.u32 %v1386, 7
    %v1388 = vsub.s32 0, %v1387
    %v1389 = vrot.slane %v829, %v1388
    %v1390 = vlaneseq
    %v1391 = vshrl.u32 %v1390, 7
    %v1392 = vsub.s32 0, %v1391
    %v1393 = vrot.slane %v843, %v1392
    %v1394 = vlaneseq
    %v1395 = vshrl.u32 %v1394, 7
    %v1396 = vsub.s32 0, %v1395
    %v1397 = vrot.slane %v851, %v1396
    %v1398 = vlaneseq
    %v1399 = vshrl.u32 %v1398, 7
    %v1400 = vsub.s32 0, %v1399
    %v1401 = vrot.slane %v853, %v1400
    %v1402 = vlaneseq
    %v1403 = vshrl.u32 %v1402, 7
    %v1404 = vsub.s32 0, %v1403
    %v1405 = vrot.slane %v836, %v1404
    %v1406 = vlaneseq
    %v1407 = vshrl.u32 %v1406, 7
    %v1408 = vsub.s32 0, %v1407
    %v1409 = vrot.slane %v850, %v1408
    %v1410 = vlaneseq
    %v1411 = vshrl.u32 %v1410, 7
    %v1412 = vsub.s32 0, %v1411
    %v1413 = vrot.slane %v852, %v1412
    %v1414 = vlaneseq
    %v1415 = vshrl.u32 %v1414, 7
    %v1416 = vsub.s32 0, %v1415
    %v1417 = vrot.slane %v854, %v1416
    %v1418 = vlaneseq
    %v1419 = vshrl.u32 %v1418, 7
    %v1420 = vsub.s32 0, %v1419
    %v1421 = vrot.slane %v878, %v1420
    %v1422 = vlaneseq
    %v1423 = vshrl.u32 %v1422, 7
    %v1424 = vsub.s32 0, %v1423
    %v1425 = vrot.slane %v892, %v1424
    %v1426 = vlaneseq
    %v1427 = vshrl.u32 %v1426, 7
    %v1428 = vsub.s32 0, %v1427
    %v1429 = vrot.slane %v900, %v1428
    %v1430 = vlaneseq
    %v1431 = vshrl.u32 %v1430, 7
    %v1432 = vsub.s32 0, %v1431
    %v1433 = vrot.slane %v902, %v1432
    %v1434 = vlaneseq
    %v1435 = vshrl.u32 %v1434, 7
    %v1436 = vsub.s32 0, %v1435
    %v1437 = vrot.slane %v885, %v1436
    %v1438 = vlaneseq
    %v1439 = vshrl.u32 %v1438, 7
    %v1440 = vsub.s32 0, %v1439
    %v1441 = vrot.slane %v899, %v1440
    %v1442 = vlaneseq
    %v1443 = vshrl.u32 %v1442, 7
    %v1444 = vsub.s32 0, %v1443
    %v1445 = vrot.slane %v901, %v1444
    %v1446 = vlaneseq
    %v1447 = vshrl.u32 %v1446, 7
    %v1448 = vsub.s32 0, %v1447
    %v1449 = vrot.slane %v903, %v1448
    %v1450 = vlaneseq
    %v1451 = vshrl.u32 %v1450, 7
    %v1452 = vsub.s32 0, %v1451
    %v1453 = vrot.slane %v927, %v1452
    %v1454 = vlaneseq
    %v1455 = vshrl.u32 %v1454, 7
    %v1456 = vsub.s32 0, %v1455
    %v1457 = vrot.slane %v941, %v1456
    %v1458 = vlaneseq
    %v1459 = vshrl.u32 %v1458, 7
    %v1460 = vsub.s32 0, %v1459
    %v1461 = vrot.slane %v949, %v1460
    %v1462 = vlaneseq
    %v1463 = vshrl.u32 %v1462, 7
    %v1464 = vsub.s32 0, %v1463
    %v1465 = vrot.slane %v951, %v1464
    %v1466 = vlaneseq
    %v1467 = vshrl.u32 %v1466, 7
    %v1468 = vsub.s32 0, %v1467
    %v1469 = vrot.slane %v934, %v1468
    %v1470 = vlaneseq
    %v1471 = vshrl.u32 %v1470, 7
    %v1472 = vsub.s32 0, %v1471
    %v1473 = vrot.slane %v948, %v1472
    %v1474 = vlaneseq
    %v1475 = vshrl.u32 %v1474, 7
    %v1476 = vsub.s32 0, %v1475
    %v1477 = vrot.slane %v950, %v1476
    %v1478 = vlaneseq
    %v1479 = vshrl.u32 %v1478, 7
    %v1480 = vsub.s32 0, %v1479
    %v1481 = vrot.slane %v952, %v1480
    %v1482 = vlaneseq
    %v1483 = vshrl.u32 %v1482, 7
    %v1484 = vsub.s32 0, %v1483
    %v1485 = vrot.slane %v976, %v1484
    %v1486 = vlaneseq
    %v1487 = vshrl.u32 %v1486, 7
    %v1488 = vsub.s32 0, %v1487
    %v1489 = vrot.slane %v990, %v1488
    %v1490 = vlaneseq
    %v1491 = vshrl.u32 %v1490, 7
    %v1492 = vsub.s32 0, %v1491
    %v1493 = vrot.slane %v998, %v1492
    %v1494 = vlaneseq
    %v1495 = vshrl.u32 %v1494, 7
    %v1496 = vsub.s32 0, %v1495
    %v1497 = vrot.slane %v1000, %v1496
    %v1498 = vlaneseq
    %v1499 = vshrl.u32 %v1498, 7
    %v1500 = vsub.s32 0, %v1499
    %v1501 = vrot.slane %v983, %v1500
    %v1502 = vlaneseq
    %v1503 = vshrl.u32 %v1502, 7
    %v1504 = vsub.s32 0, %v1503
    %v1505 = vrot.slane %v997, %v1504
    %v1506 = vlaneseq
    %v1507 = vshrl.u32 %v1506, 7
    %v1508 = vsub.s32 0, %v1507
    %v1509 = vrot.slane %v999, %v1508
    %v1510 = vlaneseq
    %v1511 = vshrl.u32 %v1510, 7
    %v1512 = vsub.s32 0, %v1511
    %v1513 = vrot.slane %v1001, %v1512
    %v1642 = vmul.f32 %v74, %v1005
    %v1643 = vmul.f32 %v75, %v1009
    %v1644 = vmul.f32 %v76, %v1013
    %v1645 = vmul.f32 %v77, %v1017
    %v1646 = vmul.f32 %v78, %v1021
    %v1647 = vmul.f32 %v79, %v1025
    %v1648 = vmul.f32 %v80, %v1029
    %v1649 = vmul.f32 %v81, %v1033
    %v1650 = vmul.f32 %v82, %v1037
    %v1651 = vmul.f32 %v83, %v1041
    %v1652 = vmul.f32 %v84, %v1045
    %v1653 = vmul.f32 %v85, %v1049
    %v1654 = vmul.f32 %v86, %v1053
    %v1655 = vmul.f32 %v87, %v1057
    %v1656 = vmul.f32 %v88, %v1061
    %v1657 = vmul.f32 %v89, %v1065
    %v1658 = vmul.f32 %v90, %v1069
    %v1659 = vmul.f32 %v91, %v1073
    %v1660 = vmul.f32 %v92, %v1077
    %v1661 = vmul.f32 %v93, %v1081
    %v1662 = vmul.f32 %v94, %v1085
    %v1663 = vmul.f32 %v95, %v1089
    %v1664 = vmul.f32 %v96, %v1093
    %v1665 = vmul.f32 %v97, %v1097
    %v1666 = vmul.f32 %v98, %v1101
    %v1667 = vmul.f32 %v99, %v1105
    %v1668 = vmul.f32 %v100, %v1109
    %v1669 = vmul.f32 %v101, %v1113
    %v1670 = vmul.f32 %v102, %v1117
    %v1671 = vmul.f32 %v103, %v1121
    %v1672 = vmul.f32 %v104, %v1125
    %v1673 = vmul.f32 %v105, %v1129
    %v1674 = vmul.f32 %v106, %v1133
    %v1675 = vmul.f32 %v107, %v1137
    %v1676 = vmul.f32 %v108, %v1141
    %v1677 = vmul.f32 %v109, %v1145
    %v1678 = vmul.f32 %v110, %v1149
    %v1679 = vmul.f32 %v111, %v1153
    %v1680 = vmul.f32 %v112, %v1157
    %v1681 = vmul.f32 %v113, %v1161
    %v1682 = vmul.f32 %v114, %v1165
    %v1683 = vmul.f32 %v115, %v1169
    %v1684 = vmul.f32 %v116, %v1173
    %v1685 = vmul.f32 %v117, %v1177
    %v1686 = vmul.f32 %v118, %v1181
    %v1687 = vmul.f32 %v119, %v1185
    %v1688 = vmul.f32 %v120, %v1189
    %v1689 = vmul.f32 %v121, %v1193
    %v1690 = vmul.f32 %v122, %v1197
    %v1691 = vmul.f32 %v123, %v1201
    %v1692 = vmul.f32 %v124, %v1205
    %v1693 = vmul.f32 %v125, %v1209
    %v1694 = vmul.f32 %v126, %v1213
    %v1695 = vmul.f32 %v127, %v1217
    %v1696 = vmul.f32 %v128, %v1221
    %v1697 = vmul.f32 %v129, %v1225
    %v1698 = vmul.f32 %v130, %v1229
    %v1699 = vmul.f32 %v131, %v1233
    %v1700 = vmul.f32 %v132, %v1237
    %v1701 = vmul.f32 %v133, %v1241
    %v1702 = vmul.f32 %v134, %v1245
    %v1703 = vmul.f32 %v135, %v1249
    %v1704 = vmul.f32 %v136, %v1253
    %v1705 = vmul.f32 %v137, %v1257
    %v1706 = vmul.f32 %v138, %v1261
    %v1707 = vmul.f32 %v139, %v1265
    %v1708 = vmul.f32 %v140, %v1269
    %v1709 = vmul.f32 %v141, %v1273
    %v1710 = vmul.f32 %v142, %v1277
    %v1711 = vmul.f32 %v143, %v1281
    %v1712 = vmul.f32 %v144, %v1285
    %v1713 = vmul.f32 %v145, %v1289
    %v1714 = vmul.f32 %v146, %v1293
    %v1715 = vmul.f32 %v147, %v1297
    %v1716 = vmul.f32 %v148, %v1301
    %v1717 = vmul.f32 %v149, %v1305
    %v1718 = vmul.f32 %v150, %v1309
    %v1719 = vmul.f32 %v151, %v1313
    %v1720 = vmul.f32 %v152, %v1317
    %v1721 = vmul.f32 %v153, %v1321
    %v1722 = vmul.f32 %v154, %v1325
    %v1723 = vmul.f32 %v155, %v1329
    %v1724 = vmul.f32 %v156, %v1333
    %v1725 = vmul.f32 %v157, %v1337
    %v1726 = vmul.f32 %v158, %v1341
    %v1727 = vmul.f32 %v159, %v1345
    %v1728 = vmul.f32 %v160, %v1349
    %v1729 = vmul.f32 %v161, %v1353
    %v1730 = vmul.f32 %v162, %v1357
    %v1731 = vmul.f32 %v163, %v1361
    %v1732 = vmul.f32 %v164, %v1365
    %v1733 = vmul.f32 %v165, %v1369
    %v1734 = vmul.f32 %v166, %v1373
    %v1735 = vmul.f32 %v167, %v1377
    %v1736 = vmul.f32 %v168, %v1381
    %v1737 = vmul.f32 %v169, %v1385
    %v1738 = vmul.f32 %v170, %v1389
    %v1739 = vmul.f32 %v171, %v1393
    %v1740 = vmul.f32 %v172, %v1397
    %v1741 = vmul.f32 %v173, %v1401
    %v1742 = vmul.f32 %v174, %v1405
    %v1743 = vmul.f32 %v175, %v1409
    %v1744 = vmul.f32 %v176, %v1413
    %v1745 = vmul.f32 %v177, %v1417
    %v1746 = vmul.f32 %v178, %v1421
    %v1747 = vmul.f32 %v179, %v1425
    %v1748 = vmul.f32 %v180, %v1429
    %v1749 = vmul.f32 %v181, %v1433
    %v1750 = vmul.f32 %v182, %v1437
    %v1751 = vmul.f32 %v183, %v1441
    %v1752 = vmul.f32 %v184, %v1445
    %v1753 = vmul.f32 %v185, %v1449
    %v1754 = vmul.f32 %v186, %v1453
    %v1755 = vmul.f32 %v187, %v1457
    %v1756 = vmul.f32 %v188, %v1461
    %v1757 = vmul.f32 %v189, %v1465
    %v1758 = vmul.f32 %v190, %v1469
    %v1759 = vmul.f32 %v191, %v1473
    %v1760 = vmul.f32 %v192, %v1477
    %v1761 = vmul.f32 %v193, %v1481
    %v1762 = vmul.f32 %v194, %v1485
    %v1763 = vmul.f32 %v195, %v1489
    %v1764 = vmul.f32 %v196, %v1493
    %v1765 = vmul.f32 %v197, %v1497
    %v1766 = vmul.f32 %v198, %v1501
    %v1767 = vmul.f32 %v199, %v1505
    %v1768 = vmul.f32 %v200, %v1509
    %v1769 = vmul.f32 %v201, %v1513
    %1898 = vrot.lane.b32.xlu0 %v1642, 16
    %v1899 = vpop.permute.xlu0 %1898
    %1900 = vrot.lane.b32.xlu0 %v1643, 16
    %v1901 = vpop.permute.xlu0 %1900
    %1902 = vrot.lane.b32.xlu0 %v1644, 16
    %v1903 = vpop.permute.xlu0 %1902
    %1904 = vrot.lane.b32.xlu0 %v1645, 16
    %v1905 = vpop.permute.xlu0 %1904
    %1906 = vrot.lane.b32.xlu0 %v1646, 16
    %v1907 = vpop.permute.xlu0 %1906
    %1908 = vrot.lane.b32.xlu0 %v1647, 16
    %v1909 = vpop.permute.xlu0 %1908
    %1910 = vrot.lane.b32.xlu0 %v1648, 16
    %v1911 = vpop.permute.xlu0 %1910
    %1912 = vrot.lane.b32.xlu0 %v1649, 16
    %v1913 = vpop.permute.xlu0 %1912
    %1914 = vrot.lane.b32.xlu0 %v1650, 16
    %v1915 = vpop.permute.xlu0 %1914
    %1916 = vrot.lane.b32.xlu0 %v1651, 16
    %v1917 = vpop.permute.xlu0 %1916
    %1918 = vrot.lane.b32.xlu0 %v1652, 16
    %v1919 = vpop.permute.xlu0 %1918
    %1920 = vrot.lane.b32.xlu0 %v1653, 16
    %v1921 = vpop.permute.xlu0 %1920
    %1922 = vrot.lane.b32.xlu0 %v1654, 16
    %v1923 = vpop.permute.xlu0 %1922
    %1924 = vrot.lane.b32.xlu0 %v1655, 16
    %v1925 = vpop.permute.xlu0 %1924
    %1926 = vrot.lane.b32.xlu0 %v1656, 16
    %v1927 = vpop.permute.xlu0 %1926
    %1928 = vrot.lane.b32.xlu0 %v1657, 16
    %v1929 = vpop.permute.xlu0 %1928
    %1930 = vrot.lane.b32.xlu0 %v1658, 16
    %v1931 = vpop.permute.xlu0 %1930
    %1932 = vrot.lane.b32.xlu0 %v1659, 16
    %v1933 = vpop.permute.xlu0 %1932
    %1934 = vrot.lane.b32.xlu0 %v1660, 16
    %v1935 = vpop.permute.xlu0 %1934
    %1936 = vrot.lane.b32.xlu0 %v1661, 16
    %v1937 = vpop.permute.xlu0 %1936
    %1938 = vrot.lane.b32.xlu0 %v1662, 16
    %v1939 = vpop.permute.xlu0 %1938
    %1940 = vrot.lane.b32.xlu0 %v1663, 16
    %v1941 = vpop.permute.xlu0 %1940
    %1942 = vrot.lane.b32.xlu0 %v1664, 16
    %v1943 = vpop.permute.xlu0 %1942
    %1944 = vrot.lane.b32.xlu0 %v1665, 16
    %v1945 = vpop.permute.xlu0 %1944
    %1946 = vrot.lane.b32.xlu0 %v1666, 16
    %v1947 = vpop.permute.xlu0 %1946
    %1948 = vrot.lane.b32.xlu0 %v1667, 16
    %v1949 = vpop.permute.xlu0 %1948
    %1950 = vrot.lane.b32.xlu0 %v1668, 16
    %v1951 = vpop.permute.xlu0 %1950
    %1952 = vrot.lane.b32.xlu0 %v1669, 16
    %v1953 = vpop.permute.xlu0 %1952
    %1954 = vrot.lane.b32.xlu0 %v1670, 16
    %v1955 = vpop.permute.xlu0 %1954
    %1956 = vrot.lane.b32.xlu0 %v1671, 16
    %v1957 = vpop.permute.xlu0 %1956
    %1958 = vrot.lane.b32.xlu0 %v1672, 16
    %v1959 = vpop.permute.xlu0 %1958
    %1960 = vrot.lane.b32.xlu0 %v1673, 16
    %v1961 = vpop.permute.xlu0 %1960
    %1962 = vrot.lane.b32.xlu0 %v1674, 16
    %v1963 = vpop.permute.xlu0 %1962
    %1964 = vrot.lane.b32.xlu0 %v1675, 16
    %v1965 = vpop.permute.xlu0 %1964
    %1966 = vrot.lane.b32.xlu0 %v1676, 16
    %v1967 = vpop.permute.xlu0 %1966
    %1968 = vrot.lane.b32.xlu0 %v1677, 16
    %v1969 = vpop.permute.xlu0 %1968
    %1970 = vrot.lane.b32.xlu0 %v1678, 16
    %v1971 = vpop.permute.xlu0 %1970
    %1972 = vrot.lane.b32.xlu0 %v1679, 16
    %v1973 = vpop.permute.xlu0 %1972
    %1974 = vrot.lane.b32.xlu0 %v1680, 16
    %v1975 = vpop.permute.xlu0 %1974
    %1976 = vrot.lane.b32.xlu0 %v1681, 16
    %v1977 = vpop.permute.xlu0 %1976
    %1978 = vrot.lane.b32.xlu0 %v1682, 16
    %v1979 = vpop.permute.xlu0 %1978
    %1980 = vrot.lane.b32.xlu0 %v1683, 16
    %v1981 = vpop.permute.xlu0 %1980
    %1982 = vrot.lane.b32.xlu0 %v1684, 16
    %v1983 = vpop.permute.xlu0 %1982
    %1984 = vrot.lane.b32.xlu0 %v1685, 16
    %v1985 = vpop.permute.xlu0 %1984
    %1986 = vrot.lane.b32.xlu0 %v1686, 16
    %v1987 = vpop.permute.xlu0 %1986
    %1988 = vrot.lane.b32.xlu0 %v1687, 16
    %v1989 = vpop.permute.xlu0 %1988
    %1990 = vrot.lane.b32.xlu0 %v1688, 16
    %v1991 = vpop.permute.xlu0 %1990
    %1992 = vrot.lane.b32.xlu0 %v1689, 16
    %v1993 = vpop.permute.xlu0 %1992
    %1994 = vrot.lane.b32.xlu0 %v1690, 16
    %v1995 = vpop.permute.xlu0 %1994
    %1996 = vrot.lane.b32.xlu0 %v1691, 16
    %v1997 = vpop.permute.xlu0 %1996
    %1998 = vrot.lane.b32.xlu0 %v1692, 16
    %v1999 = vpop.permute.xlu0 %1998
    %2000 = vrot.lane.b32.xlu0 %v1693, 16
    %v2001 = vpop.permute.xlu0 %2000
    %2002 = vrot.lane.b32.xlu0 %v1694, 16
    %v2003 = vpop.permute.xlu0 %2002
    %2004 = vrot.lane.b32.xlu0 %v1695, 16
    %v2005 = vpop.permute.xlu0 %2004
    %2006 = vrot.lane.b32.xlu0 %v1696, 16
    %v2007 = vpop.permute.xlu0 %2006
    %2008 = vrot.lane.b32.xlu0 %v1697, 16
    %v2009 = vpop.permute.xlu0 %2008
    %2010 = vrot.lane.b32.xlu0 %v1698, 16
    %v2011 = vpop.permute.xlu0 %2010
    %2012 = vrot.lane.b32.xlu0 %v1699, 16
    %v2013 = vpop.permute.xlu0 %2012
    %2014 = vrot.lane.b32.xlu0 %v1700, 16
    %v2015 = vpop.permute.xlu0 %2014
    %2016 = vrot.lane.b32.xlu0 %v1701, 16
    %v2017 = vpop.permute.xlu0 %2016
    %2018 = vrot.lane.b32.xlu0 %v1702, 16
    %v2019 = vpop.permute.xlu0 %2018
    %2020 = vrot.lane.b32.xlu0 %v1703, 16
    %v2021 = vpop.permute.xlu0 %2020
    %2022 = vrot.lane.b32.xlu0 %v1704, 16
    %v2023 = vpop.permute.xlu0 %2022
    %2024 = vrot.lane.b32.xlu0 %v1705, 16
    %v2025 = vpop.permute.xlu0 %2024
    %2026 = vrot.lane.b32.xlu0 %v1706, 16
    %v2027 = vpop.permute.xlu0 %2026
    %2028 = vrot.lane.b32.xlu0 %v1707, 16
    %v2029 = vpop.permute.xlu0 %2028
    %2030 = vrot.lane.b32.xlu0 %v1708, 16
    %v2031 = vpop.permute.xlu0 %2030
    %2032 = vrot.lane.b32.xlu0 %v1709, 16
    %v2033 = vpop.permute.xlu0 %2032
    %2034 = vrot.lane.b32.xlu0 %v1710, 16
    %v2035 = vpop.permute.xlu0 %2034
    %2036 = vrot.lane.b32.xlu0 %v1711, 16
    %v2037 = vpop.permute.xlu0 %2036
    %2038 = vrot.lane.b32.xlu0 %v1712, 16
    %v2039 = vpop.permute.xlu0 %2038
    %2040 = vrot.lane.b32.xlu0 %v1713, 16
    %v2041 = vpop.permute.xlu0 %2040
    %2042 = vrot.lane.b32.xlu0 %v1714, 16
    %v2043 = vpop.permute.xlu0 %2042
    %2044 = vrot.lane.b32.xlu0 %v1715, 16
    %v2045 = vpop.permute.xlu0 %2044
    %2046 = vrot.lane.b32.xlu0 %v1716, 16
    %v2047 = vpop.permute.xlu0 %2046
    %2048 = vrot.lane.b32.xlu0 %v1717, 16
    %v2049 = vpop.permute.xlu0 %2048
    %2050 = vrot.lane.b32.xlu0 %v1718, 16
    %v2051 = vpop.permute.xlu0 %2050
    %2052 = vrot.lane.b32.xlu0 %v1719, 16
    %v2053 = vpop.permute.xlu0 %2052
    %2054 = vrot.lane.b32.xlu0 %v1720, 16
    %v2055 = vpop.permute.xlu0 %2054
    %2056 = vrot.lane.b32.xlu0 %v1721, 16
    %v2057 = vpop.permute.xlu0 %2056
    %2058 = vrot.lane.b32.xlu0 %v1722, 16
    %v2059 = vpop.permute.xlu0 %2058
    %2060 = vrot.lane.b32.xlu0 %v1723, 16
    %v2061 = vpop.permute.xlu0 %2060
    %2062 = vrot.lane.b32.xlu0 %v1724, 16
    %v2063 = vpop.permute.xlu0 %2062
    %2064 = vrot.lane.b32.xlu0 %v1725, 16
    %v2065 = vpop.permute.xlu0 %2064
    %2066 = vrot.lane.b32.xlu0 %v1726, 16
    %v2067 = vpop.permute.xlu0 %2066
    %2068 = vrot.lane.b32.xlu0 %v1727, 16
    %v2069 = vpop.permute.xlu0 %2068
    %2070 = vrot.lane.b32.xlu0 %v1728, 16
    %v2071 = vpop.permute.xlu0 %2070
    %2072 = vrot.lane.b32.xlu0 %v1729, 16
    %v2073 = vpop.permute.xlu0 %2072
    %2074 = vrot.lane.b32.xlu0 %v1730, 16
    %v2075 = vpop.permute.xlu0 %2074
    %2076 = vrot.lane.b32.xlu0 %v1731, 16
    %v2077 = vpop.permute.xlu0 %2076
    %2078 = vrot.lane.b32.xlu0 %v1732, 16
    %v2079 = vpop.permute.xlu0 %2078
    %2080 = vrot.lane.b32.xlu0 %v1733, 16
    %v2081 = vpop.permute.xlu0 %2080
    %2082 = vrot.lane.b32.xlu0 %v1734, 16
    %v2083 = vpop.permute.xlu0 %2082
    %2084 = vrot.lane.b32.xlu0 %v1735, 16
    %v2085 = vpop.permute.xlu0 %2084
    %2086 = vrot.lane.b32.xlu0 %v1736, 16
    %v2087 = vpop.permute.xlu0 %2086
    %2088 = vrot.lane.b32.xlu0 %v1737, 16
    %v2089 = vpop.permute.xlu0 %2088
    %2090 = vrot.lane.b32.xlu0 %v1738, 16
    %v2091 = vpop.permute.xlu0 %2090
    %2092 = vrot.lane.b32.xlu0 %v1739, 16
    %v2093 = vpop.permute.xlu0 %2092
    %2094 = vrot.lane.b32.xlu0 %v1740, 16
    %v2095 = vpop.permute.xlu0 %2094
    %2096 = vrot.lane.b32.xlu0 %v1741, 16
    %v2097 = vpop.permute.xlu0 %2096
    %2098 = vrot.lane.b32.xlu0 %v1742, 16
    %v2099 = vpop.permute.xlu0 %2098
    %2100 = vrot.lane.b32.xlu0 %v1743, 16
    %v2101 = vpop.permute.xlu0 %2100
    %2102 = vrot.lane.b32.xlu0 %v1744, 16
    %v2103 = vpop.permute.xlu0 %2102
    %2104 = vrot.lane.b32.xlu0 %v1745, 16
    %v2105 = vpop.permute.xlu0 %2104
    %2106 = vrot.lane.b32.xlu0 %v1746, 16
    %v2107 = vpop.permute.xlu0 %2106
    %2108 = vrot.lane.b32.xlu0 %v1747, 16
    %v2109 = vpop.permute.xlu0 %2108
    %2110 = vrot.lane.b32.xlu0 %v1748, 16
    %v2111 = vpop.permute.xlu0 %2110
    %2112 = vrot.lane.b32.xlu0 %v1749, 16
    %v2113 = vpop.permute.xlu0 %2112
    %2114 = vrot.lane.b32.xlu0 %v1750, 16
    %v2115 = vpop.permute.xlu0 %2114
    %2116 = vrot.lane.b32.xlu0 %v1751, 16
    %v2117 = vpop.permute.xlu0 %2116
    %2118 = vrot.lane.b32.xlu0 %v1752, 16
    %v2119 = vpop.permute.xlu0 %2118
    %2120 = vrot.lane.b32.xlu0 %v1753, 16
    %v2121 = vpop.permute.xlu0 %2120
    %2122 = vrot.lane.b32.xlu0 %v1754, 16
    %v2123 = vpop.permute.xlu0 %2122
    %2124 = vrot.lane.b32.xlu0 %v1755, 16
    %v2125 = vpop.permute.xlu0 %2124
    %2126 = vrot.lane.b32.xlu0 %v1756, 16
    %v2127 = vpop.permute.xlu0 %2126
    %2128 = vrot.lane.b32.xlu0 %v1757, 16
    %v2129 = vpop.permute.xlu0 %2128
    %2130 = vrot.lane.b32.xlu0 %v1758, 16
    %v2131 = vpop.permute.xlu0 %2130
    %2132 = vrot.lane.b32.xlu0 %v1759, 16
    %v2133 = vpop.permute.xlu0 %2132
    %2134 = vrot.lane.b32.xlu0 %v1760, 16
    %v2135 = vpop.permute.xlu0 %2134
    %2136 = vrot.lane.b32.xlu0 %v1761, 16
    %v2137 = vpop.permute.xlu0 %2136
    %2138 = vrot.lane.b32.xlu0 %v1762, 16
    %v2139 = vpop.permute.xlu0 %2138
    %2140 = vrot.lane.b32.xlu0 %v1763, 16
    %v2141 = vpop.permute.xlu0 %2140
    %2142 = vrot.lane.b32.xlu0 %v1764, 16
    %v2143 = vpop.permute.xlu0 %2142
    %2144 = vrot.lane.b32.xlu0 %v1765, 16
    %v2145 = vpop.permute.xlu0 %2144
    %2146 = vrot.lane.b32.xlu0 %v1766, 16
    %v2147 = vpop.permute.xlu0 %2146
    %2148 = vrot.lane.b32.xlu0 %v1767, 16
    %v2149 = vpop.permute.xlu0 %2148
    %2150 = vrot.lane.b32.xlu0 %v1768, 16
    %v2151 = vpop.permute.xlu0 %2150
    %2152 = vrot.lane.b32.xlu0 %v1769, 16
    %v2153 = vpop.permute.xlu0 %2152
    %2282 = vrot.lane.b32.xlu0 %v1005, 32
    %v2283 = vpop.permute.xlu0 %2282
    %2284 = vrot.lane.b32.xlu0 %v1009, 32
    %v2285 = vpop.permute.xlu0 %2284
    %2286 = vrot.lane.b32.xlu0 %v1013, 32
    %v2287 = vpop.permute.xlu0 %2286
    %2288 = vrot.lane.b32.xlu0 %v1017, 32
    %v2289 = vpop.permute.xlu0 %2288
    %2290 = vrot.lane.b32.xlu0 %v1021, 32
    %v2291 = vpop.permute.xlu0 %2290
    %2292 = vrot.lane.b32.xlu0 %v1025, 32
    %v2293 = vpop.permute.xlu0 %2292
    %2294 = vrot.lane.b32.xlu0 %v1029, 32
    %v2295 = vpop.permute.xlu0 %2294
    %2296 = vrot.lane.b32.xlu0 %v1033, 32
    %v2297 = vpop.permute.xlu0 %2296
    %2298 = vrot.lane.b32.xlu0 %v1037, 32
    %v2299 = vpop.permute.xlu0 %2298
    %2300 = vrot.lane.b32.xlu0 %v1041, 32
    %v2301 = vpop.permute.xlu0 %2300
    %2302 = vrot.lane.b32.xlu0 %v1045, 32
    %v2303 = vpop.permute.xlu0 %2302
    %2304 = vrot.lane.b32.xlu0 %v1049, 32
    %v2305 = vpop.permute.xlu0 %2304
    %2306 = vrot.lane.b32.xlu0 %v1053, 32
    %v2307 = vpop.permute.xlu0 %2306
    %2308 = vrot.lane.b32.xlu0 %v1057, 32
    %v2309 = vpop.permute.xlu0 %2308
    %2310 = vrot.lane.b32.xlu0 %v1061, 32
    %v2311 = vpop.permute.xlu0 %2310
    %2312 = vrot.lane.b32.xlu0 %v1065, 32
    %v2313 = vpop.permute.xlu0 %2312
    %2314 = vrot.lane.b32.xlu0 %v1069, 32
    %v2315 = vpop.permute.xlu0 %2314
    %2316 = vrot.lane.b32.xlu0 %v1073, 32
    %v2317 = vpop.permute.xlu0 %2316
    %2318 = vrot.lane.b32.xlu0 %v1077, 32
    %v2319 = vpop.permute.xlu0 %2318
    %2320 = vrot.lane.b32.xlu0 %v1081, 32
    %v2321 = vpop.permute.xlu0 %2320
    %2322 = vrot.lane.b32.xlu0 %v1085, 32
    %v2323 = vpop.permute.xlu0 %2322
    %2324 = vrot.lane.b32.xlu0 %v1089, 32
    %v2325 = vpop.permute.xlu0 %2324
    %2326 = vrot.lane.b32.xlu0 %v1093, 32
    %v2327 = vpop.permute.xlu0 %2326
    %2328 = vrot.lane.b32.xlu0 %v1097, 32
    %v2329 = vpop.permute.xlu0 %2328
    %2330 = vrot.lane.b32.xlu0 %v1101, 32
    %v2331 = vpop.permute.xlu0 %2330
    %2332 = vrot.lane.b32.xlu0 %v1105, 32
    %v2333 = vpop.permute.xlu0 %2332
    %2334 = vrot.lane.b32.xlu0 %v1109, 32
    %v2335 = vpop.permute.xlu0 %2334
    %2336 = vrot.lane.b32.xlu0 %v1113, 32
    %v2337 = vpop.permute.xlu0 %2336
    %2338 = vrot.lane.b32.xlu0 %v1117, 32
    %v2339 = vpop.permute.xlu0 %2338
    %2340 = vrot.lane.b32.xlu0 %v1121, 32
    %v2341 = vpop.permute.xlu0 %2340
    %2342 = vrot.lane.b32.xlu0 %v1125, 32
    %v2343 = vpop.permute.xlu0 %2342
    %2344 = vrot.lane.b32.xlu0 %v1129, 32
    %v2345 = vpop.permute.xlu0 %2344
    %2346 = vrot.lane.b32.xlu0 %v1133, 32
    %v2347 = vpop.permute.xlu0 %2346
    %2348 = vrot.lane.b32.xlu0 %v1137, 32
    %v2349 = vpop.permute.xlu0 %2348
    %2350 = vrot.lane.b32.xlu0 %v1141, 32
    %v2351 = vpop.permute.xlu0 %2350
    %2352 = vrot.lane.b32.xlu0 %v1145, 32
    %v2353 = vpop.permute.xlu0 %2352
    %2354 = vrot.lane.b32.xlu0 %v1149, 32
    %v2355 = vpop.permute.xlu0 %2354
    %2356 = vrot.lane.b32.xlu0 %v1153, 32
    %v2357 = vpop.permute.xlu0 %2356
    %2358 = vrot.lane.b32.xlu0 %v1157, 32
    %v2359 = vpop.permute.xlu0 %2358
    %2360 = vrot.lane.b32.xlu0 %v1161, 32
    %v2361 = vpop.permute.xlu0 %2360
    %2362 = vrot.lane.b32.xlu0 %v1165, 32
    %v2363 = vpop.permute.xlu0 %2362
    %2364 = vrot.lane.b32.xlu0 %v1169, 32
    %v2365 = vpop.permute.xlu0 %2364
    %2366 = vrot.lane.b32.xlu0 %v1173, 32
    %v2367 = vpop.permute.xlu0 %2366
    %2368 = vrot.lane.b32.xlu0 %v1177, 32
    %v2369 = vpop.permute.xlu0 %2368
    %2370 = vrot.lane.b32.xlu0 %v1181, 32
    %v2371 = vpop.permute.xlu0 %2370
    %2372 = vrot.lane.b32.xlu0 %v1185, 32
    %v2373 = vpop.permute.xlu0 %2372
    %2374 = vrot.lane.b32.xlu0 %v1189, 32
    %v2375 = vpop.permute.xlu0 %2374
    %2376 = vrot.lane.b32.xlu0 %v1193, 32
    %v2377 = vpop.permute.xlu0 %2376
    %2378 = vrot.lane.b32.xlu0 %v1197, 32
    %v2379 = vpop.permute.xlu0 %2378
    %2380 = vrot.lane.b32.xlu0 %v1201, 32
    %v2381 = vpop.permute.xlu0 %2380
    %2382 = vrot.lane.b32.xlu0 %v1205, 32
    %v2383 = vpop.permute.xlu0 %2382
    %2384 = vrot.lane.b32.xlu0 %v1209, 32
    %v2385 = vpop.permute.xlu0 %2384
    %2386 = vrot.lane.b32.xlu0 %v1213, 32
    %v2387 = vpop.permute.xlu0 %2386
    %2388 = vrot.lane.b32.xlu0 %v1217, 32
    %v2389 = vpop.permute.xlu0 %2388
    %2390 = vrot.lane.b32.xlu0 %v1221, 32
    %v2391 = vpop.permute.xlu0 %2390
    %2392 = vrot.lane.b32.xlu0 %v1225, 32
    %v2393 = vpop.permute.xlu0 %2392
    %2394 = vrot.lane.b32.xlu0 %v1229, 32
    %v2395 = vpop.permute.xlu0 %2394
    %2396 = vrot.lane.b32.xlu0 %v1233, 32
    %v2397 = vpop.permute.xlu0 %2396
    %2398 = vrot.lane.b32.xlu0 %v1237, 32
    %v2399 = vpop.permute.xlu0 %2398
    %2400 = vrot.lane.b32.xlu0 %v1241, 32
    %v2401 = vpop.permute.xlu0 %2400
    %2402 = vrot.lane.b32.xlu0 %v1245, 32
    %v2403 = vpop.permute.xlu0 %2402
    %2404 = vrot.lane.b32.xlu0 %v1249, 32
    %v2405 = vpop.permute.xlu0 %2404
    %2406 = vrot.lane.b32.xlu0 %v1253, 32
    %v2407 = vpop.permute.xlu0 %2406
    %2408 = vrot.lane.b32.xlu0 %v1257, 32
    %v2409 = vpop.permute.xlu0 %2408
    %2410 = vrot.lane.b32.xlu0 %v1261, 32
    %v2411 = vpop.permute.xlu0 %2410
    %2412 = vrot.lane.b32.xlu0 %v1265, 32
    %v2413 = vpop.permute.xlu0 %2412
    %2414 = vrot.lane.b32.xlu0 %v1269, 32
    %v2415 = vpop.permute.xlu0 %2414
    %2416 = vrot.lane.b32.xlu0 %v1273, 32
    %v2417 = vpop.permute.xlu0 %2416
    %2418 = vrot.lane.b32.xlu0 %v1277, 32
    %v2419 = vpop.permute.xlu0 %2418
    %2420 = vrot.lane.b32.xlu0 %v1281, 32
    %v2421 = vpop.permute.xlu0 %2420
    %2422 = vrot.lane.b32.xlu0 %v1285, 32
    %v2423 = vpop.permute.xlu0 %2422
    %2424 = vrot.lane.b32.xlu0 %v1289, 32
    %v2425 = vpop.permute.xlu0 %2424
    %2426 = vrot.lane.b32.xlu0 %v1293, 32
    %v2427 = vpop.permute.xlu0 %2426
    %2428 = vrot.lane.b32.xlu0 %v1297, 32
    %v2429 = vpop.permute.xlu0 %2428
    %2430 = vrot.lane.b32.xlu0 %v1301, 32
    %v2431 = vpop.permute.xlu0 %2430
    %2432 = vrot.lane.b32.xlu0 %v1305, 32
    %v2433 = vpop.permute.xlu0 %2432
    %2434 = vrot.lane.b32.xlu0 %v1309, 32
    %v2435 = vpop.permute.xlu0 %2434
    %2436 = vrot.lane.b32.xlu0 %v1313, 32
    %v2437 = vpop.permute.xlu0 %2436
    %2438 = vrot.lane.b32.xlu0 %v1317, 32
    %v2439 = vpop.permute.xlu0 %2438
    %2440 = vrot.lane.b32.xlu0 %v1321, 32
    %v2441 = vpop.permute.xlu0 %2440
    %2442 = vrot.lane.b32.xlu0 %v1325, 32
    %v2443 = vpop.permute.xlu0 %2442
    %2444 = vrot.lane.b32.xlu0 %v1329, 32
    %v2445 = vpop.permute.xlu0 %2444
    %2446 = vrot.lane.b32.xlu0 %v1333, 32
    %v2447 = vpop.permute.xlu0 %2446
    %2448 = vrot.lane.b32.xlu0 %v1337, 32
    %v2449 = vpop.permute.xlu0 %2448
    %2450 = vrot.lane.b32.xlu0 %v1341, 32
    %v2451 = vpop.permute.xlu0 %2450
    %2452 = vrot.lane.b32.xlu0 %v1345, 32
    %v2453 = vpop.permute.xlu0 %2452
    %2454 = vrot.lane.b32.xlu0 %v1349, 32
    %v2455 = vpop.permute.xlu0 %2454
    %2456 = vrot.lane.b32.xlu0 %v1353, 32
    %v2457 = vpop.permute.xlu0 %2456
    %2458 = vrot.lane.b32.xlu0 %v1357, 32
    %v2459 = vpop.permute.xlu0 %2458
    %2460 = vrot.lane.b32.xlu0 %v1361, 32
    %v2461 = vpop.permute.xlu0 %2460
    %2462 = vrot.lane.b32.xlu0 %v1365, 32
    %v2463 = vpop.permute.xlu0 %2462
    %2464 = vrot.lane.b32.xlu0 %v1369, 32
    %v2465 = vpop.permute.xlu0 %2464
    %2466 = vrot.lane.b32.xlu0 %v1373, 32
    %v2467 = vpop.permute.xlu0 %2466
    %2468 = vrot.lane.b32.xlu0 %v1377, 32
    %v2469 = vpop.permute.xlu0 %2468
    %2470 = vrot.lane.b32.xlu0 %v1381, 32
    %v2471 = vpop.permute.xlu0 %2470
    %2472 = vrot.lane.b32.xlu0 %v1385, 32
    %v2473 = vpop.permute.xlu0 %2472
    %2474 = vrot.lane.b32.xlu0 %v1389, 32
    %v2475 = vpop.permute.xlu0 %2474
    %2476 = vrot.lane.b32.xlu0 %v1393, 32
    %v2477 = vpop.permute.xlu0 %2476
    %2478 = vrot.lane.b32.xlu0 %v1397, 32
    %v2479 = vpop.permute.xlu0 %2478
    %2480 = vrot.lane.b32.xlu0 %v1401, 32
    %v2481 = vpop.permute.xlu0 %2480
    %2482 = vrot.lane.b32.xlu0 %v1405, 32
    %v2483 = vpop.permute.xlu0 %2482
    %2484 = vrot.lane.b32.xlu0 %v1409, 32
    %v2485 = vpop.permute.xlu0 %2484
    %2486 = vrot.lane.b32.xlu0 %v1413, 32
    %v2487 = vpop.permute.xlu0 %2486
    %2488 = vrot.lane.b32.xlu0 %v1417, 32
    %v2489 = vpop.permute.xlu0 %2488
    %2490 = vrot.lane.b32.xlu0 %v1421, 32
    %v2491 = vpop.permute.xlu0 %2490
    %2492 = vrot.lane.b32.xlu0 %v1425, 32
    %v2493 = vpop.permute.xlu0 %2492
    %2494 = vrot.lane.b32.xlu0 %v1429, 32
    %v2495 = vpop.permute.xlu0 %2494
    %2496 = vrot.lane.b32.xlu0 %v1433, 32
    %v2497 = vpop.permute.xlu0 %2496
    %2498 = vrot.lane.b32.xlu0 %v1437, 32
    %v2499 = vpop.permute.xlu0 %2498
    %2500 = vrot.lane.b32.xlu0 %v1441, 32
    %v2501 = vpop.permute.xlu0 %2500
    %2502 = vrot.lane.b32.xlu0 %v1445, 32
    %v2503 = vpop.permute.xlu0 %2502
    %2504 = vrot.lane.b32.xlu0 %v1449, 32
    %v2505 = vpop.permute.xlu0 %2504
    %2506 = vrot.lane.b32.xlu0 %v1453, 32
    %v2507 = vpop.permute.xlu0 %2506
    %2508 = vrot.lane.b32.xlu0 %v1457, 32
    %v2509 = vpop.permute.xlu0 %2508
    %2510 = vrot.lane.b32.xlu0 %v1461, 32
    %v2511 = vpop.permute.xlu0 %2510
    %2512 = vrot.lane.b32.xlu0 %v1465, 32
    %v2513 = vpop.permute.xlu0 %2512
    %2514 = vrot.lane.b32.xlu0 %v1469, 32
    %v2515 = vpop.permute.xlu0 %2514
    %2516 = vrot.lane.b32.xlu0 %v1473, 32
    %v2517 = vpop.permute.xlu0 %2516
    %2518 = vrot.lane.b32.xlu0 %v1477, 32
    %v2519 = vpop.permute.xlu0 %2518
    %2520 = vrot.lane.b32.xlu0 %v1481, 32
    %v2521 = vpop.permute.xlu0 %2520
    %2522 = vrot.lane.b32.xlu0 %v1485, 32
    %v2523 = vpop.permute.xlu0 %2522
    %2524 = vrot.lane.b32.xlu0 %v1489, 32
    %v2525 = vpop.permute.xlu0 %2524
    %2526 = vrot.lane.b32.xlu0 %v1493, 32
    %v2527 = vpop.permute.xlu0 %2526
    %2528 = vrot.lane.b32.xlu0 %v1497, 32
    %v2529 = vpop.permute.xlu0 %2528
    %2530 = vrot.lane.b32.xlu0 %v1501, 32
    %v2531 = vpop.permute.xlu0 %2530
    %2532 = vrot.lane.b32.xlu0 %v1505, 32
    %v2533 = vpop.permute.xlu0 %2532
    %2534 = vrot.lane.b32.xlu0 %v1509, 32
    %v2535 = vpop.permute.xlu0 %2534
    %2536 = vrot.lane.b32.xlu0 %v1513, 32
    %v2537 = vpop.permute.xlu0 %2536
    %vm2666 = vcmask 130048
    %v2667 = vsel %vm2666, %v74, %v1899
    %v2668 = vsel %vm2666, %v75, %v1901
    %v2669 = vsel %vm2666, %v76, %v1903
    %v2670 = vsel %vm2666, %v77, %v1905
    %v2671 = vsel %vm2666, %v78, %v1907
    %v2672 = vsel %vm2666, %v79, %v1909
    %v2673 = vsel %vm2666, %v80, %v1911
    %v2674 = vsel %vm2666, %v81, %v1913
    %v2675 = vsel %vm2666, %v82, %v1915
    %v2676 = vsel %vm2666, %v83, %v1917
    %v2677 = vsel %vm2666, %v84, %v1919
    %v2678 = vsel %vm2666, %v85, %v1921
    %v2679 = vsel %vm2666, %v86, %v1923
    %v2680 = vsel %vm2666, %v87, %v1925
    %v2681 = vsel %vm2666, %v88, %v1927
    %v2682 = vsel %vm2666, %v89, %v1929
    %v2683 = vsel %vm2666, %v90, %v1931
    %v2684 = vsel %vm2666, %v91, %v1933
    %v2685 = vsel %vm2666, %v92, %v1935
    %v2686 = vsel %vm2666, %v93, %v1937
    %v2687 = vsel %vm2666, %v94, %v1939
    %v2688 = vsel %vm2666, %v95, %v1941
    %v2689 = vsel %vm2666, %v96, %v1943
    %v2690 = vsel %vm2666, %v97, %v1945
    %v2691 = vsel %vm2666, %v98, %v1947
    %v2692 = vsel %vm2666, %v99, %v1949
    %v2693 = vsel %vm2666, %v100, %v1951
    %v2694 = vsel %vm2666, %v101, %v1953
    %v2695 = vsel %vm2666, %v102, %v1955
    %v2696 = vsel %vm2666, %v103, %v1957
    %v2697 = vsel %vm2666, %v104, %v1959
    %v2698 = vsel %vm2666, %v105, %v1961
    %v2699 = vsel %vm2666, %v106, %v1963
    %v2700 = vsel %vm2666, %v107, %v1965
    %v2701 = vsel %vm2666, %v108, %v1967
    %v2702 = vsel %vm2666, %v109, %v1969
    %v2703 = vsel %vm2666, %v110, %v1971
    %v2704 = vsel %vm2666, %v111, %v1973
    %v2705 = vsel %vm2666, %v112, %v1975
    %v2706 = vsel %vm2666, %v113, %v1977
    %v2707 = vsel %vm2666, %v114, %v1979
    %v2708 = vsel %vm2666, %v115, %v1981
    %v2709 = vsel %vm2666, %v116, %v1983
    %v2710 = vsel %vm2666, %v117, %v1985
    %v2711 = vsel %vm2666, %v118, %v1987
    %v2712 = vsel %vm2666, %v119, %v1989
    %v2713 = vsel %vm2666, %v120, %v1991
    %v2714 = vsel %vm2666, %v121, %v1993
    %v2715 = vsel %vm2666, %v122, %v1995
    %v2716 = vsel %vm2666, %v123, %v1997
    %v2717 = vsel %vm2666, %v124, %v1999
    %v2718 = vsel %vm2666, %v125, %v2001
    %v2719 = vsel %vm2666, %v126, %v2003
    %v2720 = vsel %vm2666, %v127, %v2005
    %v2721 = vsel %vm2666, %v128, %v2007
    %v2722 = vsel %vm2666, %v129, %v2009
    %v2723 = vsel %vm2666, %v130, %v2011
    %v2724 = vsel %vm2666, %v131, %v2013
    %v2725 = vsel %vm2666, %v132, %v2015
    %v2726 = vsel %vm2666, %v133, %v2017
    %v2727 = vsel %vm2666, %v134, %v2019
    %v2728 = vsel %vm2666, %v135, %v2021
    %v2729 = vsel %vm2666, %v136, %v2023
    %v2730 = vsel %vm2666, %v137, %v2025
    %v2731 = vsel %vm2666, %v138, %v2027
    %v2732 = vsel %vm2666, %v139, %v2029
    %v2733 = vsel %vm2666, %v140, %v2031
    %v2734 = vsel %vm2666, %v141, %v2033
    %v2735 = vsel %vm2666, %v142, %v2035
    %v2736 = vsel %vm2666, %v143, %v2037
    %v2737 = vsel %vm2666, %v144, %v2039
    %v2738 = vsel %vm2666, %v145, %v2041
    %v2739 = vsel %vm2666, %v146, %v2043
    %v2740 = vsel %vm2666, %v147, %v2045
    %v2741 = vsel %vm2666, %v148, %v2047
    %v2742 = vsel %vm2666, %v149, %v2049
    %v2743 = vsel %vm2666, %v150, %v2051
    %v2744 = vsel %vm2666, %v151, %v2053
    %v2745 = vsel %vm2666, %v152, %v2055
    %v2746 = vsel %vm2666, %v153, %v2057
    %v2747 = vsel %vm2666, %v154, %v2059
    %v2748 = vsel %vm2666, %v155, %v2061
    %v2749 = vsel %vm2666, %v156, %v2063
    %v2750 = vsel %vm2666, %v157, %v2065
    %v2751 = vsel %vm2666, %v158, %v2067
    %v2752 = vsel %vm2666, %v159, %v2069
    %v2753 = vsel %vm2666, %v160, %v2071
    %v2754 = vsel %vm2666, %v161, %v2073
    %v2755 = vsel %vm2666, %v162, %v2075
    %v2756 = vsel %vm2666, %v163, %v2077
    %v2757 = vsel %vm2666, %v164, %v2079
    %v2758 = vsel %vm2666, %v165, %v2081
    %v2759 = vsel %vm2666, %v166, %v2083
    %v2760 = vsel %vm2666, %v167, %v2085
    %v2761 = vsel %vm2666, %v168, %v2087
    %v2762 = vsel %vm2666, %v169, %v2089
    %v2763 = vsel %vm2666, %v170, %v2091
    %v2764 = vsel %vm2666, %v171, %v2093
    %v2765 = vsel %vm2666, %v172, %v2095
    %v2766 = vsel %vm2666, %v173, %v2097
    %v2767 = vsel %vm2666, %v174, %v2099
    %v2768 = vsel %vm2666, %v175, %v2101
    %v2769 = vsel %vm2666, %v176, %v2103
    %v2770 = vsel %vm2666, %v177, %v2105
    %v2771 = vsel %vm2666, %v178, %v2107
    %v2772 = vsel %vm2666, %v179, %v2109
    %v2773 = vsel %vm2666, %v180, %v2111
    %v2774 = vsel %vm2666, %v181, %v2113
    %v2775 = vsel %vm2666, %v182, %v2115
    %v2776 = vsel %vm2666, %v183, %v2117
    %v2777 = vsel %vm2666, %v184, %v2119
    %v2778 = vsel %vm2666, %v185, %v2121
    %v2779 = vsel %vm2666, %v186, %v2123
    %v2780 = vsel %vm2666, %v187, %v2125
    %v2781 = vsel %vm2666, %v188, %v2127
    %v2782 = vsel %vm2666, %v189, %v2129
    %v2783 = vsel %vm2666, %v190, %v2131
    %v2784 = vsel %vm2666, %v191, %v2133
    %v2785 = vsel %vm2666, %v192, %v2135
    %v2786 = vsel %vm2666, %v193, %v2137
    %v2787 = vsel %vm2666, %v194, %v2139
    %v2788 = vsel %vm2666, %v195, %v2141
    %v2789 = vsel %vm2666, %v196, %v2143
    %v2790 = vsel %vm2666, %v197, %v2145
    %v2791 = vsel %vm2666, %v198, %v2147
    %v2792 = vsel %vm2666, %v199, %v2149
    %v2793 = vsel %vm2666, %v200, %v2151
    %v2794 = vsel %vm2666, %v201, %v2153
    %vm2795 = vcmask 261120
    %v2796 = vsel %vm2795, %v2667, %v2283
    %v2797 = vsel %vm2795, %v2668, %v2285
    %v2798 = vsel %vm2795, %v2669, %v2287
    %v2799 = vsel %vm2795, %v2670, %v2289
    %v2800 = vsel %vm2795, %v2671, %v2291
    %v2801 = vsel %vm2795, %v2672, %v2293
    %v2802 = vsel %vm2795, %v2673, %v2295
    %v2803 = vsel %vm2795, %v2674, %v2297
    %v2804 = vsel %vm2795, %v2675, %v2299
    %v2805 = vsel %vm2795, %v2676, %v2301
    %v2806 = vsel %vm2795, %v2677, %v2303
    %v2807 = vsel %vm2795, %v2678, %v2305
    %v2808 = vsel %vm2795, %v2679, %v2307
    %v2809 = vsel %vm2795, %v2680, %v2309
    %v2810 = vsel %vm2795, %v2681, %v2311
    %v2811 = vsel %vm2795, %v2682, %v2313
    %v2812 = vsel %vm2795, %v2683, %v2315
    %v2813 = vsel %vm2795, %v2684, %v2317
    %v2814 = vsel %vm2795, %v2685, %v2319
    %v2815 = vsel %vm2795, %v2686, %v2321
    %v2816 = vsel %vm2795, %v2687, %v2323
    %v2817 = vsel %vm2795, %v2688, %v2325
    %v2818 = vsel %vm2795, %v2689, %v2327
    %v2819 = vsel %vm2795, %v2690, %v2329
    %v2820 = vsel %vm2795, %v2691, %v2331
    %v2821 = vsel %vm2795, %v2692, %v2333
    %v2822 = vsel %vm2795, %v2693, %v2335
    %v2823 = vsel %vm2795, %v2694, %v2337
    %v2824 = vsel %vm2795, %v2695, %v2339
    %v2825 = vsel %vm2795, %v2696, %v2341
    %v2826 = vsel %vm2795, %v2697, %v2343
    %v2827 = vsel %vm2795, %v2698, %v2345
    %v2828 = vsel %vm2795, %v2699, %v2347
    %v2829 = vsel %vm2795, %v2700, %v2349
    %v2830 = vsel %vm2795, %v2701, %v2351
    %v2831 = vsel %vm2795, %v2702, %v2353
    %v2832 = vsel %vm2795, %v2703, %v2355
    %v2833 = vsel %vm2795, %v2704, %v2357
    %v2834 = vsel %vm2795, %v2705, %v2359
    %v2835 = vsel %vm2795, %v2706, %v2361
    %v2836 = vsel %vm2795, %v2707, %v2363
    %v2837 = vsel %vm2795, %v2708, %v2365
    %v2838 = vsel %vm2795, %v2709, %v2367
    %v2839 = vsel %vm2795, %v2710, %v2369
    %v2840 = vsel %vm2795, %v2711, %v2371
    %v2841 = vsel %vm2795, %v2712, %v2373
    %v2842 = vsel %vm2795, %v2713, %v2375
    %v2843 = vsel %vm2795, %v2714, %v2377
    %v2844 = vsel %vm2795, %v2715, %v2379
    %v2845 = vsel %vm2795, %v2716, %v2381
    %v2846 = vsel %vm2795, %v2717, %v2383
    %v2847 = vsel %vm2795, %v2718, %v2385
    %v2848 = vsel %vm2795, %v2719, %v2387
    %v2849 = vsel %vm2795, %v2720, %v2389
    %v2850 = vsel %vm2795, %v2721, %v2391
    %v2851 = vsel %vm2795, %v2722, %v2393
    %v2852 = vsel %vm2795, %v2723, %v2395
    %v2853 = vsel %vm2795, %v2724, %v2397
    %v2854 = vsel %vm2795, %v2725, %v2399
    %v2855 = vsel %vm2795, %v2726, %v2401
    %v2856 = vsel %vm2795, %v2727, %v2403
    %v2857 = vsel %vm2795, %v2728, %v2405
    %v2858 = vsel %vm2795, %v2729, %v2407
    %v2859 = vsel %vm2795, %v2730, %v2409
    %v2860 = vsel %vm2795, %v2731, %v2411
    %v2861 = vsel %vm2795, %v2732, %v2413
    %v2862 = vsel %vm2795, %v2733, %v2415
    %v2863 = vsel %vm2795, %v2734, %v2417
    %v2864 = vsel %vm2795, %v2735, %v2419
    %v2865 = vsel %vm2795, %v2736, %v2421
    %v2866 = vsel %vm2795, %v2737, %v2423
    %v2867 = vsel %vm2795, %v2738, %v2425
    %v2868 = vsel %vm2795, %v2739, %v2427
    %v2869 = vsel %vm2795, %v2740, %v2429
    %v2870 = vsel %vm2795, %v2741, %v2431
    %v2871 = vsel %vm2795, %v2742, %v2433
    %v2872 = vsel %vm2795, %v2743, %v2435
    %v2873 = vsel %vm2795, %v2744, %v2437
    %v2874 = vsel %vm2795, %v2745, %v2439
    %v2875 = vsel %vm2795, %v2746, %v2441
    %v2876 = vsel %vm2795, %v2747, %v2443
    %v2877 = vsel %vm2795, %v2748, %v2445
    %v2878 = vsel %vm2795, %v2749, %v2447
    %v2879 = vsel %vm2795, %v2750, %v2449
    %v2880 = vsel %vm2795, %v2751, %v2451
    %v2881 = vsel %vm2795, %v2752, %v2453
    %v2882 = vsel %vm2795, %v2753, %v2455
    %v2883 = vsel %vm2795, %v2754, %v2457
    %v2884 = vsel %vm2795, %v2755, %v2459
    %v2885 = vsel %vm2795, %v2756, %v2461
    %v2886 = vsel %vm2795, %v2757, %v2463
    %v2887 = vsel %vm2795, %v2758, %v2465
    %v2888 = vsel %vm2795, %v2759, %v2467
    %v2889 = vsel %vm2795, %v2760, %v2469
    %v2890 = vsel %vm2795, %v2761, %v2471
    %v2891 = vsel %vm2795, %v2762, %v2473
    %v2892 = vsel %vm2795, %v2763, %v2475
    %v2893 = vsel %vm2795, %v2764, %v2477
    %v2894 = vsel %vm2795, %v2765, %v2479
    %v2895 = vsel %vm2795, %v2766, %v2481
    %v2896 = vsel %vm2795, %v2767, %v2483
    %v2897 = vsel %vm2795, %v2768, %v2485
    %v2898 = vsel %vm2795, %v2769, %v2487
    %v2899 = vsel %vm2795, %v2770, %v2489
    %v2900 = vsel %vm2795, %v2771, %v2491
    %v2901 = vsel %vm2795, %v2772, %v2493
    %v2902 = vsel %vm2795, %v2773, %v2495
    %v2903 = vsel %vm2795, %v2774, %v2497
    %v2904 = vsel %vm2795, %v2775, %v2499
    %v2905 = vsel %vm2795, %v2776, %v2501
    %v2906 = vsel %vm2795, %v2777, %v2503
    %v2907 = vsel %vm2795, %v2778, %v2505
    %v2908 = vsel %vm2795, %v2779, %v2507
    %v2909 = vsel %vm2795, %v2780, %v2509
    %v2910 = vsel %vm2795, %v2781, %v2511
    %v2911 = vsel %vm2795, %v2782, %v2513
    %v2912 = vsel %vm2795, %v2783, %v2515
    %v2913 = vsel %vm2795, %v2784, %v2517
    %v2914 = vsel %vm2795, %v2785, %v2519
    %v2915 = vsel %vm2795, %v2786, %v2521
    %v2916 = vsel %vm2795, %v2787, %v2523
    %v2917 = vsel %vm2795, %v2788, %v2525
    %v2918 = vsel %vm2795, %v2789, %v2527
    %v2919 = vsel %vm2795, %v2790, %v2529
    %v2920 = vsel %vm2795, %v2791, %v2531
    %v2921 = vsel %vm2795, %v2792, %v2533
    %v2922 = vsel %vm2795, %v2793, %v2535
    %v2923 = vsel %vm2795, %v2794, %v2537
    %v2924 = vpack.c.bf16 %v2797, %v2796
    %v2925 = vpack.c.bf16 %v2799, %v2798
    %v2926 = vpack.c.bf16 %v2801, %v2800
    %v2927 = vpack.c.bf16 %v2803, %v2802
    %v2928 = vpack.c.bf16 %v2805, %v2804
    %v2929 = vpack.c.bf16 %v2807, %v2806
    %v2930 = vpack.c.bf16 %v2809, %v2808
    %v2931 = vpack.c.bf16 %v2811, %v2810
    %v2932 = vpack.c.bf16 %v2813, %v2812
    %v2933 = vpack.c.bf16 %v2815, %v2814
    %v2934 = vpack.c.bf16 %v2817, %v2816
    %v2935 = vpack.c.bf16 %v2819, %v2818
    %v2936 = vpack.c.bf16 %v2821, %v2820
    %v2937 = vpack.c.bf16 %v2823, %v2822
    %v2938 = vpack.c.bf16 %v2825, %v2824
    %v2939 = vpack.c.bf16 %v2827, %v2826
    %v2940 = vpack.c.bf16 %v2829, %v2828
    %v2941 = vpack.c.bf16 %v2831, %v2830
    %v2942 = vpack.c.bf16 %v2833, %v2832
    %v2943 = vpack.c.bf16 %v2835, %v2834
    %v2944 = vpack.c.bf16 %v2837, %v2836
    %v2945 = vpack.c.bf16 %v2839, %v2838
    %v2946 = vpack.c.bf16 %v2841, %v2840
    %v2947 = vpack.c.bf16 %v2843, %v2842
    %v2948 = vpack.c.bf16 %v2845, %v2844
    %v2949 = vpack.c.bf16 %v2847, %v2846
    %v2950 = vpack.c.bf16 %v2849, %v2848
    %v2951 = vpack.c.bf16 %v2851, %v2850
    %v2952 = vpack.c.bf16 %v2853, %v2852
    %v2953 = vpack.c.bf16 %v2855, %v2854
    %v2954 = vpack.c.bf16 %v2857, %v2856
    %v2955 = vpack.c.bf16 %v2859, %v2858
    %v2956 = vpack.c.bf16 %v2861, %v2860
    %v2957 = vpack.c.bf16 %v2863, %v2862
    %v2958 = vpack.c.bf16 %v2865, %v2864
    %v2959 = vpack.c.bf16 %v2867, %v2866
    %v2960 = vpack.c.bf16 %v2869, %v2868
    %v2961 = vpack.c.bf16 %v2871, %v2870
    %v2962 = vpack.c.bf16 %v2873, %v2872
    %v2963 = vpack.c.bf16 %v2875, %v2874
    %v2964 = vpack.c.bf16 %v2877, %v2876
    %v2965 = vpack.c.bf16 %v2879, %v2878
    %v2966 = vpack.c.bf16 %v2881, %v2880
    %v2967 = vpack.c.bf16 %v2883, %v2882
    %v2968 = vpack.c.bf16 %v2885, %v2884
    %v2969 = vpack.c.bf16 %v2887, %v2886
    %v2970 = vpack.c.bf16 %v2889, %v2888
    %v2971 = vpack.c.bf16 %v2891, %v2890
    %v2972 = vpack.c.bf16 %v2893, %v2892
    %v2973 = vpack.c.bf16 %v2895, %v2894
    %v2974 = vpack.c.bf16 %v2897, %v2896
    %v2975 = vpack.c.bf16 %v2899, %v2898
    %v2976 = vpack.c.bf16 %v2901, %v2900
    %v2977 = vpack.c.bf16 %v2903, %v2902
    %v2978 = vpack.c.bf16 %v2905, %v2904
    %v2979 = vpack.c.bf16 %v2907, %v2906
    %v2980 = vpack.c.bf16 %v2909, %v2908
    %v2981 = vpack.c.bf16 %v2911, %v2910
    %v2982 = vpack.c.bf16 %v2913, %v2912
    %v2983 = vpack.c.bf16 %v2915, %v2914
    %v2984 = vpack.c.bf16 %v2917, %v2916
    %v2985 = vpack.c.bf16 %v2919, %v2918
    %v2986 = vpack.c.bf16 %v2921, %v2920
    %v2987 = vpack.c.bf16 %v2923, %v2922
    %v2988 = vld [vmem:[%s3] sm:$0xf]
    %v2989 = vld [vmem:[%s3 + $0x4] sm:$0xf]
    %v2990 = vld [vmem:[%s3 + $0x8] sm:$0xf]
    %v2991 = vld [vmem:[%s3 + $0xc] sm:$0xf]
    %v2992 = vld [vmem:[%s3 + $0x10] sm:$0xf]
    %v2993 = vld [vmem:[%s3 + $0x14] sm:$0xf]
    %v3000 = vunpack.c.l.b16 %v2988
    %v3001 = vunpack.c.l.b16 %v2989
    %v3002 = vunpack.c.l.b16 %v2990
    %v3003 = vunpack.c.l.b16 %v2991
    %v3004 = vunpack.c.l.b16 %v2992
    %v3005 = vunpack.c.l.b16 %v2993
    %v3006 = vpack.c.b16 %v3001, %v3000
    %v3007 = vpack.c.b16 %v3003, %v3002
    %v3008 = vpack.c.b16 %v3005, %v3004
    %vm3012 = vcmask 392192
    %v3014 = vsel %vm3012, %v2924, 0
    %v3017 = vsel %vm3012, %v2925, 0
    %v3020 = vsel %vm3012, %v2926, 0
    %v3023 = vsel %vm3012, %v2927, 0
    %v3026 = vsel %vm3012, %v2928, 0
    %v3029 = vsel %vm3012, %v2929, 0
    %v3032 = vsel %vm3012, %v2930, 0
    %v3035 = vsel %vm3012, %v2931, 0
    %v3038 = vsel %vm3012, %v2932, 0
    %v3041 = vsel %vm3012, %v2933, 0
    %v3044 = vsel %vm3012, %v2934, 0
    %v3047 = vsel %vm3012, %v2935, 0
    %v3050 = vsel %vm3012, %v2936, 0
    %v3053 = vsel %vm3012, %v2937, 0
    %v3056 = vsel %vm3012, %v2938, 0
    %v3059 = vsel %vm3012, %v2939, 0
    %v3062 = vsel %vm3012, %v2940, 0
    %v3065 = vsel %vm3012, %v2941, 0
    %v3068 = vsel %vm3012, %v2942, 0
    %v3071 = vsel %vm3012, %v2943, 0
    %v3074 = vsel %vm3012, %v2944, 0
    %v3077 = vsel %vm3012, %v2945, 0
    %v3080 = vsel %vm3012, %v2946, 0
    %v3083 = vsel %vm3012, %v2947, 0
    %v3086 = vsel %vm3012, %v2948, 0
    %v3089 = vsel %vm3012, %v2949, 0
    %v3092 = vsel %vm3012, %v2950, 0
    %v3095 = vsel %vm3012, %v2951, 0
    %v3098 = vsel %vm3012, %v2952, 0
    %v3101 = vsel %vm3012, %v2953, 0
    %v3104 = vsel %vm3012, %v2954, 0
    %v3107 = vsel %vm3012, %v2955, 0
    %v3110 = vsel %vm3012, %v2956, 0
    %v3113 = vsel %vm3012, %v2957, 0
    %v3116 = vsel %vm3012, %v2958, 0
    %v3119 = vsel %vm3012, %v2959, 0
    %v3122 = vsel %vm3012, %v2960, 0
    %v3125 = vsel %vm3012, %v2961, 0
    %v3128 = vsel %vm3012, %v2962, 0
    %v3131 = vsel %vm3012, %v2963, 0
    %v3134 = vsel %vm3012, %v2964, 0
    %v3137 = vsel %vm3012, %v2965, 0
    %v3140 = vsel %vm3012, %v2966, 0
    %v3143 = vsel %vm3012, %v2967, 0
    %v3146 = vsel %vm3012, %v2968, 0
    %v3149 = vsel %vm3012, %v2969, 0
    %v3152 = vsel %vm3012, %v2970, 0
    %v3155 = vsel %vm3012, %v2971, 0
    %v3158 = vsel %vm3012, %v2972, 0
    %v3161 = vsel %vm3012, %v2973, 0
    %v3164 = vsel %vm3012, %v2974, 0
    %v3167 = vsel %vm3012, %v2975, 0
    %v3170 = vsel %vm3012, %v2976, 0
    %v3173 = vsel %vm3012, %v2977, 0
    %v3176 = vsel %vm3012, %v2978, 0
    %v3179 = vsel %vm3012, %v2979, 0
    %v3182 = vsel %vm3012, %v2980, 0
    %v3185 = vsel %vm3012, %v2981, 0
    %v3188 = vsel %vm3012, %v2982, 0
    %v3191 = vsel %vm3012, %v2983, 0
    %v3194 = vsel %vm3012, %v2984, 0
    %v3197 = vsel %vm3012, %v2985, 0
    %v3200 = vsel %vm3012, %v2986, 0
    %v3203 = vsel %vm3012, %v2987, 0
    %3205 = vmatprep.subr.bf16.mxu0 0
    %3206 = vmatpush1.bf16.msra.mxu0 %v3006
    %3207 = vmatprep.subr.bf16.mxu0 0
    %3208 = vmatpush1.bf16.msra.mxu0 %v3007
    %3209 = vmatprep.subr.bf16.mxu0 0
    %3210 = vmatpush1.bf16.msra.mxu0 %v3008
    %3211 = vmatprep.subr.bf16.mxu0 0
    %3212 = vmatpush1.bf16.msra.mxu0 0
    %3213 = vmatprep.subr.bf16.mxu0 0
    %3214 = vmatpush1.bf16.msra.mxu0 0
    %3215 = vmatprep.subr.bf16.mxu0 0
    %3216 = vmatpush1.bf16.msra.mxu0 0
    %3217 = vmatprep.subr.bf16.mxu0 0
    %3218 = vmatpush1.bf16.msra.mxu0 0
    %3219 = vmatprep.subr.bf16.mxu0 0
    %3220 = vmatpush1.bf16.msra.mxu0 0
    %3221 = vmatprep.subr.bf16.mxu0 0
    %3222 = vmatpush1.bf16.msra.mxu0 0
    %3223 = vmatprep.subr.bf16.mxu0 0
    %3224 = vmatpush1.bf16.msra.mxu0 0
    %3225 = vmatprep.subr.bf16.mxu0 0
    %3226 = vmatpush1.bf16.msra.mxu0 0
    %3227 = vmatprep.subr.bf16.mxu0 0
    %3228 = vmatpush1.bf16.msra.mxu0 0
    %3229 = vmatprep.subr.bf16.mxu0 0
    %3230 = vmatpush1.bf16.msra.mxu0 0
    %3231 = vmatprep.subr.bf16.mxu0 0
    %3232 = vmatpush1.bf16.msra.mxu0 0
    %3233 = vmatprep.subr.bf16.mxu0 0
    %3234 = vmatpush1.bf16.msra.mxu0 0
    %3235 = vmatprep.subr.bf16.mxu0 0
    %3236 = vmatpush1.bf16.msra.mxu0 0
    %3237 = vmatprep.mubr.bf16.mxu0 0
    %3238 = vmatmul.mubr.bf16.gmra.mrb[0].mxu0 %v3014
    %v3239 = vpop.f32.mrb[0].mxu0
    %v3240 = vadd.f32 0.0, %v3239
    %v3241 = vpop.f32.mrb[0].mxu0
    %v3242 = vpop.f32.mrb[0].mxu0
    %v3243 = vadd.f32 0.0, %v3242
    %v3244 = vpop.f32.mrb[0].mxu0
    %3245 = vmatprep.mubr.bf16.mxu0 0
    %3246 = vmatmul.mubr.bf16.gmra.mrb[0].mxu0 %v3017
    %v3247 = vpop.f32.mrb[0].mxu0
    %v3248 = vadd.f32 0.0, %v3247
    %v3249 = vpop.f32.mrb[0].mxu0
    %v3250 = vpop.f32.mrb[0].mxu0
    %v3251 = vadd.f32 0.0, %v3250
    %v3252 = vpop.f32.mrb[0].mxu0
    %3253 = vmatprep.mubr.bf16.mxu0 0
    %3254 = vmatmul.mubr.bf16.gmra.mrb[0].mxu0 %v3020
    %v3255 = vpop.f32.mrb[0].mxu0
    %v3256 = vadd.f32 0.0, %v3255
    %v3257 = vpop.f32.mrb[0].mxu0
    %v3258 = vpop.f32.mrb[0].mxu0
    %v3259 = vadd.f32 0.0, %v3258
    %v3260 = vpop.f32.mrb[0].mxu0
    %3261 = vmatprep.mubr.bf16.mxu0 0
    %3262 = vmatmul.mubr.bf16.gmra.mrb[0].mxu0 %v3023
    %v3263 = vpop.f32.mrb[0].mxu0
    %v3264 = vadd.f32 0.0, %v3263
    %v3265 = vpop.f32.mrb[0].mxu0
    %v3266 = vpop.f32.mrb[0].mxu0
    %v3267 = vadd.f32 0.0, %v3266
    %v3268 = vpop.f32.mrb[0].mxu0
    %3269 = vmatprep.mubr.bf16.mxu0 0
    %3270 = vmatmul.mubr.bf16.gmra.mrb[0].mxu0 %v3026
    %v3271 = vpop.f32.mrb[0].mxu0
    %v3272 = vadd.f32 0.0, %v3271
    %v3273 = vpop.f32.mrb[0].mxu0
    %v3274 = vpop.f32.mrb[0].mxu0
    %v3275 = vadd.f32 0.0, %v3274
    %v3276 = vpop.f32.mrb[0].mxu0
    %3277 = vmatprep.mubr.bf16.mxu0 0
    %3278 = vmatmul.mubr.bf16.gmra.mrb[0].mxu0 %v3029
    %v3279 = vpop.f32.mrb[0].mxu0
    %v3280 = vadd.f32 0.0, %v3279
    %v3281 = vpop.f32.mrb[0].mxu0
    %v3282 = vpop.f32.mrb[0].mxu0
    %v3283 = vadd.f32 0.0, %v3282
    %v3284 = vpop.f32.mrb[0].mxu0
    %3285 = vmatprep.mubr.bf16.mxu0 0
    %3286 = vmatmul.mubr.bf16.gmra.mrb[0].mxu0 %v3032
    %v3287 = vpop.f32.mrb[0].mxu0
    %v3288 = vadd.f32 0.0, %v3287
    %v3289 = vpop.f32.mrb[0].mxu0
    %v3290 = vpop.f32.mrb[0].mxu0
    %v3291 = vadd.f32 0.0, %v3290
    %v3292 = vpop.f32.mrb[0].mxu0
    %3293 = vmatprep.mubr.bf16.mxu0 0
    %3294 = vmatmul.mubr.bf16.gmra.mrb[0].mxu0 %v3035
    %v3295 = vpop.f32.mrb[0].mxu0
    %v3296 = vadd.f32 0.0, %v3295
    %v3297 = vpop.f32.mrb[0].mxu0
    %v3298 = vpop.f32.mrb[0].mxu0
    %v3299 = vadd.f32 0.0, %v3298
    %v3300 = vpop.f32.mrb[0].mxu0
    %3301 = vmatprep.mubr.bf16.mxu0 0
    %3302 = vmatmul.mubr.bf16.gmra.mrb[0].mxu0 %v3038
    %v3303 = vpop.f32.mrb[0].mxu0
    %v3304 = vadd.f32 0.0, %v3303
    %v3305 = vpop.f32.mrb[0].mxu0
    %v3306 = vpop.f32.mrb[0].mxu0
    %v3307 = vadd.f32 0.0, %v3306
    %v3308 = vpop.f32.mrb[0].mxu0
    %3309 = vmatprep.mubr.bf16.mxu0 0
    %3310 = vmatmul.mubr.bf16.gmra.mrb[0].mxu0 %v3041
    %v3311 = vpop.f32.mrb[0].mxu0
    %v3312 = vadd.f32 0.0, %v3311
    %v3313 = vpop.f32.mrb[0].mxu0
    %v3314 = vpop.f32.mrb[0].mxu0
    %v3315 = vadd.f32 0.0, %v3314
    %v3316 = vpop.f32.mrb[0].mxu0
    %3317 = vmatprep.mubr.bf16.mxu0 0
    %3318 = vmatmul.mubr.bf16.gmra.mrb[0].mxu0 %v3044
    %v3319 = vpop.f32.mrb[0].mxu0
    %v3320 = vadd.f32 0.0, %v3319
    %v3321 = vpop.f32.mrb[0].mxu0
    %v3322 = vpop.f32.mrb[0].mxu0
    %v3323 = vadd.f32 0.0, %v3322
    %v3324 = vpop.f32.mrb[0].mxu0
    %3325 = vmatprep.mubr.bf16.mxu0 0
    %3326 = vmatmul.mubr.bf16.gmra.mrb[0].mxu0 %v3047
    %v3327 = vpop.f32.mrb[0].mxu0
    %v3328 = vadd.f32 0.0, %v3327
    %v3329 = vpop.f32.mrb[0].mxu0
    %v3330 = vpop.f32.mrb[0].mxu0
    %v3331 = vadd.f32 0.0, %v3330
    %v3332 = vpop.f32.mrb[0].mxu0
    %3333 = vmatprep.mubr.bf16.mxu0 0
    %3334 = vmatmul.mubr.bf16.gmra.mrb[0].mxu0 %v3050
    %v3335 = vpop.f32.mrb[0].mxu0
    %v3336 = vadd.f32 0.0, %v3335
    %v3337 = vpop.f32.mrb[0].mxu0
    %v3338 = vpop.f32.mrb[0].mxu0
    %v3339 = vadd.f32 0.0, %v3338
    %v3340 = vpop.f32.mrb[0].mxu0
    %3341 = vmatprep.mubr.bf16.mxu0 0
    %3342 = vmatmul.mubr.bf16.gmra.mrb[0].mxu0 %v3053
    %v3343 = vpop.f32.mrb[0].mxu0
    %v3344 = vadd.f32 0.0, %v3343
    %v3345 = vpop.f32.mrb[0].mxu0
    %v3346 = vpop.f32.mrb[0].mxu0
    %v3347 = vadd.f32 0.0, %v3346
    %v3348 = vpop.f32.mrb[0].mxu0
    %3349 = vmatprep.mubr.bf16.mxu0 0
    %3350 = vmatmul.mubr.bf16.gmra.mrb[0].mxu0 %v3056
    %v3351 = vpop.f32.mrb[0].mxu0
    %v3352 = vadd.f32 0.0, %v3351
    %v3353 = vpop.f32.mrb[0].mxu0
    %v3354 = vpop.f32.mrb[0].mxu0
    %v3355 = vadd.f32 0.0, %v3354
    %v3356 = vpop.f32.mrb[0].mxu0
    %3357 = vmatprep.mubr.bf16.mxu0 0
    %3358 = vmatmul.mubr.bf16.gmra.mrb[0].mxu0 %v3059
    %v3359 = vpop.f32.mrb[0].mxu0
    %v3360 = vadd.f32 0.0, %v3359
    %v3361 = vpop.f32.mrb[0].mxu0
    %v3362 = vpop.f32.mrb[0].mxu0
    %v3363 = vadd.f32 0.0, %v3362
    %v3364 = vpop.f32.mrb[0].mxu0
    %3365 = vmatprep.mubr.bf16.mxu0 0
    %3366 = vmatmul.mubr.bf16.gmra.mrb[0].mxu0 %v3062
    %v3367 = vpop.f32.mrb[0].mxu0
    %v3368 = vadd.f32 0.0, %v3367
    %v3369 = vpop.f32.mrb[0].mxu0
    %v3370 = vpop.f32.mrb[0].mxu0
    %v3371 = vadd.f32 0.0, %v3370
    %v3372 = vpop.f32.mrb[0].mxu0
    %3373 = vmatprep.mubr.bf16.mxu0 0
    %3374 = vmatmul.mubr.bf16.gmra.mrb[0].mxu0 %v3065
    %v3375 = vpop.f32.mrb[0].mxu0
    %v3376 = vadd.f32 0.0, %v3375
    %v3377 = vpop.f32.mrb[0].mxu0
    %v3378 = vpop.f32.mrb[0].mxu0
    %v3379 = vadd.f32 0.0, %v3378
    %v3380 = vpop.f32.mrb[0].mxu0
    %3381 = vmatprep.mubr.bf16.mxu0 0
    %3382 = vmatmul.mubr.bf16.gmra.mrb[0].mxu0 %v3068
    %v3383 = vpop.f32.mrb[0].mxu0
    %v3384 = vadd.f32 0.0, %v3383
    %v3385 = vpop.f32.mrb[0].mxu0
    %v3386 = vpop.f32.mrb[0].mxu0
    %v3387 = vadd.f32 0.0, %v3386
    %v3388 = vpop.f32.mrb[0].mxu0
    %3389 = vmatprep.mubr.bf16.mxu0 0
    %3390 = vmatmul.mubr.bf16.gmra.mrb[0].mxu0 %v3071
    %v3391 = vpop.f32.mrb[0].mxu0
    %v3392 = vadd.f32 0.0, %v3391
    %v3393 = vpop.f32.mrb[0].mxu0
    %v3394 = vpop.f32.mrb[0].mxu0
    %v3395 = vadd.f32 0.0, %v3394
    %v3396 = vpop.f32.mrb[0].mxu0
    %3397 = vmatprep.mubr.bf16.mxu0 0
    %3398 = vmatmul.mubr.bf16.gmra.mrb[0].mxu0 %v3074
    %v3399 = vpop.f32.mrb[0].mxu0
    %v3400 = vadd.f32 0.0, %v3399
    %v3401 = vpop.f32.mrb[0].mxu0
    %v3402 = vpop.f32.mrb[0].mxu0
    %v3403 = vadd.f32 0.0, %v3402
    %v3404 = vpop.f32.mrb[0].mxu0
    %3405 = vmatprep.mubr.bf16.mxu0 0
    %3406 = vmatmul.mubr.bf16.gmra.mrb[0].mxu0 %v3077
    %v3407 = vpop.f32.mrb[0].mxu0
    %v3408 = vadd.f32 0.0, %v3407
    %v3409 = vpop.f32.mrb[0].mxu0
    %v3410 = vpop.f32.mrb[0].mxu0
    %v3411 = vadd.f32 0.0, %v3410
    %v3412 = vpop.f32.mrb[0].mxu0
    %3413 = vmatprep.mubr.bf16.mxu0 0
    %3414 = vmatmul.mubr.bf16.gmra.mrb[0].mxu0 %v3080
    %v3415 = vpop.f32.mrb[0].mxu0
    %v3416 = vadd.f32 0.0, %v3415
    %v3417 = vpop.f32.mrb[0].mxu0
    %v3418 = vpop.f32.mrb[0].mxu0
    %v3419 = vadd.f32 0.0, %v3418
    %v3420 = vpop.f32.mrb[0].mxu0
    %3421 = vmatprep.mubr.bf16.mxu0 0
    %3422 = vmatmul.mubr.bf16.gmra.mrb[0].mxu0 %v3083
    %v3423 = vpop.f32.mrb[0].mxu0
    %v3424 = vadd.f32 0.0, %v3423
    %v3425 = vpop.f32.mrb[0].mxu0
    %v3426 = vpop.f32.mrb[0].mxu0
    %v3427 = vadd.f32 0.0, %v3426
    %v3428 = vpop.f32.mrb[0].mxu0
    %3429 = vmatprep.mubr.bf16.mxu0 0
    %3430 = vmatmul.mubr.bf16.gmra.mrb[0].mxu0 %v3086
    %v3431 = vpop.f32.mrb[0].mxu0
    %v3432 = vadd.f32 0.0, %v3431
    %v3433 = vpop.f32.mrb[0].mxu0
    %v3434 = vpop.f32.mrb[0].mxu0
    %v3435 = vadd.f32 0.0, %v3434
    %v3436 = vpop.f32.mrb[0].mxu0
    %3437 = vmatprep.mubr.bf16.mxu0 0
    %3438 = vmatmul.mubr.bf16.gmra.mrb[0].mxu0 %v3089
    %v3439 = vpop.f32.mrb[0].mxu0
    %v3440 = vadd.f32 0.0, %v3439
    %v3441 = vpop.f32.mrb[0].mxu0
    %v3442 = vpop.f32.mrb[0].mxu0
    %v3443 = vadd.f32 0.0, %v3442
    %v3444 = vpop.f32.mrb[0].mxu0
    %3445 = vmatprep.mubr.bf16.mxu0 0
    %3446 = vmatmul.mubr.bf16.gmra.mrb[0].mxu0 %v3092
    %v3447 = vpop.f32.mrb[0].mxu0
    %v3448 = vadd.f32 0.0, %v3447
    %v3449 = vpop.f32.mrb[0].mxu0
    %v3450 = vpop.f32.mrb[0].mxu0
    %v3451 = vadd.f32 0.0, %v3450
    %v3452 = vpop.f32.mrb[0].mxu0
    %3453 = vmatprep.mubr.bf16.mxu0 0
    %3454 = vmatmul.mubr.bf16.gmra.mrb[0].mxu0 %v3095
    %v3455 = vpop.f32.mrb[0].mxu0
    %v3456 = vadd.f32 0.0, %v3455
    %v3457 = vpop.f32.mrb[0].mxu0
    %v3458 = vpop.f32.mrb[0].mxu0
    %v3459 = vadd.f32 0.0, %v3458
    %v3460 = vpop.f32.mrb[0].mxu0
    %3461 = vmatprep.mubr.bf16.mxu0 0
    %3462 = vmatmul.mubr.bf16.gmra.mrb[0].mxu0 %v3098
    %v3463 = vpop.f32.mrb[0].mxu0
    %v3464 = vadd.f32 0.0, %v3463
    %v3465 = vpop.f32.mrb[0].mxu0
    %v3466 = vpop.f32.mrb[0].mxu0
    %v3467 = vadd.f32 0.0, %v3466
    %v3468 = vpop.f32.mrb[0].mxu0
    %3469 = vmatprep.mubr.bf16.mxu0 0
    %3470 = vmatmul.mubr.bf16.gmra.mrb[0].mxu0 %v3101
    %v3471 = vpop.f32.mrb[0].mxu0
    %v3472 = vadd.f32 0.0, %v3471
    %v3473 = vpop.f32.mrb[0].mxu0
    %v3474 = vpop.f32.mrb[0].mxu0
    %v3475 = vadd.f32 0.0, %v3474
    %v3476 = vpop.f32.mrb[0].mxu0
    %3477 = vmatprep.mubr.bf16.mxu0 0
    %3478 = vmatmul.mubr.bf16.gmra.mrb[0].mxu0 %v3104
    %v3479 = vpop.f32.mrb[0].mxu0
    %v3480 = vadd.f32 0.0, %v3479
    %v3481 = vpop.f32.mrb[0].mxu0
    %v3482 = vpop.f32.mrb[0].mxu0
    %v3483 = vadd.f32 0.0, %v3482
    %v3484 = vpop.f32.mrb[0].mxu0
    %3485 = vmatprep.mubr.bf16.mxu0 0
    %3486 = vmatmul.mubr.bf16.gmra.mrb[0].mxu0 %v3107
    %v3487 = vpop.f32.mrb[0].mxu0
    %v3488 = vadd.f32 0.0, %v3487
    %v3489 = vpop.f32.mrb[0].mxu0
    %v3490 = vpop.f32.mrb[0].mxu0
    %v3491 = vadd.f32 0.0, %v3490
    %v3492 = vpop.f32.mrb[0].mxu0
    %3493 = vmatprep.mubr.bf16.mxu0 0
    %3494 = vmatmul.mubr.bf16.gmra.mrb[0].mxu0 %v3110
    %v3495 = vpop.f32.mrb[0].mxu0
    %v3496 = vadd.f32 0.0, %v3495
    %v3497 = vpop.f32.mrb[0].mxu0
    %v3498 = vpop.f32.mrb[0].mxu0
    %v3499 = vadd.f32 0.0, %v3498
    %v3500 = vpop.f32.mrb[0].mxu0
    %3501 = vmatprep.mubr.bf16.mxu0 0
    %3502 = vmatmul.mubr.bf16.gmra.mrb[0].mxu0 %v3113
    %v3503 = vpop.f32.mrb[0].mxu0
    %v3504 = vadd.f32 0.0, %v3503
    %v3505 = vpop.f32.mrb[0].mxu0
    %v3506 = vpop.f32.mrb[0].mxu0
    %v3507 = vadd.f32 0.0, %v3506
    %v3508 = vpop.f32.mrb[0].mxu0
    %3509 = vmatprep.mubr.bf16.mxu0 0
    %3510 = vmatmul.mubr.bf16.gmra.mrb[0].mxu0 %v3116
    %v3511 = vpop.f32.mrb[0].mxu0
    %v3512 = vadd.f32 0.0, %v3511
    %v3513 = vpop.f32.mrb[0].mxu0
    %v3514 = vpop.f32.mrb[0].mxu0
    %v3515 = vadd.f32 0.0, %v3514
    %v3516 = vpop.f32.mrb[0].mxu0
    %3517 = vmatprep.mubr.bf16.mxu0 0
    %3518 = vmatmul.mubr.bf16.gmra.mrb[0].mxu0 %v3119
    %v3519 = vpop.f32.mrb[0].mxu0
    %v3520 = vadd.f32 0.0, %v3519
    %v3521 = vpop.f32.mrb[0].mxu0
    %v3522 = vpop.f32.mrb[0].mxu0
    %v3523 = vadd.f32 0.0, %v3522
    %v3524 = vpop.f32.mrb[0].mxu0
    %3525 = vmatprep.mubr.bf16.mxu0 0
    %3526 = vmatmul.mubr.bf16.gmra.mrb[0].mxu0 %v3122
    %v3527 = vpop.f32.mrb[0].mxu0
    %v3528 = vadd.f32 0.0, %v3527
    %v3529 = vpop.f32.mrb[0].mxu0
    %v3530 = vpop.f32.mrb[0].mxu0
    %v3531 = vadd.f32 0.0, %v3530
    %v3532 = vpop.f32.mrb[0].mxu0
    %3533 = vmatprep.mubr.bf16.mxu0 0
    %3534 = vmatmul.mubr.bf16.gmra.mrb[0].mxu0 %v3125
    %v3535 = vpop.f32.mrb[0].mxu0
    %v3536 = vadd.f32 0.0, %v3535
    %v3537 = vpop.f32.mrb[0].mxu0
    %v3538 = vpop.f32.mrb[0].mxu0
    %v3539 = vadd.f32 0.0, %v3538
    %v3540 = vpop.f32.mrb[0].mxu0
    %3541 = vmatprep.mubr.bf16.mxu0 0
    %3542 = vmatmul.mubr.bf16.gmra.mrb[0].mxu0 %v3128
    %v3543 = vpop.f32.mrb[0].mxu0
    %v3544 = vadd.f32 0.0, %v3543
    %v3545 = vpop.f32.mrb[0].mxu0
    %v3546 = vpop.f32.mrb[0].mxu0
    %v3547 = vadd.f32 0.0, %v3546
    %v3548 = vpop.f32.mrb[0].mxu0
    %3549 = vmatprep.mubr.bf16.mxu0 0
    %3550 = vmatmul.mubr.bf16.gmra.mrb[0].mxu0 %v3131
    %v3551 = vpop.f32.mrb[0].mxu0
    %v3552 = vadd.f32 0.0, %v3551
    %v3553 = vpop.f32.mrb[0].mxu0
    %v3554 = vpop.f32.mrb[0].mxu0
    %v3555 = vadd.f32 0.0, %v3554
    %v3556 = vpop.f32.mrb[0].mxu0
    %3557 = vmatprep.mubr.bf16.mxu0 0
    %3558 = vmatmul.mubr.bf16.gmra.mrb[0].mxu0 %v3134
    %v3559 = vpop.f32.mrb[0].mxu0
    %v3560 = vadd.f32 0.0, %v3559
    %v3561 = vpop.f32.mrb[0].mxu0
    %v3562 = vpop.f32.mrb[0].mxu0
    %v3563 = vadd.f32 0.0, %v3562
    %v3564 = vpop.f32.mrb[0].mxu0
    %3565 = vmatprep.mubr.bf16.mxu0 0
    %3566 = vmatmul.mubr.bf16.gmra.mrb[0].mxu0 %v3137
    %v3567 = vpop.f32.mrb[0].mxu0
    %v3568 = vadd.f32 0.0, %v3567
    %v3569 = vpop.f32.mrb[0].mxu0
    %v3570 = vpop.f32.mrb[0].mxu0
    %v3571 = vadd.f32 0.0, %v3570
    %v3572 = vpop.f32.mrb[0].mxu0
    %3573 = vmatprep.mubr.bf16.mxu0 0
    %3574 = vmatmul.mubr.bf16.gmra.mrb[0].mxu0 %v3140
    %v3575 = vpop.f32.mrb[0].mxu0
    %v3576 = vadd.f32 0.0, %v3575
    %v3577 = vpop.f32.mrb[0].mxu0
    %v3578 = vpop.f32.mrb[0].mxu0
    %v3579 = vadd.f32 0.0, %v3578
    %v3580 = vpop.f32.mrb[0].mxu0
    %3581 = vmatprep.mubr.bf16.mxu0 0
    %3582 = vmatmul.mubr.bf16.gmra.mrb[0].mxu0 %v3143
    %v3583 = vpop.f32.mrb[0].mxu0
    %v3584 = vadd.f32 0.0, %v3583
    %v3585 = vpop.f32.mrb[0].mxu0
    %v3586 = vpop.f32.mrb[0].mxu0
    %v3587 = vadd.f32 0.0, %v3586
    %v3588 = vpop.f32.mrb[0].mxu0
    %3589 = vmatprep.mubr.bf16.mxu0 0
    %3590 = vmatmul.mubr.bf16.gmra.mrb[0].mxu0 %v3146
    %v3591 = vpop.f32.mrb[0].mxu0
    %v3592 = vadd.f32 0.0, %v3591
    %v3593 = vpop.f32.mrb[0].mxu0
    %v3594 = vpop.f32.mrb[0].mxu0
    %v3595 = vadd.f32 0.0, %v3594
    %v3596 = vpop.f32.mrb[0].mxu0
    %3597 = vmatprep.mubr.bf16.mxu0 0
    %3598 = vmatmul.mubr.bf16.gmra.mrb[0].mxu0 %v3149
    %v3599 = vpop.f32.mrb[0].mxu0
    %v3600 = vadd.f32 0.0, %v3599
    %v3601 = vpop.f32.mrb[0].mxu0
    %v3602 = vpop.f32.mrb[0].mxu0
    %v3603 = vadd.f32 0.0, %v3602
    %v3604 = vpop.f32.mrb[0].mxu0
    %3605 = vmatprep.mubr.bf16.mxu0 0
    %3606 = vmatmul.mubr.bf16.gmra.mrb[0].mxu0 %v3152
    %v3607 = vpop.f32.mrb[0].mxu0
    %v3608 = vadd.f32 0.0, %v3607
    %v3609 = vpop.f32.mrb[0].mxu0
    %v3610 = vpop.f32.mrb[0].mxu0
    %v3611 = vadd.f32 0.0, %v3610
    %v3612 = vpop.f32.mrb[0].mxu0
    %3613 = vmatprep.mubr.bf16.mxu0 0
    %3614 = vmatmul.mubr.bf16.gmra.mrb[0].mxu0 %v3155
    %v3615 = vpop.f32.mrb[0].mxu0
    %v3616 = vadd.f32 0.0, %v3615
    %v3617 = vpop.f32.mrb[0].mxu0
    %v3618 = vpop.f32.mrb[0].mxu0
    %v3619 = vadd.f32 0.0, %v3618
    %v3620 = vpop.f32.mrb[0].mxu0
    %3621 = vmatprep.mubr.bf16.mxu0 0
    %3622 = vmatmul.mubr.bf16.gmra.mrb[0].mxu0 %v3158
    %v3623 = vpop.f32.mrb[0].mxu0
    %v3624 = vadd.f32 0.0, %v3623
    %v3625 = vpop.f32.mrb[0].mxu0
    %v3626 = vpop.f32.mrb[0].mxu0
    %v3627 = vadd.f32 0.0, %v3626
    %v3628 = vpop.f32.mrb[0].mxu0
    %3629 = vmatprep.mubr.bf16.mxu0 0
    %3630 = vmatmul.mubr.bf16.gmra.mrb[0].mxu0 %v3161
    %v3631 = vpop.f32.mrb[0].mxu0
    %v3632 = vadd.f32 0.0, %v3631
    %v3633 = vpop.f32.mrb[0].mxu0
    %v3634 = vpop.f32.mrb[0].mxu0
    %v3635 = vadd.f32 0.0, %v3634
    %v3636 = vpop.f32.mrb[0].mxu0
    %3637 = vmatprep.mubr.bf16.mxu0 0
    %3638 = vmatmul.mubr.bf16.gmra.mrb[0].mxu0 %v3164
    %v3639 = vpop.f32.mrb[0].mxu0
    %v3640 = vadd.f32 0.0, %v3639
    %v3641 = vpop.f32.mrb[0].mxu0
    %v3642 = vpop.f32.mrb[0].mxu0
    %v3643 = vadd.f32 0.0, %v3642
    %v3644 = vpop.f32.mrb[0].mxu0
    %3645 = vmatprep.mubr.bf16.mxu0 0
    %3646 = vmatmul.mubr.bf16.gmra.mrb[0].mxu0 %v3167
    %v3647 = vpop.f32.mrb[0].mxu0
    %v3648 = vadd.f32 0.0, %v3647
    %v3649 = vpop.f32.mrb[0].mxu0
    %v3650 = vpop.f32.mrb[0].mxu0
    %v3651 = vadd.f32 0.0, %v3650
    %v3652 = vpop.f32.mrb[0].mxu0
    %3653 = vmatprep.mubr.bf16.mxu0 0
    %3654 = vmatmul.mubr.bf16.gmra.mrb[0].mxu0 %v3170
    %v3655 = vpop.f32.mrb[0].mxu0
    %v3656 = vadd.f32 0.0, %v3655
    %v3657 = vpop.f32.mrb[0].mxu0
    %v3658 = vpop.f32.mrb[0].mxu0
    %v3659 = vadd.f32 0.0, %v3658
    %v3660 = vpop.f32.mrb[0].mxu0
    %3661 = vmatprep.mubr.bf16.mxu0 0
    %3662 = vmatmul.mubr.bf16.gmra.mrb[0].mxu0 %v3173
    %v3663 = vpop.f32.mrb[0].mxu0
    %v3664 = vadd.f32 0.0, %v3663
    %v3665 = vpop.f32.mrb[0].mxu0
    %v3666 = vpop.f32.mrb[0].mxu0
    %v3667 = vadd.f32 0.0, %v3666
    %v3668 = vpop.f32.mrb[0].mxu0
    %3669 = vmatprep.mubr.bf16.mxu0 0
    %3670 = vmatmul.mubr.bf16.gmra.mrb[0].mxu0 %v3176
    %v3671 = vpop.f32.mrb[0].mxu0
    %v3672 = vadd.f32 0.0, %v3671
    %v3673 = vpop.f32.mrb[0].mxu0
    %v3674 = vpop.f32.mrb[0].mxu0
    %v3675 = vadd.f32 0.0, %v3674
    %v3676 = vpop.f32.mrb[0].mxu0
    %3677 = vmatprep.mubr.bf16.mxu0 0
    %3678 = vmatmul.mubr.bf16.gmra.mrb[0].mxu0 %v3179
    %v3679 = vpop.f32.mrb[0].mxu0
    %v3680 = vadd.f32 0.0, %v3679
    %v3681 = vpop.f32.mrb[0].mxu0
    %v3682 = vpop.f32.mrb[0].mxu0
    %v3683 = vadd.f32 0.0, %v3682
    %v3684 = vpop.f32.mrb[0].mxu0
    %3685 = vmatprep.mubr.bf16.mxu0 0
    %3686 = vmatmul.mubr.bf16.gmra.mrb[0].mxu0 %v3182
    %v3687 = vpop.f32.mrb[0].mxu0
    %v3688 = vadd.f32 0.0, %v3687
    %v3689 = vpop.f32.mrb[0].mxu0
    %v3690 = vpop.f32.mrb[0].mxu0
    %v3691 = vadd.f32 0.0, %v3690
    %v3692 = vpop.f32.mrb[0].mxu0
    %3693 = vmatprep.mubr.bf16.mxu0 0
    %3694 = vmatmul.mubr.bf16.gmra.mrb[0].mxu0 %v3185
    %v3695 = vpop.f32.mrb[0].mxu0
    %v3696 = vadd.f32 0.0, %v3695
    %v3697 = vpop.f32.mrb[0].mxu0
    %v3698 = vpop.f32.mrb[0].mxu0
    %v3699 = vadd.f32 0.0, %v3698
    %v3700 = vpop.f32.mrb[0].mxu0
    %3701 = vmatprep.mubr.bf16.mxu0 0
    %3702 = vmatmul.mubr.bf16.gmra.mrb[0].mxu0 %v3188
    %v3703 = vpop.f32.mrb[0].mxu0
    %v3704 = vadd.f32 0.0, %v3703
    %v3705 = vpop.f32.mrb[0].mxu0
    %v3706 = vpop.f32.mrb[0].mxu0
    %v3707 = vadd.f32 0.0, %v3706
    %v3708 = vpop.f32.mrb[0].mxu0
    %3709 = vmatprep.mubr.bf16.mxu0 0
    %3710 = vmatmul.mubr.bf16.gmra.mrb[0].mxu0 %v3191
    %v3711 = vpop.f32.mrb[0].mxu0
    %v3712 = vadd.f32 0.0, %v3711
    %v3713 = vpop.f32.mrb[0].mxu0
    %v3714 = vpop.f32.mrb[0].mxu0
    %v3715 = vadd.f32 0.0, %v3714
    %v3716 = vpop.f32.mrb[0].mxu0
    %3717 = vmatprep.mubr.bf16.mxu0 0
    %3718 = vmatmul.mubr.bf16.gmra.mrb[0].mxu0 %v3194
    %v3719 = vpop.f32.mrb[0].mxu0
    %v3720 = vadd.f32 0.0, %v3719
    %v3721 = vpop.f32.mrb[0].mxu0
    %v3722 = vpop.f32.mrb[0].mxu0
    %v3723 = vadd.f32 0.0, %v3722
    %v3724 = vpop.f32.mrb[0].mxu0
    %3725 = vmatprep.mubr.bf16.mxu0 0
    %3726 = vmatmul.mubr.bf16.gmra.mrb[0].mxu0 %v3197
    %v3727 = vpop.f32.mrb[0].mxu0
    %v3728 = vadd.f32 0.0, %v3727
    %v3729 = vpop.f32.mrb[0].mxu0
    %v3730 = vpop.f32.mrb[0].mxu0
    %v3731 = vadd.f32 0.0, %v3730
    %v3732 = vpop.f32.mrb[0].mxu0
    %3733 = vmatprep.mubr.bf16.mxu0 0
    %3734 = vmatmul.mubr.bf16.gmra.mrb[0].mxu0 %v3200
    %v3735 = vpop.f32.mrb[0].mxu0
    %v3736 = vadd.f32 0.0, %v3735
    %v3737 = vpop.f32.mrb[0].mxu0
    %v3738 = vpop.f32.mrb[0].mxu0
    %v3739 = vadd.f32 0.0, %v3738
    %v3740 = vpop.f32.mrb[0].mxu0
    %3741 = vmatprep.mubr.bf16.mxu0 0
    %3742 = vmatmul.mubr.bf16.gmra.mrb[0].mxu0 %v3203
    %v3743 = vpop.f32.mrb[0].mxu0
    %v3744 = vadd.f32 0.0, %v3743
    %v3745 = vpop.f32.mrb[0].mxu0
    %v3746 = vpop.f32.mrb[0].mxu0
    %v3747 = vadd.f32 0.0, %v3746
    %v3748 = vpop.f32.mrb[0].mxu0
    %3749 = vdwg.mxu0
    %v3750 = vld [vmem:[%s4] sm:$0x1]
    %v3752 = vlaneseq
    %v3753 = vshrl.u32 %v3752, 7
    %v3754 = vsub.s32 0, %v3753
    %v3755 = vrot.slane %v3750, %v3754
    %v3757 = vadd.f32 %v3240, %v3755
    %v3758 = vadd.f32 %v3243, %v3755
    %v3759 = vadd.f32 %v3248, %v3755
    %v3760 = vadd.f32 %v3251, %v3755
    %v3761 = vadd.f32 %v3256, %v3755
    %v3762 = vadd.f32 %v3259, %v3755
    %v3763 = vadd.f32 %v3264, %v3755
    %v3764 = vadd.f32 %v3267, %v3755
    %v3765 = vadd.f32 %v3272, %v3755
    %v3766 = vadd.f32 %v3275, %v3755
    %v3767 = vadd.f32 %v3280, %v3755
    %v3768 = vadd.f32 %v3283, %v3755
    %v3769 = vadd.f32 %v3288, %v3755
    %v3770 = vadd.f32 %v3291, %v3755
    %v3771 = vadd.f32 %v3296, %v3755
    %v3772 = vadd.f32 %v3299, %v3755
    %v3773 = vadd.f32 %v3304, %v3755
    %v3774 = vadd.f32 %v3307, %v3755
    %v3775 = vadd.f32 %v3312, %v3755
    %v3776 = vadd.f32 %v3315, %v3755
    %v3777 = vadd.f32 %v3320, %v3755
    %v3778 = vadd.f32 %v3323, %v3755
    %v3779 = vadd.f32 %v3328, %v3755
    %v3780 = vadd.f32 %v3331, %v3755
    %v3781 = vadd.f32 %v3336, %v3755
    %v3782 = vadd.f32 %v3339, %v3755
    %v3783 = vadd.f32 %v3344, %v3755
    %v3784 = vadd.f32 %v3347, %v3755
    %v3785 = vadd.f32 %v3352, %v3755
    %v3786 = vadd.f32 %v3355, %v3755
    %v3787 = vadd.f32 %v3360, %v3755
    %v3788 = vadd.f32 %v3363, %v3755
    %v3789 = vadd.f32 %v3368, %v3755
    %v3790 = vadd.f32 %v3371, %v3755
    %v3791 = vadd.f32 %v3376, %v3755
    %v3792 = vadd.f32 %v3379, %v3755
    %v3793 = vadd.f32 %v3384, %v3755
    %v3794 = vadd.f32 %v3387, %v3755
    %v3795 = vadd.f32 %v3392, %v3755
    %v3796 = vadd.f32 %v3395, %v3755
    %v3797 = vadd.f32 %v3400, %v3755
    %v3798 = vadd.f32 %v3403, %v3755
    %v3799 = vadd.f32 %v3408, %v3755
    %v3800 = vadd.f32 %v3411, %v3755
    %v3801 = vadd.f32 %v3416, %v3755
    %v3802 = vadd.f32 %v3419, %v3755
    %v3803 = vadd.f32 %v3424, %v3755
    %v3804 = vadd.f32 %v3427, %v3755
    %v3805 = vadd.f32 %v3432, %v3755
    %v3806 = vadd.f32 %v3435, %v3755
    %v3807 = vadd.f32 %v3440, %v3755
    %v3808 = vadd.f32 %v3443, %v3755
    %v3809 = vadd.f32 %v3448, %v3755
    %v3810 = vadd.f32 %v3451, %v3755
    %v3811 = vadd.f32 %v3456, %v3755
    %v3812 = vadd.f32 %v3459, %v3755
    %v3813 = vadd.f32 %v3464, %v3755
    %v3814 = vadd.f32 %v3467, %v3755
    %v3815 = vadd.f32 %v3472, %v3755
    %v3816 = vadd.f32 %v3475, %v3755
    %v3817 = vadd.f32 %v3480, %v3755
    %v3818 = vadd.f32 %v3483, %v3755
    %v3819 = vadd.f32 %v3488, %v3755
    %v3820 = vadd.f32 %v3491, %v3755
    %v3821 = vadd.f32 %v3496, %v3755
    %v3822 = vadd.f32 %v3499, %v3755
    %v3823 = vadd.f32 %v3504, %v3755
    %v3824 = vadd.f32 %v3507, %v3755
    %v3825 = vadd.f32 %v3512, %v3755
    %v3826 = vadd.f32 %v3515, %v3755
    %v3827 = vadd.f32 %v3520, %v3755
    %v3828 = vadd.f32 %v3523, %v3755
    %v3829 = vadd.f32 %v3528, %v3755
    %v3830 = vadd.f32 %v3531, %v3755
    %v3831 = vadd.f32 %v3536, %v3755
    %v3832 = vadd.f32 %v3539, %v3755
    %v3833 = vadd.f32 %v3544, %v3755
    %v3834 = vadd.f32 %v3547, %v3755
    %v3835 = vadd.f32 %v3552, %v3755
    %v3836 = vadd.f32 %v3555, %v3755
    %v3837 = vadd.f32 %v3560, %v3755
    %v3838 = vadd.f32 %v3563, %v3755
    %v3839 = vadd.f32 %v3568, %v3755
    %v3840 = vadd.f32 %v3571, %v3755
    %v3841 = vadd.f32 %v3576, %v3755
    %v3842 = vadd.f32 %v3579, %v3755
    %v3843 = vadd.f32 %v3584, %v3755
    %v3844 = vadd.f32 %v3587, %v3755
    %v3845 = vadd.f32 %v3592, %v3755
    %v3846 = vadd.f32 %v3595, %v3755
    %v3847 = vadd.f32 %v3600, %v3755
    %v3848 = vadd.f32 %v3603, %v3755
    %v3849 = vadd.f32 %v3608, %v3755
    %v3850 = vadd.f32 %v3611, %v3755
    %v3851 = vadd.f32 %v3616, %v3755
    %v3852 = vadd.f32 %v3619, %v3755
    %v3853 = vadd.f32 %v3624, %v3755
    %v3854 = vadd.f32 %v3627, %v3755
    %v3855 = vadd.f32 %v3632, %v3755
    %v3856 = vadd.f32 %v3635, %v3755
    %v3857 = vadd.f32 %v3640, %v3755
    %v3858 = vadd.f32 %v3643, %v3755
    %v3859 = vadd.f32 %v3648, %v3755
    %v3860 = vadd.f32 %v3651, %v3755
    %v3861 = vadd.f32 %v3656, %v3755
    %v3862 = vadd.f32 %v3659, %v3755
    %v3863 = vadd.f32 %v3664, %v3755
    %v3864 = vadd.f32 %v3667, %v3755
    %v3865 = vadd.f32 %v3672, %v3755
    %v3866 = vadd.f32 %v3675, %v3755
    %v3867 = vadd.f32 %v3680, %v3755
    %v3868 = vadd.f32 %v3683, %v3755
    %v3869 = vadd.f32 %v3688, %v3755
    %v3870 = vadd.f32 %v3691, %v3755
    %v3871 = vadd.f32 %v3696, %v3755
    %v3872 = vadd.f32 %v3699, %v3755
    %v3873 = vadd.f32 %v3704, %v3755
    %v3874 = vadd.f32 %v3707, %v3755
    %v3875 = vadd.f32 %v3712, %v3755
    %v3876 = vadd.f32 %v3715, %v3755
    %v3877 = vadd.f32 %v3720, %v3755
    %v3878 = vadd.f32 %v3723, %v3755
    %v3879 = vadd.f32 %v3728, %v3755
    %v3880 = vadd.f32 %v3731, %v3755
    %v3881 = vadd.f32 %v3736, %v3755
    %v3882 = vadd.f32 %v3739, %v3755
    %v3883 = vadd.f32 %v3744, %v3755
    %v3884 = vadd.f32 %v3747, %v3755
    %v3885 = vmax.f32 %v3757, 0.0
    %v3886 = vmax.f32 %v3758, 0.0
    %v3887 = vmax.f32 %v3759, 0.0
    %v3888 = vmax.f32 %v3760, 0.0
    %v3889 = vmax.f32 %v3761, 0.0
    %v3890 = vmax.f32 %v3762, 0.0
    %v3891 = vmax.f32 %v3763, 0.0
    %v3892 = vmax.f32 %v3764, 0.0
    %v3893 = vmax.f32 %v3765, 0.0
    %v3894 = vmax.f32 %v3766, 0.0
    %v3895 = vmax.f32 %v3767, 0.0
    %v3896 = vmax.f32 %v3768, 0.0
    %v3897 = vmax.f32 %v3769, 0.0
    %v3898 = vmax.f32 %v3770, 0.0
    %v3899 = vmax.f32 %v3771, 0.0
    %v3900 = vmax.f32 %v3772, 0.0
    %v3901 = vmax.f32 %v3773, 0.0
    %v3902 = vmax.f32 %v3774, 0.0
    %v3903 = vmax.f32 %v3775, 0.0
    %v3904 = vmax.f32 %v3776, 0.0
    %v3905 = vmax.f32 %v3777, 0.0
    %v3906 = vmax.f32 %v3778, 0.0
    %v3907 = vmax.f32 %v3779, 0.0
    %v3908 = vmax.f32 %v3780, 0.0
    %v3909 = vmax.f32 %v3781, 0.0
    %v3910 = vmax.f32 %v3782, 0.0
    %v3911 = vmax.f32 %v3783, 0.0
    %v3912 = vmax.f32 %v3784, 0.0
    %v3913 = vmax.f32 %v3785, 0.0
    %v3914 = vmax.f32 %v3786, 0.0
    %v3915 = vmax.f32 %v3787, 0.0
    %v3916 = vmax.f32 %v3788, 0.0
    %v3917 = vmax.f32 %v3789, 0.0
    %v3918 = vmax.f32 %v3790, 0.0
    %v3919 = vmax.f32 %v3791, 0.0
    %v3920 = vmax.f32 %v3792, 0.0
    %v3921 = vmax.f32 %v3793, 0.0
    %v3922 = vmax.f32 %v3794, 0.0
    %v3923 = vmax.f32 %v3795, 0.0
    %v3924 = vmax.f32 %v3796, 0.0
    %v3925 = vmax.f32 %v3797, 0.0
    %v3926 = vmax.f32 %v3798, 0.0
    %v3927 = vmax.f32 %v3799, 0.0
    %v3928 = vmax.f32 %v3800, 0.0
    %v3929 = vmax.f32 %v3801, 0.0
    %v3930 = vmax.f32 %v3802, 0.0
    %v3931 = vmax.f32 %v3803, 0.0
    %v3932 = vmax.f32 %v3804, 0.0
    %v3933 = vmax.f32 %v3805, 0.0
    %v3934 = vmax.f32 %v3806, 0.0
    %v3935 = vmax.f32 %v3807, 0.0
    %v3936 = vmax.f32 %v3808, 0.0
    %v3937 = vmax.f32 %v3809, 0.0
    %v3938 = vmax.f32 %v3810, 0.0
    %v3939 = vmax.f32 %v3811, 0.0
    %v3940 = vmax.f32 %v3812, 0.0
    %v3941 = vmax.f32 %v3813, 0.0
    %v3942 = vmax.f32 %v3814, 0.0
    %v3943 = vmax.f32 %v3815, 0.0
    %v3944 = vmax.f32 %v3816, 0.0
    %v3945 = vmax.f32 %v3817, 0.0
    %v3946 = vmax.f32 %v3818, 0.0
    %v3947 = vmax.f32 %v3819, 0.0
    %v3948 = vmax.f32 %v3820, 0.0
    %v3949 = vmax.f32 %v3821, 0.0
    %v3950 = vmax.f32 %v3822, 0.0
    %v3951 = vmax.f32 %v3823, 0.0
    %v3952 = vmax.f32 %v3824, 0.0
    %v3953 = vmax.f32 %v3825, 0.0
    %v3954 = vmax.f32 %v3826, 0.0
    %v3955 = vmax.f32 %v3827, 0.0
    %v3956 = vmax.f32 %v3828, 0.0
    %v3957 = vmax.f32 %v3829, 0.0
    %v3958 = vmax.f32 %v3830, 0.0
    %v3959 = vmax.f32 %v3831, 0.0
    %v3960 = vmax.f32 %v3832, 0.0
    %v3961 = vmax.f32 %v3833, 0.0
    %v3962 = vmax.f32 %v3834, 0.0
    %v3963 = vmax.f32 %v3835, 0.0
    %v3964 = vmax.f32 %v3836, 0.0
    %v3965 = vmax.f32 %v3837, 0.0
    %v3966 = vmax.f32 %v3838, 0.0
    %v3967 = vmax.f32 %v3839, 0.0
    %v3968 = vmax.f32 %v3840, 0.0
    %v3969 = vmax.f32 %v3841, 0.0
    %v3970 = vmax.f32 %v3842, 0.0
    %v3971 = vmax.f32 %v3843, 0.0
    %v3972 = vmax.f32 %v3844, 0.0
    %v3973 = vmax.f32 %v3845, 0.0
    %v3974 = vmax.f32 %v3846, 0.0
    %v3975 = vmax.f32 %v3847, 0.0
    %v3976 = vmax.f32 %v3848, 0.0
    %v3977 = vmax.f32 %v3849, 0.0
    %v3978 = vmax.f32 %v3850, 0.0
    %v3979 = vmax.f32 %v3851, 0.0
    %v3980 = vmax.f32 %v3852, 0.0
    %v3981 = vmax.f32 %v3853, 0.0
    %v3982 = vmax.f32 %v3854, 0.0
    %v3983 = vmax.f32 %v3855, 0.0
    %v3984 = vmax.f32 %v3856, 0.0
    %v3985 = vmax.f32 %v3857, 0.0
    %v3986 = vmax.f32 %v3858, 0.0
    %v3987 = vmax.f32 %v3859, 0.0
    %v3988 = vmax.f32 %v3860, 0.0
    %v3989 = vmax.f32 %v3861, 0.0
    %v3990 = vmax.f32 %v3862, 0.0
    %v3991 = vmax.f32 %v3863, 0.0
    %v3992 = vmax.f32 %v3864, 0.0
    %v3993 = vmax.f32 %v3865, 0.0
    %v3994 = vmax.f32 %v3866, 0.0
    %v3995 = vmax.f32 %v3867, 0.0
    %v3996 = vmax.f32 %v3868, 0.0
    %v3997 = vmax.f32 %v3869, 0.0
    %v3998 = vmax.f32 %v3870, 0.0
    %v3999 = vmax.f32 %v3871, 0.0
    %v4000 = vmax.f32 %v3872, 0.0
    %v4001 = vmax.f32 %v3873, 0.0
    %v4002 = vmax.f32 %v3874, 0.0
    %v4003 = vmax.f32 %v3875, 0.0
    %v4004 = vmax.f32 %v3876, 0.0
    %v4005 = vmax.f32 %v3877, 0.0
    %v4006 = vmax.f32 %v3878, 0.0
    %v4007 = vmax.f32 %v3879, 0.0
    %v4008 = vmax.f32 %v3880, 0.0
    %v4009 = vmax.f32 %v3881, 0.0
    %v4010 = vmax.f32 %v3882, 0.0
    %v4011 = vmax.f32 %v3883, 0.0
    %v4012 = vmax.f32 %v3884, 0.0
    %v4013 = vpack.c.bf16 %v3886, %v3885
    %v4014 = vpack.c.bf16 %v3888, %v3887
    %v4015 = vpack.c.bf16 %v3890, %v3889
    %v4016 = vpack.c.bf16 %v3892, %v3891
    %v4017 = vpack.c.bf16 %v3894, %v3893
    %v4018 = vpack.c.bf16 %v3896, %v3895
    %v4019 = vpack.c.bf16 %v3898, %v3897
    %v4020 = vpack.c.bf16 %v3900, %v3899
    %v4021 = vpack.c.bf16 %v3902, %v3901
    %v4022 = vpack.c.bf16 %v3904, %v3903
    %v4023 = vpack.c.bf16 %v3906, %v3905
    %v4024 = vpack.c.bf16 %v3908, %v3907
    %v4025 = vpack.c.bf16 %v3910, %v3909
    %v4026 = vpack.c.bf16 %v3912, %v3911
    %v4027 = vpack.c.bf16 %v3914, %v3913
    %v4028 = vpack.c.bf16 %v3916, %v3915
    %v4029 = vpack.c.bf16 %v3918, %v3917
    %v4030 = vpack.c.bf16 %v3920, %v3919
    %v4031 = vpack.c.bf16 %v3922, %v3921
    %v4032 = vpack.c.bf16 %v3924, %v3923
    %v4033 = vpack.c.bf16 %v3926, %v3925
    %v4034 = vpack.c.bf16 %v3928, %v3927
    %v4035 = vpack.c.bf16 %v3930, %v3929
    %v4036 = vpack.c.bf16 %v3932, %v3931
    %v4037 = vpack.c.bf16 %v3934, %v3933
    %v4038 = vpack.c.bf16 %v3936, %v3935
    %v4039 = vpack.c.bf16 %v3938, %v3937
    %v4040 = vpack.c.bf16 %v3940, %v3939
    %v4041 = vpack.c.bf16 %v3942, %v3941
    %v4042 = vpack.c.bf16 %v3944, %v3943
    %v4043 = vpack.c.bf16 %v3946, %v3945
    %v4044 = vpack.c.bf16 %v3948, %v3947
    %v4045 = vpack.c.bf16 %v3950, %v3949
    %v4046 = vpack.c.bf16 %v3952, %v3951
    %v4047 = vpack.c.bf16 %v3954, %v3953
    %v4048 = vpack.c.bf16 %v3956, %v3955
    %v4049 = vpack.c.bf16 %v3958, %v3957
    %v4050 = vpack.c.bf16 %v3960, %v3959
    %v4051 = vpack.c.bf16 %v3962, %v3961
    %v4052 = vpack.c.bf16 %v3964, %v3963
    %v4053 = vpack.c.bf16 %v3966, %v3965
    %v4054 = vpack.c.bf16 %v3968, %v3967
    %v4055 = vpack.c.bf16 %v3970, %v3969
    %v4056 = vpack.c.bf16 %v3972, %v3971
    %v4057 = vpack.c.bf16 %v3974, %v3973
    %v4058 = vpack.c.bf16 %v3976, %v3975
    %v4059 = vpack.c.bf16 %v3978, %v3977
    %v4060 = vpack.c.bf16 %v3980, %v3979
    %v4061 = vpack.c.bf16 %v3982, %v3981
    %v4062 = vpack.c.bf16 %v3984, %v3983
    %v4063 = vpack.c.bf16 %v3986, %v3985
    %v4064 = vpack.c.bf16 %v3988, %v3987
    %v4065 = vpack.c.bf16 %v3990, %v3989
    %v4066 = vpack.c.bf16 %v3992, %v3991
    %v4067 = vpack.c.bf16 %v3994, %v3993
    %v4068 = vpack.c.bf16 %v3996, %v3995
    %v4069 = vpack.c.bf16 %v3998, %v3997
    %v4070 = vpack.c.bf16 %v4000, %v3999
    %v4071 = vpack.c.bf16 %v4002, %v4001
    %v4072 = vpack.c.bf16 %v4004, %v4003
    %v4073 = vpack.c.bf16 %v4006, %v4005
    %v4074 = vpack.c.bf16 %v4008, %v4007
    %v4075 = vpack.c.bf16 %v4010, %v4009
    %v4076 = vpack.c.bf16 %v4012, %v4011
    %v4077 = vld [vmem:[%s5] sm:$0xf]
    %v4078 = vld [vmem:[%s5 + $0x4] sm:$0xf]
    %v4079 = vld [vmem:[%s5 + $0x8] sm:$0xf]
    %v4080 = vld [vmem:[%s5 + $0xc] sm:$0xf]
    %v4081 = vld [vmem:[%s5 + $0x10] sm:$0xf]
    %v4082 = vld [vmem:[%s5 + $0x14] sm:$0xf]
    %v4083 = vld [vmem:[%s5 + $0x18] sm:$0xf]
    %v4084 = vld [vmem:[%s5 + $0x1c] sm:$0xf]
    %v4085 = vld [vmem:[%s5 + $0x20] sm:$0xf]
    %v4086 = vld [vmem:[%s5 + $0x24] sm:$0xf]
    %v4087 = vld [vmem:[%s5 + $0x28] sm:$0xf]
    %v4088 = vld [vmem:[%s5 + $0x2c] sm:$0xf]
    %v4089 = vld [vmem:[%s5 + $0x30] sm:$0xf]
    %v4090 = vld [vmem:[%s5 + $0x34] sm:$0xf]
    %v4091 = vld [vmem:[%s5 + $0x38] sm:$0xf]
    %v4092 = vld [vmem:[%s5 + $0x3c] sm:$0xf]
    %v4109 = vunpack.c.l.b16 %v4077
    %v4110 = vunpack.c.l.b16 %v4078
    %v4111 = vunpack.c.l.b16 %v4079
    %v4112 = vunpack.c.l.b16 %v4080
    %v4113 = vunpack.c.l.b16 %v4081
    %v4114 = vunpack.c.l.b16 %v4082
    %v4115 = vunpack.c.l.b16 %v4083
    %v4116 = vunpack.c.l.b16 %v4084
    %v4117 = vunpack.c.l.b16 %v4085
    %v4118 = vunpack.c.l.b16 %v4086
    %v4119 = vunpack.c.l.b16 %v4087
    %v4120 = vunpack.c.l.b16 %v4088
    %v4121 = vunpack.c.l.b16 %v4089
    %v4122 = vunpack.c.l.b16 %v4090
    %v4123 = vunpack.c.l.b16 %v4091
    %v4124 = vunpack.c.l.b16 %v4092
    %v4125 = vpack.c.b16 %v4110, %v4109
    %v4126 = vpack.c.b16 %v4112, %v4111
    %v4127 = vpack.c.b16 %v4114, %v4113
    %v4128 = vpack.c.b16 %v4116, %v4115
    %v4129 = vpack.c.b16 %v4118, %v4117
    %v4130 = vpack.c.b16 %v4120, %v4119
    %v4131 = vpack.c.b16 %v4122, %v4121
    %v4132 = vpack.c.b16 %v4124, %v4123
    %4141 = vmatprep.subr.bf16.mxu0 0
    %4142 = vmatpush1.bf16.msra.mxu0 %v4125
    %4143 = vmatprep.subr.bf16.mxu0 0
    %4144 = vmatpush1.bf16.msra.mxu0 %v4126
    %4145 = vmatprep.subr.bf16.mxu0 0
    %4146 = vmatpush1.bf16.msra.mxu0 %v4127
    %4147 = vmatprep.subr.bf16.mxu0 0
    %4148 = vmatpush1.bf16.msra.mxu0 %v4128
    %4149 = vmatprep.subr.bf16.mxu0 0
    %4150 = vmatpush1.bf16.msra.mxu0 %v4129
    %4151 = vmatprep.subr.bf16.mxu0 0
    %4152 = vmatpush1.bf16.msra.mxu0 %v4130
    %4153 = vmatprep.subr.bf16.mxu0 0
    %4154 = vmatpush1.bf16.msra.mxu0 %v4131
    %4155 = vmatprep.subr.bf16.mxu0 0
    %4156 = vmatpush1.bf16.msra.mxu0 %v4132
    %4157 = vmatprep.subr.bf16.mxu0 0
    %4158 = vmatpush1.bf16.msra.mxu0 0
    %4159 = vmatprep.subr.bf16.mxu0 0
    %4160 = vmatpush1.bf16.msra.mxu0 0
    %4161 = vmatprep.subr.bf16.mxu0 0
    %4162 = vmatpush1.bf16.msra.mxu0 0
    %4163 = vmatprep.subr.bf16.mxu0 0
    %4164 = vmatpush1.bf16.msra.mxu0 0
    %4165 = vmatprep.subr.bf16.mxu0 0
    %4166 = vmatpush1.bf16.msra.mxu0 0
    %4167 = vmatprep.subr.bf16.mxu0 0
    %4168 = vmatpush1.bf16.msra.mxu0 0
    %4169 = vmatprep.subr.bf16.mxu0 0
    %4170 = vmatpush1.bf16.msra.mxu0 0
    %4171 = vmatprep.subr.bf16.mxu0 0
    %4172 = vmatpush1.bf16.msra.mxu0 0
    %4173 = vmatprep.mubr.bf16.mxu0 0
    %4174 = vmatmul.mubr.bf16.gmra.mrb[0].mxu0 %v4013
    %v4175 = vpop.f32.mrb[0].mxu0
    %v4176 = vadd.f32 0.0, %v4175
    %v4177 = vpop.f32.mrb[0].mxu0
    %v4178 = vpop.f32.mrb[0].mxu0
    %v4179 = vadd.f32 0.0, %v4178
    %v4180 = vpop.f32.mrb[0].mxu0
    %4181 = vmatprep.mubr.bf16.mxu0 0
    %4182 = vmatmul.mubr.bf16.gmra.mrb[0].mxu0 %v4014
    %v4183 = vpop.f32.mrb[0].mxu0
    %v4184 = vadd.f32 0.0, %v4183
    %v4185 = vpop.f32.mrb[0].mxu0
    %v4186 = vpop.f32.mrb[0].mxu0
    %v4187 = vadd.f32 0.0, %v4186
    %v4188 = vpop.f32.mrb[0].mxu0
    %4189 = vmatprep.mubr.bf16.mxu0 0
    %4190 = vmatmul.mubr.bf16.gmra.mrb[0].mxu0 %v4015
    %v4191 = vpop.f32.mrb[0].mxu0
    %v4192 = vadd.f32 0.0, %v4191
    %v4193 = vpop.f32.mrb[0].mxu0
    %v4194 = vpop.f32.mrb[0].mxu0
    %v4195 = vadd.f32 0.0, %v4194
    %v4196 = vpop.f32.mrb[0].mxu0
    %4197 = vmatprep.mubr.bf16.mxu0 0
    %4198 = vmatmul.mubr.bf16.gmra.mrb[0].mxu0 %v4016
    %v4199 = vpop.f32.mrb[0].mxu0
    %v4200 = vadd.f32 0.0, %v4199
    %v4201 = vpop.f32.mrb[0].mxu0
    %v4202 = vpop.f32.mrb[0].mxu0
    %v4203 = vadd.f32 0.0, %v4202
    %v4204 = vpop.f32.mrb[0].mxu0
    %4205 = vmatprep.mubr.bf16.mxu0 0
    %4206 = vmatmul.mubr.bf16.gmra.mrb[0].mxu0 %v4017
    %v4207 = vpop.f32.mrb[0].mxu0
    %v4208 = vadd.f32 0.0, %v4207
    %v4209 = vpop.f32.mrb[0].mxu0
    %v4210 = vpop.f32.mrb[0].mxu0
    %v4211 = vadd.f32 0.0, %v4210
    %v4212 = vpop.f32.mrb[0].mxu0
    %4213 = vmatprep.mubr.bf16.mxu0 0
    %4214 = vmatmul.mubr.bf16.gmra.mrb[0].mxu0 %v4018
    %v4215 = vpop.f32.mrb[0].mxu0
    %v4216 = vadd.f32 0.0, %v4215
    %v4217 = vpop.f32.mrb[0].mxu0
    %v4218 = vpop.f32.mrb[0].mxu0
    %v4219 = vadd.f32 0.0, %v4218
    %v4220 = vpop.f32.mrb[0].mxu0
    %4221 = vmatprep.mubr.bf16.mxu0 0
    %4222 = vmatmul.mubr.bf16.gmra.mrb[0].mxu0 %v4019
    %v4223 = vpop.f32.mrb[0].mxu0
    %v4224 = vadd.f32 0.0, %v4223
    %v4225 = vpop.f32.mrb[0].mxu0
    %v4226 = vpop.f32.mrb[0].mxu0
    %v4227 = vadd.f32 0.0, %v4226
    %v4228 = vpop.f32.mrb[0].mxu0
    %4229 = vmatprep.mubr.bf16.mxu0 0
    %4230 = vmatmul.mubr.bf16.gmra.mrb[0].mxu0 %v4020
    %v4231 = vpop.f32.mrb[0].mxu0
    %v4232 = vadd.f32 0.0, %v4231
    %v4233 = vpop.f32.mrb[0].mxu0
    %v4234 = vpop.f32.mrb[0].mxu0
    %v4235 = vadd.f32 0.0, %v4234
    %v4236 = vpop.f32.mrb[0].mxu0
    %4237 = vmatprep.mubr.bf16.mxu0 0
    %4238 = vmatmul.mubr.bf16.gmra.mrb[0].mxu0 %v4021
    %v4239 = vpop.f32.mrb[0].mxu0
    %v4240 = vadd.f32 0.0, %v4239
    %v4241 = vpop.f32.mrb[0].mxu0
    %v4242 = vpop.f32.mrb[0].mxu0
    %v4243 = vadd.f32 0.0, %v4242
    %v4244 = vpop.f32.mrb[0].mxu0
    %4245 = vmatprep.mubr.bf16.mxu0 0
    %4246 = vmatmul.mubr.bf16.gmra.mrb[0].mxu0 %v4022
    %v4247 = vpop.f32.mrb[0].mxu0
    %v4248 = vadd.f32 0.0, %v4247
    %v4249 = vpop.f32.mrb[0].mxu0
    %v4250 = vpop.f32.mrb[0].mxu0
    %v4251 = vadd.f32 0.0, %v4250
    %v4252 = vpop.f32.mrb[0].mxu0
    %4253 = vmatprep.mubr.bf16.mxu0 0
    %4254 = vmatmul.mubr.bf16.gmra.mrb[0].mxu0 %v4023
    %v4255 = vpop.f32.mrb[0].mxu0
    %v4256 = vadd.f32 0.0, %v4255
    %v4257 = vpop.f32.mrb[0].mxu0
    %v4258 = vpop.f32.mrb[0].mxu0
    %v4259 = vadd.f32 0.0, %v4258
    %v4260 = vpop.f32.mrb[0].mxu0
    %4261 = vmatprep.mubr.bf16.mxu0 0
    %4262 = vmatmul.mubr.bf16.gmra.mrb[0].mxu0 %v4024
    %v4263 = vpop.f32.mrb[0].mxu0
    %v4264 = vadd.f32 0.0, %v4263
    %v4265 = vpop.f32.mrb[0].mxu0
    %v4266 = vpop.f32.mrb[0].mxu0
    %v4267 = vadd.f32 0.0, %v4266
    %v4268 = vpop.f32.mrb[0].mxu0
    %4269 = vmatprep.mubr.bf16.mxu0 0
    %4270 = vmatmul.mubr.bf16.gmra.mrb[0].mxu0 %v4025
    %v4271 = vpop.f32.mrb[0].mxu0
    %v4272 = vadd.f32 0.0, %v4271
    %v4273 = vpop.f32.mrb[0].mxu0
    %v4274 = vpop.f32.mrb[0].mxu0
    %v4275 = vadd.f32 0.0, %v4274
    %v4276 = vpop.f32.mrb[0].mxu0
    %4277 = vmatprep.mubr.bf16.mxu0 0
    %4278 = vmatmul.mubr.bf16.gmra.mrb[0].mxu0 %v4026
    %v4279 = vpop.f32.mrb[0].mxu0
    %v4280 = vadd.f32 0.0, %v4279
    %v4281 = vpop.f32.mrb[0].mxu0
    %v4282 = vpop.f32.mrb[0].mxu0
    %v4283 = vadd.f32 0.0, %v4282
    %v4284 = vpop.f32.mrb[0].mxu0
    %4285 = vmatprep.mubr.bf16.mxu0 0
    %4286 = vmatmul.mubr.bf16.gmra.mrb[0].mxu0 %v4027
    %v4287 = vpop.f32.mrb[0].mxu0
    %v4288 = vadd.f32 0.0, %v4287
    %v4289 = vpop.f32.mrb[0].mxu0
    %v4290 = vpop.f32.mrb[0].mxu0
    %v4291 = vadd.f32 0.0, %v4290
    %v4292 = vpop.f32.mrb[0].mxu0
    %4293 = vmatprep.mubr.bf16.mxu0 0
    %4294 = vmatmul.mubr.bf16.gmra.mrb[0].mxu0 %v4028
    %v4295 = vpop.f32.mrb[0].mxu0
    %v4296 = vadd.f32 0.0, %v4295
    %v4297 = vpop.f32.mrb[0].mxu0
    %v4298 = vpop.f32.mrb[0].mxu0
    %v4299 = vadd.f32 0.0, %v4298
    %v4300 = vpop.f32.mrb[0].mxu0
    %4301 = vmatprep.mubr.bf16.mxu0 0
    %4302 = vmatmul.mubr.bf16.gmra.mrb[0].mxu0 %v4029
    %v4303 = vpop.f32.mrb[0].mxu0
    %v4304 = vadd.f32 0.0, %v4303
    %v4305 = vpop.f32.mrb[0].mxu0
    %v4306 = vpop.f32.mrb[0].mxu0
    %v4307 = vadd.f32 0.0, %v4306
    %v4308 = vpop.f32.mrb[0].mxu0
    %4309 = vmatprep.mubr.bf16.mxu0 0
    %4310 = vmatmul.mubr.bf16.gmra.mrb[0].mxu0 %v4030
    %v4311 = vpop.f32.mrb[0].mxu0
    %v4312 = vadd.f32 0.0, %v4311
    %v4313 = vpop.f32.mrb[0].mxu0
    %v4314 = vpop.f32.mrb[0].mxu0
    %v4315 = vadd.f32 0.0, %v4314
    %v4316 = vpop.f32.mrb[0].mxu0
    %4317 = vmatprep.mubr.bf16.mxu0 0
    %4318 = vmatmul.mubr.bf16.gmra.mrb[0].mxu0 %v4031
    %v4319 = vpop.f32.mrb[0].mxu0
    %v4320 = vadd.f32 0.0, %v4319
    %v4321 = vpop.f32.mrb[0].mxu0
    %v4322 = vpop.f32.mrb[0].mxu0
    %v4323 = vadd.f32 0.0, %v4322
    %v4324 = vpop.f32.mrb[0].mxu0
    %4325 = vmatprep.mubr.bf16.mxu0 0
    %4326 = vmatmul.mubr.bf16.gmra.mrb[0].mxu0 %v4032
    %v4327 = vpop.f32.mrb[0].mxu0
    %v4328 = vadd.f32 0.0, %v4327
    %v4329 = vpop.f32.mrb[0].mxu0
    %v4330 = vpop.f32.mrb[0].mxu0
    %v4331 = vadd.f32 0.0, %v4330
    %v4332 = vpop.f32.mrb[0].mxu0
    %4333 = vmatprep.mubr.bf16.mxu0 0
    %4334 = vmatmul.mubr.bf16.gmra.mrb[0].mxu0 %v4033
    %v4335 = vpop.f32.mrb[0].mxu0
    %v4336 = vadd.f32 0.0, %v4335
    %v4337 = vpop.f32.mrb[0].mxu0
    %v4338 = vpop.f32.mrb[0].mxu0
    %v4339 = vadd.f32 0.0, %v4338
    %v4340 = vpop.f32.mrb[0].mxu0
    %4341 = vmatprep.mubr.bf16.mxu0 0
    %4342 = vmatmul.mubr.bf16.gmra.mrb[0].mxu0 %v4034
    %v4343 = vpop.f32.mrb[0].mxu0
    %v4344 = vadd.f32 0.0, %v4343
    %v4345 = vpop.f32.mrb[0].mxu0
    %v4346 = vpop.f32.mrb[0].mxu0
    %v4347 = vadd.f32 0.0, %v4346
    %v4348 = vpop.f32.mrb[0].mxu0
    %4349 = vmatprep.mubr.bf16.mxu0 0
    %4350 = vmatmul.mubr.bf16.gmra.mrb[0].mxu0 %v4035
    %v4351 = vpop.f32.mrb[0].mxu0
    %v4352 = vadd.f32 0.0, %v4351
    %v4353 = vpop.f32.mrb[0].mxu0
    %v4354 = vpop.f32.mrb[0].mxu0
    %v4355 = vadd.f32 0.0, %v4354
    %v4356 = vpop.f32.mrb[0].mxu0
    %4357 = vmatprep.mubr.bf16.mxu0 0
    %4358 = vmatmul.mubr.bf16.gmra.mrb[0].mxu0 %v4036
    %v4359 = vpop.f32.mrb[0].mxu0
    %v4360 = vadd.f32 0.0, %v4359
    %v4361 = vpop.f32.mrb[0].mxu0
    %v4362 = vpop.f32.mrb[0].mxu0
    %v4363 = vadd.f32 0.0, %v4362
    %v4364 = vpop.f32.mrb[0].mxu0
    %4365 = vmatprep.mubr.bf16.mxu0 0
    %4366 = vmatmul.mubr.bf16.gmra.mrb[0].mxu0 %v4037
    %v4367 = vpop.f32.mrb[0].mxu0
    %v4368 = vadd.f32 0.0, %v4367
    %v4369 = vpop.f32.mrb[0].mxu0
    %v4370 = vpop.f32.mrb[0].mxu0
    %v4371 = vadd.f32 0.0, %v4370
    %v4372 = vpop.f32.mrb[0].mxu0
    %4373 = vmatprep.mubr.bf16.mxu0 0
    %4374 = vmatmul.mubr.bf16.gmra.mrb[0].mxu0 %v4038
    %v4375 = vpop.f32.mrb[0].mxu0
    %v4376 = vadd.f32 0.0, %v4375
    %v4377 = vpop.f32.mrb[0].mxu0
    %v4378 = vpop.f32.mrb[0].mxu0
    %v4379 = vadd.f32 0.0, %v4378
    %v4380 = vpop.f32.mrb[0].mxu0
    %4381 = vmatprep.mubr.bf16.mxu0 0
    %4382 = vmatmul.mubr.bf16.gmra.mrb[0].mxu0 %v4039
    %v4383 = vpop.f32.mrb[0].mxu0
    %v4384 = vadd.f32 0.0, %v4383
    %v4385 = vpop.f32.mrb[0].mxu0
    %v4386 = vpop.f32.mrb[0].mxu0
    %v4387 = vadd.f32 0.0, %v4386
    %v4388 = vpop.f32.mrb[0].mxu0
    %4389 = vmatprep.mubr.bf16.mxu0 0
    %4390 = vmatmul.mubr.bf16.gmra.mrb[0].mxu0 %v4040
    %v4391 = vpop.f32.mrb[0].mxu0
    %v4392 = vadd.f32 0.0, %v4391
    %v4393 = vpop.f32.mrb[0].mxu0
    %v4394 = vpop.f32.mrb[0].mxu0
    %v4395 = vadd.f32 0.0, %v4394
    %v4396 = vpop.f32.mrb[0].mxu0
    %4397 = vmatprep.mubr.bf16.mxu0 0
    %4398 = vmatmul.mubr.bf16.gmra.mrb[0].mxu0 %v4041
    %v4399 = vpop.f32.mrb[0].mxu0
    %v4400 = vadd.f32 0.0, %v4399
    %v4401 = vpop.f32.mrb[0].mxu0
    %v4402 = vpop.f32.mrb[0].mxu0
    %v4403 = vadd.f32 0.0, %v4402
    %v4404 = vpop.f32.mrb[0].mxu0
    %4405 = vmatprep.mubr.bf16.mxu0 0
    %4406 = vmatmul.mubr.bf16.gmra.mrb[0].mxu0 %v4042
    %v4407 = vpop.f32.mrb[0].mxu0
    %v4408 = vadd.f32 0.0, %v4407
    %v4409 = vpop.f32.mrb[0].mxu0
    %v4410 = vpop.f32.mrb[0].mxu0
    %v4411 = vadd.f32 0.0, %v4410
    %v4412 = vpop.f32.mrb[0].mxu0
    %4413 = vmatprep.mubr.bf16.mxu0 0
    %4414 = vmatmul.mubr.bf16.gmra.mrb[0].mxu0 %v4043
    %v4415 = vpop.f32.mrb[0].mxu0
    %v4416 = vadd.f32 0.0, %v4415
    %v4417 = vpop.f32.mrb[0].mxu0
    %v4418 = vpop.f32.mrb[0].mxu0
    %v4419 = vadd.f32 0.0, %v4418
    %v4420 = vpop.f32.mrb[0].mxu0
    %4421 = vmatprep.mubr.bf16.mxu0 0
    %4422 = vmatmul.mubr.bf16.gmra.mrb[0].mxu0 %v4044
    %v4423 = vpop.f32.mrb[0].mxu0
    %v4424 = vadd.f32 0.0, %v4423
    %v4425 = vpop.f32.mrb[0].mxu0
    %v4426 = vpop.f32.mrb[0].mxu0
    %v4427 = vadd.f32 0.0, %v4426
    %v4428 = vpop.f32.mrb[0].mxu0
    %4429 = vmatprep.mubr.bf16.mxu0 0
    %4430 = vmatmul.mubr.bf16.gmra.mrb[0].mxu0 %v4045
    %v4431 = vpop.f32.mrb[0].mxu0
    %v4432 = vadd.f32 0.0, %v4431
    %v4433 = vpop.f32.mrb[0].mxu0
    %v4434 = vpop.f32.mrb[0].mxu0
    %v4435 = vadd.f32 0.0, %v4434
    %v4436 = vpop.f32.mrb[0].mxu0
    %4437 = vmatprep.mubr.bf16.mxu0 0
    %4438 = vmatmul.mubr.bf16.gmra.mrb[0].mxu0 %v4046
    %v4439 = vpop.f32.mrb[0].mxu0
    %v4440 = vadd.f32 0.0, %v4439
    %v4441 = vpop.f32.mrb[0].mxu0
    %v4442 = vpop.f32.mrb[0].mxu0
    %v4443 = vadd.f32 0.0, %v4442
    %v4444 = vpop.f32.mrb[0].mxu0
    %4445 = vmatprep.mubr.bf16.mxu0 0
    %4446 = vmatmul.mubr.bf16.gmra.mrb[0].mxu0 %v4047
    %v4447 = vpop.f32.mrb[0].mxu0
    %v4448 = vadd.f32 0.0, %v4447
    %v4449 = vpop.f32.mrb[0].mxu0
    %v4450 = vpop.f32.mrb[0].mxu0
    %v4451 = vadd.f32 0.0, %v4450
    %v4452 = vpop.f32.mrb[0].mxu0
    %4453 = vmatprep.mubr.bf16.mxu0 0
    %4454 = vmatmul.mubr.bf16.gmra.mrb[0].mxu0 %v4048
    %v4455 = vpop.f32.mrb[0].mxu0
    %v4456 = vadd.f32 0.0, %v4455
    %v4457 = vpop.f32.mrb[0].mxu0
    %v4458 = vpop.f32.mrb[0].mxu0
    %v4459 = vadd.f32 0.0, %v4458
    %v4460 = vpop.f32.mrb[0].mxu0
    %4461 = vmatprep.mubr.bf16.mxu0 0
    %4462 = vmatmul.mubr.bf16.gmra.mrb[0].mxu0 %v4049
    %v4463 = vpop.f32.mrb[0].mxu0
    %v4464 = vadd.f32 0.0, %v4463
    %v4465 = vpop.f32.mrb[0].mxu0
    %v4466 = vpop.f32.mrb[0].mxu0
    %v4467 = vadd.f32 0.0, %v4466
    %v4468 = vpop.f32.mrb[0].mxu0
    %4469 = vmatprep.mubr.bf16.mxu0 0
    %4470 = vmatmul.mubr.bf16.gmra.mrb[0].mxu0 %v4050
    %v4471 = vpop.f32.mrb[0].mxu0
    %v4472 = vadd.f32 0.0, %v4471
    %v4473 = vpop.f32.mrb[0].mxu0
    %v4474 = vpop.f32.mrb[0].mxu0
    %v4475 = vadd.f32 0.0, %v4474
    %v4476 = vpop.f32.mrb[0].mxu0
    %4477 = vmatprep.mubr.bf16.mxu0 0
    %4478 = vmatmul.mubr.bf16.gmra.mrb[0].mxu0 %v4051
    %v4479 = vpop.f32.mrb[0].mxu0
    %v4480 = vadd.f32 0.0, %v4479
    %v4481 = vpop.f32.mrb[0].mxu0
    %v4482 = vpop.f32.mrb[0].mxu0
    %v4483 = vadd.f32 0.0, %v4482
    %v4484 = vpop.f32.mrb[0].mxu0
    %4485 = vmatprep.mubr.bf16.mxu0 0
    %4486 = vmatmul.mubr.bf16.gmra.mrb[0].mxu0 %v4052
    %v4487 = vpop.f32.mrb[0].mxu0
    %v4488 = vadd.f32 0.0, %v4487
    %v4489 = vpop.f32.mrb[0].mxu0
    %v4490 = vpop.f32.mrb[0].mxu0
    %v4491 = vadd.f32 0.0, %v4490
    %v4492 = vpop.f32.mrb[0].mxu0
    %4493 = vmatprep.mubr.bf16.mxu0 0
    %4494 = vmatmul.mubr.bf16.gmra.mrb[0].mxu0 %v4053
    %v4495 = vpop.f32.mrb[0].mxu0
    %v4496 = vadd.f32 0.0, %v4495
    %v4497 = vpop.f32.mrb[0].mxu0
    %v4498 = vpop.f32.mrb[0].mxu0
    %v4499 = vadd.f32 0.0, %v4498
    %v4500 = vpop.f32.mrb[0].mxu0
    %4501 = vmatprep.mubr.bf16.mxu0 0
    %4502 = vmatmul.mubr.bf16.gmra.mrb[0].mxu0 %v4054
    %v4503 = vpop.f32.mrb[0].mxu0
    %v4504 = vadd.f32 0.0, %v4503
    %v4505 = vpop.f32.mrb[0].mxu0
    %v4506 = vpop.f32.mrb[0].mxu0
    %v4507 = vadd.f32 0.0, %v4506
    %v4508 = vpop.f32.mrb[0].mxu0
    %4509 = vmatprep.mubr.bf16.mxu0 0
    %4510 = vmatmul.mubr.bf16.gmra.mrb[0].mxu0 %v4055
    %v4511 = vpop.f32.mrb[0].mxu0
    %v4512 = vadd.f32 0.0, %v4511
    %v4513 = vpop.f32.mrb[0].mxu0
    %v4514 = vpop.f32.mrb[0].mxu0
    %v4515 = vadd.f32 0.0, %v4514
    %v4516 = vpop.f32.mrb[0].mxu0
    %4517 = vmatprep.mubr.bf16.mxu0 0
    %4518 = vmatmul.mubr.bf16.gmra.mrb[0].mxu0 %v4056
    %v4519 = vpop.f32.mrb[0].mxu0
    %v4520 = vadd.f32 0.0, %v4519
    %v4521 = vpop.f32.mrb[0].mxu0
    %v4522 = vpop.f32.mrb[0].mxu0
    %v4523 = vadd.f32 0.0, %v4522
    %v4524 = vpop.f32.mrb[0].mxu0
    %4525 = vmatprep.mubr.bf16.mxu0 0
    %4526 = vmatmul.mubr.bf16.gmra.mrb[0].mxu0 %v4057
    %v4527 = vpop.f32.mrb[0].mxu0
    %v4528 = vadd.f32 0.0, %v4527
    %v4529 = vpop.f32.mrb[0].mxu0
    %v4530 = vpop.f32.mrb[0].mxu0
    %v4531 = vadd.f32 0.0, %v4530
    %v4532 = vpop.f32.mrb[0].mxu0
    %4533 = vmatprep.mubr.bf16.mxu0 0
    %4534 = vmatmul.mubr.bf16.gmra.mrb[0].mxu0 %v4058
    %v4535 = vpop.f32.mrb[0].mxu0
    %v4536 = vadd.f32 0.0, %v4535
    %v4537 = vpop.f32.mrb[0].mxu0
    %v4538 = vpop.f32.mrb[0].mxu0
    %v4539 = vadd.f32 0.0, %v4538
    %v4540 = vpop.f32.mrb[0].mxu0
    %4541 = vmatprep.mubr.bf16.mxu0 0
    %4542 = vmatmul.mubr.bf16.gmra.mrb[0].mxu0 %v4059
    %v4543 = vpop.f32.mrb[0].mxu0
    %v4544 = vadd.f32 0.0, %v4543
    %v4545 = vpop.f32.mrb[0].mxu0
    %v4546 = vpop.f32.mrb[0].mxu0
    %v4547 = vadd.f32 0.0, %v4546
    %v4548 = vpop.f32.mrb[0].mxu0
    %4549 = vmatprep.mubr.bf16.mxu0 0
    %4550 = vmatmul.mubr.bf16.gmra.mrb[0].mxu0 %v4060
    %v4551 = vpop.f32.mrb[0].mxu0
    %v4552 = vadd.f32 0.0, %v4551
    %v4553 = vpop.f32.mrb[0].mxu0
    %v4554 = vpop.f32.mrb[0].mxu0
    %v4555 = vadd.f32 0.0, %v4554
    %v4556 = vpop.f32.mrb[0].mxu0
    %4557 = vmatprep.mubr.bf16.mxu0 0
    %4558 = vmatmul.mubr.bf16.gmra.mrb[0].mxu0 %v4061
    %v4559 = vpop.f32.mrb[0].mxu0
    %v4560 = vadd.f32 0.0, %v4559
    %v4561 = vpop.f32.mrb[0].mxu0
    %v4562 = vpop.f32.mrb[0].mxu0
    %v4563 = vadd.f32 0.0, %v4562
    %v4564 = vpop.f32.mrb[0].mxu0
    %4565 = vmatprep.mubr.bf16.mxu0 0
    %4566 = vmatmul.mubr.bf16.gmra.mrb[0].mxu0 %v4062
    %v4567 = vpop.f32.mrb[0].mxu0
    %v4568 = vadd.f32 0.0, %v4567
    %v4569 = vpop.f32.mrb[0].mxu0
    %v4570 = vpop.f32.mrb[0].mxu0
    %v4571 = vadd.f32 0.0, %v4570
    %v4572 = vpop.f32.mrb[0].mxu0
    %4573 = vmatprep.mubr.bf16.mxu0 0
    %4574 = vmatmul.mubr.bf16.gmra.mrb[0].mxu0 %v4063
    %v4575 = vpop.f32.mrb[0].mxu0
    %v4576 = vadd.f32 0.0, %v4575
    %v4577 = vpop.f32.mrb[0].mxu0
    %v4578 = vpop.f32.mrb[0].mxu0
    %v4579 = vadd.f32 0.0, %v4578
    %v4580 = vpop.f32.mrb[0].mxu0
    %4581 = vmatprep.mubr.bf16.mxu0 0
    %4582 = vmatmul.mubr.bf16.gmra.mrb[0].mxu0 %v4064
    %v4583 = vpop.f32.mrb[0].mxu0
    %v4584 = vadd.f32 0.0, %v4583
    %v4585 = vpop.f32.mrb[0].mxu0
    %v4586 = vpop.f32.mrb[0].mxu0
    %v4587 = vadd.f32 0.0, %v4586
    %v4588 = vpop.f32.mrb[0].mxu0
    %4589 = vmatprep.mubr.bf16.mxu0 0
    %4590 = vmatmul.mubr.bf16.gmra.mrb[0].mxu0 %v4065
    %v4591 = vpop.f32.mrb[0].mxu0
    %v4592 = vadd.f32 0.0, %v4591
    %v4593 = vpop.f32.mrb[0].mxu0
    %v4594 = vpop.f32.mrb[0].mxu0
    %v4595 = vadd.f32 0.0, %v4594
    %v4596 = vpop.f32.mrb[0].mxu0
    %4597 = vmatprep.mubr.bf16.mxu0 0
    %4598 = vmatmul.mubr.bf16.gmra.mrb[0].mxu0 %v4066
    %v4599 = vpop.f32.mrb[0].mxu0
    %v4600 = vadd.f32 0.0, %v4599
    %v4601 = vpop.f32.mrb[0].mxu0
    %v4602 = vpop.f32.mrb[0].mxu0
    %v4603 = vadd.f32 0.0, %v4602
    %v4604 = vpop.f32.mrb[0].mxu0
    %4605 = vmatprep.mubr.bf16.mxu0 0
    %4606 = vmatmul.mubr.bf16.gmra.mrb[0].mxu0 %v4067
    %v4607 = vpop.f32.mrb[0].mxu0
    %v4608 = vadd.f32 0.0, %v4607
    %v4609 = vpop.f32.mrb[0].mxu0
    %v4610 = vpop.f32.mrb[0].mxu0
    %v4611 = vadd.f32 0.0, %v4610
    %v4612 = vpop.f32.mrb[0].mxu0
    %4613 = vmatprep.mubr.bf16.mxu0 0
    %4614 = vmatmul.mubr.bf16.gmra.mrb[0].mxu0 %v4068
    %v4615 = vpop.f32.mrb[0].mxu0
    %v4616 = vadd.f32 0.0, %v4615
    %v4617 = vpop.f32.mrb[0].mxu0
    %v4618 = vpop.f32.mrb[0].mxu0
    %v4619 = vadd.f32 0.0, %v4618
    %v4620 = vpop.f32.mrb[0].mxu0
    %4621 = vmatprep.mubr.bf16.mxu0 0
    %4622 = vmatmul.mubr.bf16.gmra.mrb[0].mxu0 %v4069
    %v4623 = vpop.f32.mrb[0].mxu0
    %v4624 = vadd.f32 0.0, %v4623
    %v4625 = vpop.f32.mrb[0].mxu0
    %v4626 = vpop.f32.mrb[0].mxu0
    %v4627 = vadd.f32 0.0, %v4626
    %v4628 = vpop.f32.mrb[0].mxu0
    %4629 = vmatprep.mubr.bf16.mxu0 0
    %4630 = vmatmul.mubr.bf16.gmra.mrb[0].mxu0 %v4070
    %v4631 = vpop.f32.mrb[0].mxu0
    %v4632 = vadd.f32 0.0, %v4631
    %v4633 = vpop.f32.mrb[0].mxu0
    %v4634 = vpop.f32.mrb[0].mxu0
    %v4635 = vadd.f32 0.0, %v4634
    %v4636 = vpop.f32.mrb[0].mxu0
    %4637 = vmatprep.mubr.bf16.mxu0 0
    %4638 = vmatmul.mubr.bf16.gmra.mrb[0].mxu0 %v4071
    %v4639 = vpop.f32.mrb[0].mxu0
    %v4640 = vadd.f32 0.0, %v4639
    %v4641 = vpop.f32.mrb[0].mxu0
    %v4642 = vpop.f32.mrb[0].mxu0
    %v4643 = vadd.f32 0.0, %v4642
    %v4644 = vpop.f32.mrb[0].mxu0
    %4645 = vmatprep.mubr.bf16.mxu0 0
    %4646 = vmatmul.mubr.bf16.gmra.mrb[0].mxu0 %v4072
    %v4647 = vpop.f32.mrb[0].mxu0
    %v4648 = vadd.f32 0.0, %v4647
    %v4649 = vpop.f32.mrb[0].mxu0
    %v4650 = vpop.f32.mrb[0].mxu0
    %v4651 = vadd.f32 0.0, %v4650
    %v4652 = vpop.f32.mrb[0].mxu0
    %4653 = vmatprep.mubr.bf16.mxu0 0
    %4654 = vmatmul.mubr.bf16.gmra.mrb[0].mxu0 %v4073
    %v4655 = vpop.f32.mrb[0].mxu0
    %v4656 = vadd.f32 0.0, %v4655
    %v4657 = vpop.f32.mrb[0].mxu0
    %v4658 = vpop.f32.mrb[0].mxu0
    %v4659 = vadd.f32 0.0, %v4658
    %v4660 = vpop.f32.mrb[0].mxu0
    %4661 = vmatprep.mubr.bf16.mxu0 0
    %4662 = vmatmul.mubr.bf16.gmra.mrb[0].mxu0 %v4074
    %v4663 = vpop.f32.mrb[0].mxu0
    %v4664 = vadd.f32 0.0, %v4663
    %v4665 = vpop.f32.mrb[0].mxu0
    %v4666 = vpop.f32.mrb[0].mxu0
    %v4667 = vadd.f32 0.0, %v4666
    %v4668 = vpop.f32.mrb[0].mxu0
    %4669 = vmatprep.mubr.bf16.mxu0 0
    %4670 = vmatmul.mubr.bf16.gmra.mrb[0].mxu0 %v4075
    %v4671 = vpop.f32.mrb[0].mxu0
    %v4672 = vadd.f32 0.0, %v4671
    %v4673 = vpop.f32.mrb[0].mxu0
    %v4674 = vpop.f32.mrb[0].mxu0
    %v4675 = vadd.f32 0.0, %v4674
    %v4676 = vpop.f32.mrb[0].mxu0
    %4677 = vmatprep.mubr.bf16.mxu0 0
    %4678 = vmatmul.mubr.bf16.gmra.mrb[0].mxu0 %v4076
    %v4679 = vpop.f32.mrb[0].mxu0
    %v4680 = vadd.f32 0.0, %v4679
    %v4681 = vpop.f32.mrb[0].mxu0
    %v4682 = vpop.f32.mrb[0].mxu0
    %v4683 = vadd.f32 0.0, %v4682
    %v4684 = vpop.f32.mrb[0].mxu0
    %4685 = vdwg.mxu0
    %s4686 = sld [smem:[#allocation2]]
    %v4687 = vstv %s4686
    %v4688 = vadd.f32 %v4176, %v4687
    %v4689 = vadd.f32 %v4179, %v4687
    %v4690 = vadd.f32 %v4184, %v4687
    %v4691 = vadd.f32 %v4187, %v4687
    %v4692 = vadd.f32 %v4192, %v4687
    %v4693 = vadd.f32 %v4195, %v4687
    %v4694 = vadd.f32 %v4200, %v4687
    %v4695 = vadd.f32 %v4203, %v4687
    %v4696 = vadd.f32 %v4208, %v4687
    %v4697 = vadd.f32 %v4211, %v4687
    %v4698 = vadd.f32 %v4216, %v4687
    %v4699 = vadd.f32 %v4219, %v4687
    %v4700 = vadd.f32 %v4224, %v4687
    %v4701 = vadd.f32 %v4227, %v4687
    %v4702 = vadd.f32 %v4232, %v4687
    %v4703 = vadd.f32 %v4235, %v4687
    %v4704 = vadd.f32 %v4240, %v4687
    %v4705 = vadd.f32 %v4243, %v4687
    %v4706 = vadd.f32 %v4248, %v4687
    %v4707 = vadd.f32 %v4251, %v4687
    %v4708 = vadd.f32 %v4256, %v4687
    %v4709 = vadd.f32 %v4259, %v4687
    %v4710 = vadd.f32 %v4264, %v4687
    %v4711 = vadd.f32 %v4267, %v4687
    %v4712 = vadd.f32 %v4272, %v4687
    %v4713 = vadd.f32 %v4275, %v4687
    %v4714 = vadd.f32 %v4280, %v4687
    %v4715 = vadd.f32 %v4283, %v4687
    %v4716 = vadd.f32 %v4288, %v4687
    %v4717 = vadd.f32 %v4291, %v4687
    %v4718 = vadd.f32 %v4296, %v4687
    %v4719 = vadd.f32 %v4299, %v4687
    %v4720 = vadd.f32 %v4304, %v4687
    %v4721 = vadd.f32 %v4307, %v4687
    %v4722 = vadd.f32 %v4312, %v4687
    %v4723 = vadd.f32 %v4315, %v4687
    %v4724 = vadd.f32 %v4320, %v4687
    %v4725 = vadd.f32 %v4323, %v4687
    %v4726 = vadd.f32 %v4328, %v4687
    %v4727 = vadd.f32 %v4331, %v4687
    %v4728 = vadd.f32 %v4336, %v4687
    %v4729 = vadd.f32 %v4339, %v4687
    %v4730 = vadd.f32 %v4344, %v4687
    %v4731 = vadd.f32 %v4347, %v4687
    %v4732 = vadd.f32 %v4352, %v4687
    %v4733 = vadd.f32 %v4355, %v4687
    %v4734 = vadd.f32 %v4360, %v4687
    %v4735 = vadd.f32 %v4363, %v4687
    %v4736 = vadd.f32 %v4368, %v4687
    %v4737 = vadd.f32 %v4371, %v4687
    %v4738 = vadd.f32 %v4376, %v4687
    %v4739 = vadd.f32 %v4379, %v4687
    %v4740 = vadd.f32 %v4384, %v4687
    %v4741 = vadd.f32 %v4387, %v4687
    %v4742 = vadd.f32 %v4392, %v4687
    %v4743 = vadd.f32 %v4395, %v4687
    %v4744 = vadd.f32 %v4400, %v4687
    %v4745 = vadd.f32 %v4403, %v4687
    %v4746 = vadd.f32 %v4408, %v4687
    %v4747 = vadd.f32 %v4411, %v4687
    %v4748 = vadd.f32 %v4416, %v4687
    %v4749 = vadd.f32 %v4419, %v4687
    %v4750 = vadd.f32 %v4424, %v4687
    %v4751 = vadd.f32 %v4427, %v4687
    %v4752 = vadd.f32 %v4432, %v4687
    %v4753 = vadd.f32 %v4435, %v4687
    %v4754 = vadd.f32 %v4440, %v4687
    %v4755 = vadd.f32 %v4443, %v4687
    %v4756 = vadd.f32 %v4448, %v4687
    %v4757 = vadd.f32 %v4451, %v4687
    %v4758 = vadd.f32 %v4456, %v4687
    %v4759 = vadd.f32 %v4459, %v4687
    %v4760 = vadd.f32 %v4464, %v4687
    %v4761 = vadd.f32 %v4467, %v4687
    %v4762 = vadd.f32 %v4472, %v4687
    %v4763 = vadd.f32 %v4475, %v4687
    %v4764 = vadd.f32 %v4480, %v4687
    %v4765 = vadd.f32 %v4483, %v4687
    %v4766 = vadd.f32 %v4488, %v4687
    %v4767 = vadd.f32 %v4491, %v4687
    %v4768 = vadd.f32 %v4496, %v4687
    %v4769 = vadd.f32 %v4499, %v4687
    %v4770 = vadd.f32 %v4504, %v4687
    %v4771 = vadd.f32 %v4507, %v4687
    %v4772 = vadd.f32 %v4512, %v4687
    %v4773 = vadd.f32 %v4515, %v4687
    %v4774 = vadd.f32 %v4520, %v4687
    %v4775 = vadd.f32 %v4523, %v4687
    %v4776 = vadd.f32 %v4528, %v4687
    %v4777 = vadd.f32 %v4531, %v4687
    %v4778 = vadd.f32 %v4536, %v4687
    %v4779 = vadd.f32 %v4539, %v4687
    %v4780 = vadd.f32 %v4544, %v4687
    %v4781 = vadd.f32 %v4547, %v4687
    %v4782 = vadd.f32 %v4552, %v4687
    %v4783 = vadd.f32 %v4555, %v4687
    %v4784 = vadd.f32 %v4560, %v4687
    %v4785 = vadd.f32 %v4563, %v4687
    %v4786 = vadd.f32 %v4568, %v4687
    %v4787 = vadd.f32 %v4571, %v4687
    %v4788 = vadd.f32 %v4576, %v4687
    %v4789 = vadd.f32 %v4579, %v4687
    %v4790 = vadd.f32 %v4584, %v4687
    %v4791 = vadd.f32 %v4587, %v4687
    %v4792 = vadd.f32 %v4592, %v4687
    %v4793 = vadd.f32 %v4595, %v4687
    %v4794 = vadd.f32 %v4600, %v4687
    %v4795 = vadd.f32 %v4603, %v4687
    %v4796 = vadd.f32 %v4608, %v4687
    %v4797 = vadd.f32 %v4611, %v4687
    %v4798 = vadd.f32 %v4616, %v4687
    %v4799 = vadd.f32 %v4619, %v4687
    %v4800 = vadd.f32 %v4624, %v4687
    %v4801 = vadd.f32 %v4627, %v4687
    %v4802 = vadd.f32 %v4632, %v4687
    %v4803 = vadd.f32 %v4635, %v4687
    %v4804 = vadd.f32 %v4640, %v4687
    %v4805 = vadd.f32 %v4643, %v4687
    %v4806 = vadd.f32 %v4648, %v4687
    %v4807 = vadd.f32 %v4651, %v4687
    %v4808 = vadd.f32 %v4656, %v4687
    %v4809 = vadd.f32 %v4659, %v4687
    %v4810 = vadd.f32 %v4664, %v4687
    %v4811 = vadd.f32 %v4667, %v4687
    %v4812 = vadd.f32 %v4672, %v4687
    %v4813 = vadd.f32 %v4675, %v4687
    %v4814 = vadd.f32 %v4680, %v4687
    %v4815 = vadd.f32 %v4683, %v4687
    %4944 = vset.pattern.permute.xlu0 0
    %4945 = vperm.xlu0 %4944, %v4688
    %v4946 = vpop.permute.xlu0 %4945
    %4947 = vset.pattern.permute.xlu0 0
    %4948 = vperm.xlu0 %4947, %v4689
    %v4949 = vpop.permute.xlu0 %4948
    %4950 = vset.pattern.permute.xlu0 0
    %4951 = vperm.xlu0 %4950, %v4690
    %v4952 = vpop.permute.xlu0 %4951
    %4953 = vset.pattern.permute.xlu0 0
    %4954 = vperm.xlu0 %4953, %v4691
    %v4955 = vpop.permute.xlu0 %4954
    %4956 = vset.pattern.permute.xlu0 0
    %4957 = vperm.xlu0 %4956, %v4692
    %v4958 = vpop.permute.xlu0 %4957
    %4959 = vset.pattern.permute.xlu0 0
    %4960 = vperm.xlu0 %4959, %v4693
    %v4961 = vpop.permute.xlu0 %4960
    %4962 = vset.pattern.permute.xlu0 0
    %4963 = vperm.xlu0 %4962, %v4694
    %v4964 = vpop.permute.xlu0 %4963
    %4965 = vset.pattern.permute.xlu0 0
    %4966 = vperm.xlu0 %4965, %v4695
    %v4967 = vpop.permute.xlu0 %4966
    %4968 = vset.pattern.permute.xlu0 0
    %4969 = vperm.xlu0 %4968, %v4696
    %v4970 = vpop.permute.xlu0 %4969
    %4971 = vset.pattern.permute.xlu0 0
    %4972 = vperm.xlu0 %4971, %v4697
    %v4973 = vpop.permute.xlu0 %4972
    %4974 = vset.pattern.permute.xlu0 0
    %4975 = vperm.xlu0 %4974, %v4698
    %v4976 = vpop.permute.xlu0 %4975
    %4977 = vset.pattern.permute.xlu0 0
    %4978 = vperm.xlu0 %4977, %v4699
    %v4979 = vpop.permute.xlu0 %4978
    %4980 = vset.pattern.permute.xlu0 0
    %4981 = vperm.xlu0 %4980, %v4700
    %v4982 = vpop.permute.xlu0 %4981
    %4983 = vset.pattern.permute.xlu0 0
    %4984 = vperm.xlu0 %4983, %v4701
    %v4985 = vpop.permute.xlu0 %4984
    %4986 = vset.pattern.permute.xlu0 0
    %4987 = vperm.xlu0 %4986, %v4702
    %v4988 = vpop.permute.xlu0 %4987
    %4989 = vset.pattern.permute.xlu0 0
    %4990 = vperm.xlu0 %4989, %v4703
    %v4991 = vpop.permute.xlu0 %4990
    %4992 = vset.pattern.permute.xlu0 0
    %4993 = vperm.xlu0 %4992, %v4704
    %v4994 = vpop.permute.xlu0 %4993
    %4995 = vset.pattern.permute.xlu0 0
    %4996 = vperm.xlu0 %4995, %v4705
    %v4997 = vpop.permute.xlu0 %4996
    %4998 = vset.pattern.permute.xlu0 0
    %4999 = vperm.xlu0 %4998, %v4706
    %v5000 = vpop.permute.xlu0 %4999
    %5001 = vset.pattern.permute.xlu0 0
    %5002 = vperm.xlu0 %5001, %v4707
    %v5003 = vpop.permute.xlu0 %5002
    %5004 = vset.pattern.permute.xlu0 0
    %5005 = vperm.xlu0 %5004, %v4708
    %v5006 = vpop.permute.xlu0 %5005
    %5007 = vset.pattern.permute.xlu0 0
    %5008 = vperm.xlu0 %5007, %v4709
    %v5009 = vpop.permute.xlu0 %5008
    %5010 = vset.pattern.permute.xlu0 0
    %5011 = vperm.xlu0 %5010, %v4710
    %v5012 = vpop.permute.xlu0 %5011
    %5013 = vset.pattern.permute.xlu0 0
    %5014 = vperm.xlu0 %5013, %v4711
    %v5015 = vpop.permute.xlu0 %5014
    %5016 = vset.pattern.permute.xlu0 0
    %5017 = vperm.xlu0 %5016, %v4712
    %v5018 = vpop.permute.xlu0 %5017
    %5019 = vset.pattern.permute.xlu0 0
    %5020 = vperm.xlu0 %5019, %v4713
    %v5021 = vpop.permute.xlu0 %5020
    %5022 = vset.pattern.permute.xlu0 0
    %5023 = vperm.xlu0 %5022, %v4714
    %v5024 = vpop.permute.xlu0 %5023
    %5025 = vset.pattern.permute.xlu0 0
    %5026 = vperm.xlu0 %5025, %v4715
    %v5027 = vpop.permute.xlu0 %5026
    %5028 = vset.pattern.permute.xlu0 0
    %5029 = vperm.xlu0 %5028, %v4716
    %v5030 = vpop.permute.xlu0 %5029
    %5031 = vset.pattern.permute.xlu0 0
    %5032 = vperm.xlu0 %5031, %v4717
    %v5033 = vpop.permute.xlu0 %5032
    %5034 = vset.pattern.permute.xlu0 0
    %5035 = vperm.xlu0 %5034, %v4718
    %v5036 = vpop.permute.xlu0 %5035
    %5037 = vset.pattern.permute.xlu0 0
    %5038 = vperm.xlu0 %5037, %v4719
    %v5039 = vpop.permute.xlu0 %5038
    %5040 = vset.pattern.permute.xlu0 0
    %5041 = vperm.xlu0 %5040, %v4720
    %v5042 = vpop.permute.xlu0 %5041
    %5043 = vset.pattern.permute.xlu0 0
    %5044 = vperm.xlu0 %5043, %v4721
    %v5045 = vpop.permute.xlu0 %5044
    %5046 = vset.pattern.permute.xlu0 0
    %5047 = vperm.xlu0 %5046, %v4722
    %v5048 = vpop.permute.xlu0 %5047
    %5049 = vset.pattern.permute.xlu0 0
    %5050 = vperm.xlu0 %5049, %v4723
    %v5051 = vpop.permute.xlu0 %5050
    %5052 = vset.pattern.permute.xlu0 0
    %5053 = vperm.xlu0 %5052, %v4724
    %v5054 = vpop.permute.xlu0 %5053
    %5055 = vset.pattern.permute.xlu0 0
    %5056 = vperm.xlu0 %5055, %v4725
    %v5057 = vpop.permute.xlu0 %5056
    %5058 = vset.pattern.permute.xlu0 0
    %5059 = vperm.xlu0 %5058, %v4726
    %v5060 = vpop.permute.xlu0 %5059
    %5061 = vset.pattern.permute.xlu0 0
    %5062 = vperm.xlu0 %5061, %v4727
    %v5063 = vpop.permute.xlu0 %5062
    %5064 = vset.pattern.permute.xlu0 0
    %5065 = vperm.xlu0 %5064, %v4728
    %v5066 = vpop.permute.xlu0 %5065
    %5067 = vset.pattern.permute.xlu0 0
    %5068 = vperm.xlu0 %5067, %v4729
    %v5069 = vpop.permute.xlu0 %5068
    %5070 = vset.pattern.permute.xlu0 0
    %5071 = vperm.xlu0 %5070, %v4730
    %v5072 = vpop.permute.xlu0 %5071
    %5073 = vset.pattern.permute.xlu0 0
    %5074 = vperm.xlu0 %5073, %v4731
    %v5075 = vpop.permute.xlu0 %5074
    %5076 = vset.pattern.permute.xlu0 0
    %5077 = vperm.xlu0 %5076, %v4732
    %v5078 = vpop.permute.xlu0 %5077
    %5079 = vset.pattern.permute.xlu0 0
    %5080 = vperm.xlu0 %5079, %v4733
    %v5081 = vpop.permute.xlu0 %5080
    %5082 = vset.pattern.permute.xlu0 0
    %5083 = vperm.xlu0 %5082, %v4734
    %v5084 = vpop.permute.xlu0 %5083
    %5085 = vset.pattern.permute.xlu0 0
    %5086 = vperm.xlu0 %5085, %v4735
    %v5087 = vpop.permute.xlu0 %5086
    %5088 = vset.pattern.permute.xlu0 0
    %5089 = vperm.xlu0 %5088, %v4736
    %v5090 = vpop.permute.xlu0 %5089
    %5091 = vset.pattern.permute.xlu0 0
    %5092 = vperm.xlu0 %5091, %v4737
    %v5093 = vpop.permute.xlu0 %5092
    %5094 = vset.pattern.permute.xlu0 0
    %5095 = vperm.xlu0 %5094, %v4738
    %v5096 = vpop.permute.xlu0 %5095
    %5097 = vset.pattern.permute.xlu0 0
    %5098 = vperm.xlu0 %5097, %v4739
    %v5099 = vpop.permute.xlu0 %5098
    %5100 = vset.pattern.permute.xlu0 0
    %5101 = vperm.xlu0 %5100, %v4740
    %v5102 = vpop.permute.xlu0 %5101
    %5103 = vset.pattern.permute.xlu0 0
    %5104 = vperm.xlu0 %5103, %v4741
    %v5105 = vpop.permute.xlu0 %5104
    %5106 = vset.pattern.permute.xlu0 0
    %5107 = vperm.xlu0 %5106, %v4742
    %v5108 = vpop.permute.xlu0 %5107
    %5109 = vset.pattern.permute.xlu0 0
    %5110 = vperm.xlu0 %5109, %v4743
    %v5111 = vpop.permute.xlu0 %5110
    %5112 = vset.pattern.permute.xlu0 0
    %5113 = vperm.xlu0 %5112, %v4744
    %v5114 = vpop.permute.xlu0 %5113
    %5115 = vset.pattern.permute.xlu0 0
    %5116 = vperm.xlu0 %5115, %v4745
    %v5117 = vpop.permute.xlu0 %5116
    %5118 = vset.pattern.permute.xlu0 0
    %5119 = vperm.xlu0 %5118, %v4746
    %v5120 = vpop.permute.xlu0 %5119
    %5121 = vset.pattern.permute.xlu0 0
    %5122 = vperm.xlu0 %5121, %v4747
    %v5123 = vpop.permute.xlu0 %5122
    %5124 = vset.pattern.permute.xlu0 0
    %5125 = vperm.xlu0 %5124, %v4748
    %v5126 = vpop.permute.xlu0 %5125
    %5127 = vset.pattern.permute.xlu0 0
    %5128 = vperm.xlu0 %5127, %v4749
    %v5129 = vpop.permute.xlu0 %5128
    %5130 = vset.pattern.permute.xlu0 0
    %5131 = vperm.xlu0 %5130, %v4750
    %v5132 = vpop.permute.xlu0 %5131
    %5133 = vset.pattern.permute.xlu0 0
    %5134 = vperm.xlu0 %5133, %v4751
    %v5135 = vpop.permute.xlu0 %5134
    %5136 = vset.pattern.permute.xlu0 0
    %5137 = vperm.xlu0 %5136, %v4752
    %v5138 = vpop.permute.xlu0 %5137
    %5139 = vset.pattern.permute.xlu0 0
    %5140 = vperm.xlu0 %5139, %v4753
    %v5141 = vpop.permute.xlu0 %5140
    %5142 = vset.pattern.permute.xlu0 0
    %5143 = vperm.xlu0 %5142, %v4754
    %v5144 = vpop.permute.xlu0 %5143
    %5145 = vset.pattern.permute.xlu0 0
    %5146 = vperm.xlu0 %5145, %v4755
    %v5147 = vpop.permute.xlu0 %5146
    %5148 = vset.pattern.permute.xlu0 0
    %5149 = vperm.xlu0 %5148, %v4756
    %v5150 = vpop.permute.xlu0 %5149
    %5151 = vset.pattern.permute.xlu0 0
    %5152 = vperm.xlu0 %5151, %v4757
    %v5153 = vpop.permute.xlu0 %5152
    %5154 = vset.pattern.permute.xlu0 0
    %5155 = vperm.xlu0 %5154, %v4758
    %v5156 = vpop.permute.xlu0 %5155
    %5157 = vset.pattern.permute.xlu0 0
    %5158 = vperm.xlu0 %5157, %v4759
    %v5159 = vpop.permute.xlu0 %5158
    %5160 = vset.pattern.permute.xlu0 0
    %5161 = vperm.xlu0 %5160, %v4760
    %v5162 = vpop.permute.xlu0 %5161
    %5163 = vset.pattern.permute.xlu0 0
    %5164 = vperm.xlu0 %5163, %v4761
    %v5165 = vpop.permute.xlu0 %5164
    %5166 = vset.pattern.permute.xlu0 0
    %5167 = vperm.xlu0 %5166, %v4762
    %v5168 = vpop.permute.xlu0 %5167
    %5169 = vset.pattern.permute.xlu0 0
    %5170 = vperm.xlu0 %5169, %v4763
    %v5171 = vpop.permute.xlu0 %5170
    %5172 = vset.pattern.permute.xlu0 0
    %5173 = vperm.xlu0 %5172, %v4764
    %v5174 = vpop.permute.xlu0 %5173
    %5175 = vset.pattern.permute.xlu0 0
    %5176 = vperm.xlu0 %5175, %v4765
    %v5177 = vpop.permute.xlu0 %5176
    %5178 = vset.pattern.permute.xlu0 0
    %5179 = vperm.xlu0 %5178, %v4766
    %v5180 = vpop.permute.xlu0 %5179
    %5181 = vset.pattern.permute.xlu0 0
    %5182 = vperm.xlu0 %5181, %v4767
    %v5183 = vpop.permute.xlu0 %5182
    %5184 = vset.pattern.permute.xlu0 0
    %5185 = vperm.xlu0 %5184, %v4768
    %v5186 = vpop.permute.xlu0 %5185
    %5187 = vset.pattern.permute.xlu0 0
    %5188 = vperm.xlu0 %5187, %v4769
    %v5189 = vpop.permute.xlu0 %5188
    %5190 = vset.pattern.permute.xlu0 0
    %5191 = vperm.xlu0 %5190, %v4770
    %v5192 = vpop.permute.xlu0 %5191
    %5193 = vset.pattern.permute.xlu0 0
    %5194 = vperm.xlu0 %5193, %v4771
    %v5195 = vpop.permute.xlu0 %5194
    %5196 = vset.pattern.permute.xlu0 0
    %5197 = vperm.xlu0 %5196, %v4772
    %v5198 = vpop.permute.xlu0 %5197
    %5199 = vset.pattern.permute.xlu0 0
    %5200 = vperm.xlu0 %5199, %v4773
    %v5201 = vpop.permute.xlu0 %5200
    %5202 = vset.pattern.permute.xlu0 0
    %5203 = vperm.xlu0 %5202, %v4774
    %v5204 = vpop.permute.xlu0 %5203
    %5205 = vset.pattern.permute.xlu0 0
    %5206 = vperm.xlu0 %5205, %v4775
    %v5207 = vpop.permute.xlu0 %5206
    %5208 = vset.pattern.permute.xlu0 0
    %5209 = vperm.xlu0 %5208, %v4776
    %v5210 = vpop.permute.xlu0 %5209
    %5211 = vset.pattern.permute.xlu0 0
    %5212 = vperm.xlu0 %5211, %v4777
    %v5213 = vpop.permute.xlu0 %5212
    %5214 = vset.pattern.permute.xlu0 0
    %5215 = vperm.xlu0 %5214, %v4778
    %v5216 = vpop.permute.xlu0 %5215
    %5217 = vset.pattern.permute.xlu0 0
    %5218 = vperm.xlu0 %5217, %v4779
    %v5219 = vpop.permute.xlu0 %5218
    %5220 = vset.pattern.permute.xlu0 0
    %5221 = vperm.xlu0 %5220, %v4780
    %v5222 = vpop.permute.xlu0 %5221
    %5223 = vset.pattern.permute.xlu0 0
    %5224 = vperm.xlu0 %5223, %v4781
    %v5225 = vpop.permute.xlu0 %5224
    %5226 = vset.pattern.permute.xlu0 0
    %5227 = vperm.xlu0 %5226, %v4782
    %v5228 = vpop.permute.xlu0 %5227
    %5229 = vset.pattern.permute.xlu0 0
    %5230 = vperm.xlu0 %5229, %v4783
    %v5231 = vpop.permute.xlu0 %5230
    %5232 = vset.pattern.permute.xlu0 0
    %5233 = vperm.xlu0 %5232, %v4784
    %v5234 = vpop.permute.xlu0 %5233
    %5235 = vset.pattern.permute.xlu0 0
    %5236 = vperm.xlu0 %5235, %v4785
    %v5237 = vpop.permute.xlu0 %5236
    %5238 = vset.pattern.permute.xlu0 0
    %5239 = vperm.xlu0 %5238, %v4786
    %v5240 = vpop.permute.xlu0 %5239
    %5241 = vset.pattern.permute.xlu0 0
    %5242 = vperm.xlu0 %5241, %v4787
    %v5243 = vpop.permute.xlu0 %5242
    %5244 = vset.pattern.permute.xlu0 0
    %5245 = vperm.xlu0 %5244, %v4788
    %v5246 = vpop.permute.xlu0 %5245
    %5247 = vset.pattern.permute.xlu0 0
    %5248 = vperm.xlu0 %5247, %v4789
    %v5249 = vpop.permute.xlu0 %5248
    %5250 = vset.pattern.permute.xlu0 0
    %5251 = vperm.xlu0 %5250, %v4790
    %v5252 = vpop.permute.xlu0 %5251
    %5253 = vset.pattern.permute.xlu0 0
    %5254 = vperm.xlu0 %5253, %v4791
    %v5255 = vpop.permute.xlu0 %5254
    %5256 = vset.pattern.permute.xlu0 0
    %5257 = vperm.xlu0 %5256, %v4792
    %v5258 = vpop.permute.xlu0 %5257
    %5259 = vset.pattern.permute.xlu0 0
    %5260 = vperm.xlu0 %5259, %v4793
    %v5261 = vpop.permute.xlu0 %5260
    %5262 = vset.pattern.permute.xlu0 0
    %5263 = vperm.xlu0 %5262, %v4794
    %v5264 = vpop.permute.xlu0 %5263
    %5265 = vset.pattern.permute.xlu0 0
    %5266 = vperm.xlu0 %5265, %v4795
    %v5267 = vpop.permute.xlu0 %5266
    %5268 = vset.pattern.permute.xlu0 0
    %5269 = vperm.xlu0 %5268, %v4796
    %v5270 = vpop.permute.xlu0 %5269
    %5271 = vset.pattern.permute.xlu0 0
    %5272 = vperm.xlu0 %5271, %v4797
    %v5273 = vpop.permute.xlu0 %5272
    %5274 = vset.pattern.permute.xlu0 0
    %5275 = vperm.xlu0 %5274, %v4798
    %v5276 = vpop.permute.xlu0 %5275
    %5277 = vset.pattern.permute.xlu0 0
    %5278 = vperm.xlu0 %5277, %v4799
    %v5279 = vpop.permute.xlu0 %5278
    %5280 = vset.pattern.permute.xlu0 0
    %5281 = vperm.xlu0 %5280, %v4800
    %v5282 = vpop.permute.xlu0 %5281
    %5283 = vset.pattern.permute.xlu0 0
    %5284 = vperm.xlu0 %5283, %v4801
    %v5285 = vpop.permute.xlu0 %5284
    %5286 = vset.pattern.permute.xlu0 0
    %5287 = vperm.xlu0 %5286, %v4802
    %v5288 = vpop.permute.xlu0 %5287
    %5289 = vset.pattern.permute.xlu0 0
    %5290 = vperm.xlu0 %5289, %v4803
    %v5291 = vpop.permute.xlu0 %5290
    %5292 = vset.pattern.permute.xlu0 0
    %5293 = vperm.xlu0 %5292, %v4804
    %v5294 = vpop.permute.xlu0 %5293
    %5295 = vset.pattern.permute.xlu0 0
    %5296 = vperm.xlu0 %5295, %v4805
    %v5297 = vpop.permute.xlu0 %5296
    %5298 = vset.pattern.permute.xlu0 0
    %5299 = vperm.xlu0 %5298, %v4806
    %v5300 = vpop.permute.xlu0 %5299
    %5301 = vset.pattern.permute.xlu0 0
    %5302 = vperm.xlu0 %5301, %v4807
    %v5303 = vpop.permute.xlu0 %5302
    %5304 = vset.pattern.permute.xlu0 0
    %5305 = vperm.xlu0 %5304, %v4808
    %v5306 = vpop.permute.xlu0 %5305
    %5307 = vset.pattern.permute.xlu0 0
    %5308 = vperm.xlu0 %5307, %v4809
    %v5309 = vpop.permute.xlu0 %5308
    %5310 = vset.pattern.permute.xlu0 0
    %5311 = vperm.xlu0 %5310, %v4810
    %v5312 = vpop.permute.xlu0 %5311
    %5313 = vset.pattern.permute.xlu0 0
    %5314 = vperm.xlu0 %5313, %v4811
    %v5315 = vpop.permute.xlu0 %5314
    %5316 = vset.pattern.permute.xlu0 0
    %5317 = vperm.xlu0 %5316, %v4812
    %v5318 = vpop.permute.xlu0 %5317
    %5319 = vset.pattern.permute.xlu0 0
    %5320 = vperm.xlu0 %5319, %v4813
    %v5321 = vpop.permute.xlu0 %5320
    %5322 = vset.pattern.permute.xlu0 0
    %5323 = vperm.xlu0 %5322, %v4814
    %v5324 = vpop.permute.xlu0 %5323
    %5325 = vset.pattern.permute.xlu0 0
    %5326 = vperm.xlu0 %5325, %v4815
    %v5327 = vpop.permute.xlu0 %5326
    %v5328 = vlaneseq
    %v5329 = vand.u32 %v5328, 127
    %v5330 = vlaneseq
    %v5331 = vshrl.u32 %v5330, 7
    %v5332 = vsub.s32 %v5329, %v5331
    %v5333 = vrot.slane %v4946, %v5332
    %v5334 = vlaneseq
    %v5335 = vshrl.u32 %v5334, 7
    %v5336 = vsub.s32 %v5329, %v5335
    %v5337 = vrot.slane %v4949, %v5336
    %v5338 = vlaneseq
    %v5339 = vshrl.u32 %v5338, 7
    %v5340 = vsub.s32 %v5329, %v5339
    %v5341 = vrot.slane %v4952, %v5340
    %v5342 = vlaneseq
    %v5343 = vshrl.u32 %v5342, 7
    %v5344 = vsub.s32 %v5329, %v5343
    %v5345 = vrot.slane %v4955, %v5344
    %v5346 = vlaneseq
    %v5347 = vshrl.u32 %v5346, 7
    %v5348 = vsub.s32 %v5329, %v5347
    %v5349 = vrot.slane %v4958, %v5348
    %v5350 = vlaneseq
    %v5351 = vshrl.u32 %v5350, 7
    %v5352 = vsub.s32 %v5329, %v5351
    %v5353 = vrot.slane %v4961, %v5352
    %v5354 = vlaneseq
    %v5355 = vshrl.u32 %v5354, 7
    %v5356 = vsub.s32 %v5329, %v5355
    %v5357 = vrot.slane %v4964, %v5356
    %v5358 = vlaneseq
    %v5359 = vshrl.u32 %v5358, 7
    %v5360 = vsub.s32 %v5329, %v5359
    %v5361 = vrot.slane %v4967, %v5360
    %v5362 = vlaneseq
    %v5363 = vshrl.u32 %v5362, 7
    %v5364 = vsub.s32 %v5329, %v5363
    %v5365 = vrot.slane %v4970, %v5364
    %v5366 = vlaneseq
    %v5367 = vshrl.u32 %v5366, 7
    %v5368 = vsub.s32 %v5329, %v5367
    %v5369 = vrot.slane %v4973, %v5368
    %v5370 = vlaneseq
    %v5371 = vshrl.u32 %v5370, 7
    %v5372 = vsub.s32 %v5329, %v5371
    %v5373 = vrot.slane %v4976, %v5372
    %v5374 = vlaneseq
    %v5375 = vshrl.u32 %v5374, 7
    %v5376 = vsub.s32 %v5329, %v5375
    %v5377 = vrot.slane %v4979, %v5376
    %v5378 = vlaneseq
    %v5379 = vshrl.u32 %v5378, 7
    %v5380 = vsub.s32 %v5329, %v5379
    %v5381 = vrot.slane %v4982, %v5380
    %v5382 = vlaneseq
    %v5383 = vshrl.u32 %v5382, 7
    %v5384 = vsub.s32 %v5329, %v5383
    %v5385 = vrot.slane %v4985, %v5384
    %v5386 = vlaneseq
    %v5387 = vshrl.u32 %v5386, 7
    %v5388 = vsub.s32 %v5329, %v5387
    %v5389 = vrot.slane %v4988, %v5388
    %v5390 = vlaneseq
    %v5391 = vshrl.u32 %v5390, 7
    %v5392 = vsub.s32 %v5329, %v5391
    %v5393 = vrot.slane %v4991, %v5392
    %v5394 = vlaneseq
    %v5395 = vshrl.u32 %v5394, 7
    %v5396 = vsub.s32 %v5329, %v5395
    %v5397 = vrot.slane %v4994, %v5396
    %v5398 = vlaneseq
    %v5399 = vshrl.u32 %v5398, 7
    %v5400 = vsub.s32 %v5329, %v5399
    %v5401 = vrot.slane %v4997, %v5400
    %v5402 = vlaneseq
    %v5403 = vshrl.u32 %v5402, 7
    %v5404 = vsub.s32 %v5329, %v5403
    %v5405 = vrot.slane %v5000, %v5404
    %v5406 = vlaneseq
    %v5407 = vshrl.u32 %v5406, 7
    %v5408 = vsub.s32 %v5329, %v5407
    %v5409 = vrot.slane %v5003, %v5408
    %v5410 = vlaneseq
    %v5411 = vshrl.u32 %v5410, 7
    %v5412 = vsub.s32 %v5329, %v5411
    %v5413 = vrot.slane %v5006, %v5412
    %v5414 = vlaneseq
    %v5415 = vshrl.u32 %v5414, 7
    %v5416 = vsub.s32 %v5329, %v5415
    %v5417 = vrot.slane %v5009, %v5416
    %v5418 = vlaneseq
    %v5419 = vshrl.u32 %v5418, 7
    %v5420 = vsub.s32 %v5329, %v5419
    %v5421 = vrot.slane %v5012, %v5420
    %v5422 = vlaneseq
    %v5423 = vshrl.u32 %v5422, 7
    %v5424 = vsub.s32 %v5329, %v5423
    %v5425 = vrot.slane %v5015, %v5424
    %v5426 = vlaneseq
    %v5427 = vshrl.u32 %v5426, 7
    %v5428 = vsub.s32 %v5329, %v5427
    %v5429 = vrot.slane %v5018, %v5428
    %v5430 = vlaneseq
    %v5431 = vshrl.u32 %v5430, 7
    %v5432 = vsub.s32 %v5329, %v5431
    %v5433 = vrot.slane %v5021, %v5432
    %v5434 = vlaneseq
    %v5435 = vshrl.u32 %v5434, 7
    %v5436 = vsub.s32 %v5329, %v5435
    %v5437 = vrot.slane %v5024, %v5436
    %v5438 = vlaneseq
    %v5439 = vshrl.u32 %v5438, 7
    %v5440 = vsub.s32 %v5329, %v5439
    %v5441 = vrot.slane %v5027, %v5440
    %v5442 = vlaneseq
    %v5443 = vshrl.u32 %v5442, 7
    %v5444 = vsub.s32 %v5329, %v5443
    %v5445 = vrot.slane %v5030, %v5444
    %v5446 = vlaneseq
    %v5447 = vshrl.u32 %v5446, 7
    %v5448 = vsub.s32 %v5329, %v5447
    %v5449 = vrot.slane %v5033, %v5448
    %v5450 = vlaneseq
    %v5451 = vshrl.u32 %v5450, 7
    %v5452 = vsub.s32 %v5329, %v5451
    %v5453 = vrot.slane %v5036, %v5452
    %v5454 = vlaneseq
    %v5455 = vshrl.u32 %v5454, 7
    %v5456 = vsub.s32 %v5329, %v5455
    %v5457 = vrot.slane %v5039, %v5456
    %v5458 = vlaneseq
    %v5459 = vshrl.u32 %v5458, 7
    %v5460 = vsub.s32 %v5329, %v5459
    %v5461 = vrot.slane %v5042, %v5460
    %v5462 = vlaneseq
    %v5463 = vshrl.u32 %v5462, 7
    %v5464 = vsub.s32 %v5329, %v5463
    %v5465 = vrot.slane %v5045, %v5464
    %v5466 = vlaneseq
    %v5467 = vshrl.u32 %v5466, 7
    %v5468 = vsub.s32 %v5329, %v5467
    %v5469 = vrot.slane %v5048, %v5468
    %v5470 = vlaneseq
    %v5471 = vshrl.u32 %v5470, 7
    %v5472 = vsub.s32 %v5329, %v5471
    %v5473 = vrot.slane %v5051, %v5472
    %v5474 = vlaneseq
    %v5475 = vshrl.u32 %v5474, 7
    %v5476 = vsub.s32 %v5329, %v5475
    %v5477 = vrot.slane %v5054, %v5476
    %v5478 = vlaneseq
    %v5479 = vshrl.u32 %v5478, 7
    %v5480 = vsub.s32 %v5329, %v5479
    %v5481 = vrot.slane %v5057, %v5480
    %v5482 = vlaneseq
    %v5483 = vshrl.u32 %v5482, 7
    %v5484 = vsub.s32 %v5329, %v5483
    %v5485 = vrot.slane %v5060, %v5484
    %v5486 = vlaneseq
    %v5487 = vshrl.u32 %v5486, 7
    %v5488 = vsub.s32 %v5329, %v5487
    %v5489 = vrot.slane %v5063, %v5488
    %v5490 = vlaneseq
    %v5491 = vshrl.u32 %v5490, 7
    %v5492 = vsub.s32 %v5329, %v5491
    %v5493 = vrot.slane %v5066, %v5492
    %v5494 = vlaneseq
    %v5495 = vshrl.u32 %v5494, 7
    %v5496 = vsub.s32 %v5329, %v5495
    %v5497 = vrot.slane %v5069, %v5496
    %v5498 = vlaneseq
    %v5499 = vshrl.u32 %v5498, 7
    %v5500 = vsub.s32 %v5329, %v5499
    %v5501 = vrot.slane %v5072, %v5500
    %v5502 = vlaneseq
    %v5503 = vshrl.u32 %v5502, 7
    %v5504 = vsub.s32 %v5329, %v5503
    %v5505 = vrot.slane %v5075, %v5504
    %v5506 = vlaneseq
    %v5507 = vshrl.u32 %v5506, 7
    %v5508 = vsub.s32 %v5329, %v5507
    %v5509 = vrot.slane %v5078, %v5508
    %v5510 = vlaneseq
    %v5511 = vshrl.u32 %v5510, 7
    %v5512 = vsub.s32 %v5329, %v5511
    %v5513 = vrot.slane %v5081, %v5512
    %v5514 = vlaneseq
    %v5515 = vshrl.u32 %v5514, 7
    %v5516 = vsub.s32 %v5329, %v5515
    %v5517 = vrot.slane %v5084, %v5516
    %v5518 = vlaneseq
    %v5519 = vshrl.u32 %v5518, 7
    %v5520 = vsub.s32 %v5329, %v5519
    %v5521 = vrot.slane %v5087, %v5520
    %v5522 = vlaneseq
    %v5523 = vshrl.u32 %v5522, 7
    %v5524 = vsub.s32 %v5329, %v5523
    %v5525 = vrot.slane %v5090, %v5524
    %v5526 = vlaneseq
    %v5527 = vshrl.u32 %v5526, 7
    %v5528 = vsub.s32 %v5329, %v5527
    %v5529 = vrot.slane %v5093, %v5528
    %v5530 = vlaneseq
    %v5531 = vshrl.u32 %v5530, 7
    %v5532 = vsub.s32 %v5329, %v5531
    %v5533 = vrot.slane %v5096, %v5532
    %v5534 = vlaneseq
    %v5535 = vshrl.u32 %v5534, 7
    %v5536 = vsub.s32 %v5329, %v5535
    %v5537 = vrot.slane %v5099, %v5536
    %v5538 = vlaneseq
    %v5539 = vshrl.u32 %v5538, 7
    %v5540 = vsub.s32 %v5329, %v5539
    %v5541 = vrot.slane %v5102, %v5540
    %v5542 = vlaneseq
    %v5543 = vshrl.u32 %v5542, 7
    %v5544 = vsub.s32 %v5329, %v5543
    %v5545 = vrot.slane %v5105, %v5544
    %v5546 = vlaneseq
    %v5547 = vshrl.u32 %v5546, 7
    %v5548 = vsub.s32 %v5329, %v5547
    %v5549 = vrot.slane %v5108, %v5548
    %v5550 = vlaneseq
    %v5551 = vshrl.u32 %v5550, 7
    %v5552 = vsub.s32 %v5329, %v5551
    %v5553 = vrot.slane %v5111, %v5552
    %v5554 = vlaneseq
    %v5555 = vshrl.u32 %v5554, 7
    %v5556 = vsub.s32 %v5329, %v5555
    %v5557 = vrot.slane %v5114, %v5556
    %v5558 = vlaneseq
    %v5559 = vshrl.u32 %v5558, 7
    %v5560 = vsub.s32 %v5329, %v5559
    %v5561 = vrot.slane %v5117, %v5560
    %v5562 = vlaneseq
    %v5563 = vshrl.u32 %v5562, 7
    %v5564 = vsub.s32 %v5329, %v5563
    %v5565 = vrot.slane %v5120, %v5564
    %v5566 = vlaneseq
    %v5567 = vshrl.u32 %v5566, 7
    %v5568 = vsub.s32 %v5329, %v5567
    %v5569 = vrot.slane %v5123, %v5568
    %v5570 = vlaneseq
    %v5571 = vshrl.u32 %v5570, 7
    %v5572 = vsub.s32 %v5329, %v5571
    %v5573 = vrot.slane %v5126, %v5572
    %v5574 = vlaneseq
    %v5575 = vshrl.u32 %v5574, 7
    %v5576 = vsub.s32 %v5329, %v5575
    %v5577 = vrot.slane %v5129, %v5576
    %v5578 = vlaneseq
    %v5579 = vshrl.u32 %v5578, 7
    %v5580 = vsub.s32 %v5329, %v5579
    %v5581 = vrot.slane %v5132, %v5580
    %v5582 = vlaneseq
    %v5583 = vshrl.u32 %v5582, 7
    %v5584 = vsub.s32 %v5329, %v5583
    %v5585 = vrot.slane %v5135, %v5584
    %v5586 = vlaneseq
    %v5587 = vshrl.u32 %v5586, 7
    %v5588 = vsub.s32 %v5329, %v5587
    %v5589 = vrot.slane %v5138, %v5588
    %v5590 = vlaneseq
    %v5591 = vshrl.u32 %v5590, 7
    %v5592 = vsub.s32 %v5329, %v5591
    %v5593 = vrot.slane %v5141, %v5592
    %v5594 = vlaneseq
    %v5595 = vshrl.u32 %v5594, 7
    %v5596 = vsub.s32 %v5329, %v5595
    %v5597 = vrot.slane %v5144, %v5596
    %v5598 = vlaneseq
    %v5599 = vshrl.u32 %v5598, 7
    %v5600 = vsub.s32 %v5329, %v5599
    %v5601 = vrot.slane %v5147, %v5600
    %v5602 = vlaneseq
    %v5603 = vshrl.u32 %v5602, 7
    %v5604 = vsub.s32 %v5329, %v5603
    %v5605 = vrot.slane %v5150, %v5604
    %v5606 = vlaneseq
    %v5607 = vshrl.u32 %v5606, 7
    %v5608 = vsub.s32 %v5329, %v5607
    %v5609 = vrot.slane %v5153, %v5608
    %v5610 = vlaneseq
    %v5611 = vshrl.u32 %v5610, 7
    %v5612 = vsub.s32 %v5329, %v5611
    %v5613 = vrot.slane %v5156, %v5612
    %v5614 = vlaneseq
    %v5615 = vshrl.u32 %v5614, 7
    %v5616 = vsub.s32 %v5329, %v5615
    %v5617 = vrot.slane %v5159, %v5616
    %v5618 = vlaneseq
    %v5619 = vshrl.u32 %v5618, 7
    %v5620 = vsub.s32 %v5329, %v5619
    %v5621 = vrot.slane %v5162, %v5620
    %v5622 = vlaneseq
    %v5623 = vshrl.u32 %v5622, 7
    %v5624 = vsub.s32 %v5329, %v5623
    %v5625 = vrot.slane %v5165, %v5624
    %v5626 = vlaneseq
    %v5627 = vshrl.u32 %v5626, 7
    %v5628 = vsub.s32 %v5329, %v5627
    %v5629 = vrot.slane %v5168, %v5628
    %v5630 = vlaneseq
    %v5631 = vshrl.u32 %v5630, 7
    %v5632 = vsub.s32 %v5329, %v5631
    %v5633 = vrot.slane %v5171, %v5632
    %v5634 = vlaneseq
    %v5635 = vshrl.u32 %v5634, 7
    %v5636 = vsub.s32 %v5329, %v5635
    %v5637 = vrot.slane %v5174, %v5636
    %v5638 = vlaneseq
    %v5639 = vshrl.u32 %v5638, 7
    %v5640 = vsub.s32 %v5329, %v5639
    %v5641 = vrot.slane %v5177, %v5640
    %v5642 = vlaneseq
    %v5643 = vshrl.u32 %v5642, 7
    %v5644 = vsub.s32 %v5329, %v5643
    %v5645 = vrot.slane %v5180, %v5644
    %v5646 = vlaneseq
    %v5647 = vshrl.u32 %v5646, 7
    %v5648 = vsub.s32 %v5329, %v5647
    %v5649 = vrot.slane %v5183, %v5648
    %v5650 = vlaneseq
    %v5651 = vshrl.u32 %v5650, 7
    %v5652 = vsub.s32 %v5329, %v5651
    %v5653 = vrot.slane %v5186, %v5652
    %v5654 = vlaneseq
    %v5655 = vshrl.u32 %v5654, 7
    %v5656 = vsub.s32 %v5329, %v5655
    %v5657 = vrot.slane %v5189, %v5656
    %v5658 = vlaneseq
    %v5659 = vshrl.u32 %v5658, 7
    %v5660 = vsub.s32 %v5329, %v5659
    %v5661 = vrot.slane %v5192, %v5660
    %v5662 = vlaneseq
    %v5663 = vshrl.u32 %v5662, 7
    %v5664 = vsub.s32 %v5329, %v5663
    %v5665 = vrot.slane %v5195, %v5664
    %v5666 = vlaneseq
    %v5667 = vshrl.u32 %v5666, 7
    %v5668 = vsub.s32 %v5329, %v5667
    %v5669 = vrot.slane %v5198, %v5668
    %v5670 = vlaneseq
    %v5671 = vshrl.u32 %v5670, 7
    %v5672 = vsub.s32 %v5329, %v5671
    %v5673 = vrot.slane %v5201, %v5672
    %v5674 = vlaneseq
    %v5675 = vshrl.u32 %v5674, 7
    %v5676 = vsub.s32 %v5329, %v5675
    %v5677 = vrot.slane %v5204, %v5676
    %v5678 = vlaneseq
    %v5679 = vshrl.u32 %v5678, 7
    %v5680 = vsub.s32 %v5329, %v5679
    %v5681 = vrot.slane %v5207, %v5680
    %v5682 = vlaneseq
    %v5683 = vshrl.u32 %v5682, 7
    %v5684 = vsub.s32 %v5329, %v5683
    %v5685 = vrot.slane %v5210, %v5684
    %v5686 = vlaneseq
    %v5687 = vshrl.u32 %v5686, 7
    %v5688 = vsub.s32 %v5329, %v5687
    %v5689 = vrot.slane %v5213, %v5688
    %v5690 = vlaneseq
    %v5691 = vshrl.u32 %v5690, 7
    %v5692 = vsub.s32 %v5329, %v5691
    %v5693 = vrot.slane %v5216, %v5692
    %v5694 = vlaneseq
    %v5695 = vshrl.u32 %v5694, 7
    %v5696 = vsub.s32 %v5329, %v5695
    %v5697 = vrot.slane %v5219, %v5696
    %v5698 = vlaneseq
    %v5699 = vshrl.u32 %v5698, 7
    %v5700 = vsub.s32 %v5329, %v5699
    %v5701 = vrot.slane %v5222, %v5700
    %v5702 = vlaneseq
    %v5703 = vshrl.u32 %v5702, 7
    %v5704 = vsub.s32 %v5329, %v5703
    %v5705 = vrot.slane %v5225, %v5704
    %v5706 = vlaneseq
    %v5707 = vshrl.u32 %v5706, 7
    %v5708 = vsub.s32 %v5329, %v5707
    %v5709 = vrot.slane %v5228, %v5708
    %v5710 = vlaneseq
    %v5711 = vshrl.u32 %v5710, 7
    %v5712 = vsub.s32 %v5329, %v5711
    %v5713 = vrot.slane %v5231, %v5712
    %v5714 = vlaneseq
    %v5715 = vshrl.u32 %v5714, 7
    %v5716 = vsub.s32 %v5329, %v5715
    %v5717 = vrot.slane %v5234, %v5716
    %v5718 = vlaneseq
    %v5719 = vshrl.u32 %v5718, 7
    %v5720 = vsub.s32 %v5329, %v5719
    %v5721 = vrot.slane %v5237, %v5720
    %v5722 = vlaneseq
    %v5723 = vshrl.u32 %v5722, 7
    %v5724 = vsub.s32 %v5329, %v5723
    %v5725 = vrot.slane %v5240, %v5724
    %v5726 = vlaneseq
    %v5727 = vshrl.u32 %v5726, 7
    %v5728 = vsub.s32 %v5329, %v5727
    %v5729 = vrot.slane %v5243, %v5728
    %v5730 = vlaneseq
    %v5731 = vshrl.u32 %v5730, 7
    %v5732 = vsub.s32 %v5329, %v5731
    %v5733 = vrot.slane %v5246, %v5732
    %v5734 = vlaneseq
    %v5735 = vshrl.u32 %v5734, 7
    %v5736 = vsub.s32 %v5329, %v5735
    %v5737 = vrot.slane %v5249, %v5736
    %v5738 = vlaneseq
    %v5739 = vshrl.u32 %v5738, 7
    %v5740 = vsub.s32 %v5329, %v5739
    %v5741 = vrot.slane %v5252, %v5740
    %v5742 = vlaneseq
    %v5743 = vshrl.u32 %v5742, 7
    %v5744 = vsub.s32 %v5329, %v5743
    %v5745 = vrot.slane %v5255, %v5744
    %v5746 = vlaneseq
    %v5747 = vshrl.u32 %v5746, 7
    %v5748 = vsub.s32 %v5329, %v5747
    %v5749 = vrot.slane %v5258, %v5748
    %v5750 = vlaneseq
    %v5751 = vshrl.u32 %v5750, 7
    %v5752 = vsub.s32 %v5329, %v5751
    %v5753 = vrot.slane %v5261, %v5752
    %v5754 = vlaneseq
    %v5755 = vshrl.u32 %v5754, 7
    %v5756 = vsub.s32 %v5329, %v5755
    %v5757 = vrot.slane %v5264, %v5756
    %v5758 = vlaneseq
    %v5759 = vshrl.u32 %v5758, 7
    %v5760 = vsub.s32 %v5329, %v5759
    %v5761 = vrot.slane %v5267, %v5760
    %v5762 = vlaneseq
    %v5763 = vshrl.u32 %v5762, 7
    %v5764 = vsub.s32 %v5329, %v5763
    %v5765 = vrot.slane %v5270, %v5764
    %v5766 = vlaneseq
    %v5767 = vshrl.u32 %v5766, 7
    %v5768 = vsub.s32 %v5329, %v5767
    %v5769 = vrot.slane %v5273, %v5768
    %v5770 = vlaneseq
    %v5771 = vshrl.u32 %v5770, 7
    %v5772 = vsub.s32 %v5329, %v5771
    %v5773 = vrot.slane %v5276, %v5772
    %v5774 = vlaneseq
    %v5775 = vshrl.u32 %v5774, 7
    %v5776 = vsub.s32 %v5329, %v5775
    %v5777 = vrot.slane %v5279, %v5776
    %v5778 = vlaneseq
    %v5779 = vshrl.u32 %v5778, 7
    %v5780 = vsub.s32 %v5329, %v5779
    %v5781 = vrot.slane %v5282, %v5780
    %v5782 = vlaneseq
    %v5783 = vshrl.u32 %v5782, 7
    %v5784 = vsub.s32 %v5329, %v5783
    %v5785 = vrot.slane %v5285, %v5784
    %v5786 = vlaneseq
    %v5787 = vshrl.u32 %v5786, 7
    %v5788 = vsub.s32 %v5329, %v5787
    %v5789 = vrot.slane %v5288, %v5788
    %v5790 = vlaneseq
    %v5791 = vshrl.u32 %v5790, 7
    %v5792 = vsub.s32 %v5329, %v5791
    %v5793 = vrot.slane %v5291, %v5792
    %v5794 = vlaneseq
    %v5795 = vshrl.u32 %v5794, 7
    %v5796 = vsub.s32 %v5329, %v5795
    %v5797 = vrot.slane %v5294, %v5796
    %v5798 = vlaneseq
    %v5799 = vshrl.u32 %v5798, 7
    %v5800 = vsub.s32 %v5329, %v5799
    %v5801 = vrot.slane %v5297, %v5800
    %v5802 = vlaneseq
    %v5803 = vshrl.u32 %v5802, 7
    %v5804 = vsub.s32 %v5329, %v5803
    %v5805 = vrot.slane %v5300, %v5804
    %v5806 = vlaneseq
    %v5807 = vshrl.u32 %v5806, 7
    %v5808 = vsub.s32 %v5329, %v5807
    %v5809 = vrot.slane %v5303, %v5808
    %v5810 = vlaneseq
    %v5811 = vshrl.u32 %v5810, 7
    %v5812 = vsub.s32 %v5329, %v5811
    %v5813 = vrot.slane %v5306, %v5812
    %v5814 = vlaneseq
    %v5815 = vshrl.u32 %v5814, 7
    %v5816 = vsub.s32 %v5329, %v5815
    %v5817 = vrot.slane %v5309, %v5816
    %v5818 = vlaneseq
    %v5819 = vshrl.u32 %v5818, 7
    %v5820 = vsub.s32 %v5329, %v5819
    %v5821 = vrot.slane %v5312, %v5820
    %v5822 = vlaneseq
    %v5823 = vshrl.u32 %v5822, 7
    %v5824 = vsub.s32 %v5329, %v5823
    %v5825 = vrot.slane %v5315, %v5824
    %v5826 = vlaneseq
    %v5827 = vshrl.u32 %v5826, 7
    %v5828 = vsub.s32 %v5329, %v5827
    %v5829 = vrot.slane %v5318, %v5828
    %v5830 = vlaneseq
    %v5831 = vshrl.u32 %v5830, 7
    %v5832 = vsub.s32 %v5329, %v5831
    %v5833 = vrot.slane %v5321, %v5832
    %v5834 = vlaneseq
    %v5835 = vshrl.u32 %v5834, 7
    %v5836 = vsub.s32 %v5329, %v5835
    %v5837 = vrot.slane %v5324, %v5836
    %v5838 = vlaneseq
    %v5839 = vshrl.u32 %v5838, 7
    %v5840 = vsub.s32 %v5329, %v5839
    %v5841 = vrot.slane %v5327, %v5840
    %vm5842 = vcmask 1041409
    %v5843 = vsel %vm5842, %v5337, %v5333
    %vm5844 = vcmask 1042434
    %v5845 = vsel %vm5844, %v5341, %v5843
    %vm5846 = vcmask 1043459
    %v5847 = vsel %vm5846, %v5345, %v5845
    %vm5848 = vcmask 1044484
    %v5849 = vsel %vm5848, %v5349, %v5847
    %vm5850 = vcmask 1045509
    %v5851 = vsel %vm5850, %v5353, %v5849
    %vm5852 = vcmask 1046534
    %v5853 = vsel %vm5852, %v5357, %v5851
    %vm5854 = vcmask 1047559
    %v5855 = vsel %vm5854, %v5361, %v5853
    %v5856 = vsel %vm5842, %v5369, %v5365
    %v5857 = vsel %vm5844, %v5373, %v5856
    %v5858 = vsel %vm5846, %v5377, %v5857
    %v5859 = vsel %vm5848, %v5381, %v5858
    %v5860 = vsel %vm5850, %v5385, %v5859
    %v5861 = vsel %vm5852, %v5389, %v5860
    %v5862 = vsel %vm5854, %v5393, %v5861
    %v5863 = vsel %vm5842, %v5401, %v5397
    %v5864 = vsel %vm5844, %v5405, %v5863
    %v5865 = vsel %vm5846, %v5409, %v5864
    %v5866 = vsel %vm5848, %v5413, %v5865
    %v5867 = vsel %vm5850, %v5417, %v5866
    %v5868 = vsel %vm5852, %v5421, %v5867
    %v5869 = vsel %vm5854, %v5425, %v5868
    %v5870 = vsel %vm5842, %v5433, %v5429
    %v5871 = vsel %vm5844, %v5437, %v5870
    %v5872 = vsel %vm5846, %v5441, %v5871
    %v5873 = vsel %vm5848, %v5445, %v5872
    %v5874 = vsel %vm5850, %v5449, %v5873
    %v5875 = vsel %vm5852, %v5453, %v5874
    %v5876 = vsel %vm5854, %v5457, %v5875
    %v5877 = vsel %vm5842, %v5465, %v5461
    %v5878 = vsel %vm5844, %v5469, %v5877
    %v5879 = vsel %vm5846, %v5473, %v5878
    %v5880 = vsel %vm5848, %v5477, %v5879
    %v5881 = vsel %vm5850, %v5481, %v5880
    %v5882 = vsel %vm5852, %v5485, %v5881
    %v5883 = vsel %vm5854, %v5489, %v5882
    %v5884 = vsel %vm5842, %v5497, %v5493
    %v5885 = vsel %vm5844, %v5501, %v5884
    %v5886 = vsel %vm5846, %v5505, %v5885
    %v5887 = vsel %vm5848, %v5509, %v5886
    %v5888 = vsel %vm5850, %v5513, %v5887
    %v5889 = vsel %vm5852, %v5517, %v5888
    %v5890 = vsel %vm5854, %v5521, %v5889
    %v5891 = vsel %vm5842, %v5529, %v5525
    %v5892 = vsel %vm5844, %v5533, %v5891
    %v5893 = vsel %vm5846, %v5537, %v5892
    %v5894 = vsel %vm5848, %v5541, %v5893
    %v5895 = vsel %vm5850, %v5545, %v5894
    %v5896 = vsel %vm5852, %v5549, %v5895
    %v5897 = vsel %vm5854, %v5553, %v5896
    %v5898 = vsel %vm5842, %v5561, %v5557
    %v5899 = vsel %vm5844, %v5565, %v5898
    %v5900 = vsel %vm5846, %v5569, %v5899
    %v5901 = vsel %vm5848, %v5573, %v5900
    %v5902 = vsel %vm5850, %v5577, %v5901
    %v5903 = vsel %vm5852, %v5581, %v5902
    %v5904 = vsel %vm5854, %v5585, %v5903
    %v5905 = vsel %vm5842, %v5593, %v5589
    %v5906 = vsel %vm5844, %v5597, %v5905
    %v5907 = vsel %vm5846, %v5601, %v5906
    %v5908 = vsel %vm5848, %v5605, %v5907
    %v5909 = vsel %vm5850, %v5609, %v5908
    %v5910 = vsel %vm5852, %v5613, %v5909
    %v5911 = vsel %vm5854, %v5617, %v5910
    %v5912 = vsel %vm5842, %v5625, %v5621
    %v5913 = vsel %vm5844, %v5629, %v5912
    %v5914 = vsel %vm5846, %v5633, %v5913
    %v5915 = vsel %vm5848, %v5637, %v5914
    %v5916 = vsel %vm5850, %v5641, %v5915
    %v5917 = vsel %vm5852, %v5645, %v5916
    %v5918 = vsel %vm5854, %v5649, %v5917
    %v5919 = vsel %vm5842, %v5657, %v5653
    %v5920 = vsel %vm5844, %v5661, %v5919
    %v5921 = vsel %vm5846, %v5665, %v5920
    %v5922 = vsel %vm5848, %v5669, %v5921
    %v5923 = vsel %vm5850, %v5673, %v5922
    %v5924 = vsel %vm5852, %v5677, %v5923
    %v5925 = vsel %vm5854, %v5681, %v5924
    %v5926 = vsel %vm5842, %v5689, %v5685
    %v5927 = vsel %vm5844, %v5693, %v5926
    %v5928 = vsel %vm5846, %v5697, %v5927
    %v5929 = vsel %vm5848, %v5701, %v5928
    %v5930 = vsel %vm5850, %v5705, %v5929
    %v5931 = vsel %vm5852, %v5709, %v5930
    %v5932 = vsel %vm5854, %v5713, %v5931
    %v5933 = vsel %vm5842, %v5721, %v5717
    %v5934 = vsel %vm5844, %v5725, %v5933
    %v5935 = vsel %vm5846, %v5729, %v5934
    %v5936 = vsel %vm5848, %v5733, %v5935
    %v5937 = vsel %vm5850, %v5737, %v5936
    %v5938 = vsel %vm5852, %v5741, %v5937
    %v5939 = vsel %vm5854, %v5745, %v5938
    %v5940 = vsel %vm5842, %v5753, %v5749
    %v5941 = vsel %vm5844, %v5757, %v5940
    %v5942 = vsel %vm5846, %v5761, %v5941
    %v5943 = vsel %vm5848, %v5765, %v5942
    %v5944 = vsel %vm5850, %v5769, %v5943
    %v5945 = vsel %vm5852, %v5773, %v5944
    %v5946 = vsel %vm5854, %v5777, %v5945
    %v5947 = vsel %vm5842, %v5785, %v5781
    %v5948 = vsel %vm5844, %v5789, %v5947
    %v5949 = vsel %vm5846, %v5793, %v5948
    %v5950 = vsel %vm5848, %v5797, %v5949
    %v5951 = vsel %vm5850, %v5801, %v5950
    %v5952 = vsel %vm5852, %v5805, %v5951
    %v5953 = vsel %vm5854, %v5809, %v5952
    %v5954 = vsel %vm5842, %v5817, %v5813
    %v5955 = vsel %vm5844, %v5821, %v5954
    %v5956 = vsel %vm5846, %v5825, %v5955
    %v5957 = vsel %vm5848, %v5829, %v5956
    %v5958 = vsel %vm5850, %v5833, %v5957
    %v5959 = vsel %vm5852, %v5837, %v5958
    %v5960 = vsel %vm5854, %v5841, %v5959
    %vm5977 = vcmask 64512
    %v5978 = vsel %vm5977, %v5855, -inf
    %5979 = vmax.xlane.f32.xlu0 %v5978
    %v5980 = vpop.xlane.xlu0 %5979
    %v5981 = vsel %vm5977, %v5862, -inf
    %5982 = vmax.xlane.f32.xlu0 %v5981
    %v5983 = vpop.xlane.xlu0 %5982
    %v5984 = vsel %vm5977, %v5869, -inf
    %5985 = vmax.xlane.f32.xlu0 %v5984
    %v5986 = vpop.xlane.xlu0 %5985
    %v5987 = vsel %vm5977, %v5876, -inf
    %5988 = vmax.xlane.f32.xlu0 %v5987
    %v5989 = vpop.xlane.xlu0 %5988
    %v5990 = vsel %vm5977, %v5883, -inf
    %5991 = vmax.xlane.f32.xlu0 %v5990
    %v5992 = vpop.xlane.xlu0 %5991
    %v5993 = vsel %vm5977, %v5890, -inf
    %5994 = vmax.xlane.f32.xlu0 %v5993
    %v5995 = vpop.xlane.xlu0 %5994
    %v5996 = vsel %vm5977, %v5897, -inf
    %5997 = vmax.xlane.f32.xlu0 %v5996
    %v5998 = vpop.xlane.xlu0 %5997
    %v5999 = vsel %vm5977, %v5904, -inf
    %6000 = vmax.xlane.f32.xlu0 %v5999
    %v6001 = vpop.xlane.xlu0 %6000
    %v6002 = vsel %vm5977, %v5911, -inf
    %6003 = vmax.xlane.f32.xlu0 %v6002
    %v6004 = vpop.xlane.xlu0 %6003
    %v6005 = vsel %vm5977, %v5918, -inf
    %6006 = vmax.xlane.f32.xlu0 %v6005
    %v6007 = vpop.xlane.xlu0 %6006
    %v6008 = vsel %vm5977, %v5925, -inf
    %6009 = vmax.xlane.f32.xlu0 %v6008
    %v6010 = vpop.xlane.xlu0 %6009
    %v6011 = vsel %vm5977, %v5932, -inf
    %6012 = vmax.xlane.f32.xlu0 %v6011
    %v6013 = vpop.xlane.xlu0 %6012
    %v6014 = vsel %vm5977, %v5939, -inf
    %6015 = vmax.xlane.f32.xlu0 %v6014
    %v6016 = vpop.xlane.xlu0 %6015
    %v6017 = vsel %vm5977, %v5946, -inf
    %6018 = vmax.xlane.f32.xlu0 %v6017
    %v6019 = vpop.xlane.xlu0 %6018
    %v6020 = vsel %vm5977, %v5953, -inf
    %6021 = vmax.xlane.f32.xlu0 %v6020
    %v6022 = vpop.xlane.xlu0 %6021
    %v6023 = vsel %vm5977, %v5960, -inf
    %6024 = vmax.xlane.f32.xlu0 %v6023
    %v6025 = vpop.xlane.xlu0 %6024
    %v6042 = vlaneseq
    %v6043 = vshrl.u32 %v6042, 7
    %v6044 = vsub.s32 0, %v6043
    %v6045 = vrot.slane %v5980, %v6044
    %v6046 = vlaneseq
    %v6047 = vshrl.u32 %v6046, 7
    %v6048 = vsub.s32 1, %v6047
    %v6049 = vrot.slane %v5980, %v6048
    %v6050 = vlaneseq
    %v6051 = vshrl.u32 %v6050, 7
    %v6052 = vsub.s32 2, %v6051
    %v6053 = vrot.slane %v5980, %v6052
    %v6054 = vlaneseq
    %v6055 = vshrl.u32 %v6054, 7
    %v6056 = vsub.s32 3, %v6055
    %v6057 = vrot.slane %v5980, %v6056
    %v6058 = vlaneseq
    %v6059 = vshrl.u32 %v6058, 7
    %v6060 = vsub.s32 4, %v6059
    %v6061 = vrot.slane %v5980, %v6060
    %v6062 = vlaneseq
    %v6063 = vshrl.u32 %v6062, 7
    %v6064 = vsub.s32 5, %v6063
    %v6065 = vrot.slane %v5980, %v6064
    %v6066 = vlaneseq
    %v6067 = vshrl.u32 %v6066, 7
    %v6068 = vsub.s32 6, %v6067
    %v6069 = vrot.slane %v5980, %v6068
    %v6070 = vlaneseq
    %v6071 = vshrl.u32 %v6070, 7
    %v6072 = vsub.s32 7, %v6071
    %v6073 = vrot.slane %v5980, %v6072
    %v6074 = vlaneseq
    %v6075 = vshrl.u32 %v6074, 7
    %v6076 = vsub.s32 0, %v6075
    %v6077 = vrot.slane %v5983, %v6076
    %v6078 = vlaneseq
    %v6079 = vshrl.u32 %v6078, 7
    %v6080 = vsub.s32 1, %v6079
    %v6081 = vrot.slane %v5983, %v6080
    %v6082 = vlaneseq
    %v6083 = vshrl.u32 %v6082, 7
    %v6084 = vsub.s32 2, %v6083
    %v6085 = vrot.slane %v5983, %v6084
    %v6086 = vlaneseq
    %v6087 = vshrl.u32 %v6086, 7
    %v6088 = vsub.s32 3, %v6087
    %v6089 = vrot.slane %v5983, %v6088
    %v6090 = vlaneseq
    %v6091 = vshrl.u32 %v6090, 7
    %v6092 = vsub.s32 4, %v6091
    %v6093 = vrot.slane %v5983, %v6092
    %v6094 = vlaneseq
    %v6095 = vshrl.u32 %v6094, 7
    %v6096 = vsub.s32 5, %v6095
    %v6097 = vrot.slane %v5983, %v6096
    %v6098 = vlaneseq
    %v6099 = vshrl.u32 %v6098, 7
    %v6100 = vsub.s32 6, %v6099
    %v6101 = vrot.slane %v5983, %v6100
    %v6102 = vlaneseq
    %v6103 = vshrl.u32 %v6102, 7
    %v6104 = vsub.s32 7, %v6103
    %v6105 = vrot.slane %v5983, %v6104
    %v6106 = vlaneseq
    %v6107 = vshrl.u32 %v6106, 7
    %v6108 = vsub.s32 0, %v6107
    %v6109 = vrot.slane %v5986, %v6108
    %v6110 = vlaneseq
    %v6111 = vshrl.u32 %v6110, 7
    %v6112 = vsub.s32 1, %v6111
    %v6113 = vrot.slane %v5986, %v6112
    %v6114 = vlaneseq
    %v6115 = vshrl.u32 %v6114, 7
    %v6116 = vsub.s32 2, %v6115
    %v6117 = vrot.slane %v5986, %v6116
    %v6118 = vlaneseq
    %v6119 = vshrl.u32 %v6118, 7
    %v6120 = vsub.s32 3, %v6119
    %v6121 = vrot.slane %v5986, %v6120
    %v6122 = vlaneseq
    %v6123 = vshrl.u32 %v6122, 7
    %v6124 = vsub.s32 4, %v6123
    %v6125 = vrot.slane %v5986, %v6124
    %v6126 = vlaneseq
    %v6127 = vshrl.u32 %v6126, 7
    %v6128 = vsub.s32 5, %v6127
    %v6129 = vrot.slane %v5986, %v6128
    %v6130 = vlaneseq
    %v6131 = vshrl.u32 %v6130, 7
    %v6132 = vsub.s32 6, %v6131
    %v6133 = vrot.slane %v5986, %v6132
    %v6134 = vlaneseq
    %v6135 = vshrl.u32 %v6134, 7
    %v6136 = vsub.s32 7, %v6135
    %v6137 = vrot.slane %v5986, %v6136
    %v6138 = vlaneseq
    %v6139 = vshrl.u32 %v6138, 7
    %v6140 = vsub.s32 0, %v6139
    %v6141 = vrot.slane %v5989, %v6140
    %v6142 = vlaneseq
    %v6143 = vshrl.u32 %v6142, 7
    %v6144 = vsub.s32 1, %v6143
    %v6145 = vrot.slane %v5989, %v6144
    %v6146 = vlaneseq
    %v6147 = vshrl.u32 %v6146, 7
    %v6148 = vsub.s32 2, %v6147
    %v6149 = vrot.slane %v5989, %v6148
    %v6150 = vlaneseq
    %v6151 = vshrl.u32 %v6150, 7
    %v6152 = vsub.s32 3, %v6151
    %v6153 = vrot.slane %v5989, %v6152
    %v6154 = vlaneseq
    %v6155 = vshrl.u32 %v6154, 7
    %v6156 = vsub.s32 4, %v6155
    %v6157 = vrot.slane %v5989, %v6156
    %v6158 = vlaneseq
    %v6159 = vshrl.u32 %v6158, 7
    %v6160 = vsub.s32 5, %v6159
    %v6161 = vrot.slane %v5989, %v6160
    %v6162 = vlaneseq
    %v6163 = vshrl.u32 %v6162, 7
    %v6164 = vsub.s32 6, %v6163
    %v6165 = vrot.slane %v5989, %v6164
    %v6166 = vlaneseq
    %v6167 = vshrl.u32 %v6166, 7
    %v6168 = vsub.s32 7, %v6167
    %v6169 = vrot.slane %v5989, %v6168
    %v6170 = vlaneseq
    %v6171 = vshrl.u32 %v6170, 7
    %v6172 = vsub.s32 0, %v6171
    %v6173 = vrot.slane %v5992, %v6172
    %v6174 = vlaneseq
    %v6175 = vshrl.u32 %v6174, 7
    %v6176 = vsub.s32 1, %v6175
    %v6177 = vrot.slane %v5992, %v6176
    %v6178 = vlaneseq
    %v6179 = vshrl.u32 %v6178, 7
    %v6180 = vsub.s32 2, %v6179
    %v6181 = vrot.slane %v5992, %v6180
    %v6182 = vlaneseq
    %v6183 = vshrl.u32 %v6182, 7
    %v6184 = vsub.s32 3, %v6183
    %v6185 = vrot.slane %v5992, %v6184
    %v6186 = vlaneseq
    %v6187 = vshrl.u32 %v6186, 7
    %v6188 = vsub.s32 4, %v6187
    %v6189 = vrot.slane %v5992, %v6188
    %v6190 = vlaneseq
    %v6191 = vshrl.u32 %v6190, 7
    %v6192 = vsub.s32 5, %v6191
    %v6193 = vrot.slane %v5992, %v6192
    %v6194 = vlaneseq
    %v6195 = vshrl.u32 %v6194, 7
    %v6196 = vsub.s32 6, %v6195
    %v6197 = vrot.slane %v5992, %v6196
    %v6198 = vlaneseq
    %v6199 = vshrl.u32 %v6198, 7
    %v6200 = vsub.s32 7, %v6199
    %v6201 = vrot.slane %v5992, %v6200
    %v6202 = vlaneseq
    %v6203 = vshrl.u32 %v6202, 7
    %v6204 = vsub.s32 0, %v6203
    %v6205 = vrot.slane %v5995, %v6204
    %v6206 = vlaneseq
    %v6207 = vshrl.u32 %v6206, 7
    %v6208 = vsub.s32 1, %v6207
    %v6209 = vrot.slane %v5995, %v6208
    %v6210 = vlaneseq
    %v6211 = vshrl.u32 %v6210, 7
    %v6212 = vsub.s32 2, %v6211
    %v6213 = vrot.slane %v5995, %v6212
    %v6214 = vlaneseq
    %v6215 = vshrl.u32 %v6214, 7
    %v6216 = vsub.s32 3, %v6215
    %v6217 = vrot.slane %v5995, %v6216
    %v6218 = vlaneseq
    %v6219 = vshrl.u32 %v6218, 7
    %v6220 = vsub.s32 4, %v6219
    %v6221 = vrot.slane %v5995, %v6220
    %v6222 = vlaneseq
    %v6223 = vshrl.u32 %v6222, 7
    %v6224 = vsub.s32 5, %v6223
    %v6225 = vrot.slane %v5995, %v6224
    %v6226 = vlaneseq
    %v6227 = vshrl.u32 %v6226, 7
    %v6228 = vsub.s32 6, %v6227
    %v6229 = vrot.slane %v5995, %v6228
    %v6230 = vlaneseq
    %v6231 = vshrl.u32 %v6230, 7
    %v6232 = vsub.s32 7, %v6231
    %v6233 = vrot.slane %v5995, %v6232
    %v6234 = vlaneseq
    %v6235 = vshrl.u32 %v6234, 7
    %v6236 = vsub.s32 0, %v6235
    %v6237 = vrot.slane %v5998, %v6236
    %v6238 = vlaneseq
    %v6239 = vshrl.u32 %v6238, 7
    %v6240 = vsub.s32 1, %v6239
    %v6241 = vrot.slane %v5998, %v6240
    %v6242 = vlaneseq
    %v6243 = vshrl.u32 %v6242, 7
    %v6244 = vsub.s32 2, %v6243
    %v6245 = vrot.slane %v5998, %v6244
    %v6246 = vlaneseq
    %v6247 = vshrl.u32 %v6246, 7
    %v6248 = vsub.s32 3, %v6247
    %v6249 = vrot.slane %v5998, %v6248
    %v6250 = vlaneseq
    %v6251 = vshrl.u32 %v6250, 7
    %v6252 = vsub.s32 4, %v6251
    %v6253 = vrot.slane %v5998, %v6252
    %v6254 = vlaneseq
    %v6255 = vshrl.u32 %v6254, 7
    %v6256 = vsub.s32 5, %v6255
    %v6257 = vrot.slane %v5998, %v6256
    %v6258 = vlaneseq
    %v6259 = vshrl.u32 %v6258, 7
    %v6260 = vsub.s32 6, %v6259
    %v6261 = vrot.slane %v5998, %v6260
    %v6262 = vlaneseq
    %v6263 = vshrl.u32 %v6262, 7
    %v6264 = vsub.s32 7, %v6263
    %v6265 = vrot.slane %v5998, %v6264
    %v6266 = vlaneseq
    %v6267 = vshrl.u32 %v6266, 7
    %v6268 = vsub.s32 0, %v6267
    %v6269 = vrot.slane %v6001, %v6268
    %v6270 = vlaneseq
    %v6271 = vshrl.u32 %v6270, 7
    %v6272 = vsub.s32 1, %v6271
    %v6273 = vrot.slane %v6001, %v6272
    %v6274 = vlaneseq
    %v6275 = vshrl.u32 %v6274, 7
    %v6276 = vsub.s32 2, %v6275
    %v6277 = vrot.slane %v6001, %v6276
    %v6278 = vlaneseq
    %v6279 = vshrl.u32 %v6278, 7
    %v6280 = vsub.s32 3, %v6279
    %v6281 = vrot.slane %v6001, %v6280
    %v6282 = vlaneseq
    %v6283 = vshrl.u32 %v6282, 7
    %v6284 = vsub.s32 4, %v6283
    %v6285 = vrot.slane %v6001, %v6284
    %v6286 = vlaneseq
    %v6287 = vshrl.u32 %v6286, 7
    %v6288 = vsub.s32 5, %v6287
    %v6289 = vrot.slane %v6001, %v6288
    %v6290 = vlaneseq
    %v6291 = vshrl.u32 %v6290, 7
    %v6292 = vsub.s32 6, %v6291
    %v6293 = vrot.slane %v6001, %v6292
    %v6294 = vlaneseq
    %v6295 = vshrl.u32 %v6294, 7
    %v6296 = vsub.s32 7, %v6295
    %v6297 = vrot.slane %v6001, %v6296
    %v6298 = vlaneseq
    %v6299 = vshrl.u32 %v6298, 7
    %v6300 = vsub.s32 0, %v6299
    %v6301 = vrot.slane %v6004, %v6300
    %v6302 = vlaneseq
    %v6303 = vshrl.u32 %v6302, 7
    %v6304 = vsub.s32 1, %v6303
    %v6305 = vrot.slane %v6004, %v6304
    %v6306 = vlaneseq
    %v6307 = vshrl.u32 %v6306, 7
    %v6308 = vsub.s32 2, %v6307
    %v6309 = vrot.slane %v6004, %v6308
    %v6310 = vlaneseq
    %v6311 = vshrl.u32 %v6310, 7
    %v6312 = vsub.s32 3, %v6311
    %v6313 = vrot.slane %v6004, %v6312
    %v6314 = vlaneseq
    %v6315 = vshrl.u32 %v6314, 7
    %v6316 = vsub.s32 4, %v6315
    %v6317 = vrot.slane %v6004, %v6316
    %v6318 = vlaneseq
    %v6319 = vshrl.u32 %v6318, 7
    %v6320 = vsub.s32 5, %v6319
    %v6321 = vrot.slane %v6004, %v6320
    %v6322 = vlaneseq
    %v6323 = vshrl.u32 %v6322, 7
    %v6324 = vsub.s32 6, %v6323
    %v6325 = vrot.slane %v6004, %v6324
    %v6326 = vlaneseq
    %v6327 = vshrl.u32 %v6326, 7
    %v6328 = vsub.s32 7, %v6327
    %v6329 = vrot.slane %v6004, %v6328
    %v6330 = vlaneseq
    %v6331 = vshrl.u32 %v6330, 7
    %v6332 = vsub.s32 0, %v6331
    %v6333 = vrot.slane %v6007, %v6332
    %v6334 = vlaneseq
    %v6335 = vshrl.u32 %v6334, 7
    %v6336 = vsub.s32 1, %v6335
    %v6337 = vrot.slane %v6007, %v6336
    %v6338 = vlaneseq
    %v6339 = vshrl.u32 %v6338, 7
    %v6340 = vsub.s32 2, %v6339
    %v6341 = vrot.slane %v6007, %v6340
    %v6342 = vlaneseq
    %v6343 = vshrl.u32 %v6342, 7
    %v6344 = vsub.s32 3, %v6343
    %v6345 = vrot.slane %v6007, %v6344
    %v6346 = vlaneseq
    %v6347 = vshrl.u32 %v6346, 7
    %v6348 = vsub.s32 4, %v6347
    %v6349 = vrot.slane %v6007, %v6348
    %v6350 = vlaneseq
    %v6351 = vshrl.u32 %v6350, 7
    %v6352 = vsub.s32 5, %v6351
    %v6353 = vrot.slane %v6007, %v6352
    %v6354 = vlaneseq
    %v6355 = vshrl.u32 %v6354, 7
    %v6356 = vsub.s32 6, %v6355
    %v6357 = vrot.slane %v6007, %v6356
    %v6358 = vlaneseq
    %v6359 = vshrl.u32 %v6358, 7
    %v6360 = vsub.s32 7, %v6359
    %v6361 = vrot.slane %v6007, %v6360
    %v6362 = vlaneseq
    %v6363 = vshrl.u32 %v6362, 7
    %v6364 = vsub.s32 0, %v6363
    %v6365 = vrot.slane %v6010, %v6364
    %v6366 = vlaneseq
    %v6367 = vshrl.u32 %v6366, 7
    %v6368 = vsub.s32 1, %v6367
    %v6369 = vrot.slane %v6010, %v6368
    %v6370 = vlaneseq
    %v6371 = vshrl.u32 %v6370, 7
    %v6372 = vsub.s32 2, %v6371
    %v6373 = vrot.slane %v6010, %v6372
    %v6374 = vlaneseq
    %v6375 = vshrl.u32 %v6374, 7
    %v6376 = vsub.s32 3, %v6375
    %v6377 = vrot.slane %v6010, %v6376
    %v6378 = vlaneseq
    %v6379 = vshrl.u32 %v6378, 7
    %v6380 = vsub.s32 4, %v6379
    %v6381 = vrot.slane %v6010, %v6380
    %v6382 = vlaneseq
    %v6383 = vshrl.u32 %v6382, 7
    %v6384 = vsub.s32 5, %v6383
    %v6385 = vrot.slane %v6010, %v6384
    %v6386 = vlaneseq
    %v6387 = vshrl.u32 %v6386, 7
    %v6388 = vsub.s32 6, %v6387
    %v6389 = vrot.slane %v6010, %v6388
    %v6390 = vlaneseq
    %v6391 = vshrl.u32 %v6390, 7
    %v6392 = vsub.s32 7, %v6391
    %v6393 = vrot.slane %v6010, %v6392
    %v6394 = vlaneseq
    %v6395 = vshrl.u32 %v6394, 7
    %v6396 = vsub.s32 0, %v6395
    %v6397 = vrot.slane %v6013, %v6396
    %v6398 = vlaneseq
    %v6399 = vshrl.u32 %v6398, 7
    %v6400 = vsub.s32 1, %v6399
    %v6401 = vrot.slane %v6013, %v6400
    %v6402 = vlaneseq
    %v6403 = vshrl.u32 %v6402, 7
    %v6404 = vsub.s32 2, %v6403
    %v6405 = vrot.slane %v6013, %v6404
    %v6406 = vlaneseq
    %v6407 = vshrl.u32 %v6406, 7
    %v6408 = vsub.s32 3, %v6407
    %v6409 = vrot.slane %v6013, %v6408
    %v6410 = vlaneseq
    %v6411 = vshrl.u32 %v6410, 7
    %v6412 = vsub.s32 4, %v6411
    %v6413 = vrot.slane %v6013, %v6412
    %v6414 = vlaneseq
    %v6415 = vshrl.u32 %v6414, 7
    %v6416 = vsub.s32 5, %v6415
    %v6417 = vrot.slane %v6013, %v6416
    %v6418 = vlaneseq
    %v6419 = vshrl.u32 %v6418, 7
    %v6420 = vsub.s32 6, %v6419
    %v6421 = vrot.slane %v6013, %v6420
    %v6422 = vlaneseq
    %v6423 = vshrl.u32 %v6422, 7
    %v6424 = vsub.s32 7, %v6423
    %v6425 = vrot.slane %v6013, %v6424
    %v6426 = vlaneseq
    %v6427 = vshrl.u32 %v6426, 7
    %v6428 = vsub.s32 0, %v6427
    %v6429 = vrot.slane %v6016, %v6428
    %v6430 = vlaneseq
    %v6431 = vshrl.u32 %v6430, 7
    %v6432 = vsub.s32 1, %v6431
    %v6433 = vrot.slane %v6016, %v6432
    %v6434 = vlaneseq
    %v6435 = vshrl.u32 %v6434, 7
    %v6436 = vsub.s32 2, %v6435
    %v6437 = vrot.slane %v6016, %v6436
    %v6438 = vlaneseq
    %v6439 = vshrl.u32 %v6438, 7
    %v6440 = vsub.s32 3, %v6439
    %v6441 = vrot.slane %v6016, %v6440
    %v6442 = vlaneseq
    %v6443 = vshrl.u32 %v6442, 7
    %v6444 = vsub.s32 4, %v6443
    %v6445 = vrot.slane %v6016, %v6444
    %v6446 = vlaneseq
    %v6447 = vshrl.u32 %v6446, 7
    %v6448 = vsub.s32 5, %v6447
    %v6449 = vrot.slane %v6016, %v6448
    %v6450 = vlaneseq
    %v6451 = vshrl.u32 %v6450, 7
    %v6452 = vsub.s32 6, %v6451
    %v6453 = vrot.slane %v6016, %v6452
    %v6454 = vlaneseq
    %v6455 = vshrl.u32 %v6454, 7
    %v6456 = vsub.s32 7, %v6455
    %v6457 = vrot.slane %v6016, %v6456
    %v6458 = vlaneseq
    %v6459 = vshrl.u32 %v6458, 7
    %v6460 = vsub.s32 0, %v6459
    %v6461 = vrot.slane %v6019, %v6460
    %v6462 = vlaneseq
    %v6463 = vshrl.u32 %v6462, 7
    %v6464 = vsub.s32 1, %v6463
    %v6465 = vrot.slane %v6019, %v6464
    %v6466 = vlaneseq
    %v6467 = vshrl.u32 %v6466, 7
    %v6468 = vsub.s32 2, %v6467
    %v6469 = vrot.slane %v6019, %v6468
    %v6470 = vlaneseq
    %v6471 = vshrl.u32 %v6470, 7
    %v6472 = vsub.s32 3, %v6471
    %v6473 = vrot.slane %v6019, %v6472
    %v6474 = vlaneseq
    %v6475 = vshrl.u32 %v6474, 7
    %v6476 = vsub.s32 4, %v6475
    %v6477 = vrot.slane %v6019, %v6476
    %v6478 = vlaneseq
    %v6479 = vshrl.u32 %v6478, 7
    %v6480 = vsub.s32 5, %v6479
    %v6481 = vrot.slane %v6019, %v6480
    %v6482 = vlaneseq
    %v6483 = vshrl.u32 %v6482, 7
    %v6484 = vsub.s32 6, %v6483
    %v6485 = vrot.slane %v6019, %v6484
    %v6486 = vlaneseq
    %v6487 = vshrl.u32 %v6486, 7
    %v6488 = vsub.s32 7, %v6487
    %v6489 = vrot.slane %v6019, %v6488
    %v6490 = vlaneseq
    %v6491 = vshrl.u32 %v6490, 7
    %v6492 = vsub.s32 0, %v6491
    %v6493 = vrot.slane %v6022, %v6492
    %v6494 = vlaneseq
    %v6495 = vshrl.u32 %v6494, 7
    %v6496 = vsub.s32 1, %v6495
    %v6497 = vrot.slane %v6022, %v6496
    %v6498 = vlaneseq
    %v6499 = vshrl.u32 %v6498, 7
    %v6500 = vsub.s32 2, %v6499
    %v6501 = vrot.slane %v6022, %v6500
    %v6502 = vlaneseq
    %v6503 = vshrl.u32 %v6502, 7
    %v6504 = vsub.s32 3, %v6503
    %v6505 = vrot.slane %v6022, %v6504
    %v6506 = vlaneseq
    %v6507 = vshrl.u32 %v6506, 7
    %v6508 = vsub.s32 4, %v6507
    %v6509 = vrot.slane %v6022, %v6508
    %v6510 = vlaneseq
    %v6511 = vshrl.u32 %v6510, 7
    %v6512 = vsub.s32 5, %v6511
    %v6513 = vrot.slane %v6022, %v6512
    %v6514 = vlaneseq
    %v6515 = vshrl.u32 %v6514, 7
    %v6516 = vsub.s32 6, %v6515
    %v6517 = vrot.slane %v6022, %v6516
    %v6518 = vlaneseq
    %v6519 = vshrl.u32 %v6518, 7
    %v6520 = vsub.s32 7, %v6519
    %v6521 = vrot.slane %v6022, %v6520
    %v6522 = vlaneseq
    %v6523 = vshrl.u32 %v6522, 7
    %v6524 = vsub.s32 0, %v6523
    %v6525 = vrot.slane %v6025, %v6524
    %v6526 = vlaneseq
    %v6527 = vshrl.u32 %v6526, 7
    %v6528 = vsub.s32 1, %v6527
    %v6529 = vrot.slane %v6025, %v6528
    %v6530 = vlaneseq
    %v6531 = vshrl.u32 %v6530, 7
    %v6532 = vsub.s32 2, %v6531
    %v6533 = vrot.slane %v6025, %v6532
    %v6534 = vlaneseq
    %v6535 = vshrl.u32 %v6534, 7
    %v6536 = vsub.s32 3, %v6535
    %v6537 = vrot.slane %v6025, %v6536
    %v6538 = vlaneseq
    %v6539 = vshrl.u32 %v6538, 7
    %v6540 = vsub.s32 4, %v6539
    %v6541 = vrot.slane %v6025, %v6540
    %v6542 = vlaneseq
    %v6543 = vshrl.u32 %v6542, 7
    %v6544 = vsub.s32 5, %v6543
    %v6545 = vrot.slane %v6025, %v6544
    %v6546 = vlaneseq
    %v6547 = vshrl.u32 %v6546, 7
    %v6548 = vsub.s32 6, %v6547
    %v6549 = vrot.slane %v6025, %v6548
    %v6550 = vlaneseq
    %v6551 = vshrl.u32 %v6550, 7
    %v6552 = vsub.s32 7, %v6551
    %v6553 = vrot.slane %v6025, %v6552
    %v6682 = vsub.f32 %v4688, %v6045
    %v6683 = vsub.f32 %v4689, %v6049
    %v6684 = vsub.f32 %v4690, %v6053
    %v6685 = vsub.f32 %v4691, %v6057
    %v6686 = vsub.f32 %v4692, %v6061
    %v6687 = vsub.f32 %v4693, %v6065
    %v6688 = vsub.f32 %v4694, %v6069
    %v6689 = vsub.f32 %v4695, %v6073
    %v6690 = vsub.f32 %v4696, %v6077
    %v6691 = vsub.f32 %v4697, %v6081
    %v6692 = vsub.f32 %v4698, %v6085
    %v6693 = vsub.f32 %v4699, %v6089
    %v6694 = vsub.f32 %v4700, %v6093
    %v6695 = vsub.f32 %v4701, %v6097
    %v6696 = vsub.f32 %v4702, %v6101
    %v6697 = vsub.f32 %v4703, %v6105
    %v6698 = vsub.f32 %v4704, %v6109
    %v6699 = vsub.f32 %v4705, %v6113
    %v6700 = vsub.f32 %v4706, %v6117
    %v6701 = vsub.f32 %v4707, %v6121
    %v6702 = vsub.f32 %v4708, %v6125
    %v6703 = vsub.f32 %v4709, %v6129
    %v6704 = vsub.f32 %v4710, %v6133
    %v6705 = vsub.f32 %v4711, %v6137
    %v6706 = vsub.f32 %v4712, %v6141
    %v6707 = vsub.f32 %v4713, %v6145
    %v6708 = vsub.f32 %v4714, %v6149
    %v6709 = vsub.f32 %v4715, %v6153
    %v6710 = vsub.f32 %v4716, %v6157
    %v6711 = vsub.f32 %v4717, %v6161
    %v6712 = vsub.f32 %v4718, %v6165
    %v6713 = vsub.f32 %v4719, %v6169
    %v6714 = vsub.f32 %v4720, %v6173
    %v6715 = vsub.f32 %v4721, %v6177
    %v6716 = vsub.f32 %v4722, %v6181
    %v6717 = vsub.f32 %v4723, %v6185
    %v6718 = vsub.f32 %v4724, %v6189
    %v6719 = vsub.f32 %v4725, %v6193
    %v6720 = vsub.f32 %v4726, %v6197
    %v6721 = vsub.f32 %v4727, %v6201
    %v6722 = vsub.f32 %v4728, %v6205
    %v6723 = vsub.f32 %v4729, %v6209
    %v6724 = vsub.f32 %v4730, %v6213
    %v6725 = vsub.f32 %v4731, %v6217
    %v6726 = vsub.f32 %v4732, %v6221
    %v6727 = vsub.f32 %v4733, %v6225
    %v6728 = vsub.f32 %v4734, %v6229
    %v6729 = vsub.f32 %v4735, %v6233
    %v6730 = vsub.f32 %v4736, %v6237
    %v6731 = vsub.f32 %v4737, %v6241
    %v6732 = vsub.f32 %v4738, %v6245
    %v6733 = vsub.f32 %v4739, %v6249
    %v6734 = vsub.f32 %v4740, %v6253
    %v6735 = vsub.f32 %v4741, %v6257
    %v6736 = vsub.f32 %v4742, %v6261
    %v6737 = vsub.f32 %v4743, %v6265
    %v6738 = vsub.f32 %v4744, %v6269
    %v6739 = vsub.f32 %v4745, %v6273
    %v6740 = vsub.f32 %v4746, %v6277
    %v6741 = vsub.f32 %v4747, %v6281
    %v6742 = vsub.f32 %v4748, %v6285
    %v6743 = vsub.f32 %v4749, %v6289
    %v6744 = vsub.f32 %v4750, %v6293
    %v6745 = vsub.f32 %v4751, %v6297
    %v6746 = vsub.f32 %v4752, %v6301
    %v6747 = vsub.f32 %v4753, %v6305
    %v6748 = vsub.f32 %v4754, %v6309
    %v6749 = vsub.f32 %v4755, %v6313
    %v6750 = vsub.f32 %v4756, %v6317
    %v6751 = vsub.f32 %v4757, %v6321
    %v6752 = vsub.f32 %v4758, %v6325
    %v6753 = vsub.f32 %v4759, %v6329
    %v6754 = vsub.f32 %v4760, %v6333
    %v6755 = vsub.f32 %v4761, %v6337
    %v6756 = vsub.f32 %v4762, %v6341
    %v6757 = vsub.f32 %v4763, %v6345
    %v6758 = vsub.f32 %v4764, %v6349
    %v6759 = vsub.f32 %v4765, %v6353
    %v6760 = vsub.f32 %v4766, %v6357
    %v6761 = vsub.f32 %v4767, %v6361
    %v6762 = vsub.f32 %v4768, %v6365
    %v6763 = vsub.f32 %v4769, %v6369
    %v6764 = vsub.f32 %v4770, %v6373
    %v6765 = vsub.f32 %v4771, %v6377
    %v6766 = vsub.f32 %v4772, %v6381
    %v6767 = vsub.f32 %v4773, %v6385
    %v6768 = vsub.f32 %v4774, %v6389
    %v6769 = vsub.f32 %v4775, %v6393
    %v6770 = vsub.f32 %v4776, %v6397
    %v6771 = vsub.f32 %v4777, %v6401
    %v6772 = vsub.f32 %v4778, %v6405
    %v6773 = vsub.f32 %v4779, %v6409
    %v6774 = vsub.f32 %v4780, %v6413
    %v6775 = vsub.f32 %v4781, %v6417
    %v6776 = vsub.f32 %v4782, %v6421
    %v6777 = vsub.f32 %v4783, %v6425
    %v6778 = vsub.f32 %v4784, %v6429
    %v6779 = vsub.f32 %v4785, %v6433
    %v6780 = vsub.f32 %v4786, %v6437
    %v6781 = vsub.f32 %v4787, %v6441
    %v6782 = vsub.f32 %v4788, %v6445
    %v6783 = vsub.f32 %v4789, %v6449
    %v6784 = vsub.f32 %v4790, %v6453
    %v6785 = vsub.f32 %v4791, %v6457
    %v6786 = vsub.f32 %v4792, %v6461
    %v6787 = vsub.f32 %v4793, %v6465
    %v6788 = vsub.f32 %v4794, %v6469
    %v6789 = vsub.f32 %v4795, %v6473
    %v6790 = vsub.f32 %v4796, %v6477
    %v6791 = vsub.f32 %v4797, %v6481
    %v6792 = vsub.f32 %v4798, %v6485
    %v6793 = vsub.f32 %v4799, %v6489
    %v6794 = vsub.f32 %v4800, %v6493
    %v6795 = vsub.f32 %v4801, %v6497
    %v6796 = vsub.f32 %v4802, %v6501
    %v6797 = vsub.f32 %v4803, %v6505
    %v6798 = vsub.f32 %v4804, %v6509
    %v6799 = vsub.f32 %v4805, %v6513
    %v6800 = vsub.f32 %v4806, %v6517
    %v6801 = vsub.f32 %v4807, %v6521
    %v6802 = vsub.f32 %v4808, %v6525
    %v6803 = vsub.f32 %v4809, %v6529
    %v6804 = vsub.f32 %v4810, %v6533
    %v6805 = vsub.f32 %v4811, %v6537
    %v6806 = vsub.f32 %v4812, %v6541
    %v6807 = vsub.f32 %v4813, %v6545
    %v6808 = vsub.f32 %v4814, %v6549
    %v6809 = vsub.f32 %v4815, %v6553
    %v6810 = vmul.f32 %v6682, 1.442695
    %v6811 = vpow.pop %v6810
    %v6812 = vmul.f32 %v6683, 1.442695
    %v6813 = vpow.pop %v6812
    %v6814 = vmul.f32 %v6684, 1.442695
    %v6815 = vpow.pop %v6814
    %v6816 = vmul.f32 %v6685, 1.442695
    %v6817 = vpow.pop %v6816
    %v6818 = vmul.f32 %v6686, 1.442695
    %v6819 = vpow.pop %v6818
    %v6820 = vmul.f32 %v6687, 1.442695
    %v6821 = vpow.pop %v6820
    %v6822 = vmul.f32 %v6688, 1.442695
    %v6823 = vpow.pop %v6822
    %v6824 = vmul.f32 %v6689, 1.442695
    %v6825 = vpow.pop %v6824
    %v6826 = vmul.f32 %v6690, 1.442695
    %v6827 = vpow.pop %v6826
    %v6828 = vmul.f32 %v6691, 1.442695
    %v6829 = vpow.pop %v6828
    %v6830 = vmul.f32 %v6692, 1.442695
    %v6831 = vpow.pop %v6830
    %v6832 = vmul.f32 %v6693, 1.442695
    %v6833 = vpow.pop %v6832
    %v6834 = vmul.f32 %v6694, 1.442695
    %v6835 = vpow.pop %v6834
    %v6836 = vmul.f32 %v6695, 1.442695
    %v6837 = vpow.pop %v6836
    %v6838 = vmul.f32 %v6696, 1.442695
    %v6839 = vpow.pop %v6838
    %v6840 = vmul.f32 %v6697, 1.442695
    %v6841 = vpow.pop %v6840
    %v6842 = vmul.f32 %v6698, 1.442695
    %v6843 = vpow.pop %v6842
    %v6844 = vmul.f32 %v6699, 1.442695
    %v6845 = vpow.pop %v6844
    %v6846 = vmul.f32 %v6700, 1.442695
    %v6847 = vpow.pop %v6846
    %v6848 = vmul.f32 %v6701, 1.442695
    %v6849 = vpow.pop %v6848
    %v6850 = vmul.f32 %v6702, 1.442695
    %v6851 = vpow.pop %v6850
    %v6852 = vmul.f32 %v6703, 1.442695
    %v6853 = vpow.pop %v6852
    %v6854 = vmul.f32 %v6704, 1.442695
    %v6855 = vpow.pop %v6854
    %v6856 = vmul.f32 %v6705, 1.442695
    %v6857 = vpow.pop %v6856
    %v6858 = vmul.f32 %v6706, 1.442695
    %v6859 = vpow.pop %v6858
    %v6860 = vmul.f32 %v6707, 1.442695
    %v6861 = vpow.pop %v6860
    %v6862 = vmul.f32 %v6708, 1.442695
    %v6863 = vpow.pop %v6862
    %v6864 = vmul.f32 %v6709, 1.442695
    %v6865 = vpow.pop %v6864
    %v6866 = vmul.f32 %v6710, 1.442695
    %v6867 = vpow.pop %v6866
    %v6868 = vmul.f32 %v6711, 1.442695
    %v6869 = vpow.pop %v6868
    %v6870 = vmul.f32 %v6712, 1.442695
    %v6871 = vpow.pop %v6870
    %v6872 = vmul.f32 %v6713, 1.442695
    %v6873 = vpow.pop %v6872
    %v6874 = vmul.f32 %v6714, 1.442695
    %v6875 = vpow.pop %v6874
    %v6876 = vmul.f32 %v6715, 1.442695
    %v6877 = vpow.pop %v6876
    %v6878 = vmul.f32 %v6716, 1.442695
    %v6879 = vpow.pop %v6878
    %v6880 = vmul.f32 %v6717, 1.442695
    %v6881 = vpow.pop %v6880
    %v6882 = vmul.f32 %v6718, 1.442695
    %v6883 = vpow.pop %v6882
    %v6884 = vmul.f32 %v6719, 1.442695
    %v6885 = vpow.pop %v6884
    %v6886 = vmul.f32 %v6720, 1.442695
    %v6887 = vpow.pop %v6886
    %v6888 = vmul.f32 %v6721, 1.442695
    %v6889 = vpow.pop %v6888
    %v6890 = vmul.f32 %v6722, 1.442695
    %v6891 = vpow.pop %v6890
    %v6892 = vmul.f32 %v6723, 1.442695
    %v6893 = vpow.pop %v6892
    %v6894 = vmul.f32 %v6724, 1.442695
    %v6895 = vpow.pop %v6894
    %v6896 = vmul.f32 %v6725, 1.442695
    %v6897 = vpow.pop %v6896
    %v6898 = vmul.f32 %v6726, 1.442695
    %v6899 = vpow.pop %v6898
    %v6900 = vmul.f32 %v6727, 1.442695
    %v6901 = vpow.pop %v6900
    %v6902 = vmul.f32 %v6728, 1.442695
    %v6903 = vpow.pop %v6902
    %v6904 = vmul.f32 %v6729, 1.442695
    %v6905 = vpow.pop %v6904
    %v6906 = vmul.f32 %v6730, 1.442695
    %v6907 = vpow.pop %v6906
    %v6908 = vmul.f32 %v6731, 1.442695
    %v6909 = vpow.pop %v6908
    %v6910 = vmul.f32 %v6732, 1.442695
    %v6911 = vpow.pop %v6910
    %v6912 = vmul.f32 %v6733, 1.442695
    %v6913 = vpow.pop %v6912
    %v6914 = vmul.f32 %v6734, 1.442695
    %v6915 = vpow.pop %v6914
    %v6916 = vmul.f32 %v6735, 1.442695
    %v6917 = vpow.pop %v6916
    %v6918 = vmul.f32 %v6736, 1.442695
    %v6919 = vpow.pop %v6918
    %v6920 = vmul.f32 %v6737, 1.442695
    %v6921 = vpow.pop %v6920
    %v6922 = vmul.f32 %v6738, 1.442695
    %v6923 = vpow.pop %v6922
    %v6924 = vmul.f32 %v6739, 1.442695
    %v6925 = vpow.pop %v6924
    %v6926 = vmul.f32 %v6740, 1.442695
    %v6927 = vpow.pop %v6926
    %v6928 = vmul.f32 %v6741, 1.442695
    %v6929 = vpow.pop %v6928
    %v6930 = vmul.f32 %v6742, 1.442695
    %v6931 = vpow.pop %v6930
    %v6932 = vmul.f32 %v6743, 1.442695
    %v6933 = vpow.pop %v6932
    %v6934 = vmul.f32 %v6744, 1.442695
    %v6935 = vpow.pop %v6934
    %v6936 = vmul.f32 %v6745, 1.442695
    %v6937 = vpow.pop %v6936
    %v6938 = vmul.f32 %v6746, 1.442695
    %v6939 = vpow.pop %v6938
    %v6940 = vmul.f32 %v6747, 1.442695
    %v6941 = vpow.pop %v6940
    %v6942 = vmul.f32 %v6748, 1.442695
    %v6943 = vpow.pop %v6942
    %v6944 = vmul.f32 %v6749, 1.442695
    %v6945 = vpow.pop %v6944
    %v6946 = vmul.f32 %v6750, 1.442695
    %v6947 = vpow.pop %v6946
    %v6948 = vmul.f32 %v6751, 1.442695
    %v6949 = vpow.pop %v6948
    %v6950 = vmul.f32 %v6752, 1.442695
    %v6951 = vpow.pop %v6950
    %v6952 = vmul.f32 %v6753, 1.442695
    %v6953 = vpow.pop %v6952
    %v6954 = vmul.f32 %v6754, 1.442695
    %v6955 = vpow.pop %v6954
    %v6956 = vmul.f32 %v6755, 1.442695
    %v6957 = vpow.pop %v6956
    %v6958 = vmul.f32 %v6756, 1.442695
    %v6959 = vpow.pop %v6958
    %v6960 = vmul.f32 %v6757, 1.442695
    %v6961 = vpow.pop %v6960
    %v6962 = vmul.f32 %v6758, 1.442695
    %v6963 = vpow.pop %v6962
    %v6964 = vmul.f32 %v6759, 1.442695
    %v6965 = vpow.pop %v6964
    %v6966 = vmul.f32 %v6760, 1.442695
    %v6967 = vpow.pop %v6966
    %v6968 = vmul.f32 %v6761, 1.442695
    %v6969 = vpow.pop %v6968
    %v6970 = vmul.f32 %v6762, 1.442695
    %v6971 = vpow.pop %v6970
    %v6972 = vmul.f32 %v6763, 1.442695
    %v6973 = vpow.pop %v6972
    %v6974 = vmul.f32 %v6764, 1.442695
    %v6975 = vpow.pop %v6974
    %v6976 = vmul.f32 %v6765, 1.442695
    %v6977 = vpow.pop %v6976
    %v6978 = vmul.f32 %v6766, 1.442695
    %v6979 = vpow.pop %v6978
    %v6980 = vmul.f32 %v6767, 1.442695
    %v6981 = vpow.pop %v6980
    %v6982 = vmul.f32 %v6768, 1.442695
    %v6983 = vpow.pop %v6982
    %v6984 = vmul.f32 %v6769, 1.442695
    %v6985 = vpow.pop %v6984
    %v6986 = vmul.f32 %v6770, 1.442695
    %v6987 = vpow.pop %v6986
    %v6988 = vmul.f32 %v6771, 1.442695
    %v6989 = vpow.pop %v6988
    %v6990 = vmul.f32 %v6772, 1.442695
    %v6991 = vpow.pop %v6990
    %v6992 = vmul.f32 %v6773, 1.442695
    %v6993 = vpow.pop %v6992
    %v6994 = vmul.f32 %v6774, 1.442695
    %v6995 = vpow.pop %v6994
    %v6996 = vmul.f32 %v6775, 1.442695
    %v6997 = vpow.pop %v6996
    %v6998 = vmul.f32 %v6776, 1.442695
    %v6999 = vpow.pop %v6998
    %v7000 = vmul.f32 %v6777, 1.442695
    %v7001 = vpow.pop %v7000
    %v7002 = vmul.f32 %v6778, 1.442695
    %v7003 = vpow.pop %v7002
    %v7004 = vmul.f32 %v6779, 1.442695
    %v7005 = vpow.pop %v7004
    %v7006 = vmul.f32 %v6780, 1.442695
    %v7007 = vpow.pop %v7006
    %v7008 = vmul.f32 %v6781, 1.442695
    %v7009 = vpow.pop %v7008
    %v7010 = vmul.f32 %v6782, 1.442695
    %v7011 = vpow.pop %v7010
    %v7012 = vmul.f32 %v6783, 1.442695
    %v7013 = vpow.pop %v7012
    %v7014 = vmul.f32 %v6784, 1.442695
    %v7015 = vpow.pop %v7014
    %v7016 = vmul.f32 %v6785, 1.442695
    %v7017 = vpow.pop %v7016
    %v7018 = vmul.f32 %v6786, 1.442695
    %v7019 = vpow.pop %v7018
    %v7020 = vmul.f32 %v6787, 1.442695
    %v7021 = vpow.pop %v7020
    %v7022 = vmul.f32 %v6788, 1.442695
    %v7023 = vpow.pop %v7022
    %v7024 = vmul.f32 %v6789, 1.442695
    %v7025 = vpow.pop %v7024
    %v7026 = vmul.f32 %v6790, 1.442695
    %v7027 = vpow.pop %v7026
    %v7028 = vmul.f32 %v6791, 1.442695
    %v7029 = vpow.pop %v7028
    %v7030 = vmul.f32 %v6792, 1.442695
    %v7031 = vpow.pop %v7030
    %v7032 = vmul.f32 %v6793, 1.442695
    %v7033 = vpow.pop %v7032
    %v7034 = vmul.f32 %v6794, 1.442695
    %v7035 = vpow.pop %v7034
    %v7036 = vmul.f32 %v6795, 1.442695
    %v7037 = vpow.pop %v7036
    %v7038 = vmul.f32 %v6796, 1.442695
    %v7039 = vpow.pop %v7038
    %v7040 = vmul.f32 %v6797, 1.442695
    %v7041 = vpow.pop %v7040
    %v7042 = vmul.f32 %v6798, 1.442695
    %v7043 = vpow.pop %v7042
    %v7044 = vmul.f32 %v6799, 1.442695
    %v7045 = vpow.pop %v7044
    %v7046 = vmul.f32 %v6800, 1.442695
    %v7047 = vpow.pop %v7046
    %v7048 = vmul.f32 %v6801, 1.442695
    %v7049 = vpow.pop %v7048
    %v7050 = vmul.f32 %v6802, 1.442695
    %v7051 = vpow.pop %v7050
    %v7052 = vmul.f32 %v6803, 1.442695
    %v7053 = vpow.pop %v7052
    %v7054 = vmul.f32 %v6804, 1.442695
    %v7055 = vpow.pop %v7054
    %v7056 = vmul.f32 %v6805, 1.442695
    %v7057 = vpow.pop %v7056
    %v7058 = vmul.f32 %v6806, 1.442695
    %v7059 = vpow.pop %v7058
    %v7060 = vmul.f32 %v6807, 1.442695
    %v7061 = vpow.pop %v7060
    %v7062 = vmul.f32 %v6808, 1.442695
    %v7063 = vpow.pop %v7062
    %v7064 = vmul.f32 %v6809, 1.442695
    %v7065 = vpow.pop %v7064
    %7194 = vset.pattern.permute.xlu0 0
    %7195 = vperm.xlu0 %7194, %v6811
    %v7196 = vpop.permute.xlu0 %7195
    %7197 = vset.pattern.permute.xlu0 0
    %7198 = vperm.xlu0 %7197, %v6813
    %v7199 = vpop.permute.xlu0 %7198
    %7200 = vset.pattern.permute.xlu0 0
    %7201 = vperm.xlu0 %7200, %v6815
    %v7202 = vpop.permute.xlu0 %7201
    %7203 = vset.pattern.permute.xlu0 0
    %7204 = vperm.xlu0 %7203, %v6817
    %v7205 = vpop.permute.xlu0 %7204
    %7206 = vset.pattern.permute.xlu0 0
    %7207 = vperm.xlu0 %7206, %v6819
    %v7208 = vpop.permute.xlu0 %7207
    %7209 = vset.pattern.permute.xlu0 0
    %7210 = vperm.xlu0 %7209, %v6821
    %v7211 = vpop.permute.xlu0 %7210
    %7212 = vset.pattern.permute.xlu0 0
    %7213 = vperm.xlu0 %7212, %v6823
    %v7214 = vpop.permute.xlu0 %7213
    %7215 = vset.pattern.permute.xlu0 0
    %7216 = vperm.xlu0 %7215, %v6825
    %v7217 = vpop.permute.xlu0 %7216
    %7218 = vset.pattern.permute.xlu0 0
    %7219 = vperm.xlu0 %7218, %v6827
    %v7220 = vpop.permute.xlu0 %7219
    %7221 = vset.pattern.permute.xlu0 0
    %7222 = vperm.xlu0 %7221, %v6829
    %v7223 = vpop.permute.xlu0 %7222
    %7224 = vset.pattern.permute.xlu0 0
    %7225 = vperm.xlu0 %7224, %v6831
    %v7226 = vpop.permute.xlu0 %7225
    %7227 = vset.pattern.permute.xlu0 0
    %7228 = vperm.xlu0 %7227, %v6833
    %v7229 = vpop.permute.xlu0 %7228
    %7230 = vset.pattern.permute.xlu0 0
    %7231 = vperm.xlu0 %7230, %v6835
    %v7232 = vpop.permute.xlu0 %7231
    %7233 = vset.pattern.permute.xlu0 0
    %7234 = vperm.xlu0 %7233, %v6837
    %v7235 = vpop.permute.xlu0 %7234
    %7236 = vset.pattern.permute.xlu0 0
    %7237 = vperm.xlu0 %7236, %v6839
    %v7238 = vpop.permute.xlu0 %7237
    %7239 = vset.pattern.permute.xlu0 0
    %7240 = vperm.xlu0 %7239, %v6841
    %v7241 = vpop.permute.xlu0 %7240
    %7242 = vset.pattern.permute.xlu0 0
    %7243 = vperm.xlu0 %7242, %v6843
    %v7244 = vpop.permute.xlu0 %7243
    %7245 = vset.pattern.permute.xlu0 0
    %7246 = vperm.xlu0 %7245, %v6845
    %v7247 = vpop.permute.xlu0 %7246
    %7248 = vset.pattern.permute.xlu0 0
    %7249 = vperm.xlu0 %7248, %v6847
    %v7250 = vpop.permute.xlu0 %7249
    %7251 = vset.pattern.permute.xlu0 0
    %7252 = vperm.xlu0 %7251, %v6849
    %v7253 = vpop.permute.xlu0 %7252
    %7254 = vset.pattern.permute.xlu0 0
    %7255 = vperm.xlu0 %7254, %v6851
    %v7256 = vpop.permute.xlu0 %7255
    %7257 = vset.pattern.permute.xlu0 0
    %7258 = vperm.xlu0 %7257, %v6853
    %v7259 = vpop.permute.xlu0 %7258
    %7260 = vset.pattern.permute.xlu0 0
    %7261 = vperm.xlu0 %7260, %v6855
    %v7262 = vpop.permute.xlu0 %7261
    %7263 = vset.pattern.permute.xlu0 0
    %7264 = vperm.xlu0 %7263, %v6857
    %v7265 = vpop.permute.xlu0 %7264
    %7266 = vset.pattern.permute.xlu0 0
    %7267 = vperm.xlu0 %7266, %v6859
    %v7268 = vpop.permute.xlu0 %7267
    %7269 = vset.pattern.permute.xlu0 0
    %7270 = vperm.xlu0 %7269, %v6861
    %v7271 = vpop.permute.xlu0 %7270
    %7272 = vset.pattern.permute.xlu0 0
    %7273 = vperm.xlu0 %7272, %v6863
    %v7274 = vpop.permute.xlu0 %7273
    %7275 = vset.pattern.permute.xlu0 0
    %7276 = vperm.xlu0 %7275, %v6865
    %v7277 = vpop.permute.xlu0 %7276
    %7278 = vset.pattern.permute.xlu0 0
    %7279 = vperm.xlu0 %7278, %v6867
    %v7280 = vpop.permute.xlu0 %7279
    %7281 = vset.pattern.permute.xlu0 0
    %7282 = vperm.xlu0 %7281, %v6869
    %v7283 = vpop.permute.xlu0 %7282
    %7284 = vset.pattern.permute.xlu0 0
    %7285 = vperm.xlu0 %7284, %v6871
    %v7286 = vpop.permute.xlu0 %7285
    %7287 = vset.pattern.permute.xlu0 0
    %7288 = vperm.xlu0 %7287, %v6873
    %v7289 = vpop.permute.xlu0 %7288
    %7290 = vset.pattern.permute.xlu0 0
    %7291 = vperm.xlu0 %7290, %v6875
    %v7292 = vpop.permute.xlu0 %7291
    %7293 = vset.pattern.permute.xlu0 0
    %7294 = vperm.xlu0 %7293, %v6877
    %v7295 = vpop.permute.xlu0 %7294
    %7296 = vset.pattern.permute.xlu0 0
    %7297 = vperm.xlu0 %7296, %v6879
    %v7298 = vpop.permute.xlu0 %7297
    %7299 = vset.pattern.permute.xlu0 0
    %7300 = vperm.xlu0 %7299, %v6881
    %v7301 = vpop.permute.xlu0 %7300
    %7302 = vset.pattern.permute.xlu0 0
    %7303 = vperm.xlu0 %7302, %v6883
    %v7304 = vpop.permute.xlu0 %7303
    %7305 = vset.pattern.permute.xlu0 0
    %7306 = vperm.xlu0 %7305, %v6885
    %v7307 = vpop.permute.xlu0 %7306
    %7308 = vset.pattern.permute.xlu0 0
    %7309 = vperm.xlu0 %7308, %v6887
    %v7310 = vpop.permute.xlu0 %7309
    %7311 = vset.pattern.permute.xlu0 0
    %7312 = vperm.xlu0 %7311, %v6889
    %v7313 = vpop.permute.xlu0 %7312
    %7314 = vset.pattern.permute.xlu0 0
    %7315 = vperm.xlu0 %7314, %v6891
    %v7316 = vpop.permute.xlu0 %7315
    %7317 = vset.pattern.permute.xlu0 0
    %7318 = vperm.xlu0 %7317, %v6893
    %v7319 = vpop.permute.xlu0 %7318
    %7320 = vset.pattern.permute.xlu0 0
    %7321 = vperm.xlu0 %7320, %v6895
    %v7322 = vpop.permute.xlu0 %7321
    %7323 = vset.pattern.permute.xlu0 0
    %7324 = vperm.xlu0 %7323, %v6897
    %v7325 = vpop.permute.xlu0 %7324
    %7326 = vset.pattern.permute.xlu0 0
    %7327 = vperm.xlu0 %7326, %v6899
    %v7328 = vpop.permute.xlu0 %7327
    %7329 = vset.pattern.permute.xlu0 0
    %7330 = vperm.xlu0 %7329, %v6901
    %v7331 = vpop.permute.xlu0 %7330
    %7332 = vset.pattern.permute.xlu0 0
    %7333 = vperm.xlu0 %7332, %v6903
    %v7334 = vpop.permute.xlu0 %7333
    %7335 = vset.pattern.permute.xlu0 0
    %7336 = vperm.xlu0 %7335, %v6905
    %v7337 = vpop.permute.xlu0 %7336
    %7338 = vset.pattern.permute.xlu0 0
    %7339 = vperm.xlu0 %7338, %v6907
    %v7340 = vpop.permute.xlu0 %7339
    %7341 = vset.pattern.permute.xlu0 0
    %7342 = vperm.xlu0 %7341, %v6909
    %v7343 = vpop.permute.xlu0 %7342
    %7344 = vset.pattern.permute.xlu0 0
    %7345 = vperm.xlu0 %7344, %v6911
    %v7346 = vpop.permute.xlu0 %7345
    %7347 = vset.pattern.permute.xlu0 0
    %7348 = vperm.xlu0 %7347, %v6913
    %v7349 = vpop.permute.xlu0 %7348
    %7350 = vset.pattern.permute.xlu0 0
    %7351 = vperm.xlu0 %7350, %v6915
    %v7352 = vpop.permute.xlu0 %7351
    %7353 = vset.pattern.permute.xlu0 0
    %7354 = vperm.xlu0 %7353, %v6917
    %v7355 = vpop.permute.xlu0 %7354
    %7356 = vset.pattern.permute.xlu0 0
    %7357 = vperm.xlu0 %7356, %v6919
    %v7358 = vpop.permute.xlu0 %7357
    %7359 = vset.pattern.permute.xlu0 0
    %7360 = vperm.xlu0 %7359, %v6921
    %v7361 = vpop.permute.xlu0 %7360
    %7362 = vset.pattern.permute.xlu0 0
    %7363 = vperm.xlu0 %7362, %v6923
    %v7364 = vpop.permute.xlu0 %7363
    %7365 = vset.pattern.permute.xlu0 0
    %7366 = vperm.xlu0 %7365, %v6925
    %v7367 = vpop.permute.xlu0 %7366
    %7368 = vset.pattern.permute.xlu0 0
    %7369 = vperm.xlu0 %7368, %v6927
    %v7370 = vpop.permute.xlu0 %7369
    %7371 = vset.pattern.permute.xlu0 0
    %7372 = vperm.xlu0 %7371, %v6929
    %v7373 = vpop.permute.xlu0 %7372
    %7374 = vset.pattern.permute.xlu0 0
    %7375 = vperm.xlu0 %7374, %v6931
    %v7376 = vpop.permute.xlu0 %7375
    %7377 = vset.pattern.permute.xlu0 0
    %7378 = vperm.xlu0 %7377, %v6933
    %v7379 = vpop.permute.xlu0 %7378
    %7380 = vset.pattern.permute.xlu0 0
    %7381 = vperm.xlu0 %7380, %v6935
    %v7382 = vpop.permute.xlu0 %7381
    %7383 = vset.pattern.permute.xlu0 0
    %7384 = vperm.xlu0 %7383, %v6937
    %v7385 = vpop.permute.xlu0 %7384
    %7386 = vset.pattern.permute.xlu0 0
    %7387 = vperm.xlu0 %7386, %v6939
    %v7388 = vpop.permute.xlu0 %7387
    %7389 = vset.pattern.permute.xlu0 0
    %7390 = vperm.xlu0 %7389, %v6941
    %v7391 = vpop.permute.xlu0 %7390
    %7392 = vset.pattern.permute.xlu0 0
    %7393 = vperm.xlu0 %7392, %v6943
    %v7394 = vpop.permute.xlu0 %7393
    %7395 = vset.pattern.permute.xlu0 0
    %7396 = vperm.xlu0 %7395, %v6945
    %v7397 = vpop.permute.xlu0 %7396
    %7398 = vset.pattern.permute.xlu0 0
    %7399 = vperm.xlu0 %7398, %v6947
    %v7400 = vpop.permute.xlu0 %7399
    %7401 = vset.pattern.permute.xlu0 0
    %7402 = vperm.xlu0 %7401, %v6949
    %v7403 = vpop.permute.xlu0 %7402
    %7404 = vset.pattern.permute.xlu0 0
    %7405 = vperm.xlu0 %7404, %v6951
    %v7406 = vpop.permute.xlu0 %7405
    %7407 = vset.pattern.permute.xlu0 0
    %7408 = vperm.xlu0 %7407, %v6953
    %v7409 = vpop.permute.xlu0 %7408
    %7410 = vset.pattern.permute.xlu0 0
    %7411 = vperm.xlu0 %7410, %v6955
    %v7412 = vpop.permute.xlu0 %7411
    %7413 = vset.pattern.permute.xlu0 0
    %7414 = vperm.xlu0 %7413, %v6957
    %v7415 = vpop.permute.xlu0 %7414
    %7416 = vset.pattern.permute.xlu0 0
    %7417 = vperm.xlu0 %7416, %v6959
    %v7418 = vpop.permute.xlu0 %7417
    %7419 = vset.pattern.permute.xlu0 0
    %7420 = vperm.xlu0 %7419, %v6961
    %v7421 = vpop.permute.xlu0 %7420
    %7422 = vset.pattern.permute.xlu0 0
    %7423 = vperm.xlu0 %7422, %v6963
    %v7424 = vpop.permute.xlu0 %7423
    %7425 = vset.pattern.permute.xlu0 0
    %7426 = vperm.xlu0 %7425, %v6965
    %v7427 = vpop.permute.xlu0 %7426
    %7428 = vset.pattern.permute.xlu0 0
    %7429 = vperm.xlu0 %7428, %v6967
    %v7430 = vpop.permute.xlu0 %7429
    %7431 = vset.pattern.permute.xlu0 0
    %7432 = vperm.xlu0 %7431, %v6969
    %v7433 = vpop.permute.xlu0 %7432
    %7434 = vset.pattern.permute.xlu0 0
    %7435 = vperm.xlu0 %7434, %v6971
    %v7436 = vpop.permute.xlu0 %7435
    %7437 = vset.pattern.permute.xlu0 0
    %7438 = vperm.xlu0 %7437, %v6973
    %v7439 = vpop.permute.xlu0 %7438
    %7440 = vset.pattern.permute.xlu0 0
    %7441 = vperm.xlu0 %7440, %v6975
    %v7442 = vpop.permute.xlu0 %7441
    %7443 = vset.pattern.permute.xlu0 0
    %7444 = vperm.xlu0 %7443, %v6977
    %v7445 = vpop.permute.xlu0 %7444
    %7446 = vset.pattern.permute.xlu0 0
    %7447 = vperm.xlu0 %7446, %v6979
    %v7448 = vpop.permute.xlu0 %7447
    %7449 = vset.pattern.permute.xlu0 0
    %7450 = vperm.xlu0 %7449, %v6981
    %v7451 = vpop.permute.xlu0 %7450
    %7452 = vset.pattern.permute.xlu0 0
    %7453 = vperm.xlu0 %7452, %v6983
    %v7454 = vpop.permute.xlu0 %7453
    %7455 = vset.pattern.permute.xlu0 0
    %7456 = vperm.xlu0 %7455, %v6985
    %v7457 = vpop.permute.xlu0 %7456
    %7458 = vset.pattern.permute.xlu0 0
    %7459 = vperm.xlu0 %7458, %v6987
    %v7460 = vpop.permute.xlu0 %7459
    %7461 = vset.pattern.permute.xlu0 0
    %7462 = vperm.xlu0 %7461, %v6989
    %v7463 = vpop.permute.xlu0 %7462
    %7464 = vset.pattern.permute.xlu0 0
    %7465 = vperm.xlu0 %7464, %v6991
    %v7466 = vpop.permute.xlu0 %7465
    %7467 = vset.pattern.permute.xlu0 0
    %7468 = vperm.xlu0 %7467, %v6993
    %v7469 = vpop.permute.xlu0 %7468
    %7470 = vset.pattern.permute.xlu0 0
    %7471 = vperm.xlu0 %7470, %v6995
    %v7472 = vpop.permute.xlu0 %7471
    %7473 = vset.pattern.permute.xlu0 0
    %7474 = vperm.xlu0 %7473, %v6997
    %v7475 = vpop.permute.xlu0 %7474
    %7476 = vset.pattern.permute.xlu0 0
    %7477 = vperm.xlu0 %7476, %v6999
    %v7478 = vpop.permute.xlu0 %7477
    %7479 = vset.pattern.permute.xlu0 0
    %7480 = vperm.xlu0 %7479, %v7001
    %v7481 = vpop.permute.xlu0 %7480
    %7482 = vset.pattern.permute.xlu0 0
    %7483 = vperm.xlu0 %7482, %v7003
    %v7484 = vpop.permute.xlu0 %7483
    %7485 = vset.pattern.permute.xlu0 0
    %7486 = vperm.xlu0 %7485, %v7005
    %v7487 = vpop.permute.xlu0 %7486
    %7488 = vset.pattern.permute.xlu0 0
    %7489 = vperm.xlu0 %7488, %v7007
    %v7490 = vpop.permute.xlu0 %7489
    %7491 = vset.pattern.permute.xlu0 0
    %7492 = vperm.xlu0 %7491, %v7009
    %v7493 = vpop.permute.xlu0 %7492
    %7494 = vset.pattern.permute.xlu0 0
    %7495 = vperm.xlu0 %7494, %v7011
    %v7496 = vpop.permute.xlu0 %7495
    %7497 = vset.pattern.permute.xlu0 0
    %7498 = vperm.xlu0 %7497, %v7013
    %v7499 = vpop.permute.xlu0 %7498
    %7500 = vset.pattern.permute.xlu0 0
    %7501 = vperm.xlu0 %7500, %v7015
    %v7502 = vpop.permute.xlu0 %7501
    %7503 = vset.pattern.permute.xlu0 0
    %7504 = vperm.xlu0 %7503, %v7017
    %v7505 = vpop.permute.xlu0 %7504
    %7506 = vset.pattern.permute.xlu0 0
    %7507 = vperm.xlu0 %7506, %v7019
    %v7508 = vpop.permute.xlu0 %7507
    %7509 = vset.pattern.permute.xlu0 0
    %7510 = vperm.xlu0 %7509, %v7021
    %v7511 = vpop.permute.xlu0 %7510
    %7512 = vset.pattern.permute.xlu0 0
    %7513 = vperm.xlu0 %7512, %v7023
    %v7514 = vpop.permute.xlu0 %7513
    %7515 = vset.pattern.permute.xlu0 0
    %7516 = vperm.xlu0 %7515, %v7025
    %v7517 = vpop.permute.xlu0 %7516
    %7518 = vset.pattern.permute.xlu0 0
    %7519 = vperm.xlu0 %7518, %v7027
    %v7520 = vpop.permute.xlu0 %7519
    %7521 = vset.pattern.permute.xlu0 0
    %7522 = vperm.xlu0 %7521, %v7029
    %v7523 = vpop.permute.xlu0 %7522
    %7524 = vset.pattern.permute.xlu0 0
    %7525 = vperm.xlu0 %7524, %v7031
    %v7526 = vpop.permute.xlu0 %7525
    %7527 = vset.pattern.permute.xlu0 0
    %7528 = vperm.xlu0 %7527, %v7033
    %v7529 = vpop.permute.xlu0 %7528
    %7530 = vset.pattern.permute.xlu0 0
    %7531 = vperm.xlu0 %7530, %v7035
    %v7532 = vpop.permute.xlu0 %7531
    %7533 = vset.pattern.permute.xlu0 0
    %7534 = vperm.xlu0 %7533, %v7037
    %v7535 = vpop.permute.xlu0 %7534
    %7536 = vset.pattern.permute.xlu0 0
    %7537 = vperm.xlu0 %7536, %v7039
    %v7538 = vpop.permute.xlu0 %7537
    %7539 = vset.pattern.permute.xlu0 0
    %7540 = vperm.xlu0 %7539, %v7041
    %v7541 = vpop.permute.xlu0 %7540
    %7542 = vset.pattern.permute.xlu0 0
    %7543 = vperm.xlu0 %7542, %v7043
    %v7544 = vpop.permute.xlu0 %7543
    %7545 = vset.pattern.permute.xlu0 0
    %7546 = vperm.xlu0 %7545, %v7045
    %v7547 = vpop.permute.xlu0 %7546
    %7548 = vset.pattern.permute.xlu0 0
    %7549 = vperm.xlu0 %7548, %v7047
    %v7550 = vpop.permute.xlu0 %7549
    %7551 = vset.pattern.permute.xlu0 0
    %7552 = vperm.xlu0 %7551, %v7049
    %v7553 = vpop.permute.xlu0 %7552
    %7554 = vset.pattern.permute.xlu0 0
    %7555 = vperm.xlu0 %7554, %v7051
    %v7556 = vpop.permute.xlu0 %7555
    %7557 = vset.pattern.permute.xlu0 0
    %7558 = vperm.xlu0 %7557, %v7053
    %v7559 = vpop.permute.xlu0 %7558
    %7560 = vset.pattern.permute.xlu0 0
    %7561 = vperm.xlu0 %7560, %v7055
    %v7562 = vpop.permute.xlu0 %7561
    %7563 = vset.pattern.permute.xlu0 0
    %7564 = vperm.xlu0 %7563, %v7057
    %v7565 = vpop.permute.xlu0 %7564
    %7566 = vset.pattern.permute.xlu0 0
    %7567 = vperm.xlu0 %7566, %v7059
    %v7568 = vpop.permute.xlu0 %7567
    %7569 = vset.pattern.permute.xlu0 0
    %7570 = vperm.xlu0 %7569, %v7061
    %v7571 = vpop.permute.xlu0 %7570
    %7572 = vset.pattern.permute.xlu0 0
    %7573 = vperm.xlu0 %7572, %v7063
    %v7574 = vpop.permute.xlu0 %7573
    %7575 = vset.pattern.permute.xlu0 0
    %7576 = vperm.xlu0 %7575, %v7065
    %v7577 = vpop.permute.xlu0 %7576
    %v7578 = vlaneseq
    %v7579 = vshrl.u32 %v7578, 7
    %v7580 = vsub.s32 %v5329, %v7579
    %v7581 = vrot.slane %v7196, %v7580
    %v7582 = vlaneseq
    %v7583 = vshrl.u32 %v7582, 7
    %v7584 = vsub.s32 %v5329, %v7583
    %v7585 = vrot.slane %v7199, %v7584
    %v7586 = vlaneseq
    %v7587 = vshrl.u32 %v7586, 7
    %v7588 = vsub.s32 %v5329, %v7587
    %v7589 = vrot.slane %v7202, %v7588
    %v7590 = vlaneseq
    %v7591 = vshrl.u32 %v7590, 7
    %v7592 = vsub.s32 %v5329, %v7591
    %v7593 = vrot.slane %v7205, %v7592
    %v7594 = vlaneseq
    %v7595 = vshrl.u32 %v7594, 7
    %v7596 = vsub.s32 %v5329, %v7595
    %v7597 = vrot.slane %v7208, %v7596
    %v7598 = vlaneseq
    %v7599 = vshrl.u32 %v7598, 7
    %v7600 = vsub.s32 %v5329, %v7599
    %v7601 = vrot.slane %v7211, %v7600
    %v7602 = vlaneseq
    %v7603 = vshrl.u32 %v7602, 7
    %v7604 = vsub.s32 %v5329, %v7603
    %v7605 = vrot.slane %v7214, %v7604
    %v7606 = vlaneseq
    %v7607 = vshrl.u32 %v7606, 7
    %v7608 = vsub.s32 %v5329, %v7607
    %v7609 = vrot.slane %v7217, %v7608
    %v7610 = vlaneseq
    %v7611 = vshrl.u32 %v7610, 7
    %v7612 = vsub.s32 %v5329, %v7611
    %v7613 = vrot.slane %v7220, %v7612
    %v7614 = vlaneseq
    %v7615 = vshrl.u32 %v7614, 7
    %v7616 = vsub.s32 %v5329, %v7615
    %v7617 = vrot.slane %v7223, %v7616
    %v7618 = vlaneseq
    %v7619 = vshrl.u32 %v7618, 7
    %v7620 = vsub.s32 %v5329, %v7619
    %v7621 = vrot.slane %v7226, %v7620
    %v7622 = vlaneseq
    %v7623 = vshrl.u32 %v7622, 7
    %v7624 = vsub.s32 %v5329, %v7623
    %v7625 = vrot.slane %v7229, %v7624
    %v7626 = vlaneseq
    %v7627 = vshrl.u32 %v7626, 7
    %v7628 = vsub.s32 %v5329, %v7627
    %v7629 = vrot.slane %v7232, %v7628
    %v7630 = vlaneseq
    %v7631 = vshrl.u32 %v7630, 7
    %v7632 = vsub.s32 %v5329, %v7631
    %v7633 = vrot.slane %v7235, %v7632
    %v7634 = vlaneseq
    %v7635 = vshrl.u32 %v7634, 7
    %v7636 = vsub.s32 %v5329, %v7635
    %v7637 = vrot.slane %v7238, %v7636
    %v7638 = vlaneseq
    %v7639 = vshrl.u32 %v7638, 7
    %v7640 = vsub.s32 %v5329, %v7639
    %v7641 = vrot.slane %v7241, %v7640
    %v7642 = vlaneseq
    %v7643 = vshrl.u32 %v7642, 7
    %v7644 = vsub.s32 %v5329, %v7643
    %v7645 = vrot.slane %v7244, %v7644
    %v7646 = vlaneseq
    %v7647 = vshrl.u32 %v7646, 7
    %v7648 = vsub.s32 %v5329, %v7647
    %v7649 = vrot.slane %v7247, %v7648
    %v7650 = vlaneseq
    %v7651 = vshrl.u32 %v7650, 7
    %v7652 = vsub.s32 %v5329, %v7651
    %v7653 = vrot.slane %v7250, %v7652
    %v7654 = vlaneseq
    %v7655 = vshrl.u32 %v7654, 7
    %v7656 = vsub.s32 %v5329, %v7655
    %v7657 = vrot.slane %v7253, %v7656
    %v7658 = vlaneseq
    %v7659 = vshrl.u32 %v7658, 7
    %v7660 = vsub.s32 %v5329, %v7659
    %v7661 = vrot.slane %v7256, %v7660
    %v7662 = vlaneseq
    %v7663 = vshrl.u32 %v7662, 7
    %v7664 = vsub.s32 %v5329, %v7663
    %v7665 = vrot.slane %v7259, %v7664
    %v7666 = vlaneseq
    %v7667 = vshrl.u32 %v7666, 7
    %v7668 = vsub.s32 %v5329, %v7667
    %v7669 = vrot.slane %v7262, %v7668
    %v7670 = vlaneseq
    %v7671 = vshrl.u32 %v7670, 7
    %v7672 = vsub.s32 %v5329, %v7671
    %v7673 = vrot.slane %v7265, %v7672
    %v7674 = vlaneseq
    %v7675 = vshrl.u32 %v7674, 7
    %v7676 = vsub.s32 %v5329, %v7675
    %v7677 = vrot.slane %v7268, %v7676
    %v7678 = vlaneseq
    %v7679 = vshrl.u32 %v7678, 7
    %v7680 = vsub.s32 %v5329, %v7679
    %v7681 = vrot.slane %v7271, %v7680
    %v7682 = vlaneseq
    %v7683 = vshrl.u32 %v7682, 7
    %v7684 = vsub.s32 %v5329, %v7683
    %v7685 = vrot.slane %v7274, %v7684
    %v7686 = vlaneseq
    %v7687 = vshrl.u32 %v7686, 7
    %v7688 = vsub.s32 %v5329, %v7687
    %v7689 = vrot.slane %v7277, %v7688
    %v7690 = vlaneseq
    %v7691 = vshrl.u32 %v7690, 7
    %v7692 = vsub.s32 %v5329, %v7691
    %v7693 = vrot.slane %v7280, %v7692
    %v7694 = vlaneseq
    %v7695 = vshrl.u32 %v7694, 7
    %v7696 = vsub.s32 %v5329, %v7695
    %v7697 = vrot.slane %v7283, %v7696
    %v7698 = vlaneseq
    %v7699 = vshrl.u32 %v7698, 7
    %v7700 = vsub.s32 %v5329, %v7699
    %v7701 = vrot.slane %v7286, %v7700
    %v7702 = vlaneseq
    %v7703 = vshrl.u32 %v7702, 7
    %v7704 = vsub.s32 %v5329, %v7703
    %v7705 = vrot.slane %v7289, %v7704
    %v7706 = vlaneseq
    %v7707 = vshrl.u32 %v7706, 7
    %v7708 = vsub.s32 %v5329, %v7707
    %v7709 = vrot.slane %v7292, %v7708
    %v7710 = vlaneseq
    %v7711 = vshrl.u32 %v7710, 7
    %v7712 = vsub.s32 %v5329, %v7711
    %v7713 = vrot.slane %v7295, %v7712
    %v7714 = vlaneseq
    %v7715 = vshrl.u32 %v7714, 7
    %v7716 = vsub.s32 %v5329, %v7715
    %v7717 = vrot.slane %v7298, %v7716
    %v7718 = vlaneseq
    %v7719 = vshrl.u32 %v7718, 7
    %v7720 = vsub.s32 %v5329, %v7719
    %v7721 = vrot.slane %v7301, %v7720
    %v7722 = vlaneseq
    %v7723 = vshrl.u32 %v7722, 7
    %v7724 = vsub.s32 %v5329, %v7723
    %v7725 = vrot.slane %v7304, %v7724
    %v7726 = vlaneseq
    %v7727 = vshrl.u32 %v7726, 7
    %v7728 = vsub.s32 %v5329, %v7727
    %v7729 = vrot.slane %v7307, %v7728
    %v7730 = vlaneseq
    %v7731 = vshrl.u32 %v7730, 7
    %v7732 = vsub.s32 %v5329, %v7731
    %v7733 = vrot.slane %v7310, %v7732
    %v7734 = vlaneseq
    %v7735 = vshrl.u32 %v7734, 7
    %v7736 = vsub.s32 %v5329, %v7735
    %v7737 = vrot.slane %v7313, %v7736
    %v7738 = vlaneseq
    %v7739 = vshrl.u32 %v7738, 7
    %v7740 = vsub.s32 %v5329, %v7739
    %v7741 = vrot.slane %v7316, %v7740
    %v7742 = vlaneseq
    %v7743 = vshrl.u32 %v7742, 7
    %v7744 = vsub.s32 %v5329, %v7743
    %v7745 = vrot.slane %v7319, %v7744
    %v7746 = vlaneseq
    %v7747 = vshrl.u32 %v7746, 7
    %v7748 = vsub.s32 %v5329, %v7747
    %v7749 = vrot.slane %v7322, %v7748
    %v7750 = vlaneseq
    %v7751 = vshrl.u32 %v7750, 7
    %v7752 = vsub.s32 %v5329, %v7751
    %v7753 = vrot.slane %v7325, %v7752
    %v7754 = vlaneseq
    %v7755 = vshrl.u32 %v7754, 7
    %v7756 = vsub.s32 %v5329, %v7755
    %v7757 = vrot.slane %v7328, %v7756
    %v7758 = vlaneseq
    %v7759 = vshrl.u32 %v7758, 7
    %v7760 = vsub.s32 %v5329, %v7759
    %v7761 = vrot.slane %v7331, %v7760
    %v7762 = vlaneseq
    %v7763 = vshrl.u32 %v7762, 7
    %v7764 = vsub.s32 %v5329, %v7763
    %v7765 = vrot.slane %v7334, %v7764
    %v7766 = vlaneseq
    %v7767 = vshrl.u32 %v7766, 7
    %v7768 = vsub.s32 %v5329, %v7767
    %v7769 = vrot.slane %v7337, %v7768
    %v7770 = vlaneseq
    %v7771 = vshrl.u32 %v7770, 7
    %v7772 = vsub.s32 %v5329, %v7771
    %v7773 = vrot.slane %v7340, %v7772
    %v7774 = vlaneseq
    %v7775 = vshrl.u32 %v7774, 7
    %v7776 = vsub.s32 %v5329, %v7775
    %v7777 = vrot.slane %v7343, %v7776
    %v7778 = vlaneseq
    %v7779 = vshrl.u32 %v7778, 7
    %v7780 = vsub.s32 %v5329, %v7779
    %v7781 = vrot.slane %v7346, %v7780
    %v7782 = vlaneseq
    %v7783 = vshrl.u32 %v7782, 7
    %v7784 = vsub.s32 %v5329, %v7783
    %v7785 = vrot.slane %v7349, %v7784
    %v7786 = vlaneseq
    %v7787 = vshrl.u32 %v7786, 7
    %v7788 = vsub.s32 %v5329, %v7787
    %v7789 = vrot.slane %v7352, %v7788
    %v7790 = vlaneseq
    %v7791 = vshrl.u32 %v7790, 7
    %v7792 = vsub.s32 %v5329, %v7791
    %v7793 = vrot.slane %v7355, %v7792
    %v7794 = vlaneseq
    %v7795 = vshrl.u32 %v7794, 7
    %v7796 = vsub.s32 %v5329, %v7795
    %v7797 = vrot.slane %v7358, %v7796
    %v7798 = vlaneseq
    %v7799 = vshrl.u32 %v7798, 7
    %v7800 = vsub.s32 %v5329, %v7799
    %v7801 = vrot.slane %v7361, %v7800
    %v7802 = vlaneseq
    %v7803 = vshrl.u32 %v7802, 7
    %v7804 = vsub.s32 %v5329, %v7803
    %v7805 = vrot.slane %v7364, %v7804
    %v7806 = vlaneseq
    %v7807 = vshrl.u32 %v7806, 7
    %v7808 = vsub.s32 %v5329, %v7807
    %v7809 = vrot.slane %v7367, %v7808
    %v7810 = vlaneseq
    %v7811 = vshrl.u32 %v7810, 7
    %v7812 = vsub.s32 %v5329, %v7811
    %v7813 = vrot.slane %v7370, %v7812
    %v7814 = vlaneseq
    %v7815 = vshrl.u32 %v7814, 7
    %v7816 = vsub.s32 %v5329, %v7815
    %v7817 = vrot.slane %v7373, %v7816
    %v7818 = vlaneseq
    %v7819 = vshrl.u32 %v7818, 7
    %v7820 = vsub.s32 %v5329, %v7819
    %v7821 = vrot.slane %v7376, %v7820
    %v7822 = vlaneseq
    %v7823 = vshrl.u32 %v7822, 7
    %v7824 = vsub.s32 %v5329, %v7823
    %v7825 = vrot.slane %v7379, %v7824
    %v7826 = vlaneseq
    %v7827 = vshrl.u32 %v7826, 7
    %v7828 = vsub.s32 %v5329, %v7827
    %v7829 = vrot.slane %v7382, %v7828
    %v7830 = vlaneseq
    %v7831 = vshrl.u32 %v7830, 7
    %v7832 = vsub.s32 %v5329, %v7831
    %v7833 = vrot.slane %v7385, %v7832
    %v7834 = vlaneseq
    %v7835 = vshrl.u32 %v7834, 7
    %v7836 = vsub.s32 %v5329, %v7835
    %v7837 = vrot.slane %v7388, %v7836
    %v7838 = vlaneseq
    %v7839 = vshrl.u32 %v7838, 7
    %v7840 = vsub.s32 %v5329, %v7839
    %v7841 = vrot.slane %v7391, %v7840
    %v7842 = vlaneseq
    %v7843 = vshrl.u32 %v7842, 7
    %v7844 = vsub.s32 %v5329, %v7843
    %v7845 = vrot.slane %v7394, %v7844
    %v7846 = vlaneseq
    %v7847 = vshrl.u32 %v7846, 7
    %v7848 = vsub.s32 %v5329, %v7847
    %v7849 = vrot.slane %v7397, %v7848
    %v7850 = vlaneseq
    %v7851 = vshrl.u32 %v7850, 7
    %v7852 = vsub.s32 %v5329, %v7851
    %v7853 = vrot.slane %v7400, %v7852
    %v7854 = vlaneseq
    %v7855 = vshrl.u32 %v7854, 7
    %v7856 = vsub.s32 %v5329, %v7855
    %v7857 = vrot.slane %v7403, %v7856
    %v7858 = vlaneseq
    %v7859 = vshrl.u32 %v7858, 7
    %v7860 = vsub.s32 %v5329, %v7859
    %v7861 = vrot.slane %v7406, %v7860
    %v7862 = vlaneseq
    %v7863 = vshrl.u32 %v7862, 7
    %v7864 = vsub.s32 %v5329, %v7863
    %v7865 = vrot.slane %v7409, %v7864
    %v7866 = vlaneseq
    %v7867 = vshrl.u32 %v7866, 7
    %v7868 = vsub.s32 %v5329, %v7867
    %v7869 = vrot.slane %v7412, %v7868
    %v7870 = vlaneseq
    %v7871 = vshrl.u32 %v7870, 7
    %v7872 = vsub.s32 %v5329, %v7871
    %v7873 = vrot.slane %v7415, %v7872
    %v7874 = vlaneseq
    %v7875 = vshrl.u32 %v7874, 7
    %v7876 = vsub.s32 %v5329, %v7875
    %v7877 = vrot.slane %v7418, %v7876
    %v7878 = vlaneseq
    %v7879 = vshrl.u32 %v7878, 7
    %v7880 = vsub.s32 %v5329, %v7879
    %v7881 = vrot.slane %v7421, %v7880
    %v7882 = vlaneseq
    %v7883 = vshrl.u32 %v7882, 7
    %v7884 = vsub.s32 %v5329, %v7883
    %v7885 = vrot.slane %v7424, %v7884
    %v7886 = vlaneseq
    %v7887 = vshrl.u32 %v7886, 7
    %v7888 = vsub.s32 %v5329, %v7887
    %v7889 = vrot.slane %v7427, %v7888
    %v7890 = vlaneseq
    %v7891 = vshrl.u32 %v7890, 7
    %v7892 = vsub.s32 %v5329, %v7891
    %v7893 = vrot.slane %v7430, %v7892
    %v7894 = vlaneseq
    %v7895 = vshrl.u32 %v7894, 7
    %v7896 = vsub.s32 %v5329, %v7895
    %v7897 = vrot.slane %v7433, %v7896
    %v7898 = vlaneseq
    %v7899 = vshrl.u32 %v7898, 7
    %v7900 = vsub.s32 %v5329, %v7899
    %v7901 = vrot.slane %v7436, %v7900
    %v7902 = vlaneseq
    %v7903 = vshrl.u32 %v7902, 7
    %v7904 = vsub.s32 %v5329, %v7903
    %v7905 = vrot.slane %v7439, %v7904
    %v7906 = vlaneseq
    %v7907 = vshrl.u32 %v7906, 7
    %v7908 = vsub.s32 %v5329, %v7907
    %v7909 = vrot.slane %v7442, %v7908
    %v7910 = vlaneseq
    %v7911 = vshrl.u32 %v7910, 7
    %v7912 = vsub.s32 %v5329, %v7911
    %v7913 = vrot.slane %v7445, %v7912
    %v7914 = vlaneseq
    %v7915 = vshrl.u32 %v7914, 7
    %v7916 = vsub.s32 %v5329, %v7915
    %v7917 = vrot.slane %v7448, %v7916
    %v7918 = vlaneseq
    %v7919 = vshrl.u32 %v7918, 7
    %v7920 = vsub.s32 %v5329, %v7919
    %v7921 = vrot.slane %v7451, %v7920
    %v7922 = vlaneseq
    %v7923 = vshrl.u32 %v7922, 7
    %v7924 = vsub.s32 %v5329, %v7923
    %v7925 = vrot.slane %v7454, %v7924
    %v7926 = vlaneseq
    %v7927 = vshrl.u32 %v7926, 7
    %v7928 = vsub.s32 %v5329, %v7927
    %v7929 = vrot.slane %v7457, %v7928
    %v7930 = vlaneseq
    %v7931 = vshrl.u32 %v7930, 7
    %v7932 = vsub.s32 %v5329, %v7931
    %v7933 = vrot.slane %v7460, %v7932
    %v7934 = vlaneseq
    %v7935 = vshrl.u32 %v7934, 7
    %v7936 = vsub.s32 %v5329, %v7935
    %v7937 = vrot.slane %v7463, %v7936
    %v7938 = vlaneseq
    %v7939 = vshrl.u32 %v7938, 7
    %v7940 = vsub.s32 %v5329, %v7939
    %v7941 = vrot.slane %v7466, %v7940
    %v7942 = vlaneseq
    %v7943 = vshrl.u32 %v7942, 7
    %v7944 = vsub.s32 %v5329, %v7943
    %v7945 = vrot.slane %v7469, %v7944
    %v7946 = vlaneseq
    %v7947 = vshrl.u32 %v7946, 7
    %v7948 = vsub.s32 %v5329, %v7947
    %v7949 = vrot.slane %v7472, %v7948
    %v7950 = vlaneseq
    %v7951 = vshrl.u32 %v7950, 7
    %v7952 = vsub.s32 %v5329, %v7951
    %v7953 = vrot.slane %v7475, %v7952
    %v7954 = vlaneseq
    %v7955 = vshrl.u32 %v7954, 7
    %v7956 = vsub.s32 %v5329, %v7955
    %v7957 = vrot.slane %v7478, %v7956
    %v7958 = vlaneseq
    %v7959 = vshrl.u32 %v7958, 7
    %v7960 = vsub.s32 %v5329, %v7959
    %v7961 = vrot.slane %v7481, %v7960
    %v7962 = vlaneseq
    %v7963 = vshrl.u32 %v7962, 7
    %v7964 = vsub.s32 %v5329, %v7963
    %v7965 = vrot.slane %v7484, %v7964
    %v7966 = vlaneseq
    %v7967 = vshrl.u32 %v7966, 7
    %v7968 = vsub.s32 %v5329, %v7967
    %v7969 = vrot.slane %v7487, %v7968
    %v7970 = vlaneseq
    %v7971 = vshrl.u32 %v7970, 7
    %v7972 = vsub.s32 %v5329, %v7971
    %v7973 = vrot.slane %v7490, %v7972
    %v7974 = vlaneseq
    %v7975 = vshrl.u32 %v7974, 7
    %v7976 = vsub.s32 %v5329, %v7975
    %v7977 = vrot.slane %v7493, %v7976
    %v7978 = vlaneseq
    %v7979 = vshrl.u32 %v7978, 7
    %v7980 = vsub.s32 %v5329, %v7979
    %v7981 = vrot.slane %v7496, %v7980
    %v7982 = vlaneseq
    %v7983 = vshrl.u32 %v7982, 7
    %v7984 = vsub.s32 %v5329, %v7983
    %v7985 = vrot.slane %v7499, %v7984
    %v7986 = vlaneseq
    %v7987 = vshrl.u32 %v7986, 7
    %v7988 = vsub.s32 %v5329, %v7987
    %v7989 = vrot.slane %v7502, %v7988
    %v7990 = vlaneseq
    %v7991 = vshrl.u32 %v7990, 7
    %v7992 = vsub.s32 %v5329, %v7991
    %v7993 = vrot.slane %v7505, %v7992
    %v7994 = vlaneseq
    %v7995 = vshrl.u32 %v7994, 7
    %v7996 = vsub.s32 %v5329, %v7995
    %v7997 = vrot.slane %v7508, %v7996
    %v7998 = vlaneseq
    %v7999 = vshrl.u32 %v7998, 7
    %v8000 = vsub.s32 %v5329, %v7999
    %v8001 = vrot.slane %v7511, %v8000
    %v8002 = vlaneseq
    %v8003 = vshrl.u32 %v8002, 7
    %v8004 = vsub.s32 %v5329, %v8003
    %v8005 = vrot.slane %v7514, %v8004
    %v8006 = vlaneseq
    %v8007 = vshrl.u32 %v8006, 7
    %v8008 = vsub.s32 %v5329, %v8007
    %v8009 = vrot.slane %v7517, %v8008
    %v8010 = vlaneseq
    %v8011 = vshrl.u32 %v8010, 7
    %v8012 = vsub.s32 %v5329, %v8011
    %v8013 = vrot.slane %v7520, %v8012
    %v8014 = vlaneseq
    %v8015 = vshrl.u32 %v8014, 7
    %v8016 = vsub.s32 %v5329, %v8015
    %v8017 = vrot.slane %v7523, %v8016
    %v8018 = vlaneseq
    %v8019 = vshrl.u32 %v8018, 7
    %v8020 = vsub.s32 %v5329, %v8019
    %v8021 = vrot.slane %v7526, %v8020
    %v8022 = vlaneseq
    %v8023 = vshrl.u32 %v8022, 7
    %v8024 = vsub.s32 %v5329, %v8023
    %v8025 = vrot.slane %v7529, %v8024
    %v8026 = vlaneseq
    %v8027 = vshrl.u32 %v8026, 7
    %v8028 = vsub.s32 %v5329, %v8027
    %v8029 = vrot.slane %v7532, %v8028
    %v8030 = vlaneseq
    %v8031 = vshrl.u32 %v8030, 7
    %v8032 = vsub.s32 %v5329, %v8031
    %v8033 = vrot.slane %v7535, %v8032
    %v8034 = vlaneseq
    %v8035 = vshrl.u32 %v8034, 7
    %v8036 = vsub.s32 %v5329, %v8035
    %v8037 = vrot.slane %v7538, %v8036
    %v8038 = vlaneseq
    %v8039 = vshrl.u32 %v8038, 7
    %v8040 = vsub.s32 %v5329, %v8039
    %v8041 = vrot.slane %v7541, %v8040
    %v8042 = vlaneseq
    %v8043 = vshrl.u32 %v8042, 7
    %v8044 = vsub.s32 %v5329, %v8043
    %v8045 = vrot.slane %v7544, %v8044
    %v8046 = vlaneseq
    %v8047 = vshrl.u32 %v8046, 7
    %v8048 = vsub.s32 %v5329, %v8047
    %v8049 = vrot.slane %v7547, %v8048
    %v8050 = vlaneseq
    %v8051 = vshrl.u32 %v8050, 7
    %v8052 = vsub.s32 %v5329, %v8051
    %v8053 = vrot.slane %v7550, %v8052
    %v8054 = vlaneseq
    %v8055 = vshrl.u32 %v8054, 7
    %v8056 = vsub.s32 %v5329, %v8055
    %v8057 = vrot.slane %v7553, %v8056
    %v8058 = vlaneseq
    %v8059 = vshrl.u32 %v8058, 7
    %v8060 = vsub.s32 %v5329, %v8059
    %v8061 = vrot.slane %v7556, %v8060
    %v8062 = vlaneseq
    %v8063 = vshrl.u32 %v8062, 7
    %v8064 = vsub.s32 %v5329, %v8063
    %v8065 = vrot.slane %v7559, %v8064
    %v8066 = vlaneseq
    %v8067 = vshrl.u32 %v8066, 7
    %v8068 = vsub.s32 %v5329, %v8067
    %v8069 = vrot.slane %v7562, %v8068
    %v8070 = vlaneseq
    %v8071 = vshrl.u32 %v8070, 7
    %v8072 = vsub.s32 %v5329, %v8071
    %v8073 = vrot.slane %v7565, %v8072
    %v8074 = vlaneseq
    %v8075 = vshrl.u32 %v8074, 7
    %v8076 = vsub.s32 %v5329, %v8075
    %v8077 = vrot.slane %v7568, %v8076
    %v8078 = vlaneseq
    %v8079 = vshrl.u32 %v8078, 7
    %v8080 = vsub.s32 %v5329, %v8079
    %v8081 = vrot.slane %v7571, %v8080
    %v8082 = vlaneseq
    %v8083 = vshrl.u32 %v8082, 7
    %v8084 = vsub.s32 %v5329, %v8083
    %v8085 = vrot.slane %v7574, %v8084
    %v8086 = vlaneseq
    %v8087 = vshrl.u32 %v8086, 7
    %v8088 = vsub.s32 %v5329, %v8087
    %v8089 = vrot.slane %v7577, %v8088
    %v8090 = vsel %vm5842, %v7585, %v7581
    %v8091 = vsel %vm5844, %v7589, %v8090
    %v8092 = vsel %vm5846, %v7593, %v8091
    %v8093 = vsel %vm5848, %v7597, %v8092
    %v8094 = vsel %vm5850, %v7601, %v8093
    %v8095 = vsel %vm5852, %v7605, %v8094
    %v8096 = vsel %vm5854, %v7609, %v8095
    %v8097 = vsel %vm5842, %v7617, %v7613
    %v8098 = vsel %vm5844, %v7621, %v8097
    %v8099 = vsel %vm5846, %v7625, %v8098
    %v8100 = vsel %vm5848, %v7629, %v8099
    %v8101 = vsel %vm5850, %v7633, %v8100
    %v8102 = vsel %vm5852, %v7637, %v8101
    %v8103 = vsel %vm5854, %v7641, %v8102
    %v8104 = vsel %vm5842, %v7649, %v7645
    %v8105 = vsel %vm5844, %v7653, %v8104
    %v8106 = vsel %vm5846, %v7657, %v8105
    %v8107 = vsel %vm5848, %v7661, %v8106
    %v8108 = vsel %vm5850, %v7665, %v8107
    %v8109 = vsel %vm5852, %v7669, %v8108
    %v8110 = vsel %vm5854, %v7673, %v8109
    %v8111 = vsel %vm5842, %v7681, %v7677
    %v8112 = vsel %vm5844, %v7685, %v8111
    %v8113 = vsel %vm5846, %v7689, %v8112
    %v8114 = vsel %vm5848, %v7693, %v8113
    %v8115 = vsel %vm5850, %v7697, %v8114
    %v8116 = vsel %vm5852, %v7701, %v8115
    %v8117 = vsel %vm5854, %v7705, %v8116
    %v8118 = vsel %vm5842, %v7713, %v7709
    %v8119 = vsel %vm5844, %v7717, %v8118
    %v8120 = vsel %vm5846, %v7721, %v8119
    %v8121 = vsel %vm5848, %v7725, %v8120
    %v8122 = vsel %vm5850, %v7729, %v8121
    %v8123 = vsel %vm5852, %v7733, %v8122
    %v8124 = vsel %vm5854, %v7737, %v8123
    %v8125 = vsel %vm5842, %v7745, %v7741
    %v8126 = vsel %vm5844, %v7749, %v8125
    %v8127 = vsel %vm5846, %v7753, %v8126
    %v8128 = vsel %vm5848, %v7757, %v8127
    %v8129 = vsel %vm5850, %v7761, %v8128
    %v8130 = vsel %vm5852, %v7765, %v8129
    %v8131 = vsel %vm5854, %v7769, %v8130
    %v8132 = vsel %vm5842, %v7777, %v7773
    %v8133 = vsel %vm5844, %v7781, %v8132
    %v8134 = vsel %vm5846, %v7785, %v8133
    %v8135 = vsel %vm5848, %v7789, %v8134
    %v8136 = vsel %vm5850, %v7793, %v8135
    %v8137 = vsel %vm5852, %v7797, %v8136
    %v8138 = vsel %vm5854, %v7801, %v8137
    %v8139 = vsel %vm5842, %v7809, %v7805
    %v8140 = vsel %vm5844, %v7813, %v8139
    %v8141 = vsel %vm5846, %v7817, %v8140
    %v8142 = vsel %vm5848, %v7821, %v8141
    %v8143 = vsel %vm5850, %v7825, %v8142
    %v8144 = vsel %vm5852, %v7829, %v8143
    %v8145 = vsel %vm5854, %v7833, %v8144
    %v8146 = vsel %vm5842, %v7841, %v7837
    %v8147 = vsel %vm5844, %v7845, %v8146
    %v8148 = vsel %vm5846, %v7849, %v8147
    %v8149 = vsel %vm5848, %v7853, %v8148
    %v8150 = vsel %vm5850, %v7857, %v8149
    %v8151 = vsel %vm5852, %v7861, %v8150
    %v8152 = vsel %vm5854, %v7865, %v8151
    %v8153 = vsel %vm5842, %v7873, %v7869
    %v8154 = vsel %vm5844, %v7877, %v8153
    %v8155 = vsel %vm5846, %v7881, %v8154
    %v8156 = vsel %vm5848, %v7885, %v8155
    %v8157 = vsel %vm5850, %v7889, %v8156
    %v8158 = vsel %vm5852, %v7893, %v8157
    %v8159 = vsel %vm5854, %v7897, %v8158
    %v8160 = vsel %vm5842, %v7905, %v7901
    %v8161 = vsel %vm5844, %v7909, %v8160
    %v8162 = vsel %vm5846, %v7913, %v8161
    %v8163 = vsel %vm5848, %v7917, %v8162
    %v8164 = vsel %vm5850, %v7921, %v8163
    %v8165 = vsel %vm5852, %v7925, %v8164
    %v8166 = vsel %vm5854, %v7929, %v8165
    %v8167 = vsel %vm5842, %v7937, %v7933
    %v8168 = vsel %vm5844, %v7941, %v8167
    %v8169 = vsel %vm5846, %v7945, %v8168
    %v8170 = vsel %vm5848, %v7949, %v8169
    %v8171 = vsel %vm5850, %v7953, %v8170
    %v8172 = vsel %vm5852, %v7957, %v8171
    %v8173 = vsel %vm5854, %v7961, %v8172
    %v8174 = vsel %vm5842, %v7969, %v7965
    %v8175 = vsel %vm5844, %v7973, %v8174
    %v8176 = vsel %vm5846, %v7977, %v8175
    %v8177 = vsel %vm5848, %v7981, %v8176
    %v8178 = vsel %vm5850, %v7985, %v8177
    %v8179 = vsel %vm5852, %v7989, %v8178
    %v8180 = vsel %vm5854, %v7993, %v8179
    %v8181 = vsel %vm5842, %v8001, %v7997
    %v8182 = vsel %vm5844, %v8005, %v8181
    %v8183 = vsel %vm5846, %v8009, %v8182
    %v8184 = vsel %vm5848, %v8013, %v8183
    %v8185 = vsel %vm5850, %v8017, %v8184
    %v8186 = vsel %vm5852, %v8021, %v8185
    %v8187 = vsel %vm5854, %v8025, %v8186
    %v8188 = vsel %vm5842, %v8033, %v8029
    %v8189 = vsel %vm5844, %v8037, %v8188
    %v8190 = vsel %vm5846, %v8041, %v8189
    %v8191 = vsel %vm5848, %v8045, %v8190
    %v8192 = vsel %vm5850, %v8049, %v8191
    %v8193 = vsel %vm5852, %v8053, %v8192
    %v8194 = vsel %vm5854, %v8057, %v8193
    %v8195 = vsel %vm5842, %v8065, %v8061
    %v8196 = vsel %vm5844, %v8069, %v8195
    %v8197 = vsel %vm5846, %v8073, %v8196
    %v8198 = vsel %vm5848, %v8077, %v8197
    %v8199 = vsel %vm5850, %v8081, %v8198
    %v8200 = vsel %vm5852, %v8085, %v8199
    %v8201 = vsel %vm5854, %v8089, %v8200
    %v8218 = vsel %vm5977, %v8096, 0.0
    %8219 = vadd.xlane.f32.xlu0 %v8218
    %v8220 = vpop.xlane.xlu0 %8219
    %v8221 = vsel %vm5977, %v8103, 0.0
    %8222 = vadd.xlane.f32.xlu0 %v8221
    %v8223 = vpop.xlane.xlu0 %8222
    %v8224 = vsel %vm5977, %v8110, 0.0
    %8225 = vadd.xlane.f32.xlu0 %v8224
    %v8226 = vpop.xlane.xlu0 %8225
    %v8227 = vsel %vm5977, %v8117, 0.0
    %8228 = vadd.xlane.f32.xlu0 %v8227
    %v8229 = vpop.xlane.xlu0 %8228
    %v8230 = vsel %vm5977, %v8124, 0.0
    %8231 = vadd.xlane.f32.xlu0 %v8230
    %v8232 = vpop.xlane.xlu0 %8231
    %v8233 = vsel %vm5977, %v8131, 0.0
    %8234 = vadd.xlane.f32.xlu0 %v8233
    %v8235 = vpop.xlane.xlu0 %8234
    %v8236 = vsel %vm5977, %v8138, 0.0
    %8237 = vadd.xlane.f32.xlu0 %v8236
    %v8238 = vpop.xlane.xlu0 %8237
    %v8239 = vsel %vm5977, %v8145, 0.0
    %8240 = vadd.xlane.f32.xlu0 %v8239
    %v8241 = vpop.xlane.xlu0 %8240
    %v8242 = vsel %vm5977, %v8152, 0.0
    %8243 = vadd.xlane.f32.xlu0 %v8242
    %v8244 = vpop.xlane.xlu0 %8243
    %v8245 = vsel %vm5977, %v8159, 0.0
    %8246 = vadd.xlane.f32.xlu0 %v8245
    %v8247 = vpop.xlane.xlu0 %8246
    %v8248 = vsel %vm5977, %v8166, 0.0
    %8249 = vadd.xlane.f32.xlu0 %v8248
    %v8250 = vpop.xlane.xlu0 %8249
    %v8251 = vsel %vm5977, %v8173, 0.0
    %8252 = vadd.xlane.f32.xlu0 %v8251
    %v8253 = vpop.xlane.xlu0 %8252
    %v8254 = vsel %vm5977, %v8180, 0.0
    %8255 = vadd.xlane.f32.xlu0 %v8254
    %v8256 = vpop.xlane.xlu0 %8255
    %v8257 = vsel %vm5977, %v8187, 0.0
    %8258 = vadd.xlane.f32.xlu0 %v8257
    %v8259 = vpop.xlane.xlu0 %8258
    %v8260 = vsel %vm5977, %v8194, 0.0
    %8261 = vadd.xlane.f32.xlu0 %v8260
    %v8262 = vpop.xlane.xlu0 %8261
    %v8263 = vsel %vm5977, %v8201, 0.0
    %8264 = vadd.xlane.f32.xlu0 %v8263
    %v8265 = vpop.xlane.xlu0 %8264
    %v8266 = vrcp.pop %v8220
    %v8267 = vrcp.pop %v8223
    %v8268 = vrcp.pop %v8226
    %v8269 = vrcp.pop %v8229
    %v8270 = vrcp.pop %v8232
    %v8271 = vrcp.pop %v8235
    %v8272 = vrcp.pop %v8238
    %v8273 = vrcp.pop %v8241
    %v8274 = vrcp.pop %v8244
    %v8275 = vrcp.pop %v8247
    %v8276 = vrcp.pop %v8250
    %v8277 = vrcp.pop %v8253
    %v8278 = vrcp.pop %v8256
    %v8279 = vrcp.pop %v8259
    %v8280 = vrcp.pop %v8262
    %v8281 = vrcp.pop %v8265
    %v8298 = vlaneseq
    %v8299 = vshrl.u32 %v8298, 7
    %v8300 = vsub.s32 0, %v8299
    %v8301 = vrot.slane %v8266, %v8300
    %v8302 = vlaneseq
    %v8303 = vshrl.u32 %v8302, 7
    %v8304 = vsub.s32 1, %v8303
    %v8305 = vrot.slane %v8266, %v8304
    %v8306 = vlaneseq
    %v8307 = vshrl.u32 %v8306, 7
    %v8308 = vsub.s32 2, %v8307
    %v8309 = vrot.slane %v8266, %v8308
    %v8310 = vlaneseq
    %v8311 = vshrl.u32 %v8310, 7
    %v8312 = vsub.s32 3, %v8311
    %v8313 = vrot.slane %v8266, %v8312
    %v8314 = vlaneseq
    %v8315 = vshrl.u32 %v8314, 7
    %v8316 = vsub.s32 4, %v8315
    %v8317 = vrot.slane %v8266, %v8316
    %v8318 = vlaneseq
    %v8319 = vshrl.u32 %v8318, 7
    %v8320 = vsub.s32 5, %v8319
    %v8321 = vrot.slane %v8266, %v8320
    %v8322 = vlaneseq
    %v8323 = vshrl.u32 %v8322, 7
    %v8324 = vsub.s32 6, %v8323
    %v8325 = vrot.slane %v8266, %v8324
    %v8326 = vlaneseq
    %v8327 = vshrl.u32 %v8326, 7
    %v8328 = vsub.s32 7, %v8327
    %v8329 = vrot.slane %v8266, %v8328
    %v8330 = vlaneseq
    %v8331 = vshrl.u32 %v8330, 7
    %v8332 = vsub.s32 0, %v8331
    %v8333 = vrot.slane %v8267, %v8332
    %v8334 = vlaneseq
    %v8335 = vshrl.u32 %v8334, 7
    %v8336 = vsub.s32 1, %v8335
    %v8337 = vrot.slane %v8267, %v8336
    %v8338 = vlaneseq
    %v8339 = vshrl.u32 %v8338, 7
    %v8340 = vsub.s32 2, %v8339
    %v8341 = vrot.slane %v8267, %v8340
    %v8342 = vlaneseq
    %v8343 = vshrl.u32 %v8342, 7
    %v8344 = vsub.s32 3, %v8343
    %v8345 = vrot.slane %v8267, %v8344
    %v8346 = vlaneseq
    %v8347 = vshrl.u32 %v8346, 7
    %v8348 = vsub.s32 4, %v8347
    %v8349 = vrot.slane %v8267, %v8348
    %v8350 = vlaneseq
    %v8351 = vshrl.u32 %v8350, 7
    %v8352 = vsub.s32 5, %v8351
    %v8353 = vrot.slane %v8267, %v8352
    %v8354 = vlaneseq
    %v8355 = vshrl.u32 %v8354, 7
    %v8356 = vsub.s32 6, %v8355
    %v8357 = vrot.slane %v8267, %v8356
    %v8358 = vlaneseq
    %v8359 = vshrl.u32 %v8358, 7
    %v8360 = vsub.s32 7, %v8359
    %v8361 = vrot.slane %v8267, %v8360
    %v8362 = vlaneseq
    %v8363 = vshrl.u32 %v8362, 7
    %v8364 = vsub.s32 0, %v8363
    %v8365 = vrot.slane %v8268, %v8364
    %v8366 = vlaneseq
    %v8367 = vshrl.u32 %v8366, 7
    %v8368 = vsub.s32 1, %v8367
    %v8369 = vrot.slane %v8268, %v8368
    %v8370 = vlaneseq
    %v8371 = vshrl.u32 %v8370, 7
    %v8372 = vsub.s32 2, %v8371
    %v8373 = vrot.slane %v8268, %v8372
    %v8374 = vlaneseq
    %v8375 = vshrl.u32 %v8374, 7
    %v8376 = vsub.s32 3, %v8375
    %v8377 = vrot.slane %v8268, %v8376
    %v8378 = vlaneseq
    %v8379 = vshrl.u32 %v8378, 7
    %v8380 = vsub.s32 4, %v8379
    %v8381 = vrot.slane %v8268, %v8380
    %v8382 = vlaneseq
    %v8383 = vshrl.u32 %v8382, 7
    %v8384 = vsub.s32 5, %v8383
    %v8385 = vrot.slane %v8268, %v8384
    %v8386 = vlaneseq
    %v8387 = vshrl.u32 %v8386, 7
    %v8388 = vsub.s32 6, %v8387
    %v8389 = vrot.slane %v8268, %v8388
    %v8390 = vlaneseq
    %v8391 = vshrl.u32 %v8390, 7
    %v8392 = vsub.s32 7, %v8391
    %v8393 = vrot.slane %v8268, %v8392
    %v8394 = vlaneseq
    %v8395 = vshrl.u32 %v8394, 7
    %v8396 = vsub.s32 0, %v8395
    %v8397 = vrot.slane %v8269, %v8396
    %v8398 = vlaneseq
    %v8399 = vshrl.u32 %v8398, 7
    %v8400 = vsub.s32 1, %v8399
    %v8401 = vrot.slane %v8269, %v8400
    %v8402 = vlaneseq
    %v8403 = vshrl.u32 %v8402, 7
    %v8404 = vsub.s32 2, %v8403
    %v8405 = vrot.slane %v8269, %v8404
    %v8406 = vlaneseq
    %v8407 = vshrl.u32 %v8406, 7
    %v8408 = vsub.s32 3, %v8407
    %v8409 = vrot.slane %v8269, %v8408
    %v8410 = vlaneseq
    %v8411 = vshrl.u32 %v8410, 7
    %v8412 = vsub.s32 4, %v8411
    %v8413 = vrot.slane %v8269, %v8412
    %v8414 = vlaneseq
    %v8415 = vshrl.u32 %v8414, 7
    %v8416 = vsub.s32 5, %v8415
    %v8417 = vrot.slane %v8269, %v8416
    %v8418 = vlaneseq
    %v8419 = vshrl.u32 %v8418, 7
    %v8420 = vsub.s32 6, %v8419
    %v8421 = vrot.slane %v8269, %v8420
    %v8422 = vlaneseq
    %v8423 = vshrl.u32 %v8422, 7
    %v8424 = vsub.s32 7, %v8423
    %v8425 = vrot.slane %v8269, %v8424
    %v8426 = vlaneseq
    %v8427 = vshrl.u32 %v8426, 7
    %v8428 = vsub.s32 0, %v8427
    %v8429 = vrot.slane %v8270, %v8428
    %v8430 = vlaneseq
    %v8431 = vshrl.u32 %v8430, 7
    %v8432 = vsub.s32 1, %v8431
    %v8433 = vrot.slane %v8270, %v8432
    %v8434 = vlaneseq
    %v8435 = vshrl.u32 %v8434, 7
    %v8436 = vsub.s32 2, %v8435
    %v8437 = vrot.slane %v8270, %v8436
    %v8438 = vlaneseq
    %v8439 = vshrl.u32 %v8438, 7
    %v8440 = vsub.s32 3, %v8439
    %v8441 = vrot.slane %v8270, %v8440
    %v8442 = vlaneseq
    %v8443 = vshrl.u32 %v8442, 7
    %v8444 = vsub.s32 4, %v8443
    %v8445 = vrot.slane %v8270, %v8444
    %v8446 = vlaneseq
    %v8447 = vshrl.u32 %v8446, 7
    %v8448 = vsub.s32 5, %v8447
    %v8449 = vrot.slane %v8270, %v8448
    %v8450 = vlaneseq
    %v8451 = vshrl.u32 %v8450, 7
    %v8452 = vsub.s32 6, %v8451
    %v8453 = vrot.slane %v8270, %v8452
    %v8454 = vlaneseq
    %v8455 = vshrl.u32 %v8454, 7
    %v8456 = vsub.s32 7, %v8455
    %v8457 = vrot.slane %v8270, %v8456
    %v8458 = vlaneseq
    %v8459 = vshrl.u32 %v8458, 7
    %v8460 = vsub.s32 0, %v8459
    %v8461 = vrot.slane %v8271, %v8460
    %v8462 = vlaneseq
    %v8463 = vshrl.u32 %v8462, 7
    %v8464 = vsub.s32 1, %v8463
    %v8465 = vrot.slane %v8271, %v8464
    %v8466 = vlaneseq
    %v8467 = vshrl.u32 %v8466, 7
    %v8468 = vsub.s32 2, %v8467
    %v8469 = vrot.slane %v8271, %v8468
    %v8470 = vlaneseq
    %v8471 = vshrl.u32 %v8470, 7
    %v8472 = vsub.s32 3, %v8471
    %v8473 = vrot.slane %v8271, %v8472
    %v8474 = vlaneseq
    %v8475 = vshrl.u32 %v8474, 7
    %v8476 = vsub.s32 4, %v8475
    %v8477 = vrot.slane %v8271, %v8476
    %v8478 = vlaneseq
    %v8479 = vshrl.u32 %v8478, 7
    %v8480 = vsub.s32 5, %v8479
    %v8481 = vrot.slane %v8271, %v8480
    %v8482 = vlaneseq
    %v8483 = vshrl.u32 %v8482, 7
    %v8484 = vsub.s32 6, %v8483
    %v8485 = vrot.slane %v8271, %v8484
    %v8486 = vlaneseq
    %v8487 = vshrl.u32 %v8486, 7
    %v8488 = vsub.s32 7, %v8487
    %v8489 = vrot.slane %v8271, %v8488
    %v8490 = vlaneseq
    %v8491 = vshrl.u32 %v8490, 7
    %v8492 = vsub.s32 0, %v8491
    %v8493 = vrot.slane %v8272, %v8492
    %v8494 = vlaneseq
    %v8495 = vshrl.u32 %v8494, 7
    %v8496 = vsub.s32 1, %v8495
    %v8497 = vrot.slane %v8272, %v8496
    %v8498 = vlaneseq
    %v8499 = vshrl.u32 %v8498, 7
    %v8500 = vsub.s32 2, %v8499
    %v8501 = vrot.slane %v8272, %v8500
    %v8502 = vlaneseq
    %v8503 = vshrl.u32 %v8502, 7
    %v8504 = vsub.s32 3, %v8503
    %v8505 = vrot.slane %v8272, %v8504
    %v8506 = vlaneseq
    %v8507 = vshrl.u32 %v8506, 7
    %v8508 = vsub.s32 4, %v8507
    %v8509 = vrot.slane %v8272, %v8508
    %v8510 = vlaneseq
    %v8511 = vshrl.u32 %v8510, 7
    %v8512 = vsub.s32 5, %v8511
    %v8513 = vrot.slane %v8272, %v8512
    %v8514 = vlaneseq
    %v8515 = vshrl.u32 %v8514, 7
    %v8516 = vsub.s32 6, %v8515
    %v8517 = vrot.slane %v8272, %v8516
    %v8518 = vlaneseq
    %v8519 = vshrl.u32 %v8518, 7
    %v8520 = vsub.s32 7, %v8519
    %v8521 = vrot.slane %v8272, %v8520
    %v8522 = vlaneseq
    %v8523 = vshrl.u32 %v8522, 7
    %v8524 = vsub.s32 0, %v8523
    %v8525 = vrot.slane %v8273, %v8524
    %v8526 = vlaneseq
    %v8527 = vshrl.u32 %v8526, 7
    %v8528 = vsub.s32 1, %v8527
    %v8529 = vrot.slane %v8273, %v8528
    %v8530 = vlaneseq
    %v8531 = vshrl.u32 %v8530, 7
    %v8532 = vsub.s32 2, %v8531
    %v8533 = vrot.slane %v8273, %v8532
    %v8534 = vlaneseq
    %v8535 = vshrl.u32 %v8534, 7
    %v8536 = vsub.s32 3, %v8535
    %v8537 = vrot.slane %v8273, %v8536
    %v8538 = vlaneseq
    %v8539 = vshrl.u32 %v8538, 7
    %v8540 = vsub.s32 4, %v8539
    %v8541 = vrot.slane %v8273, %v8540
    %v8542 = vlaneseq
    %v8543 = vshrl.u32 %v8542, 7
    %v8544 = vsub.s32 5, %v8543
    %v8545 = vrot.slane %v8273, %v8544
    %v8546 = vlaneseq
    %v8547 = vshrl.u32 %v8546, 7
    %v8548 = vsub.s32 6, %v8547
    %v8549 = vrot.slane %v8273, %v8548
    %v8550 = vlaneseq
    %v8551 = vshrl.u32 %v8550, 7
    %v8552 = vsub.s32 7, %v8551
    %v8553 = vrot.slane %v8273, %v8552
    %v8554 = vlaneseq
    %v8555 = vshrl.u32 %v8554, 7
    %v8556 = vsub.s32 0, %v8555
    %v8557 = vrot.slane %v8274, %v8556
    %v8558 = vlaneseq
    %v8559 = vshrl.u32 %v8558, 7
    %v8560 = vsub.s32 1, %v8559
    %v8561 = vrot.slane %v8274, %v8560
    %v8562 = vlaneseq
    %v8563 = vshrl.u32 %v8562, 7
    %v8564 = vsub.s32 2, %v8563
    %v8565 = vrot.slane %v8274, %v8564
    %v8566 = vlaneseq
    %v8567 = vshrl.u32 %v8566, 7
    %v8568 = vsub.s32 3, %v8567
    %v8569 = vrot.slane %v8274, %v8568
    %v8570 = vlaneseq
    %v8571 = vshrl.u32 %v8570, 7
    %v8572 = vsub.s32 4, %v8571
    %v8573 = vrot.slane %v8274, %v8572
    %v8574 = vlaneseq
    %v8575 = vshrl.u32 %v8574, 7
    %v8576 = vsub.s32 5, %v8575
    %v8577 = vrot.slane %v8274, %v8576
    %v8578 = vlaneseq
    %v8579 = vshrl.u32 %v8578, 7
    %v8580 = vsub.s32 6, %v8579
    %v8581 = vrot.slane %v8274, %v8580
    %v8582 = vlaneseq
    %v8583 = vshrl.u32 %v8582, 7
    %v8584 = vsub.s32 7, %v8583
    %v8585 = vrot.slane %v8274, %v8584
    %v8586 = vlaneseq
    %v8587 = vshrl.u32 %v8586, 7
    %v8588 = vsub.s32 0, %v8587
    %v8589 = vrot.slane %v8275, %v8588
    %v8590 = vlaneseq
    %v8591 = vshrl.u32 %v8590, 7
    %v8592 = vsub.s32 1, %v8591
    %v8593 = vrot.slane %v8275, %v8592
    %v8594 = vlaneseq
    %v8595 = vshrl.u32 %v8594, 7
    %v8596 = vsub.s32 2, %v8595
    %v8597 = vrot.slane %v8275, %v8596
    %v8598 = vlaneseq
    %v8599 = vshrl.u32 %v8598, 7
    %v8600 = vsub.s32 3, %v8599
    %v8601 = vrot.slane %v8275, %v8600
    %v8602 = vlaneseq
    %v8603 = vshrl.u32 %v8602, 7
    %v8604 = vsub.s32 4, %v8603
    %v8605 = vrot.slane %v8275, %v8604
    %v8606 = vlaneseq
    %v8607 = vshrl.u32 %v8606, 7
    %v8608 = vsub.s32 5, %v8607
    %v8609 = vrot.slane %v8275, %v8608
    %v8610 = vlaneseq
    %v8611 = vshrl.u32 %v8610, 7
    %v8612 = vsub.s32 6, %v8611
    %v8613 = vrot.slane %v8275, %v8612
    %v8614 = vlaneseq
    %v8615 = vshrl.u32 %v8614, 7
    %v8616 = vsub.s32 7, %v8615
    %v8617 = vrot.slane %v8275, %v8616
    %v8618 = vlaneseq
    %v8619 = vshrl.u32 %v8618, 7
    %v8620 = vsub.s32 0, %v8619
    %v8621 = vrot.slane %v8276, %v8620
    %v8622 = vlaneseq
    %v8623 = vshrl.u32 %v8622, 7
    %v8624 = vsub.s32 1, %v8623
    %v8625 = vrot.slane %v8276, %v8624
    %v8626 = vlaneseq
    %v8627 = vshrl.u32 %v8626, 7
    %v8628 = vsub.s32 2, %v8627
    %v8629 = vrot.slane %v8276, %v8628
    %v8630 = vlaneseq
    %v8631 = vshrl.u32 %v8630, 7
    %v8632 = vsub.s32 3, %v8631
    %v8633 = vrot.slane %v8276, %v8632
    %v8634 = vlaneseq
    %v8635 = vshrl.u32 %v8634, 7
    %v8636 = vsub.s32 4, %v8635
    %v8637 = vrot.slane %v8276, %v8636
    %v8638 = vlaneseq
    %v8639 = vshrl.u32 %v8638, 7
    %v8640 = vsub.s32 5, %v8639
    %v8641 = vrot.slane %v8276, %v8640
    %v8642 = vlaneseq
    %v8643 = vshrl.u32 %v8642, 7
    %v8644 = vsub.s32 6, %v8643
    %v8645 = vrot.slane %v8276, %v8644
    %v8646 = vlaneseq
    %v8647 = vshrl.u32 %v8646, 7
    %v8648 = vsub.s32 7, %v8647
    %v8649 = vrot.slane %v8276, %v8648
    %v8650 = vlaneseq
    %v8651 = vshrl.u32 %v8650, 7
    %v8652 = vsub.s32 0, %v8651
    %v8653 = vrot.slane %v8277, %v8652
    %v8654 = vlaneseq
    %v8655 = vshrl.u32 %v8654, 7
    %v8656 = vsub.s32 1, %v8655
    %v8657 = vrot.slane %v8277, %v8656
    %v8658 = vlaneseq
    %v8659 = vshrl.u32 %v8658, 7
    %v8660 = vsub.s32 2, %v8659
    %v8661 = vrot.slane %v8277, %v8660
    %v8662 = vlaneseq
    %v8663 = vshrl.u32 %v8662, 7
    %v8664 = vsub.s32 3, %v8663
    %v8665 = vrot.slane %v8277, %v8664
    %v8666 = vlaneseq
    %v8667 = vshrl.u32 %v8666, 7
    %v8668 = vsub.s32 4, %v8667
    %v8669 = vrot.slane %v8277, %v8668
    %v8670 = vlaneseq
    %v8671 = vshrl.u32 %v8670, 7
    %v8672 = vsub.s32 5, %v8671
    %v8673 = vrot.slane %v8277, %v8672
    %v8674 = vlaneseq
    %v8675 = vshrl.u32 %v8674, 7
    %v8676 = vsub.s32 6, %v8675
    %v8677 = vrot.slane %v8277, %v8676
    %v8678 = vlaneseq
    %v8679 = vshrl.u32 %v8678, 7
    %v8680 = vsub.s32 7, %v8679
    %v8681 = vrot.slane %v8277, %v8680
    %v8682 = vlaneseq
    %v8683 = vshrl.u32 %v8682, 7
    %v8684 = vsub.s32 0, %v8683
    %v8685 = vrot.slane %v8278, %v8684
    %v8686 = vlaneseq
    %v8687 = vshrl.u32 %v8686, 7
    %v8688 = vsub.s32 1, %v8687
    %v8689 = vrot.slane %v8278, %v8688
    %v8690 = vlaneseq
    %v8691 = vshrl.u32 %v8690, 7
    %v8692 = vsub.s32 2, %v8691
    %v8693 = vrot.slane %v8278, %v8692
    %v8694 = vlaneseq
    %v8695 = vshrl.u32 %v8694, 7
    %v8696 = vsub.s32 3, %v8695
    %v8697 = vrot.slane %v8278, %v8696
    %v8698 = vlaneseq
    %v8699 = vshrl.u32 %v8698, 7
    %v8700 = vsub.s32 4, %v8699
    %v8701 = vrot.slane %v8278, %v8700
    %v8702 = vlaneseq
    %v8703 = vshrl.u32 %v8702, 7
    %v8704 = vsub.s32 5, %v8703
    %v8705 = vrot.slane %v8278, %v8704
    %v8706 = vlaneseq
    %v8707 = vshrl.u32 %v8706, 7
    %v8708 = vsub.s32 6, %v8707
    %v8709 = vrot.slane %v8278, %v8708
    %v8710 = vlaneseq
    %v8711 = vshrl.u32 %v8710, 7
    %v8712 = vsub.s32 7, %v8711
    %v8713 = vrot.slane %v8278, %v8712
    %v8714 = vlaneseq
    %v8715 = vshrl.u32 %v8714, 7
    %v8716 = vsub.s32 0, %v8715
    %v8717 = vrot.slane %v8279, %v8716
    %v8718 = vlaneseq
    %v8719 = vshrl.u32 %v8718, 7
    %v8720 = vsub.s32 1, %v8719
    %v8721 = vrot.slane %v8279, %v8720
    %v8722 = vlaneseq
    %v8723 = vshrl.u32 %v8722, 7
    %v8724 = vsub.s32 2, %v8723
    %v8725 = vrot.slane %v8279, %v8724
    %v8726 = vlaneseq
    %v8727 = vshrl.u32 %v8726, 7
    %v8728 = vsub.s32 3, %v8727
    %v8729 = vrot.slane %v8279, %v8728
    %v8730 = vlaneseq
    %v8731 = vshrl.u32 %v8730, 7
    %v8732 = vsub.s32 4, %v8731
    %v8733 = vrot.slane %v8279, %v8732
    %v8734 = vlaneseq
    %v8735 = vshrl.u32 %v8734, 7
    %v8736 = vsub.s32 5, %v8735
    %v8737 = vrot.slane %v8279, %v8736
    %v8738 = vlaneseq
    %v8739 = vshrl.u32 %v8738, 7
    %v8740 = vsub.s32 6, %v8739
    %v8741 = vrot.slane %v8279, %v8740
    %v8742 = vlaneseq
    %v8743 = vshrl.u32 %v8742, 7
    %v8744 = vsub.s32 7, %v8743
    %v8745 = vrot.slane %v8279, %v8744
    %v8746 = vlaneseq
    %v8747 = vshrl.u32 %v8746, 7
    %v8748 = vsub.s32 0, %v8747
    %v8749 = vrot.slane %v8280, %v8748
    %v8750 = vlaneseq
    %v8751 = vshrl.u32 %v8750, 7
    %v8752 = vsub.s32 1, %v8751
    %v8753 = vrot.slane %v8280, %v8752
    %v8754 = vlaneseq
    %v8755 = vshrl.u32 %v8754, 7
    %v8756 = vsub.s32 2, %v8755
    %v8757 = vrot.slane %v8280, %v8756
    %v8758 = vlaneseq
    %v8759 = vshrl.u32 %v8758, 7
    %v8760 = vsub.s32 3, %v8759
    %v8761 = vrot.slane %v8280, %v8760
    %v8762 = vlaneseq
    %v8763 = vshrl.u32 %v8762, 7
    %v8764 = vsub.s32 4, %v8763
    %v8765 = vrot.slane %v8280, %v8764
    %v8766 = vlaneseq
    %v8767 = vshrl.u32 %v8766, 7
    %v8768 = vsub.s32 5, %v8767
    %v8769 = vrot.slane %v8280, %v8768
    %v8770 = vlaneseq
    %v8771 = vshrl.u32 %v8770, 7
    %v8772 = vsub.s32 6, %v8771
    %v8773 = vrot.slane %v8280, %v8772
    %v8774 = vlaneseq
    %v8775 = vshrl.u32 %v8774, 7
    %v8776 = vsub.s32 7, %v8775
    %v8777 = vrot.slane %v8280, %v8776
    %v8778 = vlaneseq
    %v8779 = vshrl.u32 %v8778, 7
    %v8780 = vsub.s32 0, %v8779
    %v8781 = vrot.slane %v8281, %v8780
    %v8782 = vlaneseq
    %v8783 = vshrl.u32 %v8782, 7
    %v8784 = vsub.s32 1, %v8783
    %v8785 = vrot.slane %v8281, %v8784
    %v8786 = vlaneseq
    %v8787 = vshrl.u32 %v8786, 7
    %v8788 = vsub.s32 2, %v8787
    %v8789 = vrot.slane %v8281, %v8788
    %v8790 = vlaneseq
    %v8791 = vshrl.u32 %v8790, 7
    %v8792 = vsub.s32 3, %v8791
    %v8793 = vrot.slane %v8281, %v8792
    %v8794 = vlaneseq
    %v8795 = vshrl.u32 %v8794, 7
    %v8796 = vsub.s32 4, %v8795
    %v8797 = vrot.slane %v8281, %v8796
    %v8798 = vlaneseq
    %v8799 = vshrl.u32 %v8798, 7
    %v8800 = vsub.s32 5, %v8799
    %v8801 = vrot.slane %v8281, %v8800
    %v8802 = vlaneseq
    %v8803 = vshrl.u32 %v8802, 7
    %v8804 = vsub.s32 6, %v8803
    %v8805 = vrot.slane %v8281, %v8804
    %v8806 = vlaneseq
    %v8807 = vshrl.u32 %v8806, 7
    %v8808 = vsub.s32 7, %v8807
    %v8809 = vrot.slane %v8281, %v8808
    %v8938 = vmul.f32 %v6811, %v8301
    %v8939 = vmul.f32 %v6813, %v8305
    %v8940 = vmul.f32 %v6815, %v8309
    %v8941 = vmul.f32 %v6817, %v8313
    %v8942 = vmul.f32 %v6819, %v8317
    %v8943 = vmul.f32 %v6821, %v8321
    %v8944 = vmul.f32 %v6823, %v8325
    %v8945 = vmul.f32 %v6825, %v8329
    %v8946 = vmul.f32 %v6827, %v8333
    %v8947 = vmul.f32 %v6829, %v8337
    %v8948 = vmul.f32 %v6831, %v8341
    %v8949 = vmul.f32 %v6833, %v8345
    %v8950 = vmul.f32 %v6835, %v8349
    %v8951 = vmul.f32 %v6837, %v8353
    %v8952 = vmul.f32 %v6839, %v8357
    %v8953 = vmul.f32 %v6841, %v8361
    %v8954 = vmul.f32 %v6843, %v8365
    %v8955 = vmul.f32 %v6845, %v8369
    %v8956 = vmul.f32 %v6847, %v8373
    %v8957 = vmul.f32 %v6849, %v8377
    %v8958 = vmul.f32 %v6851, %v8381
    %v8959 = vmul.f32 %v6853, %v8385
    %v8960 = vmul.f32 %v6855, %v8389
    %v8961 = vmul.f32 %v6857, %v8393
    %v8962 = vmul.f32 %v6859, %v8397
    %v8963 = vmul.f32 %v6861, %v8401
    %v8964 = vmul.f32 %v6863, %v8405
    %v8965 = vmul.f32 %v6865, %v8409
    %v8966 = vmul.f32 %v6867, %v8413
    %v8967 = vmul.f32 %v6869, %v8417
    %v8968 = vmul.f32 %v6871, %v8421
    %v8969 = vmul.f32 %v6873, %v8425
    %v8970 = vmul.f32 %v6875, %v8429
    %v8971 = vmul.f32 %v6877, %v8433
    %v8972 = vmul.f32 %v6879, %v8437
    %v8973 = vmul.f32 %v6881, %v8441
    %v8974 = vmul.f32 %v6883, %v8445
    %v8975 = vmul.f32 %v6885, %v8449
    %v8976 = vmul.f32 %v6887, %v8453
    %v8977 = vmul.f32 %v6889, %v8457
    %v8978 = vmul.f32 %v6891, %v8461
    %v8979 = vmul.f32 %v6893, %v8465
    %v8980 = vmul.f32 %v6895, %v8469
    %v8981 = vmul.f32 %v6897, %v8473
    %v8982 = vmul.f32 %v6899, %v8477
    %v8983 = vmul.f32 %v6901, %v8481
    %v8984 = vmul.f32 %v6903, %v8485
    %v8985 = vmul.f32 %v6905, %v8489
    %v8986 = vmul.f32 %v6907, %v8493
    %v8987 = vmul.f32 %v6909, %v8497
    %v8988 = vmul.f32 %v6911, %v8501
    %v8989 = vmul.f32 %v6913, %v8505
    %v8990 = vmul.f32 %v6915, %v8509
    %v8991 = vmul.f32 %v6917, %v8513
    %v8992 = vmul.f32 %v6919, %v8517
    %v8993 = vmul.f32 %v6921, %v8521
    %v8994 = vmul.f32 %v6923, %v8525
    %v8995 = vmul.f32 %v6925, %v8529
    %v8996 = vmul.f32 %v6927, %v8533
    %v8997 = vmul.f32 %v6929, %v8537
    %v8998 = vmul.f32 %v6931, %v8541
    %v8999 = vmul.f32 %v6933, %v8545
    %v9000 = vmul.f32 %v6935, %v8549
    %v9001 = vmul.f32 %v6937, %v8553
    %v9002 = vmul.f32 %v6939, %v8557
    %v9003 = vmul.f32 %v6941, %v8561
    %v9004 = vmul.f32 %v6943, %v8565
    %v9005 = vmul.f32 %v6945, %v8569
    %v9006 = vmul.f32 %v6947, %v8573
    %v9007 = vmul.f32 %v6949, %v8577
    %v9008 = vmul.f32 %v6951, %v8581
    %v9009 = vmul.f32 %v6953, %v8585
    %v9010 = vmul.f32 %v6955, %v8589
    %v9011 = vmul.f32 %v6957, %v8593
    %v9012 = vmul.f32 %v6959, %v8597
    %v9013 = vmul.f32 %v6961, %v8601
    %v9014 = vmul.f32 %v6963, %v8605
    %v9015 = vmul.f32 %v6965, %v8609
    %v9016 = vmul.f32 %v6967, %v8613
    %v9017 = vmul.f32 %v6969, %v8617
    %v9018 = vmul.f32 %v6971, %v8621
    %v9019 = vmul.f32 %v6973, %v8625
    %v9020 = vmul.f32 %v6975, %v8629
    %v9021 = vmul.f32 %v6977, %v8633
    %v9022 = vmul.f32 %v6979, %v8637
    %v9023 = vmul.f32 %v6981, %v8641
    %v9024 = vmul.f32 %v6983, %v8645
    %v9025 = vmul.f32 %v6985, %v8649
    %v9026 = vmul.f32 %v6987, %v8653
    %v9027 = vmul.f32 %v6989, %v8657
    %v9028 = vmul.f32 %v6991, %v8661
    %v9029 = vmul.f32 %v6993, %v8665
    %v9030 = vmul.f32 %v6995, %v8669
    %v9031 = vmul.f32 %v6997, %v8673
    %v9032 = vmul.f32 %v6999, %v8677
    %v9033 = vmul.f32 %v7001, %v8681
    %v9034 = vmul.f32 %v7003, %v8685
    %v9035 = vmul.f32 %v7005, %v8689
    %v9036 = vmul.f32 %v7007, %v8693
    %v9037 = vmul.f32 %v7009, %v8697
    %v9038 = vmul.f32 %v7011, %v8701
    %v9039 = vmul.f32 %v7013, %v8705
    %v9040 = vmul.f32 %v7015, %v8709
    %v9041 = vmul.f32 %v7017, %v8713
    %v9042 = vmul.f32 %v7019, %v8717
    %v9043 = vmul.f32 %v7021, %v8721
    %v9044 = vmul.f32 %v7023, %v8725
    %v9045 = vmul.f32 %v7025, %v8729
    %v9046 = vmul.f32 %v7027, %v8733
    %v9047 = vmul.f32 %v7029, %v8737
    %v9048 = vmul.f32 %v7031, %v8741
    %v9049 = vmul.f32 %v7033, %v8745
    %v9050 = vmul.f32 %v7035, %v8749
    %v9051 = vmul.f32 %v7037, %v8753
    %v9052 = vmul.f32 %v7039, %v8757
    %v9053 = vmul.f32 %v7041, %v8761
    %v9054 = vmul.f32 %v7043, %v8765
    %v9055 = vmul.f32 %v7045, %v8769
    %v9056 = vmul.f32 %v7047, %v8773
    %v9057 = vmul.f32 %v7049, %v8777
    %v9058 = vmul.f32 %v7051, %v8781
    %v9059 = vmul.f32 %v7053, %v8785
    %v9060 = vmul.f32 %v7055, %v8789
    %v9061 = vmul.f32 %v7057, %v8793
    %v9062 = vmul.f32 %v7059, %v8797
    %v9063 = vmul.f32 %v7061, %v8801
    %v9064 = vmul.f32 %v7063, %v8805
    %v9065 = vmul.f32 %v7065, %v8809
    %9067 = vset.pattern.permute.xlu0 0
    %9068 = vperm.xlu0 %9067, %v8938
    %v9069 = vpop.permute.xlu0 %9068
    %9072 = vset.pattern.permute.xlu0 0
    %9073 = vperm.xlu0 %9072, %v8939
    %v9074 = vpop.permute.xlu0 %9073
    %9077 = vset.pattern.permute.xlu0 0
    %9078 = vperm.xlu0 %9077, %v8940
    %v9079 = vpop.permute.xlu0 %9078
    %9082 = vset.pattern.permute.xlu0 0
    %9083 = vperm.xlu0 %9082, %v8941
    %v9084 = vpop.permute.xlu0 %9083
    %9087 = vset.pattern.permute.xlu0 0
    %9088 = vperm.xlu0 %9087, %v8942
    %v9089 = vpop.permute.xlu0 %9088
    %9092 = vset.pattern.permute.xlu0 0
    %9093 = vperm.xlu0 %9092, %v8943
    %v9094 = vpop.permute.xlu0 %9093
    %9097 = vset.pattern.permute.xlu0 0
    %9098 = vperm.xlu0 %9097, %v8944
    %v9099 = vpop.permute.xlu0 %9098
    %9102 = vset.pattern.permute.xlu0 0
    %9103 = vperm.xlu0 %9102, %v8945
    %v9104 = vpop.permute.xlu0 %9103
    %9107 = vset.pattern.permute.xlu0 0
    %9108 = vperm.xlu0 %9107, %v8946
    %v9109 = vpop.permute.xlu0 %9108
    %9112 = vset.pattern.permute.xlu0 0
    %9113 = vperm.xlu0 %9112, %v8947
    %v9114 = vpop.permute.xlu0 %9113
    %9117 = vset.pattern.permute.xlu0 0
    %9118 = vperm.xlu0 %9117, %v8948
    %v9119 = vpop.permute.xlu0 %9118
    %9122 = vset.pattern.permute.xlu0 0
    %9123 = vperm.xlu0 %9122, %v8949
    %v9124 = vpop.permute.xlu0 %9123
    %9127 = vset.pattern.permute.xlu0 0
    %9128 = vperm.xlu0 %9127, %v8950
    %v9129 = vpop.permute.xlu0 %9128
    %9132 = vset.pattern.permute.xlu0 0
    %9133 = vperm.xlu0 %9132, %v8951
    %v9134 = vpop.permute.xlu0 %9133
    %9137 = vset.pattern.permute.xlu0 0
    %9138 = vperm.xlu0 %9137, %v8952
    %v9139 = vpop.permute.xlu0 %9138
    %9142 = vset.pattern.permute.xlu0 0
    %9143 = vperm.xlu0 %9142, %v8953
    %v9144 = vpop.permute.xlu0 %9143
    %9147 = vset.pattern.permute.xlu0 0
    %9148 = vperm.xlu0 %9147, %v8954
    %v9149 = vpop.permute.xlu0 %9148
    %9152 = vset.pattern.permute.xlu0 0
    %9153 = vperm.xlu0 %9152, %v8955
    %v9154 = vpop.permute.xlu0 %9153
    %9157 = vset.pattern.permute.xlu0 0
    %9158 = vperm.xlu0 %9157, %v8956
    %v9159 = vpop.permute.xlu0 %9158
    %9162 = vset.pattern.permute.xlu0 0
    %9163 = vperm.xlu0 %9162, %v8957
    %v9164 = vpop.permute.xlu0 %9163
    %9167 = vset.pattern.permute.xlu0 0
    %9168 = vperm.xlu0 %9167, %v8958
    %v9169 = vpop.permute.xlu0 %9168
    %9172 = vset.pattern.permute.xlu0 0
    %9173 = vperm.xlu0 %9172, %v8959
    %v9174 = vpop.permute.xlu0 %9173
    %9177 = vset.pattern.permute.xlu0 0
    %9178 = vperm.xlu0 %9177, %v8960
    %v9179 = vpop.permute.xlu0 %9178
    %9182 = vset.pattern.permute.xlu0 0
    %9183 = vperm.xlu0 %9182, %v8961
    %v9184 = vpop.permute.xlu0 %9183
    %9187 = vset.pattern.permute.xlu0 0
    %9188 = vperm.xlu0 %9187, %v8962
    %v9189 = vpop.permute.xlu0 %9188
    %9192 = vset.pattern.permute.xlu0 0
    %9193 = vperm.xlu0 %9192, %v8963
    %v9194 = vpop.permute.xlu0 %9193
    %9197 = vset.pattern.permute.xlu0 0
    %9198 = vperm.xlu0 %9197, %v8964
    %v9199 = vpop.permute.xlu0 %9198
    %9202 = vset.pattern.permute.xlu0 0
    %9203 = vperm.xlu0 %9202, %v8965
    %v9204 = vpop.permute.xlu0 %9203
    %9207 = vset.pattern.permute.xlu0 0
    %9208 = vperm.xlu0 %9207, %v8966
    %v9209 = vpop.permute.xlu0 %9208
    %9212 = vset.pattern.permute.xlu0 0
    %9213 = vperm.xlu0 %9212, %v8967
    %v9214 = vpop.permute.xlu0 %9213
    %9217 = vset.pattern.permute.xlu0 0
    %9218 = vperm.xlu0 %9217, %v8968
    %v9219 = vpop.permute.xlu0 %9218
    %9222 = vset.pattern.permute.xlu0 0
    %9223 = vperm.xlu0 %9222, %v8969
    %v9224 = vpop.permute.xlu0 %9223
    %9227 = vset.pattern.permute.xlu0 0
    %9228 = vperm.xlu0 %9227, %v8970
    %v9229 = vpop.permute.xlu0 %9228
    %9232 = vset.pattern.permute.xlu0 0
    %9233 = vperm.xlu0 %9232, %v8971
    %v9234 = vpop.permute.xlu0 %9233
    %9237 = vset.pattern.permute.xlu0 0
    %9238 = vperm.xlu0 %9237, %v8972
    %v9239 = vpop.permute.xlu0 %9238
    %9242 = vset.pattern.permute.xlu0 0
    %9243 = vperm.xlu0 %9242, %v8973
    %v9244 = vpop.permute.xlu0 %9243
    %9247 = vset.pattern.permute.xlu0 0
    %9248 = vperm.xlu0 %9247, %v8974
    %v9249 = vpop.permute.xlu0 %9248
    %9252 = vset.pattern.permute.xlu0 0
    %9253 = vperm.xlu0 %9252, %v8975
    %v9254 = vpop.permute.xlu0 %9253
    %9257 = vset.pattern.permute.xlu0 0
    %9258 = vperm.xlu0 %9257, %v8976
    %v9259 = vpop.permute.xlu0 %9258
    %9262 = vset.pattern.permute.xlu0 0
    %9263 = vperm.xlu0 %9262, %v8977
    %v9264 = vpop.permute.xlu0 %9263
    %9267 = vset.pattern.permute.xlu0 0
    %9268 = vperm.xlu0 %9267, %v8978
    %v9269 = vpop.permute.xlu0 %9268
    %9272 = vset.pattern.permute.xlu0 0
    %9273 = vperm.xlu0 %9272, %v8979
    %v9274 = vpop.permute.xlu0 %9273
    %9277 = vset.pattern.permute.xlu0 0
    %9278 = vperm.xlu0 %9277, %v8980
    %v9279 = vpop.permute.xlu0 %9278
    %9282 = vset.pattern.permute.xlu0 0
    %9283 = vperm.xlu0 %9282, %v8981
    %v9284 = vpop.permute.xlu0 %9283
    %9287 = vset.pattern.permute.xlu0 0
    %9288 = vperm.xlu0 %9287, %v8982
    %v9289 = vpop.permute.xlu0 %9288
    %9292 = vset.pattern.permute.xlu0 0
    %9293 = vperm.xlu0 %9292, %v8983
    %v9294 = vpop.permute.xlu0 %9293
    %9297 = vset.pattern.permute.xlu0 0
    %9298 = vperm.xlu0 %9297, %v8984
    %v9299 = vpop.permute.xlu0 %9298
    %9302 = vset.pattern.permute.xlu0 0
    %9303 = vperm.xlu0 %9302, %v8985
    %v9304 = vpop.permute.xlu0 %9303
    %9307 = vset.pattern.permute.xlu0 0
    %9308 = vperm.xlu0 %9307, %v8986
    %v9309 = vpop.permute.xlu0 %9308
    %9312 = vset.pattern.permute.xlu0 0
    %9313 = vperm.xlu0 %9312, %v8987
    %v9314 = vpop.permute.xlu0 %9313
    %9317 = vset.pattern.permute.xlu0 0
    %9318 = vperm.xlu0 %9317, %v8988
    %v9319 = vpop.permute.xlu0 %9318
    %9322 = vset.pattern.permute.xlu0 0
    %9323 = vperm.xlu0 %9322, %v8989
    %v9324 = vpop.permute.xlu0 %9323
    %9327 = vset.pattern.permute.xlu0 0
    %9328 = vperm.xlu0 %9327, %v8990
    %v9329 = vpop.permute.xlu0 %9328
    %9332 = vset.pattern.permute.xlu0 0
    %9333 = vperm.xlu0 %9332, %v8991
    %v9334 = vpop.permute.xlu0 %9333
    %9337 = vset.pattern.permute.xlu0 0
    %9338 = vperm.xlu0 %9337, %v8992
    %v9339 = vpop.permute.xlu0 %9338
    %9342 = vset.pattern.permute.xlu0 0
    %9343 = vperm.xlu0 %9342, %v8993
    %v9344 = vpop.permute.xlu0 %9343
    %9347 = vset.pattern.permute.xlu0 0
    %9348 = vperm.xlu0 %9347, %v8994
    %v9349 = vpop.permute.xlu0 %9348
    %9352 = vset.pattern.permute.xlu0 0
    %9353 = vperm.xlu0 %9352, %v8995
    %v9354 = vpop.permute.xlu0 %9353
    %9357 = vset.pattern.permute.xlu0 0
    %9358 = vperm.xlu0 %9357, %v8996
    %v9359 = vpop.permute.xlu0 %9358
    %9362 = vset.pattern.permute.xlu0 0
    %9363 = vperm.xlu0 %9362, %v8997
    %v9364 = vpop.permute.xlu0 %9363
    %9367 = vset.pattern.permute.xlu0 0
    %9368 = vperm.xlu0 %9367, %v8998
    %v9369 = vpop.permute.xlu0 %9368
    %9372 = vset.pattern.permute.xlu0 0
    %9373 = vperm.xlu0 %9372, %v8999
    %v9374 = vpop.permute.xlu0 %9373
    %9377 = vset.pattern.permute.xlu0 0
    %9378 = vperm.xlu0 %9377, %v9000
    %v9379 = vpop.permute.xlu0 %9378
    %9382 = vset.pattern.permute.xlu0 0
    %9383 = vperm.xlu0 %9382, %v9001
    %v9384 = vpop.permute.xlu0 %9383
    %9387 = vset.pattern.permute.xlu0 0
    %9388 = vperm.xlu0 %9387, %v9002
    %v9389 = vpop.permute.xlu0 %9388
    %9392 = vset.pattern.permute.xlu0 0
    %9393 = vperm.xlu0 %9392, %v9003
    %v9394 = vpop.permute.xlu0 %9393
    %9397 = vset.pattern.permute.xlu0 0
    %9398 = vperm.xlu0 %9397, %v9004
    %v9399 = vpop.permute.xlu0 %9398
    %9402 = vset.pattern.permute.xlu0 0
    %9403 = vperm.xlu0 %9402, %v9005
    %v9404 = vpop.permute.xlu0 %9403
    %9407 = vset.pattern.permute.xlu0 0
    %9408 = vperm.xlu0 %9407, %v9006
    %v9409 = vpop.permute.xlu0 %9408
    %9412 = vset.pattern.permute.xlu0 0
    %9413 = vperm.xlu0 %9412, %v9007
    %v9414 = vpop.permute.xlu0 %9413
    %9417 = vset.pattern.permute.xlu0 0
    %9418 = vperm.xlu0 %9417, %v9008
    %v9419 = vpop.permute.xlu0 %9418
    %9422 = vset.pattern.permute.xlu0 0
    %9423 = vperm.xlu0 %9422, %v9009
    %v9424 = vpop.permute.xlu0 %9423
    %9427 = vset.pattern.permute.xlu0 0
    %9428 = vperm.xlu0 %9427, %v9010
    %v9429 = vpop.permute.xlu0 %9428
    %9432 = vset.pattern.permute.xlu0 0
    %9433 = vperm.xlu0 %9432, %v9011
    %v9434 = vpop.permute.xlu0 %9433
    %9437 = vset.pattern.permute.xlu0 0
    %9438 = vperm.xlu0 %9437, %v9012
    %v9439 = vpop.permute.xlu0 %9438
    %9442 = vset.pattern.permute.xlu0 0
    %9443 = vperm.xlu0 %9442, %v9013
    %v9444 = vpop.permute.xlu0 %9443
    %9447 = vset.pattern.permute.xlu0 0
    %9448 = vperm.xlu0 %9447, %v9014
    %v9449 = vpop.permute.xlu0 %9448
    %9452 = vset.pattern.permute.xlu0 0
    %9453 = vperm.xlu0 %9452, %v9015
    %v9454 = vpop.permute.xlu0 %9453
    %9457 = vset.pattern.permute.xlu0 0
    %9458 = vperm.xlu0 %9457, %v9016
    %v9459 = vpop.permute.xlu0 %9458
    %9462 = vset.pattern.permute.xlu0 0
    %9463 = vperm.xlu0 %9462, %v9017
    %v9464 = vpop.permute.xlu0 %9463
    %9467 = vset.pattern.permute.xlu0 0
    %9468 = vperm.xlu0 %9467, %v9018
    %v9469 = vpop.permute.xlu0 %9468
    %9472 = vset.pattern.permute.xlu0 0
    %9473 = vperm.xlu0 %9472, %v9019
    %v9474 = vpop.permute.xlu0 %9473
    %9477 = vset.pattern.permute.xlu0 0
    %9478 = vperm.xlu0 %9477, %v9020
    %v9479 = vpop.permute.xlu0 %9478
    %9482 = vset.pattern.permute.xlu0 0
    %9483 = vperm.xlu0 %9482, %v9021
    %v9484 = vpop.permute.xlu0 %9483
    %9487 = vset.pattern.permute.xlu0 0
    %9488 = vperm.xlu0 %9487, %v9022
    %v9489 = vpop.permute.xlu0 %9488
    %9492 = vset.pattern.permute.xlu0 0
    %9493 = vperm.xlu0 %9492, %v9023
    %v9494 = vpop.permute.xlu0 %9493
    %9497 = vset.pattern.permute.xlu0 0
    %9498 = vperm.xlu0 %9497, %v9024
    %v9499 = vpop.permute.xlu0 %9498
    %9502 = vset.pattern.permute.xlu0 0
    %9503 = vperm.xlu0 %9502, %v9025
    %v9504 = vpop.permute.xlu0 %9503
    %9507 = vset.pattern.permute.xlu0 0
    %9508 = vperm.xlu0 %9507, %v9026
    %v9509 = vpop.permute.xlu0 %9508
    %9512 = vset.pattern.permute.xlu0 0
    %9513 = vperm.xlu0 %9512, %v9027
    %v9514 = vpop.permute.xlu0 %9513
    %9517 = vset.pattern.permute.xlu0 0
    %9518 = vperm.xlu0 %9517, %v9028
    %v9519 = vpop.permute.xlu0 %9518
    %9522 = vset.pattern.permute.xlu0 0
    %9523 = vperm.xlu0 %9522, %v9029
    %v9524 = vpop.permute.xlu0 %9523
    %9527 = vset.pattern.permute.xlu0 0
    %9528 = vperm.xlu0 %9527, %v9030
    %v9529 = vpop.permute.xlu0 %9528
    %9532 = vset.pattern.permute.xlu0 0
    %9533 = vperm.xlu0 %9532, %v9031
    %v9534 = vpop.permute.xlu0 %9533
    %9537 = vset.pattern.permute.xlu0 0
    %9538 = vperm.xlu0 %9537, %v9032
    %v9539 = vpop.permute.xlu0 %9538
    %9542 = vset.pattern.permute.xlu0 0
    %9543 = vperm.xlu0 %9542, %v9033
    %v9544 = vpop.permute.xlu0 %9543
    %9547 = vset.pattern.permute.xlu0 0
    %9548 = vperm.xlu0 %9547, %v9034
    %v9549 = vpop.permute.xlu0 %9548
    %9552 = vset.pattern.permute.xlu0 0
    %9553 = vperm.xlu0 %9552, %v9035
    %v9554 = vpop.permute.xlu0 %9553
    %9557 = vset.pattern.permute.xlu0 0
    %9558 = vperm.xlu0 %9557, %v9036
    %v9559 = vpop.permute.xlu0 %9558
    %9562 = vset.pattern.permute.xlu0 0
    %9563 = vperm.xlu0 %9562, %v9037
    %v9564 = vpop.permute.xlu0 %9563
    %9567 = vset.pattern.permute.xlu0 0
    %9568 = vperm.xlu0 %9567, %v9038
    %v9569 = vpop.permute.xlu0 %9568
    %9572 = vset.pattern.permute.xlu0 0
    %9573 = vperm.xlu0 %9572, %v9039
    %v9574 = vpop.permute.xlu0 %9573
    %9577 = vset.pattern.permute.xlu0 0
    %9578 = vperm.xlu0 %9577, %v9040
    %v9579 = vpop.permute.xlu0 %9578
    %9582 = vset.pattern.permute.xlu0 0
    %9583 = vperm.xlu0 %9582, %v9041
    %v9584 = vpop.permute.xlu0 %9583
    %9587 = vset.pattern.permute.xlu0 0
    %9588 = vperm.xlu0 %9587, %v9042
    %v9589 = vpop.permute.xlu0 %9588
    %9592 = vset.pattern.permute.xlu0 0
    %9593 = vperm.xlu0 %9592, %v9043
    %v9594 = vpop.permute.xlu0 %9593
    %9597 = vset.pattern.permute.xlu0 0
    %9598 = vperm.xlu0 %9597, %v9044
    %v9599 = vpop.permute.xlu0 %9598
    %9602 = vset.pattern.permute.xlu0 0
    %9603 = vperm.xlu0 %9602, %v9045
    %v9604 = vpop.permute.xlu0 %9603
    %9607 = vset.pattern.permute.xlu0 0
    %9608 = vperm.xlu0 %9607, %v9046
    %v9609 = vpop.permute.xlu0 %9608
    %9612 = vset.pattern.permute.xlu0 0
    %9613 = vperm.xlu0 %9612, %v9047
    %v9614 = vpop.permute.xlu0 %9613
    %9617 = vset.pattern.permute.xlu0 0
    %9618 = vperm.xlu0 %9617, %v9048
    %v9619 = vpop.permute.xlu0 %9618
    %9622 = vset.pattern.permute.xlu0 0
    %9623 = vperm.xlu0 %9622, %v9049
    %v9624 = vpop.permute.xlu0 %9623
    %9627 = vset.pattern.permute.xlu0 0
    %9628 = vperm.xlu0 %9627, %v9050
    %v9629 = vpop.permute.xlu0 %9628
    %9632 = vset.pattern.permute.xlu0 0
    %9633 = vperm.xlu0 %9632, %v9051
    %v9634 = vpop.permute.xlu0 %9633
    %9637 = vset.pattern.permute.xlu0 0
    %9638 = vperm.xlu0 %9637, %v9052
    %v9639 = vpop.permute.xlu0 %9638
    %9642 = vset.pattern.permute.xlu0 0
    %9643 = vperm.xlu0 %9642, %v9053
    %v9644 = vpop.permute.xlu0 %9643
    %9647 = vset.pattern.permute.xlu0 0
    %9648 = vperm.xlu0 %9647, %v9054
    %v9649 = vpop.permute.xlu0 %9648
    %9652 = vset.pattern.permute.xlu0 0
    %9653 = vperm.xlu0 %9652, %v9055
    %v9654 = vpop.permute.xlu0 %9653
    %9657 = vset.pattern.permute.xlu0 0
    %9658 = vperm.xlu0 %9657, %v9056
    %v9659 = vpop.permute.xlu0 %9658
    %9662 = vset.pattern.permute.xlu0 0
    %9663 = vperm.xlu0 %9662, %v9057
    %v9664 = vpop.permute.xlu0 %9663
    %9667 = vset.pattern.permute.xlu0 0
    %9668 = vperm.xlu0 %9667, %v9058
    %v9669 = vpop.permute.xlu0 %9668
    %9672 = vset.pattern.permute.xlu0 0
    %9673 = vperm.xlu0 %9672, %v9059
    %v9674 = vpop.permute.xlu0 %9673
    %9677 = vset.pattern.permute.xlu0 0
    %9678 = vperm.xlu0 %9677, %v9060
    %v9679 = vpop.permute.xlu0 %9678
    %9682 = vset.pattern.permute.xlu0 0
    %9683 = vperm.xlu0 %9682, %v9061
    %v9684 = vpop.permute.xlu0 %9683
    %9687 = vset.pattern.permute.xlu0 0
    %9688 = vperm.xlu0 %9687, %v9062
    %v9689 = vpop.permute.xlu0 %9688
    %9692 = vset.pattern.permute.xlu0 0
    %9693 = vperm.xlu0 %9692, %v9063
    %v9694 = vpop.permute.xlu0 %9693
    %9697 = vset.pattern.permute.xlu0 0
    %9698 = vperm.xlu0 %9697, %v9064
    %v9699 = vpop.permute.xlu0 %9698
    %9702 = vset.pattern.permute.xlu0 0
    %9703 = vperm.xlu0 %9702, %v9065
    %v9704 = vpop.permute.xlu0 %9703
    %v9706 = vmul.f32 %v74, %v9069
    %v9707 = vmul.f32 %v75, %v9074
    %v9708 = vmul.f32 %v76, %v9079
    %v9709 = vmul.f32 %v77, %v9084
    %v9710 = vmul.f32 %v78, %v9089
    %v9711 = vmul.f32 %v79, %v9094
    %v9712 = vmul.f32 %v80, %v9099
    %v9713 = vmul.f32 %v81, %v9104
    %v9714 = vmul.f32 %v82, %v9109
    %v9715 = vmul.f32 %v83, %v9114
    %v9716 = vmul.f32 %v84, %v9119
    %v9717 = vmul.f32 %v85, %v9124
    %v9718 = vmul.f32 %v86, %v9129
    %v9719 = vmul.f32 %v87, %v9134
    %v9720 = vmul.f32 %v88, %v9139
    %v9721 = vmul.f32 %v89, %v9144
    %v9722 = vmul.f32 %v90, %v9149
    %v9723 = vmul.f32 %v91, %v9154
    %v9724 = vmul.f32 %v92, %v9159
    %v9725 = vmul.f32 %v93, %v9164
    %v9726 = vmul.f32 %v94, %v9169
    %v9727 = vmul.f32 %v95, %v9174
    %v9728 = vmul.f32 %v96, %v9179
    %v9729 = vmul.f32 %v97, %v9184
    %v9730 = vmul.f32 %v98, %v9189
    %v9731 = vmul.f32 %v99, %v9194
    %v9732 = vmul.f32 %v100, %v9199
    %v9733 = vmul.f32 %v101, %v9204
    %v9734 = vmul.f32 %v102, %v9209
    %v9735 = vmul.f32 %v103, %v9214
    %v9736 = vmul.f32 %v104, %v9219
    %v9737 = vmul.f32 %v105, %v9224
    %v9738 = vmul.f32 %v106, %v9229
    %v9739 = vmul.f32 %v107, %v9234
    %v9740 = vmul.f32 %v108, %v9239
    %v9741 = vmul.f32 %v109, %v9244
    %v9742 = vmul.f32 %v110, %v9249
    %v9743 = vmul.f32 %v111, %v9254
    %v9744 = vmul.f32 %v112, %v9259
    %v9745 = vmul.f32 %v113, %v9264
    %v9746 = vmul.f32 %v114, %v9269
    %v9747 = vmul.f32 %v115, %v9274
    %v9748 = vmul.f32 %v116, %v9279
    %v9749 = vmul.f32 %v117, %v9284
    %v9750 = vmul.f32 %v118, %v9289
    %v9751 = vmul.f32 %v119, %v9294
    %v9752 = vmul.f32 %v120, %v9299
    %v9753 = vmul.f32 %v121, %v9304
    %v9754 = vmul.f32 %v122, %v9309
    %v9755 = vmul.f32 %v123, %v9314
    %v9756 = vmul.f32 %v124, %v9319
    %v9757 = vmul.f32 %v125, %v9324
    %v9758 = vmul.f32 %v126, %v9329
    %v9759 = vmul.f32 %v127, %v9334
    %v9760 = vmul.f32 %v128, %v9339
    %v9761 = vmul.f32 %v129, %v9344
    %v9762 = vmul.f32 %v130, %v9349
    %v9763 = vmul.f32 %v131, %v9354
    %v9764 = vmul.f32 %v132, %v9359
    %v9765 = vmul.f32 %v133, %v9364
    %v9766 = vmul.f32 %v134, %v9369
    %v9767 = vmul.f32 %v135, %v9374
    %v9768 = vmul.f32 %v136, %v9379
    %v9769 = vmul.f32 %v137, %v9384
    %v9770 = vmul.f32 %v138, %v9389
    %v9771 = vmul.f32 %v139, %v9394
    %v9772 = vmul.f32 %v140, %v9399
    %v9773 = vmul.f32 %v141, %v9404
    %v9774 = vmul.f32 %v142, %v9409
    %v9775 = vmul.f32 %v143, %v9414
    %v9776 = vmul.f32 %v144, %v9419
    %v9777 = vmul.f32 %v145, %v9424
    %v9778 = vmul.f32 %v146, %v9429
    %v9779 = vmul.f32 %v147, %v9434
    %v9780 = vmul.f32 %v148, %v9439
    %v9781 = vmul.f32 %v149, %v9444
    %v9782 = vmul.f32 %v150, %v9449
    %v9783 = vmul.f32 %v151, %v9454
    %v9784 = vmul.f32 %v152, %v9459
    %v9785 = vmul.f32 %v153, %v9464
    %v9786 = vmul.f32 %v154, %v9469
    %v9787 = vmul.f32 %v155, %v9474
    %v9788 = vmul.f32 %v156, %v9479
    %v9789 = vmul.f32 %v157, %v9484
    %v9790 = vmul.f32 %v158, %v9489
    %v9791 = vmul.f32 %v159, %v9494
    %v9792 = vmul.f32 %v160, %v9499
    %v9793 = vmul.f32 %v161, %v9504
    %v9794 = vmul.f32 %v162, %v9509
    %v9795 = vmul.f32 %v163, %v9514
    %v9796 = vmul.f32 %v164, %v9519
    %v9797 = vmul.f32 %v165, %v9524
    %v9798 = vmul.f32 %v166, %v9529
    %v9799 = vmul.f32 %v167, %v9534
    %v9800 = vmul.f32 %v168, %v9539
    %v9801 = vmul.f32 %v169, %v9544
    %v9802 = vmul.f32 %v170, %v9549
    %v9803 = vmul.f32 %v171, %v9554
    %v9804 = vmul.f32 %v172, %v9559
    %v9805 = vmul.f32 %v173, %v9564
    %v9806 = vmul.f32 %v174, %v9569
    %v9807 = vmul.f32 %v175, %v9574
    %v9808 = vmul.f32 %v176, %v9579
    %v9809 = vmul.f32 %v177, %v9584
    %v9810 = vmul.f32 %v178, %v9589
    %v9811 = vmul.f32 %v179, %v9594
    %v9812 = vmul.f32 %v180, %v9599
    %v9813 = vmul.f32 %v181, %v9604
    %v9814 = vmul.f32 %v182, %v9609
    %v9815 = vmul.f32 %v183, %v9614
    %v9816 = vmul.f32 %v184, %v9619
    %v9817 = vmul.f32 %v185, %v9624
    %v9818 = vmul.f32 %v186, %v9629
    %v9819 = vmul.f32 %v187, %v9634
    %v9820 = vmul.f32 %v188, %v9639
    %v9821 = vmul.f32 %v189, %v9644
    %v9822 = vmul.f32 %v190, %v9649
    %v9823 = vmul.f32 %v191, %v9654
    %v9824 = vmul.f32 %v192, %v9659
    %v9825 = vmul.f32 %v193, %v9664
    %v9826 = vmul.f32 %v194, %v9669
    %v9827 = vmul.f32 %v195, %v9674
    %v9828 = vmul.f32 %v196, %v9679
    %v9829 = vmul.f32 %v197, %v9684
    %v9830 = vmul.f32 %v198, %v9689
    %v9831 = vmul.f32 %v199, %v9694
    %v9832 = vmul.f32 %v200, %v9699
    %v9833 = vmul.f32 %v201, %v9704
    %v9834 = vsel %vm2666, %v9706, 0.0
    %v9835 = vrot.slane %v9834, 4
    %v9836 = vadd.f32 %v9834, %v9835
    %v9837 = vrot.slane %v9836, 2
    %v9838 = vadd.f32 %v9836, %v9837
    %v9839 = vrot.slane %v9838, 1
    %v9840 = vadd.f32 %v9838, %v9839
    %v9841 = vsel %vm2666, %v9707, 0.0
    %v9842 = vrot.slane %v9841, 4
    %v9843 = vadd.f32 %v9841, %v9842
    %v9844 = vrot.slane %v9843, 2
    %v9845 = vadd.f32 %v9843, %v9844
    %v9846 = vrot.slane %v9845, 1
    %v9847 = vadd.f32 %v9845, %v9846
    %v9848 = vsel %vm2666, %v9708, 0.0
    %v9849 = vrot.slane %v9848, 4
    %v9850 = vadd.f32 %v9848, %v9849
    %v9851 = vrot.slane %v9850, 2
    %v9852 = vadd.f32 %v9850, %v9851
    %v9853 = vrot.slane %v9852, 1
    %v9854 = vadd.f32 %v9852, %v9853
    %v9855 = vsel %vm2666, %v9709, 0.0
    %v9856 = vrot.slane %v9855, 4
    %v9857 = vadd.f32 %v9855, %v9856
    %v9858 = vrot.slane %v9857, 2
    %v9859 = vadd.f32 %v9857, %v9858
    %v9860 = vrot.slane %v9859, 1
    %v9861 = vadd.f32 %v9859, %v9860
    %v9862 = vsel %vm2666, %v9710, 0.0
    %v9863 = vrot.slane %v9862, 4
    %v9864 = vadd.f32 %v9862, %v9863
    %v9865 = vrot.slane %v9864, 2
    %v9866 = vadd.f32 %v9864, %v9865
    %v9867 = vrot.slane %v9866, 1
    %v9868 = vadd.f32 %v9866, %v9867
    %v9869 = vsel %vm2666, %v9711, 0.0
    %v9870 = vrot.slane %v9869, 4
    %v9871 = vadd.f32 %v9869, %v9870
    %v9872 = vrot.slane %v9871, 2
    %v9873 = vadd.f32 %v9871, %v9872
    %v9874 = vrot.slane %v9873, 1
    %v9875 = vadd.f32 %v9873, %v9874
    %v9876 = vsel %vm2666, %v9712, 0.0
    %v9877 = vrot.slane %v9876, 4
    %v9878 = vadd.f32 %v9876, %v9877
    %v9879 = vrot.slane %v9878, 2
    %v9880 = vadd.f32 %v9878, %v9879
    %v9881 = vrot.slane %v9880, 1
    %v9882 = vadd.f32 %v9880, %v9881
    %v9883 = vsel %vm2666, %v9713, 0.0
    %v9884 = vrot.slane %v9883, 4
    %v9885 = vadd.f32 %v9883, %v9884
    %v9886 = vrot.slane %v9885, 2
    %v9887 = vadd.f32 %v9885, %v9886
    %v9888 = vrot.slane %v9887, 1
    %v9889 = vadd.f32 %v9887, %v9888
    %v9890 = vsel %vm2666, %v9714, 0.0
    %v9891 = vrot.slane %v9890, 4
    %v9892 = vadd.f32 %v9890, %v9891
    %v9893 = vrot.slane %v9892, 2
    %v9894 = vadd.f32 %v9892, %v9893
    %v9895 = vrot.slane %v9894, 1
    %v9896 = vadd.f32 %v9894, %v9895
    %v9897 = vsel %vm2666, %v9715, 0.0
    %v9898 = vrot.slane %v9897, 4
    %v9899 = vadd.f32 %v9897, %v9898
    %v9900 = vrot.slane %v9899, 2
    %v9901 = vadd.f32 %v9899, %v9900
    %v9902 = vrot.slane %v9901, 1
    %v9903 = vadd.f32 %v9901, %v9902
    %v9904 = vsel %vm2666, %v9716, 0.0
    %v9905 = vrot.slane %v9904, 4
    %v9906 = vadd.f32 %v9904, %v9905
    %v9907 = vrot.slane %v9906, 2
    %v9908 = vadd.f32 %v9906, %v9907
    %v9909 = vrot.slane %v9908, 1
    %v9910 = vadd.f32 %v9908, %v9909
    %v9911 = vsel %vm2666, %v9717, 0.0
    %v9912 = vrot.slane %v9911, 4
    %v9913 = vadd.f32 %v9911, %v9912
    %v9914 = vrot.slane %v9913, 2
    %v9915 = vadd.f32 %v9913, %v9914
    %v9916 = vrot.slane %v9915, 1
    %v9917 = vadd.f32 %v9915, %v9916
    %v9918 = vsel %vm2666, %v9718, 0.0
    %v9919 = vrot.slane %v9918, 4
    %v9920 = vadd.f32 %v9918, %v9919
    %v9921 = vrot.slane %v9920, 2
    %v9922 = vadd.f32 %v9920, %v9921
    %v9923 = vrot.slane %v9922, 1
    %v9924 = vadd.f32 %v9922, %v9923
    %v9925 = vsel %vm2666, %v9719, 0.0
    %v9926 = vrot.slane %v9925, 4
    %v9927 = vadd.f32 %v9925, %v9926
    %v9928 = vrot.slane %v9927, 2
    %v9929 = vadd.f32 %v9927, %v9928
    %v9930 = vrot.slane %v9929, 1
    %v9931 = vadd.f32 %v9929, %v9930
    %v9932 = vsel %vm2666, %v9720, 0.0
    %v9933 = vrot.slane %v9932, 4
    %v9934 = vadd.f32 %v9932, %v9933
    %v9935 = vrot.slane %v9934, 2
    %v9936 = vadd.f32 %v9934, %v9935
    %v9937 = vrot.slane %v9936, 1
    %v9938 = vadd.f32 %v9936, %v9937
    %v9939 = vsel %vm2666, %v9721, 0.0
    %v9940 = vrot.slane %v9939, 4
    %v9941 = vadd.f32 %v9939, %v9940
    %v9942 = vrot.slane %v9941, 2
    %v9943 = vadd.f32 %v9941, %v9942
    %v9944 = vrot.slane %v9943, 1
    %v9945 = vadd.f32 %v9943, %v9944
    %v9946 = vsel %vm2666, %v9722, 0.0
    %v9947 = vrot.slane %v9946, 4
    %v9948 = vadd.f32 %v9946, %v9947
    %v9949 = vrot.slane %v9948, 2
    %v9950 = vadd.f32 %v9948, %v9949
    %v9951 = vrot.slane %v9950, 1
    %v9952 = vadd.f32 %v9950, %v9951
    %v9953 = vsel %vm2666, %v9723, 0.0
    %v9954 = vrot.slane %v9953, 4
    %v9955 = vadd.f32 %v9953, %v9954
    %v9956 = vrot.slane %v9955, 2
    %v9957 = vadd.f32 %v9955, %v9956
    %v9958 = vrot.slane %v9957, 1
    %v9959 = vadd.f32 %v9957, %v9958
    %v9960 = vsel %vm2666, %v9724, 0.0
    %v9961 = vrot.slane %v9960, 4
    %v9962 = vadd.f32 %v9960, %v9961
    %v9963 = vrot.slane %v9962, 2
    %v9964 = vadd.f32 %v9962, %v9963
    %v9965 = vrot.slane %v9964, 1
    %v9966 = vadd.f32 %v9964, %v9965
    %v9967 = vsel %vm2666, %v9725, 0.0
    %v9968 = vrot.slane %v9967, 4
    %v9969 = vadd.f32 %v9967, %v9968
    %v9970 = vrot.slane %v9969, 2
    %v9971 = vadd.f32 %v9969, %v9970
    %v9972 = vrot.slane %v9971, 1
    %v9973 = vadd.f32 %v9971, %v9972
    %v9974 = vsel %vm2666, %v9726, 0.0
    %v9975 = vrot.slane %v9974, 4
    %v9976 = vadd.f32 %v9974, %v9975
    %v9977 = vrot.slane %v9976, 2
    %v9978 = vadd.f32 %v9976, %v9977
    %v9979 = vrot.slane %v9978, 1
    %v9980 = vadd.f32 %v9978, %v9979
    %v9981 = vsel %vm2666, %v9727, 0.0
    %v9982 = vrot.slane %v9981, 4
    %v9983 = vadd.f32 %v9981, %v9982
    %v9984 = vrot.slane %v9983, 2
    %v9985 = vadd.f32 %v9983, %v9984
    %v9986 = vrot.slane %v9985, 1
    %v9987 = vadd.f32 %v9985, %v9986
    %v9988 = vsel %vm2666, %v9728, 0.0
    %v9989 = vrot.slane %v9988, 4
    %v9990 = vadd.f32 %v9988, %v9989
    %v9991 = vrot.slane %v9990, 2
    %v9992 = vadd.f32 %v9990, %v9991
    %v9993 = vrot.slane %v9992, 1
    %v9994 = vadd.f32 %v9992, %v9993
    %v9995 = vsel %vm2666, %v9729, 0.0
    %v9996 = vrot.slane %v9995, 4
    %v9997 = vadd.f32 %v9995, %v9996
    %v9998 = vrot.slane %v9997, 2
    %v9999 = vadd.f32 %v9997, %v9998
    %v10000 = vrot.slane %v9999, 1
    %v10001 = vadd.f32 %v9999, %v10000
    %v10002 = vsel %vm2666, %v9730, 0.0
    %v10003 = vrot.slane %v10002, 4
    %v10004 = vadd.f32 %v10002, %v10003
    %v10005 = vrot.slane %v10004, 2
    %v10006 = vadd.f32 %v10004, %v10005
    %v10007 = vrot.slane %v10006, 1
    %v10008 = vadd.f32 %v10006, %v10007
    %v10009 = vsel %vm2666, %v9731, 0.0
    %v10010 = vrot.slane %v10009, 4
    %v10011 = vadd.f32 %v10009, %v10010
    %v10012 = vrot.slane %v10011, 2
    %v10013 = vadd.f32 %v10011, %v10012
    %v10014 = vrot.slane %v10013, 1
    %v10015 = vadd.f32 %v10013, %v10014
    %v10016 = vsel %vm2666, %v9732, 0.0
    %v10017 = vrot.slane %v10016, 4
    %v10018 = vadd.f32 %v10016, %v10017
    %v10019 = vrot.slane %v10018, 2
    %v10020 = vadd.f32 %v10018, %v10019
    %v10021 = vrot.slane %v10020, 1
    %v10022 = vadd.f32 %v10020, %v10021
    %v10023 = vsel %vm2666, %v9733, 0.0
    %v10024 = vrot.slane %v10023, 4
    %v10025 = vadd.f32 %v10023, %v10024
    %v10026 = vrot.slane %v10025, 2
    %v10027 = vadd.f32 %v10025, %v10026
    %v10028 = vrot.slane %v10027, 1
    %v10029 = vadd.f32 %v10027, %v10028
    %v10030 = vsel %vm2666, %v9734, 0.0
    %v10031 = vrot.slane %v10030, 4
    %v10032 = vadd.f32 %v10030, %v10031
    %v10033 = vrot.slane %v10032, 2
    %v10034 = vadd.f32 %v10032, %v10033
    %v10035 = vrot.slane %v10034, 1
    %v10036 = vadd.f32 %v10034, %v10035
    %v10037 = vsel %vm2666, %v9735, 0.0
    %v10038 = vrot.slane %v10037, 4
    %v10039 = vadd.f32 %v10037, %v10038
    %v10040 = vrot.slane %v10039, 2
    %v10041 = vadd.f32 %v10039, %v10040
    %v10042 = vrot.slane %v10041, 1
    %v10043 = vadd.f32 %v10041, %v10042
    %v10044 = vsel %vm2666, %v9736, 0.0
    %v10045 = vrot.slane %v10044, 4
    %v10046 = vadd.f32 %v10044, %v10045
    %v10047 = vrot.slane %v10046, 2
    %v10048 = vadd.f32 %v10046, %v10047
    %v10049 = vrot.slane %v10048, 1
    %v10050 = vadd.f32 %v10048, %v10049
    %v10051 = vsel %vm2666, %v9737, 0.0
    %v10052 = vrot.slane %v10051, 4
    %v10053 = vadd.f32 %v10051, %v10052
    %v10054 = vrot.slane %v10053, 2
    %v10055 = vadd.f32 %v10053, %v10054
    %v10056 = vrot.slane %v10055, 1
    %v10057 = vadd.f32 %v10055, %v10056
    %v10058 = vsel %vm2666, %v9738, 0.0
    %v10059 = vrot.slane %v10058, 4
    %v10060 = vadd.f32 %v10058, %v10059
    %v10061 = vrot.slane %v10060, 2
    %v10062 = vadd.f32 %v10060, %v10061
    %v10063 = vrot.slane %v10062, 1
    %v10064 = vadd.f32 %v10062, %v10063
    %v10065 = vsel %vm2666, %v9739, 0.0
    %v10066 = vrot.slane %v10065, 4
    %v10067 = vadd.f32 %v10065, %v10066
    %v10068 = vrot.slane %v10067, 2
    %v10069 = vadd.f32 %v10067, %v10068
    %v10070 = vrot.slane %v10069, 1
    %v10071 = vadd.f32 %v10069, %v10070
    %v10072 = vsel %vm2666, %v9740, 0.0
    %v10073 = vrot.slane %v10072, 4
    %v10074 = vadd.f32 %v10072, %v10073
    %v10075 = vrot.slane %v10074, 2
    %v10076 = vadd.f32 %v10074, %v10075
    %v10077 = vrot.slane %v10076, 1
    %v10078 = vadd.f32 %v10076, %v10077
    %v10079 = vsel %vm2666, %v9741, 0.0
    %v10080 = vrot.slane %v10079, 4
    %v10081 = vadd.f32 %v10079, %v10080
    %v10082 = vrot.slane %v10081, 2
    %v10083 = vadd.f32 %v10081, %v10082
    %v10084 = vrot.slane %v10083, 1
    %v10085 = vadd.f32 %v10083, %v10084
    %v10086 = vsel %vm2666, %v9742, 0.0
    %v10087 = vrot.slane %v10086, 4
    %v10088 = vadd.f32 %v10086, %v10087
    %v10089 = vrot.slane %v10088, 2
    %v10090 = vadd.f32 %v10088, %v10089
    %v10091 = vrot.slane %v10090, 1
    %v10092 = vadd.f32 %v10090, %v10091
    %v10093 = vsel %vm2666, %v9743, 0.0
    %v10094 = vrot.slane %v10093, 4
    %v10095 = vadd.f32 %v10093, %v10094
    %v10096 = vrot.slane %v10095, 2
    %v10097 = vadd.f32 %v10095, %v10096
    %v10098 = vrot.slane %v10097, 1
    %v10099 = vadd.f32 %v10097, %v10098
    %v10100 = vsel %vm2666, %v9744, 0.0
    %v10101 = vrot.slane %v10100, 4
    %v10102 = vadd.f32 %v10100, %v10101
    %v10103 = vrot.slane %v10102, 2
    %v10104 = vadd.f32 %v10102, %v10103
    %v10105 = vrot.slane %v10104, 1
    %v10106 = vadd.f32 %v10104, %v10105
    %v10107 = vsel %vm2666, %v9745, 0.0
    %v10108 = vrot.slane %v10107, 4
    %v10109 = vadd.f32 %v10107, %v10108
    %v10110 = vrot.slane %v10109, 2
    %v10111 = vadd.f32 %v10109, %v10110
    %v10112 = vrot.slane %v10111, 1
    %v10113 = vadd.f32 %v10111, %v10112
    %v10114 = vsel %vm2666, %v9746, 0.0
    %v10115 = vrot.slane %v10114, 4
    %v10116 = vadd.f32 %v10114, %v10115
    %v10117 = vrot.slane %v10116, 2
    %v10118 = vadd.f32 %v10116, %v10117
    %v10119 = vrot.slane %v10118, 1
    %v10120 = vadd.f32 %v10118, %v10119
    %v10121 = vsel %vm2666, %v9747, 0.0
    %v10122 = vrot.slane %v10121, 4
    %v10123 = vadd.f32 %v10121, %v10122
    %v10124 = vrot.slane %v10123, 2
    %v10125 = vadd.f32 %v10123, %v10124
    %v10126 = vrot.slane %v10125, 1
    %v10127 = vadd.f32 %v10125, %v10126
    %v10128 = vsel %vm2666, %v9748, 0.0
    %v10129 = vrot.slane %v10128, 4
    %v10130 = vadd.f32 %v10128, %v10129
    %v10131 = vrot.slane %v10130, 2
    %v10132 = vadd.f32 %v10130, %v10131
    %v10133 = vrot.slane %v10132, 1
    %v10134 = vadd.f32 %v10132, %v10133
    %v10135 = vsel %vm2666, %v9749, 0.0
    %v10136 = vrot.slane %v10135, 4
    %v10137 = vadd.f32 %v10135, %v10136
    %v10138 = vrot.slane %v10137, 2
    %v10139 = vadd.f32 %v10137, %v10138
    %v10140 = vrot.slane %v10139, 1
    %v10141 = vadd.f32 %v10139, %v10140
    %v10142 = vsel %vm2666, %v9750, 0.0
    %v10143 = vrot.slane %v10142, 4
    %v10144 = vadd.f32 %v10142, %v10143
    %v10145 = vrot.slane %v10144, 2
    %v10146 = vadd.f32 %v10144, %v10145
    %v10147 = vrot.slane %v10146, 1
    %v10148 = vadd.f32 %v10146, %v10147
    %v10149 = vsel %vm2666, %v9751, 0.0
    %v10150 = vrot.slane %v10149, 4
    %v10151 = vadd.f32 %v10149, %v10150
    %v10152 = vrot.slane %v10151, 2
    %v10153 = vadd.f32 %v10151, %v10152
    %v10154 = vrot.slane %v10153, 1
    %v10155 = vadd.f32 %v10153, %v10154
    %v10156 = vsel %vm2666, %v9752, 0.0
    %v10157 = vrot.slane %v10156, 4
    %v10158 = vadd.f32 %v10156, %v10157
    %v10159 = vrot.slane %v10158, 2
    %v10160 = vadd.f32 %v10158, %v10159
    %v10161 = vrot.slane %v10160, 1
    %v10162 = vadd.f32 %v10160, %v10161
    %v10163 = vsel %vm2666, %v9753, 0.0
    %v10164 = vrot.slane %v10163, 4
    %v10165 = vadd.f32 %v10163, %v10164
    %v10166 = vrot.slane %v10165, 2
    %v10167 = vadd.f32 %v10165, %v10166
    %v10168 = vrot.slane %v10167, 1
    %v10169 = vadd.f32 %v10167, %v10168
    %v10170 = vsel %vm2666, %v9754, 0.0
    %v10171 = vrot.slane %v10170, 4
    %v10172 = vadd.f32 %v10170, %v10171
    %v10173 = vrot.slane %v10172, 2
    %v10174 = vadd.f32 %v10172, %v10173
    %v10175 = vrot.slane %v10174, 1
    %v10176 = vadd.f32 %v10174, %v10175
    %v10177 = vsel %vm2666, %v9755, 0.0
    %v10178 = vrot.slane %v10177, 4
    %v10179 = vadd.f32 %v10177, %v10178
    %v10180 = vrot.slane %v10179, 2
    %v10181 = vadd.f32 %v10179, %v10180
    %v10182 = vrot.slane %v10181, 1
    %v10183 = vadd.f32 %v10181, %v10182
    %v10184 = vsel %vm2666, %v9756, 0.0
    %v10185 = vrot.slane %v10184, 4
    %v10186 = vadd.f32 %v10184, %v10185
    %v10187 = vrot.slane %v10186, 2
    %v10188 = vadd.f32 %v10186, %v10187
    %v10189 = vrot.slane %v10188, 1
    %v10190 = vadd.f32 %v10188, %v10189
    %v10191 = vsel %vm2666, %v9757, 0.0
    %v10192 = vrot.slane %v10191, 4
    %v10193 = vadd.f32 %v10191, %v10192
    %v10194 = vrot.slane %v10193, 2
    %v10195 = vadd.f32 %v10193, %v10194
    %v10196 = vrot.slane %v10195, 1
    %v10197 = vadd.f32 %v10195, %v10196
    %v10198 = vsel %vm2666, %v9758, 0.0
    %v10199 = vrot.slane %v10198, 4
    %v10200 = vadd.f32 %v10198, %v10199
    %v10201 = vrot.slane %v10200, 2
    %v10202 = vadd.f32 %v10200, %v10201
    %v10203 = vrot.slane %v10202, 1
    %v10204 = vadd.f32 %v10202, %v10203
    %v10205 = vsel %vm2666, %v9759, 0.0
    %v10206 = vrot.slane %v10205, 4
    %v10207 = vadd.f32 %v10205, %v10206
    %v10208 = vrot.slane %v10207, 2
    %v10209 = vadd.f32 %v10207, %v10208
    %v10210 = vrot.slane %v10209, 1
    %v10211 = vadd.f32 %v10209, %v10210
    %v10212 = vsel %vm2666, %v9760, 0.0
    %v10213 = vrot.slane %v10212, 4
    %v10214 = vadd.f32 %v10212, %v10213
    %v10215 = vrot.slane %v10214, 2
    %v10216 = vadd.f32 %v10214, %v10215
    %v10217 = vrot.slane %v10216, 1
    %v10218 = vadd.f32 %v10216, %v10217
    %v10219 = vsel %vm2666, %v9761, 0.0
    %v10220 = vrot.slane %v10219, 4
    %v10221 = vadd.f32 %v10219, %v10220
    %v10222 = vrot.slane %v10221, 2
    %v10223 = vadd.f32 %v10221, %v10222
    %v10224 = vrot.slane %v10223, 1
    %v10225 = vadd.f32 %v10223, %v10224
    %v10226 = vsel %vm2666, %v9762, 0.0
    %v10227 = vrot.slane %v10226, 4
    %v10228 = vadd.f32 %v10226, %v10227
    %v10229 = vrot.slane %v10228, 2
    %v10230 = vadd.f32 %v10228, %v10229
    %v10231 = vrot.slane %v10230, 1
    %v10232 = vadd.f32 %v10230, %v10231
    %v10233 = vsel %vm2666, %v9763, 0.0
    %v10234 = vrot.slane %v10233, 4
    %v10235 = vadd.f32 %v10233, %v10234
    %v10236 = vrot.slane %v10235, 2
    %v10237 = vadd.f32 %v10235, %v10236
    %v10238 = vrot.slane %v10237, 1
    %v10239 = vadd.f32 %v10237, %v10238
    %v10240 = vsel %vm2666, %v9764, 0.0
    %v10241 = vrot.slane %v10240, 4
    %v10242 = vadd.f32 %v10240, %v10241
    %v10243 = vrot.slane %v10242, 2
    %v10244 = vadd.f32 %v10242, %v10243
    %v10245 = vrot.slane %v10244, 1
    %v10246 = vadd.f32 %v10244, %v10245
    %v10247 = vsel %vm2666, %v9765, 0.0
    %v10248 = vrot.slane %v10247, 4
    %v10249 = vadd.f32 %v10247, %v10248
    %v10250 = vrot.slane %v10249, 2
    %v10251 = vadd.f32 %v10249, %v10250
    %v10252 = vrot.slane %v10251, 1
    %v10253 = vadd.f32 %v10251, %v10252
    %v10254 = vsel %vm2666, %v9766, 0.0
    %v10255 = vrot.slane %v10254, 4
    %v10256 = vadd.f32 %v10254, %v10255
    %v10257 = vrot.slane %v10256, 2
    %v10258 = vadd.f32 %v10256, %v10257
    %v10259 = vrot.slane %v10258, 1
    %v10260 = vadd.f32 %v10258, %v10259
    %v10261 = vsel %vm2666, %v9767, 0.0
    %v10262 = vrot.slane %v10261, 4
    %v10263 = vadd.f32 %v10261, %v10262
    %v10264 = vrot.slane %v10263, 2
    %v10265 = vadd.f32 %v10263, %v10264
    %v10266 = vrot.slane %v10265, 1
    %v10267 = vadd.f32 %v10265, %v10266
    %v10268 = vsel %vm2666, %v9768, 0.0
    %v10269 = vrot.slane %v10268, 4
    %v10270 = vadd.f32 %v10268, %v10269
    %v10271 = vrot.slane %v10270, 2
    %v10272 = vadd.f32 %v10270, %v10271
    %v10273 = vrot.slane %v10272, 1
    %v10274 = vadd.f32 %v10272, %v10273
    %v10275 = vsel %vm2666, %v9769, 0.0
    %v10276 = vrot.slane %v10275, 4
    %v10277 = vadd.f32 %v10275, %v10276
    %v10278 = vrot.slane %v10277, 2
    %v10279 = vadd.f32 %v10277, %v10278
    %v10280 = vrot.slane %v10279, 1
    %v10281 = vadd.f32 %v10279, %v10280
    %v10282 = vsel %vm2666, %v9770, 0.0
    %v10283 = vrot.slane %v10282, 4
    %v10284 = vadd.f32 %v10282, %v10283
    %v10285 = vrot.slane %v10284, 2
    %v10286 = vadd.f32 %v10284, %v10285
    %v10287 = vrot.slane %v10286, 1
    %v10288 = vadd.f32 %v10286, %v10287
    %v10289 = vsel %vm2666, %v9771, 0.0
    %v10290 = vrot.slane %v10289, 4
    %v10291 = vadd.f32 %v10289, %v10290
    %v10292 = vrot.slane %v10291, 2
    %v10293 = vadd.f32 %v10291, %v10292
    %v10294 = vrot.slane %v10293, 1
    %v10295 = vadd.f32 %v10293, %v10294
    %v10296 = vsel %vm2666, %v9772, 0.0
    %v10297 = vrot.slane %v10296, 4
    %v10298 = vadd.f32 %v10296, %v10297
    %v10299 = vrot.slane %v10298, 2
    %v10300 = vadd.f32 %v10298, %v10299
    %v10301 = vrot.slane %v10300, 1
    %v10302 = vadd.f32 %v10300, %v10301
    %v10303 = vsel %vm2666, %v9773, 0.0
    %v10304 = vrot.slane %v10303, 4
    %v10305 = vadd.f32 %v10303, %v10304
    %v10306 = vrot.slane %v10305, 2
    %v10307 = vadd.f32 %v10305, %v10306
    %v10308 = vrot.slane %v10307, 1
    %v10309 = vadd.f32 %v10307, %v10308
    %v10310 = vsel %vm2666, %v9774, 0.0
    %v10311 = vrot.slane %v10310, 4
    %v10312 = vadd.f32 %v10310, %v10311
    %v10313 = vrot.slane %v10312, 2
    %v10314 = vadd.f32 %v10312, %v10313
    %v10315 = vrot.slane %v10314, 1
    %v10316 = vadd.f32 %v10314, %v10315
    %v10317 = vsel %vm2666, %v9775, 0.0
    %v10318 = vrot.slane %v10317, 4
    %v10319 = vadd.f32 %v10317, %v10318
    %v10320 = vrot.slane %v10319, 2
    %v10321 = vadd.f32 %v10319, %v10320
    %v10322 = vrot.slane %v10321, 1
    %v10323 = vadd.f32 %v10321, %v10322
    %v10324 = vsel %vm2666, %v9776, 0.0
    %v10325 = vrot.slane %v10324, 4
    %v10326 = vadd.f32 %v10324, %v10325
    %v10327 = vrot.slane %v10326, 2
    %v10328 = vadd.f32 %v10326, %v10327
    %v10329 = vrot.slane %v10328, 1
    %v10330 = vadd.f32 %v10328, %v10329
    %v10331 = vsel %vm2666, %v9777, 0.0
    %v10332 = vrot.slane %v10331, 4
    %v10333 = vadd.f32 %v10331, %v10332
    %v10334 = vrot.slane %v10333, 2
    %v10335 = vadd.f32 %v10333, %v10334
    %v10336 = vrot.slane %v10335, 1
    %v10337 = vadd.f32 %v10335, %v10336
    %v10338 = vsel %vm2666, %v9778, 0.0
    %v10339 = vrot.slane %v10338, 4
    %v10340 = vadd.f32 %v10338, %v10339
    %v10341 = vrot.slane %v10340, 2
    %v10342 = vadd.f32 %v10340, %v10341
    %v10343 = vrot.slane %v10342, 1
    %v10344 = vadd.f32 %v10342, %v10343
    %v10345 = vsel %vm2666, %v9779, 0.0
    %v10346 = vrot.slane %v10345, 4
    %v10347 = vadd.f32 %v10345, %v10346
    %v10348 = vrot.slane %v10347, 2
    %v10349 = vadd.f32 %v10347, %v10348
    %v10350 = vrot.slane %v10349, 1
    %v10351 = vadd.f32 %v10349, %v10350
    %v10352 = vsel %vm2666, %v9780, 0.0
    %v10353 = vrot.slane %v10352, 4
    %v10354 = vadd.f32 %v10352, %v10353
    %v10355 = vrot.slane %v10354, 2
    %v10356 = vadd.f32 %v10354, %v10355
    %v10357 = vrot.slane %v10356, 1
    %v10358 = vadd.f32 %v10356, %v10357
    %v10359 = vsel %vm2666, %v9781, 0.0
    %v10360 = vrot.slane %v10359, 4
    %v10361 = vadd.f32 %v10359, %v10360
    %v10362 = vrot.slane %v10361, 2
    %v10363 = vadd.f32 %v10361, %v10362
    %v10364 = vrot.slane %v10363, 1
    %v10365 = vadd.f32 %v10363, %v10364
    %v10366 = vsel %vm2666, %v9782, 0.0
    %v10367 = vrot.slane %v10366, 4
    %v10368 = vadd.f32 %v10366, %v10367
    %v10369 = vrot.slane %v10368, 2
    %v10370 = vadd.f32 %v10368, %v10369
    %v10371 = vrot.slane %v10370, 1
    %v10372 = vadd.f32 %v10370, %v10371
    %v10373 = vsel %vm2666, %v9783, 0.0
    %v10374 = vrot.slane %v10373, 4
    %v10375 = vadd.f32 %v10373, %v10374
    %v10376 = vrot.slane %v10375, 2
    %v10377 = vadd.f32 %v10375, %v10376
    %v10378 = vrot.slane %v10377, 1
    %v10379 = vadd.f32 %v10377, %v10378
    %v10380 = vsel %vm2666, %v9784, 0.0
    %v10381 = vrot.slane %v10380, 4
    %v10382 = vadd.f32 %v10380, %v10381
    %v10383 = vrot.slane %v10382, 2
    %v10384 = vadd.f32 %v10382, %v10383
    %v10385 = vrot.slane %v10384, 1
    %v10386 = vadd.f32 %v10384, %v10385
    %v10387 = vsel %vm2666, %v9785, 0.0
    %v10388 = vrot.slane %v10387, 4
    %v10389 = vadd.f32 %v10387, %v10388
    %v10390 = vrot.slane %v10389, 2
    %v10391 = vadd.f32 %v10389, %v10390
    %v10392 = vrot.slane %v10391, 1
    %v10393 = vadd.f32 %v10391, %v10392
    %v10394 = vsel %vm2666, %v9786, 0.0
    %v10395 = vrot.slane %v10394, 4
    %v10396 = vadd.f32 %v10394, %v10395
    %v10397 = vrot.slane %v10396, 2
    %v10398 = vadd.f32 %v10396, %v10397
    %v10399 = vrot.slane %v10398, 1
    %v10400 = vadd.f32 %v10398, %v10399
    %v10401 = vsel %vm2666, %v9787, 0.0
    %v10402 = vrot.slane %v10401, 4
    %v10403 = vadd.f32 %v10401, %v10402
    %v10404 = vrot.slane %v10403, 2
    %v10405 = vadd.f32 %v10403, %v10404
    %v10406 = vrot.slane %v10405, 1
    %v10407 = vadd.f32 %v10405, %v10406
    %v10408 = vsel %vm2666, %v9788, 0.0
    %v10409 = vrot.slane %v10408, 4
    %v10410 = vadd.f32 %v10408, %v10409
    %v10411 = vrot.slane %v10410, 2
    %v10412 = vadd.f32 %v10410, %v10411
    %v10413 = vrot.slane %v10412, 1
    %v10414 = vadd.f32 %v10412, %v10413
    %v10415 = vsel %vm2666, %v9789, 0.0
    %v10416 = vrot.slane %v10415, 4
    %v10417 = vadd.f32 %v10415, %v10416
    %v10418 = vrot.slane %v10417, 2
    %v10419 = vadd.f32 %v10417, %v10418
    %v10420 = vrot.slane %v10419, 1
    %v10421 = vadd.f32 %v10419, %v10420
    %v10422 = vsel %vm2666, %v9790, 0.0
    %v10423 = vrot.slane %v10422, 4
    %v10424 = vadd.f32 %v10422, %v10423
    %v10425 = vrot.slane %v10424, 2
    %v10426 = vadd.f32 %v10424, %v10425
    %v10427 = vrot.slane %v10426, 1
    %v10428 = vadd.f32 %v10426, %v10427
    %v10429 = vsel %vm2666, %v9791, 0.0
    %v10430 = vrot.slane %v10429, 4
    %v10431 = vadd.f32 %v10429, %v10430
    %v10432 = vrot.slane %v10431, 2
    %v10433 = vadd.f32 %v10431, %v10432
    %v10434 = vrot.slane %v10433, 1
    %v10435 = vadd.f32 %v10433, %v10434
    %v10436 = vsel %vm2666, %v9792, 0.0
    %v10437 = vrot.slane %v10436, 4
    %v10438 = vadd.f32 %v10436, %v10437
    %v10439 = vrot.slane %v10438, 2
    %v10440 = vadd.f32 %v10438, %v10439
    %v10441 = vrot.slane %v10440, 1
    %v10442 = vadd.f32 %v10440, %v10441
    %v10443 = vsel %vm2666, %v9793, 0.0
    %v10444 = vrot.slane %v10443, 4
    %v10445 = vadd.f32 %v10443, %v10444
    %v10446 = vrot.slane %v10445, 2
    %v10447 = vadd.f32 %v10445, %v10446
    %v10448 = vrot.slane %v10447, 1
    %v10449 = vadd.f32 %v10447, %v10448
    %v10450 = vsel %vm2666, %v9794, 0.0
    %v10451 = vrot.slane %v10450, 4
    %v10452 = vadd.f32 %v10450, %v10451
    %v10453 = vrot.slane %v10452, 2
    %v10454 = vadd.f32 %v10452, %v10453
    %v10455 = vrot.slane %v10454, 1
    %v10456 = vadd.f32 %v10454, %v10455
    %v10457 = vsel %vm2666, %v9795, 0.0
    %v10458 = vrot.slane %v10457, 4
    %v10459 = vadd.f32 %v10457, %v10458
    %v10460 = vrot.slane %v10459, 2
    %v10461 = vadd.f32 %v10459, %v10460
    %v10462 = vrot.slane %v10461, 1
    %v10463 = vadd.f32 %v10461, %v10462
    %v10464 = vsel %vm2666, %v9796, 0.0
    %v10465 = vrot.slane %v10464, 4
    %v10466 = vadd.f32 %v10464, %v10465
    %v10467 = vrot.slane %v10466, 2
    %v10468 = vadd.f32 %v10466, %v10467
    %v10469 = vrot.slane %v10468, 1
    %v10470 = vadd.f32 %v10468, %v10469
    %v10471 = vsel %vm2666, %v9797, 0.0
    %v10472 = vrot.slane %v10471, 4
    %v10473 = vadd.f32 %v10471, %v10472
    %v10474 = vrot.slane %v10473, 2
    %v10475 = vadd.f32 %v10473, %v10474
    %v10476 = vrot.slane %v10475, 1
    %v10477 = vadd.f32 %v10475, %v10476
    %v10478 = vsel %vm2666, %v9798, 0.0
    %v10479 = vrot.slane %v10478, 4
    %v10480 = vadd.f32 %v10478, %v10479
    %v10481 = vrot.slane %v10480, 2
    %v10482 = vadd.f32 %v10480, %v10481
    %v10483 = vrot.slane %v10482, 1
    %v10484 = vadd.f32 %v10482, %v10483
    %v10485 = vsel %vm2666, %v9799, 0.0
    %v10486 = vrot.slane %v10485, 4
    %v10487 = vadd.f32 %v10485, %v10486
    %v10488 = vrot.slane %v10487, 2
    %v10489 = vadd.f32 %v10487, %v10488
    %v10490 = vrot.slane %v10489, 1
    %v10491 = vadd.f32 %v10489, %v10490
    %v10492 = vsel %vm2666, %v9800, 0.0
    %v10493 = vrot.slane %v10492, 4
    %v10494 = vadd.f32 %v10492, %v10493
    %v10495 = vrot.slane %v10494, 2
    %v10496 = vadd.f32 %v10494, %v10495
    %v10497 = vrot.slane %v10496, 1
    %v10498 = vadd.f32 %v10496, %v10497
    %v10499 = vsel %vm2666, %v9801, 0.0
    %v10500 = vrot.slane %v10499, 4
    %v10501 = vadd.f32 %v10499, %v10500
    %v10502 = vrot.slane %v10501, 2
    %v10503 = vadd.f32 %v10501, %v10502
    %v10504 = vrot.slane %v10503, 1
    %v10505 = vadd.f32 %v10503, %v10504
    %v10506 = vsel %vm2666, %v9802, 0.0
    %v10507 = vrot.slane %v10506, 4
    %v10508 = vadd.f32 %v10506, %v10507
    %v10509 = vrot.slane %v10508, 2
    %v10510 = vadd.f32 %v10508, %v10509
    %v10511 = vrot.slane %v10510, 1
    %v10512 = vadd.f32 %v10510, %v10511
    %v10513 = vsel %vm2666, %v9803, 0.0
    %v10514 = vrot.slane %v10513, 4
    %v10515 = vadd.f32 %v10513, %v10514
    %v10516 = vrot.slane %v10515, 2
    %v10517 = vadd.f32 %v10515, %v10516
    %v10518 = vrot.slane %v10517, 1
    %v10519 = vadd.f32 %v10517, %v10518
    %v10520 = vsel %vm2666, %v9804, 0.0
    %v10521 = vrot.slane %v10520, 4
    %v10522 = vadd.f32 %v10520, %v10521
    %v10523 = vrot.slane %v10522, 2
    %v10524 = vadd.f32 %v10522, %v10523
    %v10525 = vrot.slane %v10524, 1
    %v10526 = vadd.f32 %v10524, %v10525
    %v10527 = vsel %vm2666, %v9805, 0.0
    %v10528 = vrot.slane %v10527, 4
    %v10529 = vadd.f32 %v10527, %v10528
    %v10530 = vrot.slane %v10529, 2
    %v10531 = vadd.f32 %v10529, %v10530
    %v10532 = vrot.slane %v10531, 1
    %v10533 = vadd.f32 %v10531, %v10532
    %v10534 = vsel %vm2666, %v9806, 0.0
    %v10535 = vrot.slane %v10534, 4
    %v10536 = vadd.f32 %v10534, %v10535
    %v10537 = vrot.slane %v10536, 2
    %v10538 = vadd.f32 %v10536, %v10537
    %v10539 = vrot.slane %v10538, 1
    %v10540 = vadd.f32 %v10538, %v10539
    %v10541 = vsel %vm2666, %v9807, 0.0
    %v10542 = vrot.slane %v10541, 4
    %v10543 = vadd.f32 %v10541, %v10542
    %v10544 = vrot.slane %v10543, 2
    %v10545 = vadd.f32 %v10543, %v10544
    %v10546 = vrot.slane %v10545, 1
    %v10547 = vadd.f32 %v10545, %v10546
    %v10548 = vsel %vm2666, %v9808, 0.0
    %v10549 = vrot.slane %v10548, 4
    %v10550 = vadd.f32 %v10548, %v10549
    %v10551 = vrot.slane %v10550, 2
    %v10552 = vadd.f32 %v10550, %v10551
    %v10553 = vrot.slane %v10552, 1
    %v10554 = vadd.f32 %v10552, %v10553
    %v10555 = vsel %vm2666, %v9809, 0.0
    %v10556 = vrot.slane %v10555, 4
    %v10557 = vadd.f32 %v10555, %v10556
    %v10558 = vrot.slane %v10557, 2
    %v10559 = vadd.f32 %v10557, %v10558
    %v10560 = vrot.slane %v10559, 1
    %v10561 = vadd.f32 %v10559, %v10560
    %v10562 = vsel %vm2666, %v9810, 0.0
    %v10563 = vrot.slane %v10562, 4
    %v10564 = vadd.f32 %v10562, %v10563
    %v10565 = vrot.slane %v10564, 2
    %v10566 = vadd.f32 %v10564, %v10565
    %v10567 = vrot.slane %v10566, 1
    %v10568 = vadd.f32 %v10566, %v10567
    %v10569 = vsel %vm2666, %v9811, 0.0
    %v10570 = vrot.slane %v10569, 4
    %v10571 = vadd.f32 %v10569, %v10570
    %v10572 = vrot.slane %v10571, 2
    %v10573 = vadd.f32 %v10571, %v10572
    %v10574 = vrot.slane %v10573, 1
    %v10575 = vadd.f32 %v10573, %v10574
    %v10576 = vsel %vm2666, %v9812, 0.0
    %v10577 = vrot.slane %v10576, 4
    %v10578 = vadd.f32 %v10576, %v10577
    %v10579 = vrot.slane %v10578, 2
    %v10580 = vadd.f32 %v10578, %v10579
    %v10581 = vrot.slane %v10580, 1
    %v10582 = vadd.f32 %v10580, %v10581
    %v10583 = vsel %vm2666, %v9813, 0.0
    %v10584 = vrot.slane %v10583, 4
    %v10585 = vadd.f32 %v10583, %v10584
    %v10586 = vrot.slane %v10585, 2
    %v10587 = vadd.f32 %v10585, %v10586
    %v10588 = vrot.slane %v10587, 1
    %v10589 = vadd.f32 %v10587, %v10588
    %v10590 = vsel %vm2666, %v9814, 0.0
    %v10591 = vrot.slane %v10590, 4
    %v10592 = vadd.f32 %v10590, %v10591
    %v10593 = vrot.slane %v10592, 2
    %v10594 = vadd.f32 %v10592, %v10593
    %v10595 = vrot.slane %v10594, 1
    %v10596 = vadd.f32 %v10594, %v10595
    %v10597 = vsel %vm2666, %v9815, 0.0
    %v10598 = vrot.slane %v10597, 4
    %v10599 = vadd.f32 %v10597, %v10598
    %v10600 = vrot.slane %v10599, 2
    %v10601 = vadd.f32 %v10599, %v10600
    %v10602 = vrot.slane %v10601, 1
    %v10603 = vadd.f32 %v10601, %v10602
    %v10604 = vsel %vm2666, %v9816, 0.0
    %v10605 = vrot.slane %v10604, 4
    %v10606 = vadd.f32 %v10604, %v10605
    %v10607 = vrot.slane %v10606, 2
    %v10608 = vadd.f32 %v10606, %v10607
    %v10609 = vrot.slane %v10608, 1
    %v10610 = vadd.f32 %v10608, %v10609
    %v10611 = vsel %vm2666, %v9817, 0.0
    %v10612 = vrot.slane %v10611, 4
    %v10613 = vadd.f32 %v10611, %v10612
    %v10614 = vrot.slane %v10613, 2
    %v10615 = vadd.f32 %v10613, %v10614
    %v10616 = vrot.slane %v10615, 1
    %v10617 = vadd.f32 %v10615, %v10616
    %v10618 = vsel %vm2666, %v9818, 0.0
    %v10619 = vrot.slane %v10618, 4
    %v10620 = vadd.f32 %v10618, %v10619
    %v10621 = vrot.slane %v10620, 2
    %v10622 = vadd.f32 %v10620, %v10621
    %v10623 = vrot.slane %v10622, 1
    %v10624 = vadd.f32 %v10622, %v10623
    %v10625 = vsel %vm2666, %v9819, 0.0
    %v10626 = vrot.slane %v10625, 4
    %v10627 = vadd.f32 %v10625, %v10626
    %v10628 = vrot.slane %v10627, 2
    %v10629 = vadd.f32 %v10627, %v10628
    %v10630 = vrot.slane %v10629, 1
    %v10631 = vadd.f32 %v10629, %v10630
    %v10632 = vsel %vm2666, %v9820, 0.0
    %v10633 = vrot.slane %v10632, 4
    %v10634 = vadd.f32 %v10632, %v10633
    %v10635 = vrot.slane %v10634, 2
    %v10636 = vadd.f32 %v10634, %v10635
    %v10637 = vrot.slane %v10636, 1
    %v10638 = vadd.f32 %v10636, %v10637
    %v10639 = vsel %vm2666, %v9821, 0.0
    %v10640 = vrot.slane %v10639, 4
    %v10641 = vadd.f32 %v10639, %v10640
    %v10642 = vrot.slane %v10641, 2
    %v10643 = vadd.f32 %v10641, %v10642
    %v10644 = vrot.slane %v10643, 1
    %v10645 = vadd.f32 %v10643, %v10644
    %v10646 = vsel %vm2666, %v9822, 0.0
    %v10647 = vrot.slane %v10646, 4
    %v10648 = vadd.f32 %v10646, %v10647
    %v10649 = vrot.slane %v10648, 2
    %v10650 = vadd.f32 %v10648, %v10649
    %v10651 = vrot.slane %v10650, 1
    %v10652 = vadd.f32 %v10650, %v10651
    %v10653 = vsel %vm2666, %v9823, 0.0
    %v10654 = vrot.slane %v10653, 4
    %v10655 = vadd.f32 %v10653, %v10654
    %v10656 = vrot.slane %v10655, 2
    %v10657 = vadd.f32 %v10655, %v10656
    %v10658 = vrot.slane %v10657, 1
    %v10659 = vadd.f32 %v10657, %v10658
    %v10660 = vsel %vm2666, %v9824, 0.0
    %v10661 = vrot.slane %v10660, 4
    %v10662 = vadd.f32 %v10660, %v10661
    %v10663 = vrot.slane %v10662, 2
    %v10664 = vadd.f32 %v10662, %v10663
    %v10665 = vrot.slane %v10664, 1
    %v10666 = vadd.f32 %v10664, %v10665
    %v10667 = vsel %vm2666, %v9825, 0.0
    %v10668 = vrot.slane %v10667, 4
    %v10669 = vadd.f32 %v10667, %v10668
    %v10670 = vrot.slane %v10669, 2
    %v10671 = vadd.f32 %v10669, %v10670
    %v10672 = vrot.slane %v10671, 1
    %v10673 = vadd.f32 %v10671, %v10672
    %v10674 = vsel %vm2666, %v9826, 0.0
    %v10675 = vrot.slane %v10674, 4
    %v10676 = vadd.f32 %v10674, %v10675
    %v10677 = vrot.slane %v10676, 2
    %v10678 = vadd.f32 %v10676, %v10677
    %v10679 = vrot.slane %v10678, 1
    %v10680 = vadd.f32 %v10678, %v10679
    %v10681 = vsel %vm2666, %v9827, 0.0
    %v10682 = vrot.slane %v10681, 4
    %v10683 = vadd.f32 %v10681, %v10682
    %v10684 = vrot.slane %v10683, 2
    %v10685 = vadd.f32 %v10683, %v10684
    %v10686 = vrot.slane %v10685, 1
    %v10687 = vadd.f32 %v10685, %v10686
    %v10688 = vsel %vm2666, %v9828, 0.0
    %v10689 = vrot.slane %v10688, 4
    %v10690 = vadd.f32 %v10688, %v10689
    %v10691 = vrot.slane %v10690, 2
    %v10692 = vadd.f32 %v10690, %v10691
    %v10693 = vrot.slane %v10692, 1
    %v10694 = vadd.f32 %v10692, %v10693
    %v10695 = vsel %vm2666, %v9829, 0.0
    %v10696 = vrot.slane %v10695, 4
    %v10697 = vadd.f32 %v10695, %v10696
    %v10698 = vrot.slane %v10697, 2
    %v10699 = vadd.f32 %v10697, %v10698
    %v10700 = vrot.slane %v10699, 1
    %v10701 = vadd.f32 %v10699, %v10700
    %v10702 = vsel %vm2666, %v9830, 0.0
    %v10703 = vrot.slane %v10702, 4
    %v10704 = vadd.f32 %v10702, %v10703
    %v10705 = vrot.slane %v10704, 2
    %v10706 = vadd.f32 %v10704, %v10705
    %v10707 = vrot.slane %v10706, 1
    %v10708 = vadd.f32 %v10706, %v10707
    %v10709 = vsel %vm2666, %v9831, 0.0
    %v10710 = vrot.slane %v10709, 4
    %v10711 = vadd.f32 %v10709, %v10710
    %v10712 = vrot.slane %v10711, 2
    %v10713 = vadd.f32 %v10711, %v10712
    %v10714 = vrot.slane %v10713, 1
    %v10715 = vadd.f32 %v10713, %v10714
    %v10716 = vsel %vm2666, %v9832, 0.0
    %v10717 = vrot.slane %v10716, 4
    %v10718 = vadd.f32 %v10716, %v10717
    %v10719 = vrot.slane %v10718, 2
    %v10720 = vadd.f32 %v10718, %v10719
    %v10721 = vrot.slane %v10720, 1
    %v10722 = vadd.f32 %v10720, %v10721
    %v10723 = vsel %vm2666, %v9833, 0.0
    %v10724 = vrot.slane %v10723, 4
    %v10725 = vadd.f32 %v10723, %v10724
    %v10726 = vrot.slane %v10725, 2
    %v10727 = vadd.f32 %v10725, %v10726
    %v10728 = vrot.slane %v10727, 1
    %v10729 = vadd.f32 %v10727, %v10728
    %v10858 = vsel %vm5842, %v9847, %v9840
    %v10859 = vsel %vm5844, %v9854, %v10858
    %v10860 = vsel %vm5846, %v9861, %v10859
    %v10861 = vsel %vm5848, %v9868, %v10860
    %v10862 = vsel %vm5850, %v9875, %v10861
    %v10863 = vsel %vm5852, %v9882, %v10862
    %v10864 = vsel %vm5854, %v9889, %v10863
    %v10865 = vsel %vm5842, %v9903, %v9896
    %v10866 = vsel %vm5844, %v9910, %v10865
    %v10867 = vsel %vm5846, %v9917, %v10866
    %v10868 = vsel %vm5848, %v9924, %v10867
    %v10869 = vsel %vm5850, %v9931, %v10868
    %v10870 = vsel %vm5852, %v9938, %v10869
    %v10871 = vsel %vm5854, %v9945, %v10870
    %v10872 = vsel %vm5842, %v9959, %v9952
    %v10873 = vsel %vm5844, %v9966, %v10872
    %v10874 = vsel %vm5846, %v9973, %v10873
    %v10875 = vsel %vm5848, %v9980, %v10874
    %v10876 = vsel %vm5850, %v9987, %v10875
    %v10877 = vsel %vm5852, %v9994, %v10876
    %v10878 = vsel %vm5854, %v10001, %v10877
    %v10879 = vsel %vm5842, %v10015, %v10008
    %v10880 = vsel %vm5844, %v10022, %v10879
    %v10881 = vsel %vm5846, %v10029, %v10880
    %v10882 = vsel %vm5848, %v10036, %v10881
    %v10883 = vsel %vm5850, %v10043, %v10882
    %v10884 = vsel %vm5852, %v10050, %v10883
    %v10885 = vsel %vm5854, %v10057, %v10884
    %v10886 = vsel %vm5842, %v10071, %v10064
    %v10887 = vsel %vm5844, %v10078, %v10886
    %v10888 = vsel %vm5846, %v10085, %v10887
    %v10889 = vsel %vm5848, %v10092, %v10888
    %v10890 = vsel %vm5850, %v10099, %v10889
    %v10891 = vsel %vm5852, %v10106, %v10890
    %v10892 = vsel %vm5854, %v10113, %v10891
    %v10893 = vsel %vm5842, %v10127, %v10120
    %v10894 = vsel %vm5844, %v10134, %v10893
    %v10895 = vsel %vm5846, %v10141, %v10894
    %v10896 = vsel %vm5848, %v10148, %v10895
    %v10897 = vsel %vm5850, %v10155, %v10896
    %v10898 = vsel %vm5852, %v10162, %v10897
    %v10899 = vsel %vm5854, %v10169, %v10898
    %v10900 = vsel %vm5842, %v10183, %v10176
    %v10901 = vsel %vm5844, %v10190, %v10900
    %v10902 = vsel %vm5846, %v10197, %v10901
    %v10903 = vsel %vm5848, %v10204, %v10902
    %v10904 = vsel %vm5850, %v10211, %v10903
    %v10905 = vsel %vm5852, %v10218, %v10904
    %v10906 = vsel %vm5854, %v10225, %v10905
    %v10907 = vsel %vm5842, %v10239, %v10232
    %v10908 = vsel %vm5844, %v10246, %v10907
    %v10909 = vsel %vm5846, %v10253, %v10908
    %v10910 = vsel %vm5848, %v10260, %v10909
    %v10911 = vsel %vm5850, %v10267, %v10910
    %v10912 = vsel %vm5852, %v10274, %v10911
    %v10913 = vsel %vm5854, %v10281, %v10912
    %v10914 = vsel %vm5842, %v10295, %v10288
    %v10915 = vsel %vm5844, %v10302, %v10914
    %v10916 = vsel %vm5846, %v10309, %v10915
    %v10917 = vsel %vm5848, %v10316, %v10916
    %v10918 = vsel %vm5850, %v10323, %v10917
    %v10919 = vsel %vm5852, %v10330, %v10918
    %v10920 = vsel %vm5854, %v10337, %v10919
    %v10921 = vsel %vm5842, %v10351, %v10344
    %v10922 = vsel %vm5844, %v10358, %v10921
    %v10923 = vsel %vm5846, %v10365, %v10922
    %v10924 = vsel %vm5848, %v10372, %v10923
    %v10925 = vsel %vm5850, %v10379, %v10924
    %v10926 = vsel %vm5852, %v10386, %v10925
    %v10927 = vsel %vm5854, %v10393, %v10926
    %v10928 = vsel %vm5842, %v10407, %v10400
    %v10929 = vsel %vm5844, %v10414, %v10928
    %v10930 = vsel %vm5846, %v10421, %v10929
    %v10931 = vsel %vm5848, %v10428, %v10930
    %v10932 = vsel %vm5850, %v10435, %v10931
    %v10933 = vsel %vm5852, %v10442, %v10932
    %v10934 = vsel %vm5854, %v10449, %v10933
    %v10935 = vsel %vm5842, %v10463, %v10456
    %v10936 = vsel %vm5844, %v10470, %v10935
    %v10937 = vsel %vm5846, %v10477, %v10936
    %v10938 = vsel %vm5848, %v10484, %v10937
    %v10939 = vsel %vm5850, %v10491, %v10938
    %v10940 = vsel %vm5852, %v10498, %v10939
    %v10941 = vsel %vm5854, %v10505, %v10940
    %v10942 = vsel %vm5842, %v10519, %v10512
    %v10943 = vsel %vm5844, %v10526, %v10942
    %v10944 = vsel %vm5846, %v10533, %v10943
    %v10945 = vsel %vm5848, %v10540, %v10944
    %v10946 = vsel %vm5850, %v10547, %v10945
    %v10947 = vsel %vm5852, %v10554, %v10946
    %v10948 = vsel %vm5854, %v10561, %v10947
    %v10949 = vsel %vm5842, %v10575, %v10568
    %v10950 = vsel %vm5844, %v10582, %v10949
    %v10951 = vsel %vm5846, %v10589, %v10950
    %v10952 = vsel %vm5848, %v10596, %v10951
    %v10953 = vsel %vm5850, %v10603, %v10952
    %v10954 = vsel %vm5852, %v10610, %v10953
    %v10955 = vsel %vm5854, %v10617, %v10954
    %v10956 = vsel %vm5842, %v10631, %v10624
    %v10957 = vsel %vm5844, %v10638, %v10956
    %v10958 = vsel %vm5846, %v10645, %v10957
    %v10959 = vsel %vm5848, %v10652, %v10958
    %v10960 = vsel %vm5850, %v10659, %v10959
    %v10961 = vsel %vm5852, %v10666, %v10960
    %v10962 = vsel %vm5854, %v10673, %v10961
    %v10963 = vsel %vm5842, %v10687, %v10680
    %v10964 = vsel %vm5844, %v10694, %v10963
    %v10965 = vsel %vm5846, %v10701, %v10964
    %v10966 = vsel %vm5848, %v10708, %v10965
    %v10967 = vsel %vm5850, %v10715, %v10966
    %v10968 = vsel %vm5852, %v10722, %v10967
    %v10969 = vsel %vm5854, %v10729, %v10968
    %10970 = vrot.lane.b32.xlu0 %v10864, 32
    %v10971 = vpop.permute.xlu0 %10970
    %10972 = vrot.lane.b32.xlu0 %v10871, 32
    %v10973 = vpop.permute.xlu0 %10972
    %10974 = vrot.lane.b32.xlu0 %v10878, 32
    %v10975 = vpop.permute.xlu0 %10974
    %10976 = vrot.lane.b32.xlu0 %v10885, 32
    %v10977 = vpop.permute.xlu0 %10976
    %10978 = vrot.lane.b32.xlu0 %v10892, 32
    %v10979 = vpop.permute.xlu0 %10978
    %10980 = vrot.lane.b32.xlu0 %v10899, 32
    %v10981 = vpop.permute.xlu0 %10980
    %10982 = vrot.lane.b32.xlu0 %v10906, 32
    %v10983 = vpop.permute.xlu0 %10982
    %10984 = vrot.lane.b32.xlu0 %v10913, 32
    %v10985 = vpop.permute.xlu0 %10984
    %10986 = vrot.lane.b32.xlu0 %v10920, 32
    %v10987 = vpop.permute.xlu0 %10986
    %10988 = vrot.lane.b32.xlu0 %v10927, 32
    %v10989 = vpop.permute.xlu0 %10988
    %10990 = vrot.lane.b32.xlu0 %v10934, 32
    %v10991 = vpop.permute.xlu0 %10990
    %10992 = vrot.lane.b32.xlu0 %v10941, 32
    %v10993 = vpop.permute.xlu0 %10992
    %10994 = vrot.lane.b32.xlu0 %v10948, 32
    %v10995 = vpop.permute.xlu0 %10994
    %10996 = vrot.lane.b32.xlu0 %v10955, 32
    %v10997 = vpop.permute.xlu0 %10996
    %10998 = vrot.lane.b32.xlu0 %v10962, 32
    %v10999 = vpop.permute.xlu0 %10998
    %11000 = vrot.lane.b32.xlu0 %v10969, 32
    %v11001 = vpop.permute.xlu0 %11000
    %11018 = vrot.lane.b32.xlu0 %v58, 48
    %v11019 = vpop.permute.xlu0 %11018
    %11020 = vrot.lane.b32.xlu0 %v59, 48
    %v11021 = vpop.permute.xlu0 %11020
    %11022 = vrot.lane.b32.xlu0 %v60, 48
    %v11023 = vpop.permute.xlu0 %11022
    %11024 = vrot.lane.b32.xlu0 %v61, 48
    %v11025 = vpop.permute.xlu0 %11024
    %11026 = vrot.lane.b32.xlu0 %v62, 48
    %v11027 = vpop.permute.xlu0 %11026
    %11028 = vrot.lane.b32.xlu0 %v63, 48
    %v11029 = vpop.permute.xlu0 %11028
    %11030 = vrot.lane.b32.xlu0 %v64, 48
    %v11031 = vpop.permute.xlu0 %11030
    %11032 = vrot.lane.b32.xlu0 %v65, 48
    %v11033 = vpop.permute.xlu0 %11032
    %11034 = vrot.lane.b32.xlu0 %v66, 48
    %v11035 = vpop.permute.xlu0 %11034
    %11036 = vrot.lane.b32.xlu0 %v67, 48
    %v11037 = vpop.permute.xlu0 %11036
    %11038 = vrot.lane.b32.xlu0 %v68, 48
    %v11039 = vpop.permute.xlu0 %11038
    %11040 = vrot.lane.b32.xlu0 %v69, 48
    %v11041 = vpop.permute.xlu0 %11040
    %11042 = vrot.lane.b32.xlu0 %v70, 48
    %v11043 = vpop.permute.xlu0 %11042
    %11044 = vrot.lane.b32.xlu0 %v71, 48
    %v11045 = vpop.permute.xlu0 %11044
    %11046 = vrot.lane.b32.xlu0 %v72, 48
    %v11047 = vpop.permute.xlu0 %11046
    %11048 = vrot.lane.b32.xlu0 %v73, 48
    %v11049 = vpop.permute.xlu0 %11048
    %v11066 = vsel %vm2795, %v42, %v10971
    %v11067 = vsel %vm2795, %v43, %v10973
    %v11068 = vsel %vm2795, %v44, %v10975
    %v11069 = vsel %vm2795, %v45, %v10977
    %v11070 = vsel %vm2795, %v46, %v10979
    %v11071 = vsel %vm2795, %v47, %v10981
    %v11072 = vsel %vm2795, %v48, %v10983
    %v11073 = vsel %vm2795, %v49, %v10985
    %v11074 = vsel %vm2795, %v50, %v10987
    %v11075 = vsel %vm2795, %v51, %v10989
    %v11076 = vsel %vm2795, %v52, %v10991
    %v11077 = vsel %vm2795, %v53, %v10993
    %v11078 = vsel %vm2795, %v54, %v10995
    %v11079 = vsel %vm2795, %v55, %v10997
    %v11080 = vsel %vm2795, %v56, %v10999
    %v11081 = vsel %vm2795, %v57, %v11001
    %v11082 = vsel %vm3012, %v11066, %v11019
    %v11083 = vsel %vm3012, %v11067, %v11021
    %v11084 = vsel %vm3012, %v11068, %v11023
    %v11085 = vsel %vm3012, %v11069, %v11025
    %v11086 = vsel %vm3012, %v11070, %v11027
    %v11087 = vsel %vm3012, %v11071, %v11029
    %v11088 = vsel %vm3012, %v11072, %v11031
    %v11089 = vsel %vm3012, %v11073, %v11033
    %v11090 = vsel %vm3012, %v11074, %v11035
    %v11091 = vsel %vm3012, %v11075, %v11037
    %v11092 = vsel %vm3012, %v11076, %v11039
    %v11093 = vsel %vm3012, %v11077, %v11041
    %v11094 = vsel %vm3012, %v11078, %v11043
    %v11095 = vsel %vm3012, %v11079, %v11045
    %v11096 = vsel %vm3012, %v11080, %v11047
    %v11097 = vsel %vm3012, %v11081, %v11049
    %v11098 = vpack.c.bf16 %v11083, %v11082
    %v11099 = vpack.c.bf16 %v11085, %v11084
    %v11100 = vpack.c.bf16 %v11087, %v11086
    %v11101 = vpack.c.bf16 %v11089, %v11088
    %v11102 = vpack.c.bf16 %v11091, %v11090
    %v11103 = vpack.c.bf16 %v11093, %v11092
    %v11104 = vpack.c.bf16 %v11095, %v11094
    %v11105 = vpack.c.bf16 %v11097, %v11096
    %v11106 = vld [vmem:[%s7] sm:$0xf]
    %v11107 = vld [vmem:[%s7 + $0x4] sm:$0xf]
    %v11108 = vld [vmem:[%s7 + $0x8] sm:$0xf]
    %v11109 = vld [vmem:[%s7 + $0xc] sm:$0xf]
    %v11110 = vld [vmem:[%s7 + $0x10] sm:$0xf]
    %v11111 = vld [vmem:[%s7 + $0x14] sm:$0xf]
    %v11112 = vld [vmem:[%s7 + $0x18] sm:$0xf]
    %v11113 = vld [vmem:[%s7 + $0x1c] sm:$0xf]
    %v11114 = vld [vmem:[%s8] sm:$0x1]
    %v11116 = vlaneseq
    %v11117 = vshrl.u32 %v11116, 7
    %v11118 = vsub.s32 0, %v11117
    %v11119 = vrot.slane %v11114, %v11118
    %v11129 = vunpack.c.l.b16 %v11106
    %v11130 = vunpack.c.l.b16 %v11107
    %v11131 = vunpack.c.l.b16 %v11108
    %v11132 = vunpack.c.l.b16 %v11109
    %v11133 = vunpack.c.l.b16 %v11110
    %v11134 = vunpack.c.l.b16 %v11111
    %v11135 = vunpack.c.l.b16 %v11112
    %v11136 = vunpack.c.l.b16 %v11113
    %v11137 = vpack.c.b16 %v11130, %v11129
    %v11138 = vpack.c.b16 %v11132, %v11131
    %v11139 = vpack.c.b16 %v11134, %v11133
    %v11140 = vpack.c.b16 %v11136, %v11135
    %vm11145 = vcmask 523264
    %v11147 = vsel %vm11145, %v11098, 0
    %v11150 = vsel %vm11145, %v11099, 0
    %v11153 = vsel %vm11145, %v11100, 0
    %v11156 = vsel %vm11145, %v11101, 0
    %v11159 = vsel %vm11145, %v11102, 0
    %v11162 = vsel %vm11145, %v11103, 0
    %v11165 = vsel %vm11145, %v11104, 0
    %v11168 = vsel %vm11145, %v11105, 0
    %11170 = vmatprep.subr.bf16.mxu0 0
    %11171 = vmatpush1.bf16.msra.mxu0 %v11137
    %11172 = vmatprep.subr.bf16.mxu0 0
    %11173 = vmatpush1.bf16.msra.mxu0 %v11138
    %11174 = vmatprep.subr.bf16.mxu0 0
    %11175 = vmatpush1.bf16.msra.mxu0 %v11139
    %11176 = vmatprep.subr.bf16.mxu0 0
    %11177 = vmatpush1.bf16.msra.mxu0 %v11140
    %11178 = vmatprep.subr.bf16.mxu0 0
    %11179 = vmatpush1.bf16.msra.mxu0 0
    %11180 = vmatprep.subr.bf16.mxu0 0
    %11181 = vmatpush1.bf16.msra.mxu0 0
    %11182 = vmatprep.subr.bf16.mxu0 0
    %11183 = vmatpush1.bf16.msra.mxu0 0
    %11184 = vmatprep.subr.bf16.mxu0 0
    %11185 = vmatpush1.bf16.msra.mxu0 0
    %11186 = vmatprep.subr.bf16.mxu0 0
    %11187 = vmatpush1.bf16.msra.mxu0 0
    %11188 = vmatprep.subr.bf16.mxu0 0
    %11189 = vmatpush1.bf16.msra.mxu0 0
    %11190 = vmatprep.subr.bf16.mxu0 0
    %11191 = vmatpush1.bf16.msra.mxu0 0
    %11192 = vmatprep.subr.bf16.mxu0 0
    %11193 = vmatpush1.bf16.msra.mxu0 0
    %11194 = vmatprep.subr.bf16.mxu0 0
    %11195 = vmatpush1.bf16.msra.mxu0 0
    %11196 = vmatprep.subr.bf16.mxu0 0
    %11197 = vmatpush1.bf16.msra.mxu0 0
    %11198 = vmatprep.subr.bf16.mxu0 0
    %11199 = vmatpush1.bf16.msra.mxu0 0
    %11200 = vmatprep.subr.bf16.mxu0 0
    %11201 = vmatpush1.bf16.msra.mxu0 0
    %11202 = vmatprep.mubr.bf16.mxu0 0
    %11203 = vmatmul.mubr.bf16.gmra.mrb[0].mxu0 %v11147
    %v11204 = vpop.f32.mrb[0].mxu0
    %v11205 = vadd.f32 %v11119, %v11204
    %v11206 = vpop.f32.mrb[0].mxu0
    %v11207 = vpop.f32.mrb[0].mxu0
    %v11208 = vadd.f32 %v11119, %v11207
    %v11209 = vpop.f32.mrb[0].mxu0
    %11210 = vmatprep.mubr.bf16.mxu0 0
    %11211 = vmatmul.mubr.bf16.gmra.mrb[0].mxu0 %v11150
    %v11212 = vpop.f32.mrb[0].mxu0
    %v11213 = vadd.f32 %v11119, %v11212
    %v11214 = vpop.f32.mrb[0].mxu0
    %v11215 = vpop.f32.mrb[0].mxu0
    %v11216 = vadd.f32 %v11119, %v11215
    %v11217 = vpop.f32.mrb[0].mxu0
    %11218 = vmatprep.mubr.bf16.mxu0 0
    %11219 = vmatmul.mubr.bf16.gmra.mrb[0].mxu0 %v11153
    %v11220 = vpop.f32.mrb[0].mxu0
    %v11221 = vadd.f32 %v11119, %v11220
    %v11222 = vpop.f32.mrb[0].mxu0
    %v11223 = vpop.f32.mrb[0].mxu0
    %v11224 = vadd.f32 %v11119, %v11223
    %v11225 = vpop.f32.mrb[0].mxu0
    %11226 = vmatprep.mubr.bf16.mxu0 0
    %11227 = vmatmul.mubr.bf16.gmra.mrb[0].mxu0 %v11156
    %v11228 = vpop.f32.mrb[0].mxu0
    %v11229 = vadd.f32 %v11119, %v11228
    %v11230 = vpop.f32.mrb[0].mxu0
    %v11231 = vpop.f32.mrb[0].mxu0
    %v11232 = vadd.f32 %v11119, %v11231
    %v11233 = vpop.f32.mrb[0].mxu0
    %11234 = vmatprep.mubr.bf16.mxu0 0
    %11235 = vmatmul.mubr.bf16.gmra.mrb[0].mxu0 %v11159
    %v11236 = vpop.f32.mrb[0].mxu0
    %v11237 = vadd.f32 %v11119, %v11236
    %v11238 = vpop.f32.mrb[0].mxu0
    %v11239 = vpop.f32.mrb[0].mxu0
    %v11240 = vadd.f32 %v11119, %v11239
    %v11241 = vpop.f32.mrb[0].mxu0
    %11242 = vmatprep.mubr.bf16.mxu0 0
    %11243 = vmatmul.mubr.bf16.gmra.mrb[0].mxu0 %v11162
    %v11244 = vpop.f32.mrb[0].mxu0
    %v11245 = vadd.f32 %v11119, %v11244
    %v11246 = vpop.f32.mrb[0].mxu0
    %v11247 = vpop.f32.mrb[0].mxu0
    %v11248 = vadd.f32 %v11119, %v11247
    %v11249 = vpop.f32.mrb[0].mxu0
    %11250 = vmatprep.mubr.bf16.mxu0 0
    %11251 = vmatmul.mubr.bf16.gmra.mrb[0].mxu0 %v11165
    %v11252 = vpop.f32.mrb[0].mxu0
    %v11253 = vadd.f32 %v11119, %v11252
    %v11254 = vpop.f32.mrb[0].mxu0
    %v11255 = vpop.f32.mrb[0].mxu0
    %v11256 = vadd.f32 %v11119, %v11255
    %v11257 = vpop.f32.mrb[0].mxu0
    %11258 = vmatprep.mubr.bf16.mxu0 0
    %11259 = vmatmul.mubr.bf16.gmra.mrb[0].mxu0 %v11168
    %v11260 = vpop.f32.mrb[0].mxu0
    %v11261 = vadd.f32 %v11119, %v11260
    %v11262 = vpop.f32.mrb[0].mxu0
    %v11263 = vpop.f32.mrb[0].mxu0
    %v11264 = vadd.f32 %v11119, %v11263
    %v11265 = vpop.f32.mrb[0].mxu0
    %11266 = vdwg.mxu0
    %v11267 = vmax.f32 %v11205, 0.0
    %v11268 = vmax.f32 %v11208, 0.0
    %v11269 = vmax.f32 %v11213, 0.0
    %v11270 = vmax.f32 %v11216, 0.0
    %v11271 = vmax.f32 %v11221, 0.0
    %v11272 = vmax.f32 %v11224, 0.0
    %v11273 = vmax.f32 %v11229, 0.0
    %v11274 = vmax.f32 %v11232, 0.0
    %v11275 = vmax.f32 %v11237, 0.0
    %v11276 = vmax.f32 %v11240, 0.0
    %v11277 = vmax.f32 %v11245, 0.0
    %v11278 = vmax.f32 %v11248, 0.0
    %v11279 = vmax.f32 %v11253, 0.0
    %v11280 = vmax.f32 %v11256, 0.0
    %v11281 = vmax.f32 %v11261, 0.0
    %v11282 = vmax.f32 %v11264, 0.0
    %v11283 = vpack.c.bf16 %v11268, %v11267
    %v11284 = vpack.c.bf16 %v11270, %v11269
    %v11285 = vpack.c.bf16 %v11272, %v11271
    %v11286 = vpack.c.bf16 %v11274, %v11273
    %v11287 = vpack.c.bf16 %v11276, %v11275
    %v11288 = vpack.c.bf16 %v11278, %v11277
    %v11289 = vpack.c.bf16 %v11280, %v11279
    %v11290 = vpack.c.bf16 %v11282, %v11281
    %v11291 = vld [vmem:[%s9] sm:$0xf]
    %v11292 = vld [vmem:[%s9 + $0x4] sm:$0xf]
    %v11293 = vld [vmem:[%s9 + $0x8] sm:$0xf]
    %v11294 = vld [vmem:[%s9 + $0xc] sm:$0xf]
    %v11295 = vld [vmem:[%s9 + $0x10] sm:$0xf]
    %v11296 = vld [vmem:[%s9 + $0x14] sm:$0xf]
    %v11297 = vld [vmem:[%s9 + $0x18] sm:$0xf]
    %v11298 = vld [vmem:[%s9 + $0x1c] sm:$0xf]
    %v11299 = vld [vmem:[%s9 + $0x20] sm:$0xf]
    %v11300 = vld [vmem:[%s9 + $0x24] sm:$0xf]
    %v11301 = vld [vmem:[%s9 + $0x28] sm:$0xf]
    %v11302 = vld [vmem:[%s9 + $0x2c] sm:$0xf]
    %v11303 = vld [vmem:[%s9 + $0x30] sm:$0xf]
    %v11304 = vld [vmem:[%s9 + $0x34] sm:$0xf]
    %v11305 = vld [vmem:[%s9 + $0x38] sm:$0xf]
    %v11306 = vld [vmem:[%s9 + $0x3c] sm:$0xf]
    %v11323 = vunpack.c.l.b16 %v11291
    %v11324 = vunpack.c.l.b16 %v11292
    %v11325 = vunpack.c.l.b16 %v11293
    %v11326 = vunpack.c.l.b16 %v11294
    %v11327 = vunpack.c.l.b16 %v11295
    %v11328 = vunpack.c.l.b16 %v11296
    %v11329 = vunpack.c.l.b16 %v11297
    %v11330 = vunpack.c.l.b16 %v11298
    %v11331 = vunpack.c.l.b16 %v11299
    %v11332 = vunpack.c.l.b16 %v11300
    %v11333 = vunpack.c.l.b16 %v11301
    %v11334 = vunpack.c.l.b16 %v11302
    %v11335 = vunpack.c.l.b16 %v11303
    %v11336 = vunpack.c.l.b16 %v11304
    %v11337 = vunpack.c.l.b16 %v11305
    %v11338 = vunpack.c.l.b16 %v11306
    %v11339 = vpack.c.b16 %v11324, %v11323
    %v11340 = vpack.c.b16 %v11326, %v11325
    %v11341 = vpack.c.b16 %v11328, %v11327
    %v11342 = vpack.c.b16 %v11330, %v11329
    %v11343 = vpack.c.b16 %v11332, %v11331
    %v11344 = vpack.c.b16 %v11334, %v11333
    %v11345 = vpack.c.b16 %v11336, %v11335
    %v11346 = vpack.c.b16 %v11338, %v11337
    %11355 = vmatprep.subr.bf16.mxu0 0
    %11356 = vmatpush1.bf16.msra.mxu0 %v11339
    %11357 = vmatprep.subr.bf16.mxu0 0
    %11358 = vmatpush1.bf16.msra.mxu0 %v11340
    %11359 = vmatprep.subr.bf16.mxu0 0
    %11360 = vmatpush1.bf16.msra.mxu0 %v11341
    %11361 = vmatprep.subr.bf16.mxu0 0
    %11362 = vmatpush1.bf16.msra.mxu0 %v11342
    %11363 = vmatprep.subr.bf16.mxu0 0
    %11364 = vmatpush1.bf16.msra.mxu0 %v11343
    %11365 = vmatprep.subr.bf16.mxu0 0
    %11366 = vmatpush1.bf16.msra.mxu0 %v11344
    %11367 = vmatprep.subr.bf16.mxu0 0
    %11368 = vmatpush1.bf16.msra.mxu0 %v11345
    %11369 = vmatprep.subr.bf16.mxu0 0
    %11370 = vmatpush1.bf16.msra.mxu0 %v11346
    %11371 = vmatprep.subr.bf16.mxu0 0
    %11372 = vmatpush1.bf16.msra.mxu0 0
    %11373 = vmatprep.subr.bf16.mxu0 0
    %11374 = vmatpush1.bf16.msra.mxu0 0
    %11375 = vmatprep.subr.bf16.mxu0 0
    %11376 = vmatpush1.bf16.msra.mxu0 0
    %11377 = vmatprep.subr.bf16.mxu0 0
    %11378 = vmatpush1.bf16.msra.mxu0 0
    %11379 = vmatprep.subr.bf16.mxu0 0
    %11380 = vmatpush1.bf16.msra.mxu0 0
    %11381 = vmatprep.subr.bf16.mxu0 0
    %11382 = vmatpush1.bf16.msra.mxu0 0
    %11383 = vmatprep.subr.bf16.mxu0 0
    %11384 = vmatpush1.bf16.msra.mxu0 0
    %11385 = vmatprep.subr.bf16.mxu0 0
    %11386 = vmatpush1.bf16.msra.mxu0 0
    %11387 = vmatprep.mubr.bf16.mxu0 0
    %11388 = vmatmul.mubr.bf16.gmra.mrb[0].mxu0 %v11283
    %v11389 = vpop.f32.mrb[0].mxu0
    %v11390 = vadd.f32 0.0, %v11389
    %v11391 = vpop.f32.mrb[0].mxu0
    %v11392 = vpop.f32.mrb[0].mxu0
    %v11393 = vadd.f32 0.0, %v11392
    %v11394 = vpop.f32.mrb[0].mxu0
    %11395 = vmatprep.mubr.bf16.mxu0 0
    %11396 = vmatmul.mubr.bf16.gmra.mrb[0].mxu0 %v11284
    %v11397 = vpop.f32.mrb[0].mxu0
    %v11398 = vadd.f32 0.0, %v11397
    %v11399 = vpop.f32.mrb[0].mxu0
    %v11400 = vpop.f32.mrb[0].mxu0
    %v11401 = vadd.f32 0.0, %v11400
    %v11402 = vpop.f32.mrb[0].mxu0
    %11403 = vmatprep.mubr.bf16.mxu0 0
    %11404 = vmatmul.mubr.bf16.gmra.mrb[0].mxu0 %v11285
    %v11405 = vpop.f32.mrb[0].mxu0
    %v11406 = vadd.f32 0.0, %v11405
    %v11407 = vpop.f32.mrb[0].mxu0
    %v11408 = vpop.f32.mrb[0].mxu0
    %v11409 = vadd.f32 0.0, %v11408
    %v11410 = vpop.f32.mrb[0].mxu0
    %11411 = vmatprep.mubr.bf16.mxu0 0
    %11412 = vmatmul.mubr.bf16.gmra.mrb[0].mxu0 %v11286
    %v11413 = vpop.f32.mrb[0].mxu0
    %v11414 = vadd.f32 0.0, %v11413
    %v11415 = vpop.f32.mrb[0].mxu0
    %v11416 = vpop.f32.mrb[0].mxu0
    %v11417 = vadd.f32 0.0, %v11416
    %v11418 = vpop.f32.mrb[0].mxu0
    %11419 = vmatprep.mubr.bf16.mxu0 0
    %11420 = vmatmul.mubr.bf16.gmra.mrb[0].mxu0 %v11287
    %v11421 = vpop.f32.mrb[0].mxu0
    %v11422 = vadd.f32 0.0, %v11421
    %v11423 = vpop.f32.mrb[0].mxu0
    %v11424 = vpop.f32.mrb[0].mxu0
    %v11425 = vadd.f32 0.0, %v11424
    %v11426 = vpop.f32.mrb[0].mxu0
    %11427 = vmatprep.mubr.bf16.mxu0 0
    %11428 = vmatmul.mubr.bf16.gmra.mrb[0].mxu0 %v11288
    %v11429 = vpop.f32.mrb[0].mxu0
    %v11430 = vadd.f32 0.0, %v11429
    %v11431 = vpop.f32.mrb[0].mxu0
    %v11432 = vpop.f32.mrb[0].mxu0
    %v11433 = vadd.f32 0.0, %v11432
    %v11434 = vpop.f32.mrb[0].mxu0
    %11435 = vmatprep.mubr.bf16.mxu0 0
    %11436 = vmatmul.mubr.bf16.gmra.mrb[0].mxu0 %v11289
    %v11437 = vpop.f32.mrb[0].mxu0
    %v11438 = vadd.f32 0.0, %v11437
    %v11439 = vpop.f32.mrb[0].mxu0
    %v11440 = vpop.f32.mrb[0].mxu0
    %v11441 = vadd.f32 0.0, %v11440
    %v11442 = vpop.f32.mrb[0].mxu0
    %11443 = vmatprep.mubr.bf16.mxu0 0
    %11444 = vmatmul.mubr.bf16.gmra.mrb[0].mxu0 %v11290
    %v11445 = vpop.f32.mrb[0].mxu0
    %v11446 = vadd.f32 0.0, %v11445
    %v11447 = vpop.f32.mrb[0].mxu0
    %v11448 = vpop.f32.mrb[0].mxu0
    %v11449 = vadd.f32 0.0, %v11448
    %v11450 = vpop.f32.mrb[0].mxu0
    %11451 = vdwg.mxu0
    %s11452 = sld [smem:[#allocation3]]
    %v11453 = vstv %s11452
    %v11454 = vadd.f32 %v11390, %v11453
    %v11455 = vadd.f32 %v11393, %v11453
    %v11456 = vadd.f32 %v11398, %v11453
    %v11457 = vadd.f32 %v11401, %v11453
    %v11458 = vadd.f32 %v11406, %v11453
    %v11459 = vadd.f32 %v11409, %v11453
    %v11460 = vadd.f32 %v11414, %v11453
    %v11461 = vadd.f32 %v11417, %v11453
    %v11462 = vadd.f32 %v11422, %v11453
    %v11463 = vadd.f32 %v11425, %v11453
    %v11464 = vadd.f32 %v11430, %v11453
    %v11465 = vadd.f32 %v11433, %v11453
    %v11466 = vadd.f32 %v11438, %v11453
    %v11467 = vadd.f32 %v11441, %v11453
    %v11468 = vadd.f32 %v11446, %v11453
    %v11469 = vadd.f32 %v11449, %v11453
    %11486 = vset.pattern.permute.xlu0 0
    %11487 = vperm.xlu0 %11486, %v11454
    %v11488 = vpop.permute.xlu0 %11487
    %11489 = vset.pattern.permute.xlu0 0
    %11490 = vperm.xlu0 %11489, %v11455
    %v11491 = vpop.permute.xlu0 %11490
    %11492 = vset.pattern.permute.xlu0 0
    %11493 = vperm.xlu0 %11492, %v11456
    %v11494 = vpop.permute.xlu0 %11493
    %11495 = vset.pattern.permute.xlu0 0
    %11496 = vperm.xlu0 %11495, %v11457
    %v11497 = vpop.permute.xlu0 %11496
    %11498 = vset.pattern.permute.xlu0 0
    %11499 = vperm.xlu0 %11498, %v11458
    %v11500 = vpop.permute.xlu0 %11499
    %11501 = vset.pattern.permute.xlu0 0
    %11502 = vperm.xlu0 %11501, %v11459
    %v11503 = vpop.permute.xlu0 %11502
    %11504 = vset.pattern.permute.xlu0 0
    %11505 = vperm.xlu0 %11504, %v11460
    %v11506 = vpop.permute.xlu0 %11505
    %11507 = vset.pattern.permute.xlu0 0
    %11508 = vperm.xlu0 %11507, %v11461
    %v11509 = vpop.permute.xlu0 %11508
    %11510 = vset.pattern.permute.xlu0 0
    %11511 = vperm.xlu0 %11510, %v11462
    %v11512 = vpop.permute.xlu0 %11511
    %11513 = vset.pattern.permute.xlu0 0
    %11514 = vperm.xlu0 %11513, %v11463
    %v11515 = vpop.permute.xlu0 %11514
    %11516 = vset.pattern.permute.xlu0 0
    %11517 = vperm.xlu0 %11516, %v11464
    %v11518 = vpop.permute.xlu0 %11517
    %11519 = vset.pattern.permute.xlu0 0
    %11520 = vperm.xlu0 %11519, %v11465
    %v11521 = vpop.permute.xlu0 %11520
    %11522 = vset.pattern.permute.xlu0 0
    %11523 = vperm.xlu0 %11522, %v11466
    %v11524 = vpop.permute.xlu0 %11523
    %11525 = vset.pattern.permute.xlu0 0
    %11526 = vperm.xlu0 %11525, %v11467
    %v11527 = vpop.permute.xlu0 %11526
    %11528 = vset.pattern.permute.xlu0 0
    %11529 = vperm.xlu0 %11528, %v11468
    %v11530 = vpop.permute.xlu0 %11529
    %11531 = vset.pattern.permute.xlu0 0
    %11532 = vperm.xlu0 %11531, %v11469
    %v11533 = vpop.permute.xlu0 %11532
    %v11534 = vlaneseq
    %v11535 = vshrl.u32 %v11534, 7
    %v11536 = vsub.s32 %v5329, %v11535
    %v11537 = vrot.slane %v11488, %v11536
    %v11538 = vadd.s32 %v5329, 4294967288
    %v11539 = vlaneseq
    %v11540 = vshrl.u32 %v11539, 7
    %v11541 = vsub.s32 %v11538, %v11540
    %v11542 = vrot.slane %v11491, %v11541
    %vm11543 = vcmask 130112
    %v11544 = vsel %vm11543, %v11542, %v11537
    %v11545 = vadd.s32 %v5329, 4294967280
    %v11546 = vlaneseq
    %v11547 = vshrl.u32 %v11546, 7
    %v11548 = vsub.s32 %v11545, %v11547
    %v11549 = vrot.slane %v11494, %v11548
    %vm11550 = vcmask 195712
    %v11551 = vsel %vm11550, %v11549, %v11544
    %v11552 = vadd.s32 %v5329, 4294967272
    %v11553 = vlaneseq
    %v11554 = vshrl.u32 %v11553, 7
    %v11555 = vsub.s32 %v11552, %v11554
    %v11556 = vrot.slane %v11497, %v11555
    %vm11557 = vcmask 261312
    %v11558 = vsel %vm11557, %v11556, %v11551
    %v11559 = vadd.s32 %v5329, 4294967264
    %v11560 = vlaneseq
    %v11561 = vshrl.u32 %v11560, 7
    %v11562 = vsub.s32 %v11559, %v11561
    %v11563 = vrot.slane %v11500, %v11562
    %vm11564 = vcmask 326912
    %v11565 = vsel %vm11564, %v11563, %v11558
    %v11566 = vadd.s32 %v5329, 4294967256
    %v11567 = vlaneseq
    %v11568 = vshrl.u32 %v11567, 7
    %v11569 = vsub.s32 %v11566, %v11568
    %v11570 = vrot.slane %v11503, %v11569
    %vm11571 = vcmask 392512
    %v11572 = vsel %vm11571, %v11570, %v11565
    %v11573 = vadd.s32 %v5329, 4294967248
    %v11574 = vlaneseq
    %v11575 = vshrl.u32 %v11574, 7
    %v11576 = vsub.s32 %v11573, %v11575
    %v11577 = vrot.slane %v11506, %v11576
    %vm11578 = vcmask 458112
    %v11579 = vsel %vm11578, %v11577, %v11572
    %v11580 = vadd.s32 %v5329, 4294967240
    %v11581 = vlaneseq
    %v11582 = vshrl.u32 %v11581, 7
    %v11583 = vsub.s32 %v11580, %v11582
    %v11584 = vrot.slane %v11509, %v11583
    %vm11585 = vcmask 523712
    %v11586 = vsel %vm11585, %v11584, %v11579
    %v11587 = vadd.s32 %v5329, 4294967232
    %v11588 = vlaneseq
    %v11589 = vshrl.u32 %v11588, 7
    %v11590 = vsub.s32 %v11587, %v11589
    %v11591 = vrot.slane %v11512, %v11590
    %vm11592 = vcmask 589312
    %v11593 = vsel %vm11592, %v11591, %v11586
    %v11594 = vadd.s32 %v5329, 4294967224
    %v11595 = vlaneseq
    %v11596 = vshrl.u32 %v11595, 7
    %v11597 = vsub.s32 %v11594, %v11596
    %v11598 = vrot.slane %v11515, %v11597
    %vm11599 = vcmask 654912
    %v11600 = vsel %vm11599, %v11598, %v11593
    %v11601 = vadd.s32 %v5329, 4294967216
    %v11602 = vlaneseq
    %v11603 = vshrl.u32 %v11602, 7
    %v11604 = vsub.s32 %v11601, %v11603
    %v11605 = vrot.slane %v11518, %v11604
    %vm11606 = vcmask 720512
    %v11607 = vsel %vm11606, %v11605, %v11600
    %v11608 = vadd.s32 %v5329, 4294967208
    %v11609 = vlaneseq
    %v11610 = vshrl.u32 %v11609, 7
    %v11611 = vsub.s32 %v11608, %v11610
    %v11612 = vrot.slane %v11521, %v11611
    %vm11613 = vcmask 786112
    %v11614 = vsel %vm11613, %v11612, %v11607
    %v11615 = vadd.s32 %v5329, 4294967200
    %v11616 = vlaneseq
    %v11617 = vshrl.u32 %v11616, 7
    %v11618 = vsub.s32 %v11615, %v11617
    %v11619 = vrot.slane %v11524, %v11618
    %vm11620 = vcmask 851712
    %v11621 = vsel %vm11620, %v11619, %v11614
    %v11622 = vadd.s32 %v5329, 4294967192
    %v11623 = vlaneseq
    %v11624 = vshrl.u32 %v11623, 7
    %v11625 = vsub.s32 %v11622, %v11624
    %v11626 = vrot.slane %v11527, %v11625
    %vm11627 = vcmask 917312
    %v11628 = vsel %vm11627, %v11626, %v11621
    %v11629 = vadd.s32 %v5329, 4294967184
    %v11630 = vlaneseq
    %v11631 = vshrl.u32 %v11630, 7
    %v11632 = vsub.s32 %v11629, %v11631
    %v11633 = vrot.slane %v11530, %v11632
    %vm11634 = vcmask 982912
    %v11635 = vsel %vm11634, %v11633, %v11628
    %v11636 = vadd.s32 %v5329, 4294967176
    %v11637 = vlaneseq
    %v11638 = vshrl.u32 %v11637, 7
    %v11639 = vsub.s32 %v11636, %v11638
    %v11640 = vrot.slane %v11533, %v11639
    %vm11641 = vcmask 1048512
    %v11642 = vsel %vm11641, %v11640, %v11635
    %11644 = vst [vmem:[#allocation4] sm:$0x1] %v11642
    // Predicated region
    $region46: #{tpu_custom_call.1} parent=1 // pred_check
      _
    $region47: #{tpu_custom_call.1} parent=1 // pred_check_branch
      %11646 = sbr.rel (0) target = $region49
    $region48: #{tpu_custom_call.1} parent=1 // pred_region
      %s11648 = ssub.s32 16, 16
      %11649 = vsyncadd [#allocation5], %s11648
      %s11651 = sshll.u32 [#allocation4], 4
      %s11652 = int_to_ptr.vmem [resolvable:$true] %s11651
      %11654 = dma.vmem_to_hbm [thread:$0]  %s11652, 16, %s11, [#allocation5]
    $region49: #{tpu_custom_call.1} parent=1 // pred_fallthru
      _
    // Predicated region
    $region50: #{tpu_custom_call.1} parent=1 // pred_check
      _
    $region51: #{tpu_custom_call.1} parent=1 // pred_check_branch
      %11656 = sbr.rel (0) target = $region53
    $region52: #{tpu_custom_call.1} parent=1 // pred_region
      %11657 = dma.done [#allocation5], 16
    $region53: #{tpu_custom_call.1} parent=1 // pred_fallthru
      _
    %11658 = vsyncpa [#allocation5], 1

</llo_original>
